<compile_context>
chip_gen: v7x
topology: tpu7x:2x2x1
jax: 0.10.0
libtpu: 0.0.40
codegen_flags: <defaults>
</compile_context>

<pallas_src>
import functools
import math

import jax
import jax.numpy as jnp
from jax.experimental import pallas as pl
from jax.experimental.pallas import tpu as pltpu

_INV_SQRT2 = 0.7071067811865476
_LN_EPS = 1e-5          # PyTorch LayerNorm default
_NEG_BIG = -1e30        # finite mask value (avoids -inf -> NaN pitfalls)


# ----------------------------- in-kernel math helpers -----------------------------

def _mm(x, w, b=None):
    y = jnp.dot(x, w, preferred_element_type=jnp.float32)
    if b is not None:
        y = y + b
    return y


def _gelu(x):
    # exact (erf) GELU, matching torch.nn.functional.gelu default
    return 0.5 * x * (1.0 + jax.lax.erf(x * _INV_SQRT2))


def _layer_norm(x, g, b):
    mu = jnp.mean(x, axis=-1, keepdims=True)
    var = jnp.mean((x - mu) ** 2, axis=-1, keepdims=True)
    return (x - mu) * jax.lax.rsqrt(var + _LN_EPS) * g + b


def _softmax_rows(s):
    m = jnp.max(s, axis=-1, keepdims=True)
    p = jnp.exp(s - m)
    denom = jnp.sum(p, axis=-1, keepdims=True)
    return p * pl.reciprocal(denom, approx=True)   # EUP slot, effectively free


def _mha(q, k, v, wo, bo, *, n_heads, causal, mix):
    """Multi-head attention + output projection for ONE batch element.

    q: (Lq, Dm), k/v: (Lk, Dm), wo: (Dm, Dm), bo: (1, Dm) -> (Lq, Dm).
    Equivalent (at these sizes) to the reference ProbAttention + out_projection.
    """
    Lq, Dm = q.shape
    Lk = k.shape[0]
    dh = Dm // n_heads
    scale = 1.0 / math.sqrt(dh)

    heads = []
    for h in range(n_heads):
        sl = slice(h * dh, (h + 1) * dh)
        s = jax.lax.dot_general(q[:, sl], k[:, sl], (((1,), (1,)), ((), ())),
                                preferred_element_type=jnp.float32) * scale
        if causal:
            row = jax.lax.broadcasted_iota(jnp.int32, (Lq, Lk), 0)
            col = jax.lax.broadcasted_iota(jnp.int32, (Lq, Lk), 1)
            s = jnp.where(col <= row, s, _NEG_BIG)
        p = _softmax_rows(s)
        heads.append(jnp.dot(p, v[:, sl], preferred_element_type=jnp.float32))

    acc = None
    if not mix:
        # concat(heads) @ Wo == sum_h heads[h] @ Wo[h*dh:(h+1)*dh, :]
        for h in range(n_heads):
            t = _mm(heads[h], wo[h * dh:(h + 1) * dh, :])
            acc = t if acc is None else acc + t
    else:
        # torch mix=True: out(B,L,H,dh).transpose(2,1).contiguous().view(B,L,H*dh)
        # mixed[l', j*dh:(j+1)*dh] = heads[hh][ll]  with  l'*H + j == hh*Lq + ll.
        # Fold the row re-gather into constant 0/1 selection matrices so that no
        # concatenate/reshape is needed: mixed @ Wo == sum_{j,h} S_{j,h} @ heads[h] @ Wo_j.
        r = jax.lax.broadcasted_iota(jnp.int32, (Lq, Lq), 0)   # l'
        c = jax.lax.broadcasted_iota(jnp.int32, (Lq, Lq), 1)   # ll
        for j in range(n_heads):
            blk = None
            for h in range(n_heads):
                sel = jnp.where(r * n_heads + j == h * Lq + c, 1.0, 0.0)
                t = jnp.dot(sel, heads[h], preferred_element_type=jnp.float32)
                blk = t if blk is None else blk + t
            t = _mm(blk, wo[j * dh:(j + 1) * dh, :])
            acc = t if acc is None else acc + t
    return acc + bo


# ----------------------------- fused whole-model kernel -----------------------------

def _prtplus_kernel(*refs, d_model, n_heads, e_layers, d_layers):
    """One grid step == one batch element.  refs = (inputs..., out_ref)."""
    Dm = d_model
    out_ref = refs[-1]
    it = iter(refs[:-1])

    def nxt():
        return next(it)[...]

    x_enc = next(it)[0]          # (Le, enc_in)
    x_dec = next(it)[0]          # (Ld, dec_in)

    # ---------------- encoder: embedding ----------------
    w, b, pos = nxt(), nxt(), nxt()
    enc = _mm(x_enc, w, b) + pos                       # dropout == identity (eval)

    # ---------------- encoder layers ----------------
    for _ in range(e_layers):
        wqkv, bqkv, wo, bo = nxt(), nxt(), nxt(), nxt()
        n1g, n1b = nxt(), nxt()
        w1, b1, w2, b2 = nxt(), nxt(), nxt(), nxt()
        n2g, n2b = nxt(), nxt()

        qkv = _mm(enc, wqkv, bqkv)                     # fused QKV projection
        a = _mha(qkv[:, :Dm], qkv[:, Dm:2 * Dm], qkv[:, 2 * Dm:], wo, bo,
                 n_heads=n_heads, causal=False, mix=False)
        x = _layer_norm(enc + a, n1g, n1b)
        y = _mm(_gelu(_mm(x, w1, b1)), w2, b2)         # Conv1d(k=1) pair == FFN
        enc = _layer_norm(x + y, n2g, n2b)

    enc = _layer_norm(enc, nxt(), nxt())               # encoder final norm

    # ---------------- decoder: embedding ----------------
    w, b, pos = nxt(), nxt(), nxt()
    dec = _mm(x_dec, w, b) + pos

    # ---------------- decoder layers ----------------
    for _ in range(d_layers):
        swqkv, sbqkv, swo, sbo = nxt(), nxt(), nxt(), nxt()
        cwq, cbq, cwkv, cbkv, cwo, cbo = nxt(), nxt(), nxt(), nxt(), nxt(), nxt()
        n1g, n1b, n2g, n2b = nxt(), nxt(), nxt(), nxt()
        w1, b1, w2, b2 = nxt(), nxt(), nxt(), nxt()
        n3g, n3b = nxt(), nxt()

        # masked self-attention (mix=True in the reference)
        qkv = _mm(dec, swqkv, sbqkv)
        a = _mha(qkv[:, :Dm], qkv[:, Dm:2 * Dm], qkv[:, 2 * Dm:], swo, sbo,
                 n_heads=n_heads, causal=True, mix=True)
        dec = _layer_norm(dec + a, n1g, n1b)

        # cross-attention to the encoder output (fused KV projection)
        q = _mm(dec, cwq, cbq)
        kv = _mm(enc, cwkv, cbkv)
        a = _mha(q, kv[:, :Dm], kv[:, Dm:], cwo, cbo,
                 n_heads=n_heads, causal=False, mix=False)
        dec = _layer_norm(dec + a, n2g, n2b)

        y = _mm(_gelu(_mm(dec, w1, b1)), w2, b2)
        dec = _layer_norm(dec + y, n3g, n3b)

    dec = _layer_norm(dec, nxt(), nxt())               # decoder final norm

    pw, pb = nxt(), nxt()
    out_ref[0] = _mm(dec, pw, pb).astype(out_ref.dtype)


# ----------------------------- wrapper -----------------------------

def prt_plus_forward(params, x_enc, x_mark_enc, x_dec, x_mark_dec,
                     *, n_heads, pred_len):
    del x_mark_enc, x_mark_dec   # unused in reference DataEmbedding.forward
    B, Le, _ = x_enc.shape
    _, Ld, _ = x_dec.shape
    d_model = params["enc_emb"]["w"].shape[1]
    c_out = params["proj_w"].shape[1]
    e_layers = len(params["enc_layers"])
    d_layers = len(params["dec_layers"])

    flat, specs = [], []

    def add_batched(a):   # (B, L, C) -> one (1, L, C) block per grid step
        flat.append(a)
        specs.append(pl.BlockSpec((1,) + a.shape[1:], lambda i: (i, 0, 0)))

    def add_const(a):     # grid-invariant: full array resident in VMEM
        a = jnp.asarray(a, jnp.float32)
        if a.ndim == 1:
            a = a.reshape(1, -1)
        flat.append(a)
        specs.append(pl.BlockSpec(a.shape, lambda i, nd=a.ndim: (0,) * nd))

    add_batched(x_enc)
    add_batched(x_dec)

    ee = params["enc_emb"]
    add_const(ee["w"]); add_const(ee["b"]); add_const(ee["pos"][0, :Le, :])
    for lp in params["enc_layers"]:
        at = lp["attn"]
        for arr in (at["wqkv"], at["bqkv"], at["wo"], at["bo"],
                    lp["norm1_g"], lp["norm1_b"],
                    lp["conv1_w"], lp["conv1_b"], lp["conv2_w"], lp["conv2_b"],
                    lp["norm2_g"], lp["norm2_b"]):
            add_const(arr)
    add_const(params["enc_norm_g"]); add_const(params["enc_norm_b"])

    de = params["dec_emb"]
    add_const(de["w"]); add_const(de["b"]); add_const(de["pos"][0, :Ld, :])
    for lp in params["dec_layers"]:
        sa, ca = lp["self_attn"], lp["cross_attn"]
        for arr in (sa["wqkv"], sa["bqkv"], sa["wo"], sa["bo"],
                    ca["wq"], ca["bq"], ca["wkv"], ca["bkv"], ca["wo"], ca["bo"],
                    lp["norm1_g"], lp["norm1_b"], lp["norm2_g"], lp["norm2_b"],
                    lp["conv1_w"], lp["conv1_b"], lp["conv2_w"], lp["conv2_b"],
                    lp["norm3_g"], lp["norm3_b"]):
            add_const(arr)
    add_const(params["dec_norm_g"]); add_const(params["dec_norm_b"])
    add_const(params["proj_w"]); add_const(params["proj_b"])

    kernel = functools.partial(_prtplus_kernel, d_model=d_model, n_heads=n_heads,
                               e_layers=e_layers, d_layers=d_layers)
    out = pl.pallas_call(
        kernel,
        grid=(B,),
        in_specs=specs,
        out_specs=pl.BlockSpec((1, Ld, c_out), lambda i: (i, 0, 0)),
        out_shape=jax.ShapeDtypeStruct((B, Ld, c_out), jnp.float32),
        compiler_params=pltpu.CompilerParams(
            dimension_semantics=("parallel",)),   # megacore sharding on v7x
    )(*flat)
    return out[:, -pred_len:, :]


# ----------------------------- parameter init -----------------------------

def _init_linear(key, din, dout):
    kw, kb = jax.random.split(key)
    bound = 1.0 / math.sqrt(din)
    w = jax.random.uniform(kw, (din, dout), jnp.float32, -bound, bound)
    b = jax.random.uniform(kb, (dout,), jnp.float32, -bound, bound)
    return w, b


def _init_attn_self(key, d_model):
    ks = jax.random.split(key, 4)
    wq, bq = _init_linear(ks[0], d_model, d_model)
    wk, bk = _init_linear(ks[1], d_model, d_model)
    wv, bv = _init_linear(ks[2], d_model, d_model)
    wo, bo = _init_linear(ks[3], d_model, d_model)
    return {"wqkv": jnp.concatenate([wq, wk, wv], axis=1),
            "bqkv": jnp.concatenate([bq, bk, bv], axis=0),
            "wo": wo, "bo": bo}


def _init_attn_cross(key, d_model):
    ks = jax.random.split(key, 4)
    wq, bq = _init_linear(ks[0], d_model, d_model)
    wk, bk = _init_linear(ks[1], d_model, d_model)
    wv, bv = _init_linear(ks[2], d_model, d_model)
    wo, bo = _init_linear(ks[3], d_model, d_model)
    return {"wq": wq, "bq": bq,
            "wkv": jnp.concatenate([wk, wv], axis=1),
            "bkv": jnp.concatenate([bk, bv], axis=0),
            "wo": wo, "bo": bo}


def _init_embedding(key, c_in, d_model, max_len=5000):
    kw, kb, kp = jax.random.split(key, 3)
    # c_in separate Linear(1, d_model) layers collapse to one (c_in, d_model) matrix
    w = jax.random.normal(kw, (c_in, d_model), jnp.float32) * 0.1
    b = jax.random.normal(kb, (d_model,), jnp.float32) * 0.01
    pos = jax.random.normal(kp, (1, max_len, d_model), jnp.float32) * 0.1
    return {"w": w, "b": b, "pos": pos}


def _init_ffn(key, d_model, d_ff):
    k1, k2 = jax.random.split(key)
    w1, b1 = _init_linear(k1, d_model, d_ff)   # Conv1d(d_model, d_ff, 1)
    w2, b2 = _init_linear(k2, d_ff, d_model)   # Conv1d(d_ff, d_model, 1)
    return w1, b1, w2, b2


def init_params(key, *, enc_in, dec_in, c_out, d_model, d_ff, e_layers, d_layers):
    n_keys = 3 + 2 * e_layers + 3 * d_layers
    ks = iter(jax.random.split(key, n_keys))
    ones = jnp.ones((d_model,), jnp.float32)
    zeros = jnp.zeros((d_model,), jnp.float32)
    params = {
        "enc_emb": _init_embedding(next(ks), enc_in, d_model),
        "dec_emb": _init_embedding(next(ks), dec_in, d_model),
        "enc_layers": [], "dec_layers": [],
        "enc_norm_g": ones, "enc_norm_b": zeros,
        "dec_norm_g": ones, "dec_norm_b": zeros,
    }
    for _ in range(e_layers):
        w1, b1, w2, b2 = _init_ffn(next(ks), d_model, d_ff)
        params["enc_layers"].append({
            "attn": _init_attn_self(next(ks), d_model),
            "conv1_w": w1, "conv1_b": b1, "conv2_w": w2, "conv2_b": b2,
            "norm1_g": ones, "norm1_b": zeros,
            "norm2_g": ones, "norm2_b": zeros,
        })
    for _ in range(d_layers):
        w1, b1, w2, b2 = _init_ffn(next(ks), d_model, d_ff)
        params["dec_layers"].append({
            "self_attn": _init_attn_self(next(ks), d_model),
            "cross_attn": _init_attn_cross(next(ks), d_model),
            "conv1_w": w1, "conv1_b": b1, "conv2_w": w2, "conv2_b": b2,
            "norm1_g": ones, "norm1_b": zeros,
            "norm2_g": ones, "norm2_b": zeros,
            "norm3_g": ones, "norm3_b": zeros,
        })
    pw, pb = _init_linear(next(ks), d_model, c_out)
    params["proj_w"] = pw
    params["proj_b"] = pb
    return params


# ----------------------------- main -----------------------------

if __name__ == "__main__":
    B = 2
    enc_in = dec_in = 4
    c_out = 1
    seq_len, label_len, pred_len = 8, 4, 2
    d_model, n_heads, d_ff = 32, 4, 64
    e_layers = d_layers = 1

    key = jax.random.PRNGKey(0)
    k_params, k_enc, k_dec = jax.random.split(key, 3)

    params = init_params(k_params, enc_in=enc_in, dec_in=dec_in, c_out=c_out,
                         d_model=d_model, d_ff=d_ff,
                         e_layers=e_layers, d_layers=d_layers)

    x_enc = jax.random.normal(k_enc, (B, seq_len, enc_in), jnp.float32)
    x_mark_enc = jnp.zeros((B, seq_len, 1), jnp.float32)
    dec_len = label_len + pred_len
    x_dec = jax.random.normal(k_dec, (B, dec_len, dec_in), jnp.float32)
    x_mark_dec = jnp.zeros((B, dec_len, 1), jnp.float32)

    fwd = jax.jit(functools.partial(prt_plus_forward,
                                    n_heads=n_heads, pred_len=pred_len))
    out = jax.block_until_ready(fwd(params, x_enc, x_mark_enc, x_dec, x_mark_dec))
    assert out.shape == (B, pred_len, c_out), out.shape
    assert bool(jnp.all(jnp.isfinite(out)))
    print("KERNEL_OK")
</pallas_src>

<mosaic_0001>
module attributes {stable_mosaic.version = 11 : i64} {
  func.func @_prtplus_kernel(%arg0: i32, %arg1: memref<1x8x4xf32, #tpu.memory_space<vmem>>, %arg2: memref<1x6x4xf32, #tpu.memory_space<vmem>>, %arg3: memref<4x32xf32, #tpu.memory_space<vmem>>, %arg4: memref<1x32xf32, #tpu.memory_space<vmem>>, %arg5: memref<8x32xf32, #tpu.memory_space<vmem>>, %arg6: memref<32x96xf32, #tpu.memory_space<vmem>>, %arg7: memref<1x96xf32, #tpu.memory_space<vmem>>, %arg8: memref<32x32xf32, #tpu.memory_space<vmem>>, %arg9: memref<1x32xf32, #tpu.memory_space<vmem>>, %arg10: memref<1x32xf32, #tpu.memory_space<vmem>>, %arg11: memref<1x32xf32, #tpu.memory_space<vmem>>, %arg12: memref<32x64xf32, #tpu.memory_space<vmem>>, %arg13: memref<1x64xf32, #tpu.memory_space<vmem>>, %arg14: memref<64x32xf32, #tpu.memory_space<vmem>>, %arg15: memref<1x32xf32, #tpu.memory_space<vmem>>, %arg16: memref<1x32xf32, #tpu.memory_space<vmem>>, %arg17: memref<1x32xf32, #tpu.memory_space<vmem>>, %arg18: memref<1x32xf32, #tpu.memory_space<vmem>>, %arg19: memref<1x32xf32, #tpu.memory_space<vmem>>, %arg20: memref<4x32xf32, #tpu.memory_space<vmem>>, %arg21: memref<1x32xf32, #tpu.memory_space<vmem>>, %arg22: memref<6x32xf32, #tpu.memory_space<vmem>>, %arg23: memref<32x96xf32, #tpu.memory_space<vmem>>, %arg24: memref<1x96xf32, #tpu.memory_space<vmem>>, %arg25: memref<32x32xf32, #tpu.memory_space<vmem>>, %arg26: memref<1x32xf32, #tpu.memory_space<vmem>>, %arg27: memref<32x32xf32, #tpu.memory_space<vmem>>, %arg28: memref<1x32xf32, #tpu.memory_space<vmem>>, %arg29: memref<32x64xf32, #tpu.memory_space<vmem>>, %arg30: memref<1x64xf32, #tpu.memory_space<vmem>>, %arg31: memref<32x32xf32, #tpu.memory_space<vmem>>, %arg32: memref<1x32xf32, #tpu.memory_space<vmem>>, %arg33: memref<1x32xf32, #tpu.memory_space<vmem>>, %arg34: memref<1x32xf32, #tpu.memory_space<vmem>>, %arg35: memref<1x32xf32, #tpu.memory_space<vmem>>, %arg36: memref<1x32xf32, #tpu.memory_space<vmem>>, %arg37: memref<32x64xf32, #tpu.memory_space<vmem>>, %arg38: memref<1x64xf32, #tpu.memory_space<vmem>>, %arg39: memref<64x32xf32, #tpu.memory_space<vmem>>, %arg40: memref<1x32xf32, #tpu.memory_space<vmem>>, %arg41: memref<1x32xf32, #tpu.memory_space<vmem>>, %arg42: memref<1x32xf32, #tpu.memory_space<vmem>>, %arg43: memref<1x32xf32, #tpu.memory_space<vmem>>, %arg44: memref<1x32xf32, #tpu.memory_space<vmem>>, %arg45: memref<32x1xf32, #tpu.memory_space<vmem>>, %arg46: memref<1x1xf32, #tpu.memory_space<vmem>>, %arg47: memref<1x6x1xf32, #tpu.memory_space<vmem>>) attributes {dimension_semantics = [#tpu.dimension_semantics<parallel>], iteration_bounds = array<i64: 2>, scalar_prefetch = 0 : i64, scratch_operands = 0 : i64, tpu.core_type = #tpu.core_type<tc>, window_params = [{transform_indices = @transform_0, window_bounds = array<i64: 1, 8, 4>}, {transform_indices = @transform_1, window_bounds = array<i64: 1, 6, 4>}, {pipeline_mode = #tpu.pipeline_mode<synchronous>, transform_indices = @transform_2, window_bounds = array<i64: 4, 32>}, {pipeline_mode = #tpu.pipeline_mode<synchronous>, transform_indices = @transform_3, window_bounds = array<i64: 1, 32>}, {pipeline_mode = #tpu.pipeline_mode<synchronous>, transform_indices = @transform_4, window_bounds = array<i64: 8, 32>}, {pipeline_mode = #tpu.pipeline_mode<synchronous>, transform_indices = @transform_5, window_bounds = array<i64: 32, 96>}, {pipeline_mode = #tpu.pipeline_mode<synchronous>, transform_indices = @transform_6, window_bounds = array<i64: 1, 96>}, {pipeline_mode = #tpu.pipeline_mode<synchronous>, transform_indices = @transform_7, window_bounds = array<i64: 32, 32>}, {pipeline_mode = #tpu.pipeline_mode<synchronous>, transform_indices = @transform_8, window_bounds = array<i64: 1, 32>}, {pipeline_mode = #tpu.pipeline_mode<synchronous>, transform_indices = @transform_9, window_bounds = array<i64: 1, 32>}, {pipeline_mode = #tpu.pipeline_mode<synchronous>, transform_indices = @transform_10, window_bounds = array<i64: 1, 32>}, {pipeline_mode = #tpu.pipeline_mode<synchronous>, transform_indices = @transform_11, window_bounds = array<i64: 32, 64>}, {pipeline_mode = #tpu.pipeline_mode<synchronous>, transform_indices = @transform_12, window_bounds = array<i64: 1, 64>}, {pipeline_mode = #tpu.pipeline_mode<synchronous>, transform_indices = @transform_13, window_bounds = array<i64: 64, 32>}, {pipeline_mode = #tpu.pipeline_mode<synchronous>, transform_indices = @transform_14, window_bounds = array<i64: 1, 32>}, {pipeline_mode = #tpu.pipeline_mode<synchronous>, transform_indices = @transform_15, window_bounds = array<i64: 1, 32>}, {pipeline_mode = #tpu.pipeline_mode<synchronous>, transform_indices = @transform_16, window_bounds = array<i64: 1, 32>}, {pipeline_mode = #tpu.pipeline_mode<synchronous>, transform_indices = @transform_17, window_bounds = array<i64: 1, 32>}, {pipeline_mode = #tpu.pipeline_mode<synchronous>, transform_indices = @transform_18, window_bounds = array<i64: 1, 32>}, {pipeline_mode = #tpu.pipeline_mode<synchronous>, transform_indices = @transform_19, window_bounds = array<i64: 4, 32>}, {pipeline_mode = #tpu.pipeline_mode<synchronous>, transform_indices = @transform_20, window_bounds = array<i64: 1, 32>}, {pipeline_mode = #tpu.pipeline_mode<synchronous>, transform_indices = @transform_21, window_bounds = array<i64: 6, 32>}, {pipeline_mode = #tpu.pipeline_mode<synchronous>, transform_indices = @transform_22, window_bounds = array<i64: 32, 96>}, {pipeline_mode = #tpu.pipeline_mode<synchronous>, transform_indices = @transform_23, window_bounds = array<i64: 1, 96>}, {pipeline_mode = #tpu.pipeline_mode<synchronous>, transform_indices = @transform_24, window_bounds = array<i64: 32, 32>}, {pipeline_mode = #tpu.pipeline_mode<synchronous>, transform_indices = @transform_25, window_bounds = array<i64: 1, 32>}, {pipeline_mode = #tpu.pipeline_mode<synchronous>, transform_indices = @transform_26, window_bounds = array<i64: 32, 32>}, {pipeline_mode = #tpu.pipeline_mode<synchronous>, transform_indices = @transform_27, window_bounds = array<i64: 1, 32>}, {pipeline_mode = #tpu.pipeline_mode<synchronous>, transform_indices = @transform_28, window_bounds = array<i64: 32, 64>}, {pipeline_mode = #tpu.pipeline_mode<synchronous>, transform_indices = @transform_29, window_bounds = array<i64: 1, 64>}, {pipeline_mode = #tpu.pipeline_mode<synchronous>, transform_indices = @transform_30, window_bounds = array<i64: 32, 32>}, {pipeline_mode = #tpu.pipeline_mode<synchronous>, transform_indices = @transform_31, window_bounds = array<i64: 1, 32>}, {pipeline_mode = #tpu.pipeline_mode<synchronous>, transform_indices = @transform_32, window_bounds = array<i64: 1, 32>}, {pipeline_mode = #tpu.pipeline_mode<synchronous>, transform_indices = @transform_33, window_bounds = array<i64: 1, 32>}, {pipeline_mode = #tpu.pipeline_mode<synchronous>, transform_indices = @transform_34, window_bounds = array<i64: 1, 32>}, {pipeline_mode = #tpu.pipeline_mode<synchronous>, transform_indices = @transform_35, window_bounds = array<i64: 1, 32>}, {pipeline_mode = #tpu.pipeline_mode<synchronous>, transform_indices = @transform_36, window_bounds = array<i64: 32, 64>}, {pipeline_mode = #tpu.pipeline_mode<synchronous>, transform_indices = @transform_37, window_bounds = array<i64: 1, 64>}, {pipeline_mode = #tpu.pipeline_mode<synchronous>, transform_indices = @transform_38, window_bounds = array<i64: 64, 32>}, {pipeline_mode = #tpu.pipeline_mode<synchronous>, transform_indices = @transform_39, window_bounds = array<i64: 1, 32>}, {pipeline_mode = #tpu.pipeline_mode<synchronous>, transform_indices = @transform_40, window_bounds = array<i64: 1, 32>}, {pipeline_mode = #tpu.pipeline_mode<synchronous>, transform_indices = @transform_41, window_bounds = array<i64: 1, 32>}, {pipeline_mode = #tpu.pipeline_mode<synchronous>, transform_indices = @transform_42, window_bounds = array<i64: 1, 32>}, {pipeline_mode = #tpu.pipeline_mode<synchronous>, transform_indices = @transform_43, window_bounds = array<i64: 1, 32>}, {pipeline_mode = #tpu.pipeline_mode<synchronous>, transform_indices = @transform_44, window_bounds = array<i64: 32, 1>}, {pipeline_mode = #tpu.pipeline_mode<synchronous>, transform_indices = @transform_45, window_bounds = array<i64: 1, 1>}, {transform_indices = @transform_46, window_bounds = array<i64: 1, 6, 1>}]} {
    %c0 = arith.constant 0 : index
    %c0_0 = arith.constant 0 : index
    %c0_1 = arith.constant 0 : index
    %0 = vector.load %arg1[%c0, %c0_0, %c0_1] : memref<1x8x4xf32, #tpu.memory_space<vmem>>, vector<1x8x4xf32>
    %1 = vector.shape_cast %0 : vector<1x8x4xf32> to vector<8x4xf32>
    %c0_2 = arith.constant 0 : index
    %c0_3 = arith.constant 0 : index
    %c0_4 = arith.constant 0 : index
    %2 = vector.load %arg2[%c0_2, %c0_3, %c0_4] : memref<1x6x4xf32, #tpu.memory_space<vmem>>, vector<1x6x4xf32>
    %3 = vector.shape_cast %2 : vector<1x6x4xf32> to vector<6x4xf32>
    %c0_5 = arith.constant 0 : index
    %c0_6 = arith.constant 0 : index
    %4 = vector.load %arg3[%c0_5, %c0_6] : memref<4x32xf32, #tpu.memory_space<vmem>>, vector<4x32xf32>
    %c0_7 = arith.constant 0 : index
    %c0_8 = arith.constant 0 : index
    %5 = vector.load %arg4[%c0_7, %c0_8] : memref<1x32xf32, #tpu.memory_space<vmem>>, vector<1x32xf32>
    %c0_9 = arith.constant 0 : index
    %c0_10 = arith.constant 0 : index
    %6 = vector.load %arg5[%c0_9, %c0_10] : memref<8x32xf32, #tpu.memory_space<vmem>>, vector<8x32xf32>
    %cst = arith.constant dense<0.000000e+00> : vector<8x32xf32>
    %7 = tpu.matmul %1, %4, %cst {dimension_numbers = #tpu.dot_dimension_numbers<[1], [0], [0], [1], [0, 0, 1, 1], [], []>} : vector<8x4xf32>, vector<4x32xf32>, vector<8x32xf32> -> vector<8x32xf32>
    %8 = vector.broadcast %5 : vector<1x32xf32> to vector<8x32xf32>
    %9 = arith.addf %7, %8 : vector<8x32xf32>
    %10 = arith.addf %9, %6 : vector<8x32xf32>
    %c0_11 = arith.constant 0 : index
    %c0_12 = arith.constant 0 : index
    %11 = vector.load %arg6[%c0_11, %c0_12] : memref<32x96xf32, #tpu.memory_space<vmem>>, vector<32x96xf32>
    %c0_13 = arith.constant 0 : index
    %c0_14 = arith.constant 0 : index
    %12 = vector.load %arg7[%c0_13, %c0_14] : memref<1x96xf32, #tpu.memory_space<vmem>>, vector<1x96xf32>
    %c0_15 = arith.constant 0 : index
    %c0_16 = arith.constant 0 : index
    %13 = vector.load %arg8[%c0_15, %c0_16] : memref<32x32xf32, #tpu.memory_space<vmem>>, vector<32x32xf32>
    %c0_17 = arith.constant 0 : index
    %c0_18 = arith.constant 0 : index
    %14 = vector.load %arg9[%c0_17, %c0_18] : memref<1x32xf32, #tpu.memory_space<vmem>>, vector<1x32xf32>
    %c0_19 = arith.constant 0 : index
    %c0_20 = arith.constant 0 : index
    %15 = vector.load %arg10[%c0_19, %c0_20] : memref<1x32xf32, #tpu.memory_space<vmem>>, vector<1x32xf32>
    %c0_21 = arith.constant 0 : index
    %c0_22 = arith.constant 0 : index
    %16 = vector.load %arg11[%c0_21, %c0_22] : memref<1x32xf32, #tpu.memory_space<vmem>>, vector<1x32xf32>
    %c0_23 = arith.constant 0 : index
    %c0_24 = arith.constant 0 : index
    %17 = vector.load %arg12[%c0_23, %c0_24] : memref<32x64xf32, #tpu.memory_space<vmem>>, vector<32x64xf32>
    %c0_25 = arith.constant 0 : index
    %c0_26 = arith.constant 0 : index
    %18 = vector.load %arg13[%c0_25, %c0_26] : memref<1x64xf32, #tpu.memory_space<vmem>>, vector<1x64xf32>
    %c0_27 = arith.constant 0 : index
    %c0_28 = arith.constant 0 : index
    %19 = vector.load %arg14[%c0_27, %c0_28] : memref<64x32xf32, #tpu.memory_space<vmem>>, vector<64x32xf32>
    %c0_29 = arith.constant 0 : index
    %c0_30 = arith.constant 0 : index
    %20 = vector.load %arg15[%c0_29, %c0_30] : memref<1x32xf32, #tpu.memory_space<vmem>>, vector<1x32xf32>
    %c0_31 = arith.constant 0 : index
    %c0_32 = arith.constant 0 : index
    %21 = vector.load %arg16[%c0_31, %c0_32] : memref<1x32xf32, #tpu.memory_space<vmem>>, vector<1x32xf32>
    %c0_33 = arith.constant 0 : index
    %c0_34 = arith.constant 0 : index
    %22 = vector.load %arg17[%c0_33, %c0_34] : memref<1x32xf32, #tpu.memory_space<vmem>>, vector<1x32xf32>
    %cst_35 = arith.constant dense<0.000000e+00> : vector<8x96xf32>
    %23 = tpu.matmul %10, %11, %cst_35 {dimension_numbers = #tpu.dot_dimension_numbers<[1], [0], [0], [1], [0, 0, 1, 1], [], []>} : vector<8x32xf32>, vector<32x96xf32>, vector<8x96xf32> -> vector<8x96xf32>
    %24 = vector.broadcast %12 : vector<1x96xf32> to vector<8x96xf32>
    %25 = arith.addf %23, %24 : vector<8x96xf32>
    %26 = vector.extract_strided_slice %25 {offsets = [0, 0], sizes = [8, 32], strides = [1, 1]} : vector<8x96xf32> to vector<8x32xf32>
    %27 = vector.extract_strided_slice %25 {offsets = [0, 32], sizes = [8, 32], strides = [1, 1]} : vector<8x96xf32> to vector<8x32xf32>
    %28 = vector.extract_strided_slice %25 {offsets = [0, 64], sizes = [8, 32], strides = [1, 1]} : vector<8x96xf32> to vector<8x32xf32>
    %29 = vector.extract_strided_slice %26 {offsets = [0, 0], sizes = [8, 8], strides = [1, 1]} : vector<8x32xf32> to vector<8x8xf32>
    %30 = vector.extract_strided_slice %27 {offsets = [0, 0], sizes = [8, 8], strides = [1, 1]} : vector<8x32xf32> to vector<8x8xf32>
    %cst_36 = arith.constant dense<0.000000e+00> : vector<8x8xf32>
    %31 = tpu.matmul %29, %30, %cst_36 {dimension_numbers = #tpu.dot_dimension_numbers<[1], [1], [0], [0], [0, 0, 1, 0], [], []>} : vector<8x8xf32>, vector<8x8xf32>, vector<8x8xf32> -> vector<8x8xf32>
    %cst_37 = arith.constant 0.353553385 : f32
    %32 = vector.broadcast %cst_37 : f32 to vector<8x8xf32>
    %33 = arith.mulf %31, %32 : vector<8x8xf32>
    %cst_38 = arith.constant dense<0xFF800000> : vector<8xf32>
    %34 = vector.multi_reduction <maximumf>, %33, %cst_38 [1] : vector<8x8xf32> to vector<8xf32>
    %35 = vector.shape_cast %34 : vector<8xf32> to vector<8x1xf32>
    %36 = vector.broadcast %35 : vector<8x1xf32> to vector<8x8xf32>
    %37 = arith.subf %33, %36 : vector<8x8xf32>
    %38 = math.exp %37 : vector<8x8xf32>
    %cst_39 = arith.constant dense<0.000000e+00> : vector<8xf32>
    %39 = vector.multi_reduction <add>, %38, %cst_39 [1] : vector<8x8xf32> to vector<8xf32>
    %40 = vector.shape_cast %39 : vector<8xf32> to vector<8x1xf32>
    %41 = tpu.reciprocal %40 {approx = true} : vector<8x1xf32> -> vector<8x1xf32>
    %42 = vector.broadcast %41 : vector<8x1xf32> to vector<8x8xf32>
    %43 = arith.mulf %38, %42 : vector<8x8xf32>
    %44 = vector.extract_strided_slice %28 {offsets = [0, 0], sizes = [8, 8], strides = [1, 1]} : vector<8x32xf32> to vector<8x8xf32>
    %cst_40 = arith.constant dense<0.000000e+00> : vector<8x8xf32>
    %45 = tpu.matmul %43, %44, %cst_40 {dimension_numbers = #tpu.dot_dimension_numbers<[1], [0], [0], [1], [0, 0, 1, 1], [], []>} : vector<8x8xf32>, vector<8x8xf32>, vector<8x8xf32> -> vector<8x8xf32>
    %46 = vector.extract_strided_slice %26 {offsets = [0, 8], sizes = [8, 8], strides = [1, 1]} : vector<8x32xf32> to vector<8x8xf32>
    %47 = vector.extract_strided_slice %27 {offsets = [0, 8], sizes = [8, 8], strides = [1, 1]} : vector<8x32xf32> to vector<8x8xf32>
    %cst_41 = arith.constant dense<0.000000e+00> : vector<8x8xf32>
    %48 = tpu.matmul %46, %47, %cst_41 {dimension_numbers = #tpu.dot_dimension_numbers<[1], [1], [0], [0], [0, 0, 1, 0], [], []>} : vector<8x8xf32>, vector<8x8xf32>, vector<8x8xf32> -> vector<8x8xf32>
    %cst_42 = arith.constant 0.353553385 : f32
    %49 = vector.broadcast %cst_42 : f32 to vector<8x8xf32>
    %50 = arith.mulf %48, %49 : vector<8x8xf32>
    %cst_43 = arith.constant dense<0xFF800000> : vector<8xf32>
    %51 = vector.multi_reduction <maximumf>, %50, %cst_43 [1] : vector<8x8xf32> to vector<8xf32>
    %52 = vector.shape_cast %51 : vector<8xf32> to vector<8x1xf32>
    %53 = vector.broadcast %52 : vector<8x1xf32> to vector<8x8xf32>
    %54 = arith.subf %50, %53 : vector<8x8xf32>
    %55 = math.exp %54 : vector<8x8xf32>
    %cst_44 = arith.constant dense<0.000000e+00> : vector<8xf32>
    %56 = vector.multi_reduction <add>, %55, %cst_44 [1] : vector<8x8xf32> to vector<8xf32>
    %57 = vector.shape_cast %56 : vector<8xf32> to vector<8x1xf32>
    %58 = tpu.reciprocal %57 {approx = true} : vector<8x1xf32> -> vector<8x1xf32>
    %59 = vector.broadcast %58 : vector<8x1xf32> to vector<8x8xf32>
    %60 = arith.mulf %55, %59 : vector<8x8xf32>
    %61 = vector.extract_strided_slice %28 {offsets = [0, 8], sizes = [8, 8], strides = [1, 1]} : vector<8x32xf32> to vector<8x8xf32>
    %cst_45 = arith.constant dense<0.000000e+00> : vector<8x8xf32>
    %62 = tpu.matmul %60, %61, %cst_45 {dimension_numbers = #tpu.dot_dimension_numbers<[1], [0], [0], [1], [0, 0, 1, 1], [], []>} : vector<8x8xf32>, vector<8x8xf32>, vector<8x8xf32> -> vector<8x8xf32>
    %63 = vector.extract_strided_slice %26 {offsets = [0, 16], sizes = [8, 8], strides = [1, 1]} : vector<8x32xf32> to vector<8x8xf32>
    %64 = vector.extract_strided_slice %27 {offsets = [0, 16], sizes = [8, 8], strides = [1, 1]} : vector<8x32xf32> to vector<8x8xf32>
    %cst_46 = arith.constant dense<0.000000e+00> : vector<8x8xf32>
    %65 = tpu.matmul %63, %64, %cst_46 {dimension_numbers = #tpu.dot_dimension_numbers<[1], [1], [0], [0], [0, 0, 1, 0], [], []>} : vector<8x8xf32>, vector<8x8xf32>, vector<8x8xf32> -> vector<8x8xf32>
    %cst_47 = arith.constant 0.353553385 : f32
    %66 = vector.broadcast %cst_47 : f32 to vector<8x8xf32>
    %67 = arith.mulf %65, %66 : vector<8x8xf32>
    %cst_48 = arith.constant dense<0xFF800000> : vector<8xf32>
    %68 = vector.multi_reduction <maximumf>, %67, %cst_48 [1] : vector<8x8xf32> to vector<8xf32>
    %69 = vector.shape_cast %68 : vector<8xf32> to vector<8x1xf32>
    %70 = vector.broadcast %69 : vector<8x1xf32> to vector<8x8xf32>
    %71 = arith.subf %67, %70 : vector<8x8xf32>
    %72 = math.exp %71 : vector<8x8xf32>
    %cst_49 = arith.constant dense<0.000000e+00> : vector<8xf32>
    %73 = vector.multi_reduction <add>, %72, %cst_49 [1] : vector<8x8xf32> to vector<8xf32>
    %74 = vector.shape_cast %73 : vector<8xf32> to vector<8x1xf32>
    %75 = tpu.reciprocal %74 {approx = true} : vector<8x1xf32> -> vector<8x1xf32>
    %76 = vector.broadcast %75 : vector<8x1xf32> to vector<8x8xf32>
    %77 = arith.mulf %72, %76 : vector<8x8xf32>
    %78 = vector.extract_strided_slice %28 {offsets = [0, 16], sizes = [8, 8], strides = [1, 1]} : vector<8x32xf32> to vector<8x8xf32>
    %cst_50 = arith.constant dense<0.000000e+00> : vector<8x8xf32>
    %79 = tpu.matmul %77, %78, %cst_50 {dimension_numbers = #tpu.dot_dimension_numbers<[1], [0], [0], [1], [0, 0, 1, 1], [], []>} : vector<8x8xf32>, vector<8x8xf32>, vector<8x8xf32> -> vector<8x8xf32>
    %80 = vector.extract_strided_slice %26 {offsets = [0, 24], sizes = [8, 8], strides = [1, 1]} : vector<8x32xf32> to vector<8x8xf32>
    %81 = vector.extract_strided_slice %27 {offsets = [0, 24], sizes = [8, 8], strides = [1, 1]} : vector<8x32xf32> to vector<8x8xf32>
    %cst_51 = arith.constant dense<0.000000e+00> : vector<8x8xf32>
    %82 = tpu.matmul %80, %81, %cst_51 {dimension_numbers = #tpu.dot_dimension_numbers<[1], [1], [0], [0], [0, 0, 1, 0], [], []>} : vector<8x8xf32>, vector<8x8xf32>, vector<8x8xf32> -> vector<8x8xf32>
    %cst_52 = arith.constant 0.353553385 : f32
    %83 = vector.broadcast %cst_52 : f32 to vector<8x8xf32>
    %84 = arith.mulf %82, %83 : vector<8x8xf32>
    %cst_53 = arith.constant dense<0xFF800000> : vector<8xf32>
    %85 = vector.multi_reduction <maximumf>, %84, %cst_53 [1] : vector<8x8xf32> to vector<8xf32>
    %86 = vector.shape_cast %85 : vector<8xf32> to vector<8x1xf32>
    %87 = vector.broadcast %86 : vector<8x1xf32> to vector<8x8xf32>
    %88 = arith.subf %84, %87 : vector<8x8xf32>
    %89 = math.exp %88 : vector<8x8xf32>
    %cst_54 = arith.constant dense<0.000000e+00> : vector<8xf32>
    %90 = vector.multi_reduction <add>, %89, %cst_54 [1] : vector<8x8xf32> to vector<8xf32>
    %91 = vector.shape_cast %90 : vector<8xf32> to vector<8x1xf32>
    %92 = tpu.reciprocal %91 {approx = true} : vector<8x1xf32> -> vector<8x1xf32>
    %93 = vector.broadcast %92 : vector<8x1xf32> to vector<8x8xf32>
    %94 = arith.mulf %89, %93 : vector<8x8xf32>
    %95 = vector.extract_strided_slice %28 {offsets = [0, 24], sizes = [8, 8], strides = [1, 1]} : vector<8x32xf32> to vector<8x8xf32>
    %cst_55 = arith.constant dense<0.000000e+00> : vector<8x8xf32>
    %96 = tpu.matmul %94, %95, %cst_55 {dimension_numbers = #tpu.dot_dimension_numbers<[1], [0], [0], [1], [0, 0, 1, 1], [], []>} : vector<8x8xf32>, vector<8x8xf32>, vector<8x8xf32> -> vector<8x8xf32>
    %97 = vector.extract_strided_slice %13 {offsets = [0, 0], sizes = [8, 32], strides = [1, 1]} : vector<32x32xf32> to vector<8x32xf32>
    %cst_56 = arith.constant dense<0.000000e+00> : vector<8x32xf32>
    %98 = tpu.matmul %45, %97, %cst_56 {dimension_numbers = #tpu.dot_dimension_numbers<[1], [0], [0], [1], [0, 0, 1, 1], [], []>} : vector<8x8xf32>, vector<8x32xf32>, vector<8x32xf32> -> vector<8x32xf32>
    %99 = vector.extract_strided_slice %13 {offsets = [8, 0], sizes = [8, 32], strides = [1, 1]} : vector<32x32xf32> to vector<8x32xf32>
    %cst_57 = arith.constant dense<0.000000e+00> : vector<8x32xf32>
    %100 = tpu.matmul %62, %99, %cst_57 {dimension_numbers = #tpu.dot_dimension_numbers<[1], [0], [0], [1], [0, 0, 1, 1], [], []>} : vector<8x8xf32>, vector<8x32xf32>, vector<8x32xf32> -> vector<8x32xf32>
    %101 = arith.addf %98, %100 : vector<8x32xf32>
    %102 = vector.extract_strided_slice %13 {offsets = [16, 0], sizes = [8, 32], strides = [1, 1]} : vector<32x32xf32> to vector<8x32xf32>
    %cst_58 = arith.constant dense<0.000000e+00> : vector<8x32xf32>
    %103 = tpu.matmul %79, %102, %cst_58 {dimension_numbers = #tpu.dot_dimension_numbers<[1], [0], [0], [1], [0, 0, 1, 1], [], []>} : vector<8x8xf32>, vector<8x32xf32>, vector<8x32xf32> -> vector<8x32xf32>
    %104 = arith.addf %101, %103 : vector<8x32xf32>
    %105 = vector.extract_strided_slice %13 {offsets = [24, 0], sizes = [8, 32], strides = [1, 1]} : vector<32x32xf32> to vector<8x32xf32>
    %cst_59 = arith.constant dense<0.000000e+00> : vector<8x32xf32>
    %106 = tpu.matmul %96, %105, %cst_59 {dimension_numbers = #tpu.dot_dimension_numbers<[1], [0], [0], [1], [0, 0, 1, 1], [], []>} : vector<8x8xf32>, vector<8x32xf32>, vector<8x32xf32> -> vector<8x32xf32>
    %107 = arith.addf %104, %106 : vector<8x32xf32>
    %108 = vector.broadcast %14 : vector<1x32xf32> to vector<8x32xf32>
    %109 = arith.addf %107, %108 : vector<8x32xf32>
    %110 = arith.addf %10, %109 : vector<8x32xf32>
    %cst_60 = arith.constant dense<0.000000e+00> : vector<8xf32>
    %111 = vector.multi_reduction <add>, %110, %cst_60 [1] : vector<8x32xf32> to vector<8xf32>
    %112 = vector.shape_cast %111 : vector<8xf32> to vector<8x1xf32>
    %cst_61 = arith.constant 3.200000e+01 : f32
    %113 = vector.broadcast %cst_61 : f32 to vector<8x1xf32>
    %114 = arith.divf %112, %113 : vector<8x1xf32>
    %115 = vector.broadcast %114 : vector<8x1xf32> to vector<8x32xf32>
    %116 = arith.subf %110, %115 : vector<8x32xf32>
    %117 = arith.mulf %116, %116 : vector<8x32xf32>
    %cst_62 = arith.constant dense<0.000000e+00> : vector<8xf32>
    %118 = vector.multi_reduction <add>, %117, %cst_62 [1] : vector<8x32xf32> to vector<8xf32>
    %119 = vector.shape_cast %118 : vector<8xf32> to vector<8x1xf32>
    %cst_63 = arith.constant 3.200000e+01 : f32
    %120 = vector.broadcast %cst_63 : f32 to vector<8x1xf32>
    %121 = arith.divf %119, %120 : vector<8x1xf32>
    %122 = vector.broadcast %114 : vector<8x1xf32> to vector<8x32xf32>
    %123 = arith.subf %110, %122 : vector<8x32xf32>
    %cst_64 = arith.constant 9.99999974E-6 : f32
    %124 = vector.broadcast %cst_64 : f32 to vector<8x1xf32>
    %125 = arith.addf %121, %124 : vector<8x1xf32>
    %126 = math.rsqrt %125 : vector<8x1xf32>
    %127 = vector.broadcast %126 : vector<8x1xf32> to vector<8x32xf32>
    %128 = arith.mulf %123, %127 : vector<8x32xf32>
    %129 = vector.broadcast %15 : vector<1x32xf32> to vector<8x32xf32>
    %130 = arith.mulf %128, %129 : vector<8x32xf32>
    %131 = vector.broadcast %16 : vector<1x32xf32> to vector<8x32xf32>
    %132 = arith.addf %130, %131 : vector<8x32xf32>
    %cst_65 = arith.constant dense<0.000000e+00> : vector<8x64xf32>
    %133 = tpu.matmul %132, %17, %cst_65 {dimension_numbers = #tpu.dot_dimension_numbers<[1], [0], [0], [1], [0, 0, 1, 1], [], []>} : vector<8x32xf32>, vector<32x64xf32>, vector<8x64xf32> -> vector<8x64xf32>
    %134 = vector.broadcast %18 : vector<1x64xf32> to vector<8x64xf32>
    %135 = arith.addf %133, %134 : vector<8x64xf32>
    %cst_66 = arith.constant 5.000000e-01 : f32
    %136 = vector.broadcast %cst_66 : f32 to vector<8x64xf32>
    %137 = arith.mulf %136, %135 : vector<8x64xf32>
    %cst_67 = arith.constant 0.707106769 : f32
    %138 = vector.broadcast %cst_67 : f32 to vector<8x64xf32>
    %139 = arith.mulf %135, %138 : vector<8x64xf32>
    %140 = math.erf %139 : vector<8x64xf32>
    %cst_68 = arith.constant 1.000000e+00 : f32
    %141 = vector.broadcast %cst_68 : f32 to vector<8x64xf32>
    %142 = arith.addf %141, %140 : vector<8x64xf32>
    %143 = arith.mulf %137, %142 : vector<8x64xf32>
    %cst_69 = arith.constant dense<0.000000e+00> : vector<8x32xf32>
    %144 = tpu.matmul %143, %19, %cst_69 {dimension_numbers = #tpu.dot_dimension_numbers<[1], [0], [0], [1], [0, 0, 1, 1], [], []>} : vector<8x64xf32>, vector<64x32xf32>, vector<8x32xf32> -> vector<8x32xf32>
    %145 = vector.broadcast %20 : vector<1x32xf32> to vector<8x32xf32>
    %146 = arith.addf %144, %145 : vector<8x32xf32>
    %147 = arith.addf %132, %146 : vector<8x32xf32>
    %cst_70 = arith.constant dense<0.000000e+00> : vector<8xf32>
    %148 = vector.multi_reduction <add>, %147, %cst_70 [1] : vector<8x32xf32> to vector<8xf32>
    %149 = vector.shape_cast %148 : vector<8xf32> to vector<8x1xf32>
    %cst_71 = arith.constant 3.200000e+01 : f32
    %150 = vector.broadcast %cst_71 : f32 to vector<8x1xf32>
    %151 = arith.divf %149, %150 : vector<8x1xf32>
    %152 = vector.broadcast %151 : vector<8x1xf32> to vector<8x32xf32>
    %153 = arith.subf %147, %152 : vector<8x32xf32>
    %154 = arith.mulf %153, %153 : vector<8x32xf32>
    %cst_72 = arith.constant dense<0.000000e+00> : vector<8xf32>
    %155 = vector.multi_reduction <add>, %154, %cst_72 [1] : vector<8x32xf32> to vector<8xf32>
    %156 = vector.shape_cast %155 : vector<8xf32> to vector<8x1xf32>
    %cst_73 = arith.constant 3.200000e+01 : f32
    %157 = vector.broadcast %cst_73 : f32 to vector<8x1xf32>
    %158 = arith.divf %156, %157 : vector<8x1xf32>
    %159 = vector.broadcast %151 : vector<8x1xf32> to vector<8x32xf32>
    %160 = arith.subf %147, %159 : vector<8x32xf32>
    %cst_74 = arith.constant 9.99999974E-6 : f32
    %161 = vector.broadcast %cst_74 : f32 to vector<8x1xf32>
    %162 = arith.addf %158, %161 : vector<8x1xf32>
    %163 = math.rsqrt %162 : vector<8x1xf32>
    %164 = vector.broadcast %163 : vector<8x1xf32> to vector<8x32xf32>
    %165 = arith.mulf %160, %164 : vector<8x32xf32>
    %166 = vector.broadcast %21 : vector<1x32xf32> to vector<8x32xf32>
    %167 = arith.mulf %165, %166 : vector<8x32xf32>
    %168 = vector.broadcast %22 : vector<1x32xf32> to vector<8x32xf32>
    %169 = arith.addf %167, %168 : vector<8x32xf32>
    %c0_75 = arith.constant 0 : index
    %c0_76 = arith.constant 0 : index
    %170 = vector.load %arg18[%c0_75, %c0_76] : memref<1x32xf32, #tpu.memory_space<vmem>>, vector<1x32xf32>
    %c0_77 = arith.constant 0 : index
    %c0_78 = arith.constant 0 : index
    %171 = vector.load %arg19[%c0_77, %c0_78] : memref<1x32xf32, #tpu.memory_space<vmem>>, vector<1x32xf32>
    %cst_79 = arith.constant dense<0.000000e+00> : vector<8xf32>
    %172 = vector.multi_reduction <add>, %169, %cst_79 [1] : vector<8x32xf32> to vector<8xf32>
    %173 = vector.shape_cast %172 : vector<8xf32> to vector<8x1xf32>
    %cst_80 = arith.constant 3.200000e+01 : f32
    %174 = vector.broadcast %cst_80 : f32 to vector<8x1xf32>
    %175 = arith.divf %173, %174 : vector<8x1xf32>
    %176 = vector.broadcast %175 : vector<8x1xf32> to vector<8x32xf32>
    %177 = arith.subf %169, %176 : vector<8x32xf32>
    %178 = arith.mulf %177, %177 : vector<8x32xf32>
    %cst_81 = arith.constant dense<0.000000e+00> : vector<8xf32>
    %179 = vector.multi_reduction <add>, %178, %cst_81 [1] : vector<8x32xf32> to vector<8xf32>
    %180 = vector.shape_cast %179 : vector<8xf32> to vector<8x1xf32>
    %cst_82 = arith.constant 3.200000e+01 : f32
    %181 = vector.broadcast %cst_82 : f32 to vector<8x1xf32>
    %182 = arith.divf %180, %181 : vector<8x1xf32>
    %183 = vector.broadcast %175 : vector<8x1xf32> to vector<8x32xf32>
    %184 = arith.subf %169, %183 : vector<8x32xf32>
    %cst_83 = arith.constant 9.99999974E-6 : f32
    %185 = vector.broadcast %cst_83 : f32 to vector<8x1xf32>
    %186 = arith.addf %182, %185 : vector<8x1xf32>
    %187 = math.rsqrt %186 : vector<8x1xf32>
    %188 = vector.broadcast %187 : vector<8x1xf32> to vector<8x32xf32>
    %189 = arith.mulf %184, %188 : vector<8x32xf32>
    %190 = vector.broadcast %170 : vector<1x32xf32> to vector<8x32xf32>
    %191 = arith.mulf %189, %190 : vector<8x32xf32>
    %192 = vector.broadcast %171 : vector<1x32xf32> to vector<8x32xf32>
    %193 = arith.addf %191, %192 : vector<8x32xf32>
    %c0_84 = arith.constant 0 : index
    %c0_85 = arith.constant 0 : index
    %194 = vector.load %arg20[%c0_84, %c0_85] : memref<4x32xf32, #tpu.memory_space<vmem>>, vector<4x32xf32>
    %c0_86 = arith.constant 0 : index
    %c0_87 = arith.constant 0 : index
    %195 = vector.load %arg21[%c0_86, %c0_87] : memref<1x32xf32, #tpu.memory_space<vmem>>, vector<1x32xf32>
    %c0_88 = arith.constant 0 : index
    %c0_89 = arith.constant 0 : index
    %196 = vector.load %arg22[%c0_88, %c0_89] : memref<6x32xf32, #tpu.memory_space<vmem>>, vector<6x32xf32>
    %cst_90 = arith.constant dense<0.000000e+00> : vector<6x32xf32>
    %197 = tpu.matmul %3, %194, %cst_90 {dimension_numbers = #tpu.dot_dimension_numbers<[1], [0], [0], [1], [0, 0, 1, 1], [], []>} : vector<6x4xf32>, vector<4x32xf32>, vector<6x32xf32> -> vector<6x32xf32>
    %198 = vector.broadcast %195 : vector<1x32xf32> to vector<6x32xf32>
    %199 = arith.addf %197, %198 : vector<6x32xf32>
    %200 = arith.addf %199, %196 : vector<6x32xf32>
    %c0_91 = arith.constant 0 : index
    %c0_92 = arith.constant 0 : index
    %201 = vector.load %arg23[%c0_91, %c0_92] : memref<32x96xf32, #tpu.memory_space<vmem>>, vector<32x96xf32>
    %c0_93 = arith.constant 0 : index
    %c0_94 = arith.constant 0 : index
    %202 = vector.load %arg24[%c0_93, %c0_94] : memref<1x96xf32, #tpu.memory_space<vmem>>, vector<1x96xf32>
    %c0_95 = arith.constant 0 : index
    %c0_96 = arith.constant 0 : index
    %203 = vector.load %arg25[%c0_95, %c0_96] : memref<32x32xf32, #tpu.memory_space<vmem>>, vector<32x32xf32>
    %c0_97 = arith.constant 0 : index
    %c0_98 = arith.constant 0 : index
    %204 = vector.load %arg26[%c0_97, %c0_98] : memref<1x32xf32, #tpu.memory_space<vmem>>, vector<1x32xf32>
    %c0_99 = arith.constant 0 : index
    %c0_100 = arith.constant 0 : index
    %205 = vector.load %arg27[%c0_99, %c0_100] : memref<32x32xf32, #tpu.memory_space<vmem>>, vector<32x32xf32>
    %c0_101 = arith.constant 0 : index
    %c0_102 = arith.constant 0 : index
    %206 = vector.load %arg28[%c0_101, %c0_102] : memref<1x32xf32, #tpu.memory_space<vmem>>, vector<1x32xf32>
    %c0_103 = arith.constant 0 : index
    %c0_104 = arith.constant 0 : index
    %207 = vector.load %arg29[%c0_103, %c0_104] : memref<32x64xf32, #tpu.memory_space<vmem>>, vector<32x64xf32>
    %c0_105 = arith.constant 0 : index
    %c0_106 = arith.constant 0 : index
    %208 = vector.load %arg30[%c0_105, %c0_106] : memref<1x64xf32, #tpu.memory_space<vmem>>, vector<1x64xf32>
    %c0_107 = arith.constant 0 : index
    %c0_108 = arith.constant 0 : index
    %209 = vector.load %arg31[%c0_107, %c0_108] : memref<32x32xf32, #tpu.memory_space<vmem>>, vector<32x32xf32>
    %c0_109 = arith.constant 0 : index
    %c0_110 = arith.constant 0 : index
    %210 = vector.load %arg32[%c0_109, %c0_110] : memref<1x32xf32, #tpu.memory_space<vmem>>, vector<1x32xf32>
    %c0_111 = arith.constant 0 : index
    %c0_112 = arith.constant 0 : index
    %211 = vector.load %arg33[%c0_111, %c0_112] : memref<1x32xf32, #tpu.memory_space<vmem>>, vector<1x32xf32>
    %c0_113 = arith.constant 0 : index
    %c0_114 = arith.constant 0 : index
    %212 = vector.load %arg34[%c0_113, %c0_114] : memref<1x32xf32, #tpu.memory_space<vmem>>, vector<1x32xf32>
    %c0_115 = arith.constant 0 : index
    %c0_116 = arith.constant 0 : index
    %213 = vector.load %arg35[%c0_115, %c0_116] : memref<1x32xf32, #tpu.memory_space<vmem>>, vector<1x32xf32>
    %c0_117 = arith.constant 0 : index
    %c0_118 = arith.constant 0 : index
    %214 = vector.load %arg36[%c0_117, %c0_118] : memref<1x32xf32, #tpu.memory_space<vmem>>, vector<1x32xf32>
    %c0_119 = arith.constant 0 : index
    %c0_120 = arith.constant 0 : index
    %215 = vector.load %arg37[%c0_119, %c0_120] : memref<32x64xf32, #tpu.memory_space<vmem>>, vector<32x64xf32>
    %c0_121 = arith.constant 0 : index
    %c0_122 = arith.constant 0 : index
    %216 = vector.load %arg38[%c0_121, %c0_122] : memref<1x64xf32, #tpu.memory_space<vmem>>, vector<1x64xf32>
    %c0_123 = arith.constant 0 : index
    %c0_124 = arith.constant 0 : index
    %217 = vector.load %arg39[%c0_123, %c0_124] : memref<64x32xf32, #tpu.memory_space<vmem>>, vector<64x32xf32>
    %c0_125 = arith.constant 0 : index
    %c0_126 = arith.constant 0 : index
    %218 = vector.load %arg40[%c0_125, %c0_126] : memref<1x32xf32, #tpu.memory_space<vmem>>, vector<1x32xf32>
    %c0_127 = arith.constant 0 : index
    %c0_128 = arith.constant 0 : index
    %219 = vector.load %arg41[%c0_127, %c0_128] : memref<1x32xf32, #tpu.memory_space<vmem>>, vector<1x32xf32>
    %c0_129 = arith.constant 0 : index
    %c0_130 = arith.constant 0 : index
    %220 = vector.load %arg42[%c0_129, %c0_130] : memref<1x32xf32, #tpu.memory_space<vmem>>, vector<1x32xf32>
    %cst_131 = arith.constant dense<0.000000e+00> : vector<6x96xf32>
    %221 = tpu.matmul %200, %201, %cst_131 {dimension_numbers = #tpu.dot_dimension_numbers<[1], [0], [0], [1], [0, 0, 1, 1], [], []>} : vector<6x32xf32>, vector<32x96xf32>, vector<6x96xf32> -> vector<6x96xf32>
    %222 = vector.broadcast %202 : vector<1x96xf32> to vector<6x96xf32>
    %223 = arith.addf %221, %222 : vector<6x96xf32>
    %224 = vector.extract_strided_slice %223 {offsets = [0, 0], sizes = [6, 32], strides = [1, 1]} : vector<6x96xf32> to vector<6x32xf32>
    %225 = vector.extract_strided_slice %223 {offsets = [0, 32], sizes = [6, 32], strides = [1, 1]} : vector<6x96xf32> to vector<6x32xf32>
    %226 = vector.extract_strided_slice %223 {offsets = [0, 64], sizes = [6, 32], strides = [1, 1]} : vector<6x96xf32> to vector<6x32xf32>
    %227 = vector.extract_strided_slice %224 {offsets = [0, 0], sizes = [6, 8], strides = [1, 1]} : vector<6x32xf32> to vector<6x8xf32>
    %228 = vector.extract_strided_slice %225 {offsets = [0, 0], sizes = [6, 8], strides = [1, 1]} : vector<6x32xf32> to vector<6x8xf32>
    %cst_132 = arith.constant dense<0.000000e+00> : vector<6x6xf32>
    %229 = tpu.matmul %227, %228, %cst_132 {dimension_numbers = #tpu.dot_dimension_numbers<[1], [1], [0], [0], [0, 0, 1, 0], [], []>} : vector<6x8xf32>, vector<6x8xf32>, vector<6x6xf32> -> vector<6x6xf32>
    %cst_133 = arith.constant 0.353553385 : f32
    %230 = vector.broadcast %cst_133 : f32 to vector<6x6xf32>
    %231 = arith.mulf %229, %230 : vector<6x6xf32>
    %232 = tpu.iota {dimensions = array<i32: 0>} : vector<6x6xi32>
    %233 = tpu.iota {dimensions = array<i32: 1>} : vector<6x6xi32>
    %234 = arith.cmpi sle, %233, %232 : vector<6x6xi32>
    %cst_134 = arith.constant -1.000000e+30 : f32
    %235 = vector.broadcast %cst_134 : f32 to vector<6x6xf32>
    %236 = arith.select %234, %231, %235 : vector<6x6xi1>, vector<6x6xf32>
    %cst_135 = arith.constant dense<0xFF800000> : vector<6xf32>
    %237 = vector.multi_reduction <maximumf>, %236, %cst_135 [1] : vector<6x6xf32> to vector<6xf32>
    %238 = vector.shape_cast %237 : vector<6xf32> to vector<6x1xf32>
    %239 = vector.broadcast %238 : vector<6x1xf32> to vector<6x6xf32>
    %240 = arith.subf %236, %239 : vector<6x6xf32>
    %241 = math.exp %240 : vector<6x6xf32>
    %cst_136 = arith.constant dense<0.000000e+00> : vector<6xf32>
    %242 = vector.multi_reduction <add>, %241, %cst_136 [1] : vector<6x6xf32> to vector<6xf32>
    %243 = vector.shape_cast %242 : vector<6xf32> to vector<6x1xf32>
    %244 = tpu.reciprocal %243 {approx = true} : vector<6x1xf32> -> vector<6x1xf32>
    %245 = vector.broadcast %244 : vector<6x1xf32> to vector<6x6xf32>
    %246 = arith.mulf %241, %245 : vector<6x6xf32>
    %247 = vector.extract_strided_slice %226 {offsets = [0, 0], sizes = [6, 8], strides = [1, 1]} : vector<6x32xf32> to vector<6x8xf32>
    %cst_137 = arith.constant dense<0.000000e+00> : vector<6x8xf32>
    %248 = tpu.matmul %246, %247, %cst_137 {dimension_numbers = #tpu.dot_dimension_numbers<[1], [0], [0], [1], [0, 0, 1, 1], [], []>} : vector<6x6xf32>, vector<6x8xf32>, vector<6x8xf32> -> vector<6x8xf32>
    %249 = vector.extract_strided_slice %224 {offsets = [0, 8], sizes = [6, 8], strides = [1, 1]} : vector<6x32xf32> to vector<6x8xf32>
    %250 = vector.extract_strided_slice %225 {offsets = [0, 8], sizes = [6, 8], strides = [1, 1]} : vector<6x32xf32> to vector<6x8xf32>
    %cst_138 = arith.constant dense<0.000000e+00> : vector<6x6xf32>
    %251 = tpu.matmul %249, %250, %cst_138 {dimension_numbers = #tpu.dot_dimension_numbers<[1], [1], [0], [0], [0, 0, 1, 0], [], []>} : vector<6x8xf32>, vector<6x8xf32>, vector<6x6xf32> -> vector<6x6xf32>
    %cst_139 = arith.constant 0.353553385 : f32
    %252 = vector.broadcast %cst_139 : f32 to vector<6x6xf32>
    %253 = arith.mulf %251, %252 : vector<6x6xf32>
    %254 = tpu.iota {dimensions = array<i32: 0>} : vector<6x6xi32>
    %255 = tpu.iota {dimensions = array<i32: 1>} : vector<6x6xi32>
    %256 = arith.cmpi sle, %255, %254 : vector<6x6xi32>
    %cst_140 = arith.constant -1.000000e+30 : f32
    %257 = vector.broadcast %cst_140 : f32 to vector<6x6xf32>
    %258 = arith.select %256, %253, %257 : vector<6x6xi1>, vector<6x6xf32>
    %cst_141 = arith.constant dense<0xFF800000> : vector<6xf32>
    %259 = vector.multi_reduction <maximumf>, %258, %cst_141 [1] : vector<6x6xf32> to vector<6xf32>
    %260 = vector.shape_cast %259 : vector<6xf32> to vector<6x1xf32>
    %261 = vector.broadcast %260 : vector<6x1xf32> to vector<6x6xf32>
    %262 = arith.subf %258, %261 : vector<6x6xf32>
    %263 = math.exp %262 : vector<6x6xf32>
    %cst_142 = arith.constant dense<0.000000e+00> : vector<6xf32>
    %264 = vector.multi_reduction <add>, %263, %cst_142 [1] : vector<6x6xf32> to vector<6xf32>
    %265 = vector.shape_cast %264 : vector<6xf32> to vector<6x1xf32>
    %266 = tpu.reciprocal %265 {approx = true} : vector<6x1xf32> -> vector<6x1xf32>
    %267 = vector.broadcast %266 : vector<6x1xf32> to vector<6x6xf32>
    %268 = arith.mulf %263, %267 : vector<6x6xf32>
    %269 = vector.extract_strided_slice %226 {offsets = [0, 8], sizes = [6, 8], strides = [1, 1]} : vector<6x32xf32> to vector<6x8xf32>
    %cst_143 = arith.constant dense<0.000000e+00> : vector<6x8xf32>
    %270 = tpu.matmul %268, %269, %cst_143 {dimension_numbers = #tpu.dot_dimension_numbers<[1], [0], [0], [1], [0, 0, 1, 1], [], []>} : vector<6x6xf32>, vector<6x8xf32>, vector<6x8xf32> -> vector<6x8xf32>
    %271 = vector.extract_strided_slice %224 {offsets = [0, 16], sizes = [6, 8], strides = [1, 1]} : vector<6x32xf32> to vector<6x8xf32>
    %272 = vector.extract_strided_slice %225 {offsets = [0, 16], sizes = [6, 8], strides = [1, 1]} : vector<6x32xf32> to vector<6x8xf32>
    %cst_144 = arith.constant dense<0.000000e+00> : vector<6x6xf32>
    %273 = tpu.matmul %271, %272, %cst_144 {dimension_numbers = #tpu.dot_dimension_numbers<[1], [1], [0], [0], [0, 0, 1, 0], [], []>} : vector<6x8xf32>, vector<6x8xf32>, vector<6x6xf32> -> vector<6x6xf32>
    %cst_145 = arith.constant 0.353553385 : f32
    %274 = vector.broadcast %cst_145 : f32 to vector<6x6xf32>
    %275 = arith.mulf %273, %274 : vector<6x6xf32>
    %276 = tpu.iota {dimensions = array<i32: 0>} : vector<6x6xi32>
    %277 = tpu.iota {dimensions = array<i32: 1>} : vector<6x6xi32>
    %278 = arith.cmpi sle, %277, %276 : vector<6x6xi32>
    %cst_146 = arith.constant -1.000000e+30 : f32
    %279 = vector.broadcast %cst_146 : f32 to vector<6x6xf32>
    %280 = arith.select %278, %275, %279 : vector<6x6xi1>, vector<6x6xf32>
    %cst_147 = arith.constant dense<0xFF800000> : vector<6xf32>
    %281 = vector.multi_reduction <maximumf>, %280, %cst_147 [1] : vector<6x6xf32> to vector<6xf32>
    %282 = vector.shape_cast %281 : vector<6xf32> to vector<6x1xf32>
    %283 = vector.broadcast %282 : vector<6x1xf32> to vector<6x6xf32>
    %284 = arith.subf %280, %283 : vector<6x6xf32>
    %285 = math.exp %284 : vector<6x6xf32>
    %cst_148 = arith.constant dense<0.000000e+00> : vector<6xf32>
    %286 = vector.multi_reduction <add>, %285, %cst_148 [1] : vector<6x6xf32> to vector<6xf32>
    %287 = vector.shape_cast %286 : vector<6xf32> to vector<6x1xf32>
    %288 = tpu.reciprocal %287 {approx = true} : vector<6x1xf32> -> vector<6x1xf32>
    %289 = vector.broadcast %288 : vector<6x1xf32> to vector<6x6xf32>
    %290 = arith.mulf %285, %289 : vector<6x6xf32>
    %291 = vector.extract_strided_slice %226 {offsets = [0, 16], sizes = [6, 8], strides = [1, 1]} : vector<6x32xf32> to vector<6x8xf32>
    %cst_149 = arith.constant dense<0.000000e+00> : vector<6x8xf32>
    %292 = tpu.matmul %290, %291, %cst_149 {dimension_numbers = #tpu.dot_dimension_numbers<[1], [0], [0], [1], [0, 0, 1, 1], [], []>} : vector<6x6xf32>, vector<6x8xf32>, vector<6x8xf32> -> vector<6x8xf32>
    %293 = vector.extract_strided_slice %224 {offsets = [0, 24], sizes = [6, 8], strides = [1, 1]} : vector<6x32xf32> to vector<6x8xf32>
    %294 = vector.extract_strided_slice %225 {offsets = [0, 24], sizes = [6, 8], strides = [1, 1]} : vector<6x32xf32> to vector<6x8xf32>
    %cst_150 = arith.constant dense<0.000000e+00> : vector<6x6xf32>
    %295 = tpu.matmul %293, %294, %cst_150 {dimension_numbers = #tpu.dot_dimension_numbers<[1], [1], [0], [0], [0, 0, 1, 0], [], []>} : vector<6x8xf32>, vector<6x8xf32>, vector<6x6xf32> -> vector<6x6xf32>
    %cst_151 = arith.constant 0.353553385 : f32
    %296 = vector.broadcast %cst_151 : f32 to vector<6x6xf32>
    %297 = arith.mulf %295, %296 : vector<6x6xf32>
    %298 = tpu.iota {dimensions = array<i32: 0>} : vector<6x6xi32>
    %299 = tpu.iota {dimensions = array<i32: 1>} : vector<6x6xi32>
    %300 = arith.cmpi sle, %299, %298 : vector<6x6xi32>
    %cst_152 = arith.constant -1.000000e+30 : f32
    %301 = vector.broadcast %cst_152 : f32 to vector<6x6xf32>
    %302 = arith.select %300, %297, %301 : vector<6x6xi1>, vector<6x6xf32>
    %cst_153 = arith.constant dense<0xFF800000> : vector<6xf32>
    %303 = vector.multi_reduction <maximumf>, %302, %cst_153 [1] : vector<6x6xf32> to vector<6xf32>
    %304 = vector.shape_cast %303 : vector<6xf32> to vector<6x1xf32>
    %305 = vector.broadcast %304 : vector<6x1xf32> to vector<6x6xf32>
    %306 = arith.subf %302, %305 : vector<6x6xf32>
    %307 = math.exp %306 : vector<6x6xf32>
    %cst_154 = arith.constant dense<0.000000e+00> : vector<6xf32>
    %308 = vector.multi_reduction <add>, %307, %cst_154 [1] : vector<6x6xf32> to vector<6xf32>
    %309 = vector.shape_cast %308 : vector<6xf32> to vector<6x1xf32>
    %310 = tpu.reciprocal %309 {approx = true} : vector<6x1xf32> -> vector<6x1xf32>
    %311 = vector.broadcast %310 : vector<6x1xf32> to vector<6x6xf32>
    %312 = arith.mulf %307, %311 : vector<6x6xf32>
    %313 = vector.extract_strided_slice %226 {offsets = [0, 24], sizes = [6, 8], strides = [1, 1]} : vector<6x32xf32> to vector<6x8xf32>
    %cst_155 = arith.constant dense<0.000000e+00> : vector<6x8xf32>
    %314 = tpu.matmul %312, %313, %cst_155 {dimension_numbers = #tpu.dot_dimension_numbers<[1], [0], [0], [1], [0, 0, 1, 1], [], []>} : vector<6x6xf32>, vector<6x8xf32>, vector<6x8xf32> -> vector<6x8xf32>
    %315 = tpu.iota {dimensions = array<i32: 0>} : vector<6x6xi32>
    %316 = tpu.iota {dimensions = array<i32: 1>} : vector<6x6xi32>
    %c4_i32 = arith.constant 4 : i32
    %317 = vector.broadcast %c4_i32 : i32 to vector<6x6xi32>
    %318 = arith.muli %315, %317 : vector<6x6xi32>
    %c0_i32 = arith.constant 0 : i32
    %319 = vector.broadcast %c0_i32 : i32 to vector<6x6xi32>
    %320 = arith.addi %318, %319 : vector<6x6xi32>
    %c0_i32_156 = arith.constant 0 : i32
    %321 = vector.broadcast %c0_i32_156 : i32 to vector<6x6xi32>
    %322 = arith.addi %321, %316 : vector<6x6xi32>
    %323 = arith.cmpi eq, %320, %322 : vector<6x6xi32>
    %cst_157 = arith.constant 1.000000e+00 : f32
    %cst_158 = arith.constant 0.000000e+00 : f32
    %324 = vector.broadcast %cst_157 : f32 to vector<6x6xf32>
    %325 = vector.broadcast %cst_158 : f32 to vector<6x6xf32>
    %326 = arith.select %323, %324, %325 : vector<6x6xi1>, vector<6x6xf32>
    %cst_159 = arith.constant dense<0.000000e+00> : vector<6x8xf32>
    %327 = tpu.matmul %326, %248, %cst_159 {dimension_numbers = #tpu.dot_dimension_numbers<[1], [0], [0], [1], [0, 0, 1, 1], [], []>} : vector<6x6xf32>, vector<6x8xf32>, vector<6x8xf32> -> vector<6x8xf32>
    %c4_i32_160 = arith.constant 4 : i32
    %328 = vector.broadcast %c4_i32_160 : i32 to vector<6x6xi32>
    %329 = arith.muli %315, %328 : vector<6x6xi32>
    %c0_i32_161 = arith.constant 0 : i32
    %330 = vector.broadcast %c0_i32_161 : i32 to vector<6x6xi32>
    %331 = arith.addi %329, %330 : vector<6x6xi32>
    %c6_i32 = arith.constant 6 : i32
    %332 = vector.broadcast %c6_i32 : i32 to vector<6x6xi32>
    %333 = arith.addi %332, %316 : vector<6x6xi32>
    %334 = arith.cmpi eq, %331, %333 : vector<6x6xi32>
    %cst_162 = arith.constant 1.000000e+00 : f32
    %cst_163 = arith.constant 0.000000e+00 : f32
    %335 = vector.broadcast %cst_162 : f32 to vector<6x6xf32>
    %336 = vector.broadcast %cst_163 : f32 to vector<6x6xf32>
    %337 = arith.select %334, %335, %336 : vector<6x6xi1>, vector<6x6xf32>
    %cst_164 = arith.constant dense<0.000000e+00> : vector<6x8xf32>
    %338 = tpu.matmul %337, %270, %cst_164 {dimension_numbers = #tpu.dot_dimension_numbers<[1], [0], [0], [1], [0, 0, 1, 1], [], []>} : vector<6x6xf32>, vector<6x8xf32>, vector<6x8xf32> -> vector<6x8xf32>
    %339 = arith.addf %327, %338 : vector<6x8xf32>
    %c4_i32_165 = arith.constant 4 : i32
    %340 = vector.broadcast %c4_i32_165 : i32 to vector<6x6xi32>
    %341 = arith.muli %315, %340 : vector<6x6xi32>
    %c0_i32_166 = arith.constant 0 : i32
    %342 = vector.broadcast %c0_i32_166 : i32 to vector<6x6xi32>
    %343 = arith.addi %341, %342 : vector<6x6xi32>
    %c12_i32 = arith.constant 12 : i32
    %344 = vector.broadcast %c12_i32 : i32 to vector<6x6xi32>
    %345 = arith.addi %344, %316 : vector<6x6xi32>
    %346 = arith.cmpi eq, %343, %345 : vector<6x6xi32>
    %cst_167 = arith.constant 1.000000e+00 : f32
    %cst_168 = arith.constant 0.000000e+00 : f32
    %347 = vector.broadcast %cst_167 : f32 to vector<6x6xf32>
    %348 = vector.broadcast %cst_168 : f32 to vector<6x6xf32>
    %349 = arith.select %346, %347, %348 : vector<6x6xi1>, vector<6x6xf32>
    %cst_169 = arith.constant dense<0.000000e+00> : vector<6x8xf32>
    %350 = tpu.matmul %349, %292, %cst_169 {dimension_numbers = #tpu.dot_dimension_numbers<[1], [0], [0], [1], [0, 0, 1, 1], [], []>} : vector<6x6xf32>, vector<6x8xf32>, vector<6x8xf32> -> vector<6x8xf32>
    %351 = arith.addf %339, %350 : vector<6x8xf32>
    %c4_i32_170 = arith.constant 4 : i32
    %352 = vector.broadcast %c4_i32_170 : i32 to vector<6x6xi32>
    %353 = arith.muli %315, %352 : vector<6x6xi32>
    %c0_i32_171 = arith.constant 0 : i32
    %354 = vector.broadcast %c0_i32_171 : i32 to vector<6x6xi32>
    %355 = arith.addi %353, %354 : vector<6x6xi32>
    %c18_i32 = arith.constant 18 : i32
    %356 = vector.broadcast %c18_i32 : i32 to vector<6x6xi32>
    %357 = arith.addi %356, %316 : vector<6x6xi32>
    %358 = arith.cmpi eq, %355, %357 : vector<6x6xi32>
    %cst_172 = arith.constant 1.000000e+00 : f32
    %cst_173 = arith.constant 0.000000e+00 : f32
    %359 = vector.broadcast %cst_172 : f32 to vector<6x6xf32>
    %360 = vector.broadcast %cst_173 : f32 to vector<6x6xf32>
    %361 = arith.select %358, %359, %360 : vector<6x6xi1>, vector<6x6xf32>
    %cst_174 = arith.constant dense<0.000000e+00> : vector<6x8xf32>
    %362 = tpu.matmul %361, %314, %cst_174 {dimension_numbers = #tpu.dot_dimension_numbers<[1], [0], [0], [1], [0, 0, 1, 1], [], []>} : vector<6x6xf32>, vector<6x8xf32>, vector<6x8xf32> -> vector<6x8xf32>
    %363 = arith.addf %351, %362 : vector<6x8xf32>
    %364 = vector.extract_strided_slice %203 {offsets = [0, 0], sizes = [8, 32], strides = [1, 1]} : vector<32x32xf32> to vector<8x32xf32>
    %cst_175 = arith.constant dense<0.000000e+00> : vector<6x32xf32>
    %365 = tpu.matmul %363, %364, %cst_175 {dimension_numbers = #tpu.dot_dimension_numbers<[1], [0], [0], [1], [0, 0, 1, 1], [], []>} : vector<6x8xf32>, vector<8x32xf32>, vector<6x32xf32> -> vector<6x32xf32>
    %c4_i32_176 = arith.constant 4 : i32
    %366 = vector.broadcast %c4_i32_176 : i32 to vector<6x6xi32>
    %367 = arith.muli %315, %366 : vector<6x6xi32>
    %c1_i32 = arith.constant 1 : i32
    %368 = vector.broadcast %c1_i32 : i32 to vector<6x6xi32>
    %369 = arith.addi %367, %368 : vector<6x6xi32>
    %c0_i32_177 = arith.constant 0 : i32
    %370 = vector.broadcast %c0_i32_177 : i32 to vector<6x6xi32>
    %371 = arith.addi %370, %316 : vector<6x6xi32>
    %372 = arith.cmpi eq, %369, %371 : vector<6x6xi32>
    %cst_178 = arith.constant 1.000000e+00 : f32
    %cst_179 = arith.constant 0.000000e+00 : f32
    %373 = vector.broadcast %cst_178 : f32 to vector<6x6xf32>
    %374 = vector.broadcast %cst_179 : f32 to vector<6x6xf32>
    %375 = arith.select %372, %373, %374 : vector<6x6xi1>, vector<6x6xf32>
    %cst_180 = arith.constant dense<0.000000e+00> : vector<6x8xf32>
    %376 = tpu.matmul %375, %248, %cst_180 {dimension_numbers = #tpu.dot_dimension_numbers<[1], [0], [0], [1], [0, 0, 1, 1], [], []>} : vector<6x6xf32>, vector<6x8xf32>, vector<6x8xf32> -> vector<6x8xf32>
    %c4_i32_181 = arith.constant 4 : i32
    %377 = vector.broadcast %c4_i32_181 : i32 to vector<6x6xi32>
    %378 = arith.muli %315, %377 : vector<6x6xi32>
    %c1_i32_182 = arith.constant 1 : i32
    %379 = vector.broadcast %c1_i32_182 : i32 to vector<6x6xi32>
    %380 = arith.addi %378, %379 : vector<6x6xi32>
    %c6_i32_183 = arith.constant 6 : i32
    %381 = vector.broadcast %c6_i32_183 : i32 to vector<6x6xi32>
    %382 = arith.addi %381, %316 : vector<6x6xi32>
    %383 = arith.cmpi eq, %380, %382 : vector<6x6xi32>
    %cst_184 = arith.constant 1.000000e+00 : f32
    %cst_185 = arith.constant 0.000000e+00 : f32
    %384 = vector.broadcast %cst_184 : f32 to vector<6x6xf32>
    %385 = vector.broadcast %cst_185 : f32 to vector<6x6xf32>
    %386 = arith.select %383, %384, %385 : vector<6x6xi1>, vector<6x6xf32>
    %cst_186 = arith.constant dense<0.000000e+00> : vector<6x8xf32>
    %387 = tpu.matmul %386, %270, %cst_186 {dimension_numbers = #tpu.dot_dimension_numbers<[1], [0], [0], [1], [0, 0, 1, 1], [], []>} : vector<6x6xf32>, vector<6x8xf32>, vector<6x8xf32> -> vector<6x8xf32>
    %388 = arith.addf %376, %387 : vector<6x8xf32>
    %c4_i32_187 = arith.constant 4 : i32
    %389 = vector.broadcast %c4_i32_187 : i32 to vector<6x6xi32>
    %390 = arith.muli %315, %389 : vector<6x6xi32>
    %c1_i32_188 = arith.constant 1 : i32
    %391 = vector.broadcast %c1_i32_188 : i32 to vector<6x6xi32>
    %392 = arith.addi %390, %391 : vector<6x6xi32>
    %c12_i32_189 = arith.constant 12 : i32
    %393 = vector.broadcast %c12_i32_189 : i32 to vector<6x6xi32>
    %394 = arith.addi %393, %316 : vector<6x6xi32>
    %395 = arith.cmpi eq, %392, %394 : vector<6x6xi32>
    %cst_190 = arith.constant 1.000000e+00 : f32
    %cst_191 = arith.constant 0.000000e+00 : f32
    %396 = vector.broadcast %cst_190 : f32 to vector<6x6xf32>
    %397 = vector.broadcast %cst_191 : f32 to vector<6x6xf32>
    %398 = arith.select %395, %396, %397 : vector<6x6xi1>, vector<6x6xf32>
    %cst_192 = arith.constant dense<0.000000e+00> : vector<6x8xf32>
    %399 = tpu.matmul %398, %292, %cst_192 {dimension_numbers = #tpu.dot_dimension_numbers<[1], [0], [0], [1], [0, 0, 1, 1], [], []>} : vector<6x6xf32>, vector<6x8xf32>, vector<6x8xf32> -> vector<6x8xf32>
    %400 = arith.addf %388, %399 : vector<6x8xf32>
    %c4_i32_193 = arith.constant 4 : i32
    %401 = vector.broadcast %c4_i32_193 : i32 to vector<6x6xi32>
    %402 = arith.muli %315, %401 : vector<6x6xi32>
    %c1_i32_194 = arith.constant 1 : i32
    %403 = vector.broadcast %c1_i32_194 : i32 to vector<6x6xi32>
    %404 = arith.addi %402, %403 : vector<6x6xi32>
    %c18_i32_195 = arith.constant 18 : i32
    %405 = vector.broadcast %c18_i32_195 : i32 to vector<6x6xi32>
    %406 = arith.addi %405, %316 : vector<6x6xi32>
    %407 = arith.cmpi eq, %404, %406 : vector<6x6xi32>
    %cst_196 = arith.constant 1.000000e+00 : f32
    %cst_197 = arith.constant 0.000000e+00 : f32
    %408 = vector.broadcast %cst_196 : f32 to vector<6x6xf32>
    %409 = vector.broadcast %cst_197 : f32 to vector<6x6xf32>
    %410 = arith.select %407, %408, %409 : vector<6x6xi1>, vector<6x6xf32>
    %cst_198 = arith.constant dense<0.000000e+00> : vector<6x8xf32>
    %411 = tpu.matmul %410, %314, %cst_198 {dimension_numbers = #tpu.dot_dimension_numbers<[1], [0], [0], [1], [0, 0, 1, 1], [], []>} : vector<6x6xf32>, vector<6x8xf32>, vector<6x8xf32> -> vector<6x8xf32>
    %412 = arith.addf %400, %411 : vector<6x8xf32>
    %413 = vector.extract_strided_slice %203 {offsets = [8, 0], sizes = [8, 32], strides = [1, 1]} : vector<32x32xf32> to vector<8x32xf32>
    %cst_199 = arith.constant dense<0.000000e+00> : vector<6x32xf32>
    %414 = tpu.matmul %412, %413, %cst_199 {dimension_numbers = #tpu.dot_dimension_numbers<[1], [0], [0], [1], [0, 0, 1, 1], [], []>} : vector<6x8xf32>, vector<8x32xf32>, vector<6x32xf32> -> vector<6x32xf32>
    %415 = arith.addf %365, %414 : vector<6x32xf32>
    %c4_i32_200 = arith.constant 4 : i32
    %416 = vector.broadcast %c4_i32_200 : i32 to vector<6x6xi32>
    %417 = arith.muli %315, %416 : vector<6x6xi32>
    %c2_i32 = arith.constant 2 : i32
    %418 = vector.broadcast %c2_i32 : i32 to vector<6x6xi32>
    %419 = arith.addi %417, %418 : vector<6x6xi32>
    %c0_i32_201 = arith.constant 0 : i32
    %420 = vector.broadcast %c0_i32_201 : i32 to vector<6x6xi32>
    %421 = arith.addi %420, %316 : vector<6x6xi32>
    %422 = arith.cmpi eq, %419, %421 : vector<6x6xi32>
    %cst_202 = arith.constant 1.000000e+00 : f32
    %cst_203 = arith.constant 0.000000e+00 : f32
    %423 = vector.broadcast %cst_202 : f32 to vector<6x6xf32>
    %424 = vector.broadcast %cst_203 : f32 to vector<6x6xf32>
    %425 = arith.select %422, %423, %424 : vector<6x6xi1>, vector<6x6xf32>
    %cst_204 = arith.constant dense<0.000000e+00> : vector<6x8xf32>
    %426 = tpu.matmul %425, %248, %cst_204 {dimension_numbers = #tpu.dot_dimension_numbers<[1], [0], [0], [1], [0, 0, 1, 1], [], []>} : vector<6x6xf32>, vector<6x8xf32>, vector<6x8xf32> -> vector<6x8xf32>
    %c4_i32_205 = arith.constant 4 : i32
    %427 = vector.broadcast %c4_i32_205 : i32 to vector<6x6xi32>
    %428 = arith.muli %315, %427 : vector<6x6xi32>
    %c2_i32_206 = arith.constant 2 : i32
    %429 = vector.broadcast %c2_i32_206 : i32 to vector<6x6xi32>
    %430 = arith.addi %428, %429 : vector<6x6xi32>
    %c6_i32_207 = arith.constant 6 : i32
    %431 = vector.broadcast %c6_i32_207 : i32 to vector<6x6xi32>
    %432 = arith.addi %431, %316 : vector<6x6xi32>
    %433 = arith.cmpi eq, %430, %432 : vector<6x6xi32>
    %cst_208 = arith.constant 1.000000e+00 : f32
    %cst_209 = arith.constant 0.000000e+00 : f32
    %434 = vector.broadcast %cst_208 : f32 to vector<6x6xf32>
    %435 = vector.broadcast %cst_209 : f32 to vector<6x6xf32>
    %436 = arith.select %433, %434, %435 : vector<6x6xi1>, vector<6x6xf32>
    %cst_210 = arith.constant dense<0.000000e+00> : vector<6x8xf32>
    %437 = tpu.matmul %436, %270, %cst_210 {dimension_numbers = #tpu.dot_dimension_numbers<[1], [0], [0], [1], [0, 0, 1, 1], [], []>} : vector<6x6xf32>, vector<6x8xf32>, vector<6x8xf32> -> vector<6x8xf32>
    %438 = arith.addf %426, %437 : vector<6x8xf32>
    %c4_i32_211 = arith.constant 4 : i32
    %439 = vector.broadcast %c4_i32_211 : i32 to vector<6x6xi32>
    %440 = arith.muli %315, %439 : vector<6x6xi32>
    %c2_i32_212 = arith.constant 2 : i32
    %441 = vector.broadcast %c2_i32_212 : i32 to vector<6x6xi32>
    %442 = arith.addi %440, %441 : vector<6x6xi32>
    %c12_i32_213 = arith.constant 12 : i32
    %443 = vector.broadcast %c12_i32_213 : i32 to vector<6x6xi32>
    %444 = arith.addi %443, %316 : vector<6x6xi32>
    %445 = arith.cmpi eq, %442, %444 : vector<6x6xi32>
    %cst_214 = arith.constant 1.000000e+00 : f32
    %cst_215 = arith.constant 0.000000e+00 : f32
    %446 = vector.broadcast %cst_214 : f32 to vector<6x6xf32>
    %447 = vector.broadcast %cst_215 : f32 to vector<6x6xf32>
    %448 = arith.select %445, %446, %447 : vector<6x6xi1>, vector<6x6xf32>
    %cst_216 = arith.constant dense<0.000000e+00> : vector<6x8xf32>
    %449 = tpu.matmul %448, %292, %cst_216 {dimension_numbers = #tpu.dot_dimension_numbers<[1], [0], [0], [1], [0, 0, 1, 1], [], []>} : vector<6x6xf32>, vector<6x8xf32>, vector<6x8xf32> -> vector<6x8xf32>
    %450 = arith.addf %438, %449 : vector<6x8xf32>
    %c4_i32_217 = arith.constant 4 : i32
    %451 = vector.broadcast %c4_i32_217 : i32 to vector<6x6xi32>
    %452 = arith.muli %315, %451 : vector<6x6xi32>
    %c2_i32_218 = arith.constant 2 : i32
    %453 = vector.broadcast %c2_i32_218 : i32 to vector<6x6xi32>
    %454 = arith.addi %452, %453 : vector<6x6xi32>
    %c18_i32_219 = arith.constant 18 : i32
    %455 = vector.broadcast %c18_i32_219 : i32 to vector<6x6xi32>
    %456 = arith.addi %455, %316 : vector<6x6xi32>
    %457 = arith.cmpi eq, %454, %456 : vector<6x6xi32>
    %cst_220 = arith.constant 1.000000e+00 : f32
    %cst_221 = arith.constant 0.000000e+00 : f32
    %458 = vector.broadcast %cst_220 : f32 to vector<6x6xf32>
    %459 = vector.broadcast %cst_221 : f32 to vector<6x6xf32>
    %460 = arith.select %457, %458, %459 : vector<6x6xi1>, vector<6x6xf32>
    %cst_222 = arith.constant dense<0.000000e+00> : vector<6x8xf32>
    %461 = tpu.matmul %460, %314, %cst_222 {dimension_numbers = #tpu.dot_dimension_numbers<[1], [0], [0], [1], [0, 0, 1, 1], [], []>} : vector<6x6xf32>, vector<6x8xf32>, vector<6x8xf32> -> vector<6x8xf32>
    %462 = arith.addf %450, %461 : vector<6x8xf32>
    %463 = vector.extract_strided_slice %203 {offsets = [16, 0], sizes = [8, 32], strides = [1, 1]} : vector<32x32xf32> to vector<8x32xf32>
    %cst_223 = arith.constant dense<0.000000e+00> : vector<6x32xf32>
    %464 = tpu.matmul %462, %463, %cst_223 {dimension_numbers = #tpu.dot_dimension_numbers<[1], [0], [0], [1], [0, 0, 1, 1], [], []>} : vector<6x8xf32>, vector<8x32xf32>, vector<6x32xf32> -> vector<6x32xf32>
    %465 = arith.addf %415, %464 : vector<6x32xf32>
    %c4_i32_224 = arith.constant 4 : i32
    %466 = vector.broadcast %c4_i32_224 : i32 to vector<6x6xi32>
    %467 = arith.muli %315, %466 : vector<6x6xi32>
    %c3_i32 = arith.constant 3 : i32
    %468 = vector.broadcast %c3_i32 : i32 to vector<6x6xi32>
    %469 = arith.addi %467, %468 : vector<6x6xi32>
    %c0_i32_225 = arith.constant 0 : i32
    %470 = vector.broadcast %c0_i32_225 : i32 to vector<6x6xi32>
    %471 = arith.addi %470, %316 : vector<6x6xi32>
    %472 = arith.cmpi eq, %469, %471 : vector<6x6xi32>
    %cst_226 = arith.constant 1.000000e+00 : f32
    %cst_227 = arith.constant 0.000000e+00 : f32
    %473 = vector.broadcast %cst_226 : f32 to vector<6x6xf32>
    %474 = vector.broadcast %cst_227 : f32 to vector<6x6xf32>
    %475 = arith.select %472, %473, %474 : vector<6x6xi1>, vector<6x6xf32>
    %cst_228 = arith.constant dense<0.000000e+00> : vector<6x8xf32>
    %476 = tpu.matmul %475, %248, %cst_228 {dimension_numbers = #tpu.dot_dimension_numbers<[1], [0], [0], [1], [0, 0, 1, 1], [], []>} : vector<6x6xf32>, vector<6x8xf32>, vector<6x8xf32> -> vector<6x8xf32>
    %c4_i32_229 = arith.constant 4 : i32
    %477 = vector.broadcast %c4_i32_229 : i32 to vector<6x6xi32>
    %478 = arith.muli %315, %477 : vector<6x6xi32>
    %c3_i32_230 = arith.constant 3 : i32
    %479 = vector.broadcast %c3_i32_230 : i32 to vector<6x6xi32>
    %480 = arith.addi %478, %479 : vector<6x6xi32>
    %c6_i32_231 = arith.constant 6 : i32
    %481 = vector.broadcast %c6_i32_231 : i32 to vector<6x6xi32>
    %482 = arith.addi %481, %316 : vector<6x6xi32>
    %483 = arith.cmpi eq, %480, %482 : vector<6x6xi32>
    %cst_232 = arith.constant 1.000000e+00 : f32
    %cst_233 = arith.constant 0.000000e+00 : f32
    %484 = vector.broadcast %cst_232 : f32 to vector<6x6xf32>
    %485 = vector.broadcast %cst_233 : f32 to vector<6x6xf32>
    %486 = arith.select %483, %484, %485 : vector<6x6xi1>, vector<6x6xf32>
    %cst_234 = arith.constant dense<0.000000e+00> : vector<6x8xf32>
    %487 = tpu.matmul %486, %270, %cst_234 {dimension_numbers = #tpu.dot_dimension_numbers<[1], [0], [0], [1], [0, 0, 1, 1], [], []>} : vector<6x6xf32>, vector<6x8xf32>, vector<6x8xf32> -> vector<6x8xf32>
    %488 = arith.addf %476, %487 : vector<6x8xf32>
    %c4_i32_235 = arith.constant 4 : i32
    %489 = vector.broadcast %c4_i32_235 : i32 to vector<6x6xi32>
    %490 = arith.muli %315, %489 : vector<6x6xi32>
    %c3_i32_236 = arith.constant 3 : i32
    %491 = vector.broadcast %c3_i32_236 : i32 to vector<6x6xi32>
    %492 = arith.addi %490, %491 : vector<6x6xi32>
    %c12_i32_237 = arith.constant 12 : i32
    %493 = vector.broadcast %c12_i32_237 : i32 to vector<6x6xi32>
    %494 = arith.addi %493, %316 : vector<6x6xi32>
    %495 = arith.cmpi eq, %492, %494 : vector<6x6xi32>
    %cst_238 = arith.constant 1.000000e+00 : f32
    %cst_239 = arith.constant 0.000000e+00 : f32
    %496 = vector.broadcast %cst_238 : f32 to vector<6x6xf32>
    %497 = vector.broadcast %cst_239 : f32 to vector<6x6xf32>
    %498 = arith.select %495, %496, %497 : vector<6x6xi1>, vector<6x6xf32>
    %cst_240 = arith.constant dense<0.000000e+00> : vector<6x8xf32>
    %499 = tpu.matmul %498, %292, %cst_240 {dimension_numbers = #tpu.dot_dimension_numbers<[1], [0], [0], [1], [0, 0, 1, 1], [], []>} : vector<6x6xf32>, vector<6x8xf32>, vector<6x8xf32> -> vector<6x8xf32>
    %500 = arith.addf %488, %499 : vector<6x8xf32>
    %c4_i32_241 = arith.constant 4 : i32
    %501 = vector.broadcast %c4_i32_241 : i32 to vector<6x6xi32>
    %502 = arith.muli %315, %501 : vector<6x6xi32>
    %c3_i32_242 = arith.constant 3 : i32
    %503 = vector.broadcast %c3_i32_242 : i32 to vector<6x6xi32>
    %504 = arith.addi %502, %503 : vector<6x6xi32>
    %c18_i32_243 = arith.constant 18 : i32
    %505 = vector.broadcast %c18_i32_243 : i32 to vector<6x6xi32>
    %506 = arith.addi %505, %316 : vector<6x6xi32>
    %507 = arith.cmpi eq, %504, %506 : vector<6x6xi32>
    %cst_244 = arith.constant 1.000000e+00 : f32
    %cst_245 = arith.constant 0.000000e+00 : f32
    %508 = vector.broadcast %cst_244 : f32 to vector<6x6xf32>
    %509 = vector.broadcast %cst_245 : f32 to vector<6x6xf32>
    %510 = arith.select %507, %508, %509 : vector<6x6xi1>, vector<6x6xf32>
    %cst_246 = arith.constant dense<0.000000e+00> : vector<6x8xf32>
    %511 = tpu.matmul %510, %314, %cst_246 {dimension_numbers = #tpu.dot_dimension_numbers<[1], [0], [0], [1], [0, 0, 1, 1], [], []>} : vector<6x6xf32>, vector<6x8xf32>, vector<6x8xf32> -> vector<6x8xf32>
    %512 = arith.addf %500, %511 : vector<6x8xf32>
    %513 = vector.extract_strided_slice %203 {offsets = [24, 0], sizes = [8, 32], strides = [1, 1]} : vector<32x32xf32> to vector<8x32xf32>
    %cst_247 = arith.constant dense<0.000000e+00> : vector<6x32xf32>
    %514 = tpu.matmul %512, %513, %cst_247 {dimension_numbers = #tpu.dot_dimension_numbers<[1], [0], [0], [1], [0, 0, 1, 1], [], []>} : vector<6x8xf32>, vector<8x32xf32>, vector<6x32xf32> -> vector<6x32xf32>
    %515 = arith.addf %465, %514 : vector<6x32xf32>
    %516 = vector.broadcast %204 : vector<1x32xf32> to vector<6x32xf32>
    %517 = arith.addf %515, %516 : vector<6x32xf32>
    %518 = arith.addf %200, %517 : vector<6x32xf32>
    %cst_248 = arith.constant dense<0.000000e+00> : vector<6xf32>
    %519 = vector.multi_reduction <add>, %518, %cst_248 [1] : vector<6x32xf32> to vector<6xf32>
    %520 = vector.shape_cast %519 : vector<6xf32> to vector<6x1xf32>
    %cst_249 = arith.constant 3.200000e+01 : f32
    %521 = vector.broadcast %cst_249 : f32 to vector<6x1xf32>
    %522 = arith.divf %520, %521 : vector<6x1xf32>
    %523 = vector.broadcast %522 : vector<6x1xf32> to vector<6x32xf32>
    %524 = arith.subf %518, %523 : vector<6x32xf32>
    %525 = arith.mulf %524, %524 : vector<6x32xf32>
    %cst_250 = arith.constant dense<0.000000e+00> : vector<6xf32>
    %526 = vector.multi_reduction <add>, %525, %cst_250 [1] : vector<6x32xf32> to vector<6xf32>
    %527 = vector.shape_cast %526 : vector<6xf32> to vector<6x1xf32>
    %cst_251 = arith.constant 3.200000e+01 : f32
    %528 = vector.broadcast %cst_251 : f32 to vector<6x1xf32>
    %529 = arith.divf %527, %528 : vector<6x1xf32>
    %530 = vector.broadcast %522 : vector<6x1xf32> to vector<6x32xf32>
    %531 = arith.subf %518, %530 : vector<6x32xf32>
    %cst_252 = arith.constant 9.99999974E-6 : f32
    %532 = vector.broadcast %cst_252 : f32 to vector<6x1xf32>
    %533 = arith.addf %529, %532 : vector<6x1xf32>
    %534 = math.rsqrt %533 : vector<6x1xf32>
    %535 = vector.broadcast %534 : vector<6x1xf32> to vector<6x32xf32>
    %536 = arith.mulf %531, %535 : vector<6x32xf32>
    %537 = vector.broadcast %211 : vector<1x32xf32> to vector<6x32xf32>
    %538 = arith.mulf %536, %537 : vector<6x32xf32>
    %539 = vector.broadcast %212 : vector<1x32xf32> to vector<6x32xf32>
    %540 = arith.addf %538, %539 : vector<6x32xf32>
    %cst_253 = arith.constant dense<0.000000e+00> : vector<6x32xf32>
    %541 = tpu.matmul %540, %205, %cst_253 {dimension_numbers = #tpu.dot_dimension_numbers<[1], [0], [0], [1], [0, 0, 1, 1], [], []>} : vector<6x32xf32>, vector<32x32xf32>, vector<6x32xf32> -> vector<6x32xf32>
    %542 = vector.broadcast %206 : vector<1x32xf32> to vector<6x32xf32>
    %543 = arith.addf %541, %542 : vector<6x32xf32>
    %cst_254 = arith.constant dense<0.000000e+00> : vector<8x64xf32>
    %544 = tpu.matmul %193, %207, %cst_254 {dimension_numbers = #tpu.dot_dimension_numbers<[1], [0], [0], [1], [0, 0, 1, 1], [], []>} : vector<8x32xf32>, vector<32x64xf32>, vector<8x64xf32> -> vector<8x64xf32>
    %545 = vector.broadcast %208 : vector<1x64xf32> to vector<8x64xf32>
    %546 = arith.addf %544, %545 : vector<8x64xf32>
    %547 = vector.extract_strided_slice %546 {offsets = [0, 0], sizes = [8, 32], strides = [1, 1]} : vector<8x64xf32> to vector<8x32xf32>
    %548 = vector.extract_strided_slice %546 {offsets = [0, 32], sizes = [8, 32], strides = [1, 1]} : vector<8x64xf32> to vector<8x32xf32>
    %549 = vector.extract_strided_slice %543 {offsets = [0, 0], sizes = [6, 8], strides = [1, 1]} : vector<6x32xf32> to vector<6x8xf32>
    %550 = vector.extract_strided_slice %547 {offsets = [0, 0], sizes = [8, 8], strides = [1, 1]} : vector<8x32xf32> to vector<8x8xf32>
    %cst_255 = arith.constant dense<0.000000e+00> : vector<6x8xf32>
    %551 = tpu.matmul %549, %550, %cst_255 {dimension_numbers = #tpu.dot_dimension_numbers<[1], [1], [0], [0], [0, 0, 1, 0], [], []>} : vector<6x8xf32>, vector<8x8xf32>, vector<6x8xf32> -> vector<6x8xf32>
    %cst_256 = arith.constant 0.353553385 : f32
    %552 = vector.broadcast %cst_256 : f32 to vector<6x8xf32>
    %553 = arith.mulf %551, %552 : vector<6x8xf32>
    %cst_257 = arith.constant dense<0xFF800000> : vector<6xf32>
    %554 = vector.multi_reduction <maximumf>, %553, %cst_257 [1] : vector<6x8xf32> to vector<6xf32>
    %555 = vector.shape_cast %554 : vector<6xf32> to vector<6x1xf32>
    %556 = vector.broadcast %555 : vector<6x1xf32> to vector<6x8xf32>
    %557 = arith.subf %553, %556 : vector<6x8xf32>
    %558 = math.exp %557 : vector<6x8xf32>
    %cst_258 = arith.constant dense<0.000000e+00> : vector<6xf32>
    %559 = vector.multi_reduction <add>, %558, %cst_258 [1] : vector<6x8xf32> to vector<6xf32>
    %560 = vector.shape_cast %559 : vector<6xf32> to vector<6x1xf32>
    %561 = tpu.reciprocal %560 {approx = true} : vector<6x1xf32> -> vector<6x1xf32>
    %562 = vector.broadcast %561 : vector<6x1xf32> to vector<6x8xf32>
    %563 = arith.mulf %558, %562 : vector<6x8xf32>
    %564 = vector.extract_strided_slice %548 {offsets = [0, 0], sizes = [8, 8], strides = [1, 1]} : vector<8x32xf32> to vector<8x8xf32>
    %cst_259 = arith.constant dense<0.000000e+00> : vector<6x8xf32>
    %565 = tpu.matmul %563, %564, %cst_259 {dimension_numbers = #tpu.dot_dimension_numbers<[1], [0], [0], [1], [0, 0, 1, 1], [], []>} : vector<6x8xf32>, vector<8x8xf32>, vector<6x8xf32> -> vector<6x8xf32>
    %566 = vector.extract_strided_slice %543 {offsets = [0, 8], sizes = [6, 8], strides = [1, 1]} : vector<6x32xf32> to vector<6x8xf32>
    %567 = vector.extract_strided_slice %547 {offsets = [0, 8], sizes = [8, 8], strides = [1, 1]} : vector<8x32xf32> to vector<8x8xf32>
    %cst_260 = arith.constant dense<0.000000e+00> : vector<6x8xf32>
    %568 = tpu.matmul %566, %567, %cst_260 {dimension_numbers = #tpu.dot_dimension_numbers<[1], [1], [0], [0], [0, 0, 1, 0], [], []>} : vector<6x8xf32>, vector<8x8xf32>, vector<6x8xf32> -> vector<6x8xf32>
    %cst_261 = arith.constant 0.353553385 : f32
    %569 = vector.broadcast %cst_261 : f32 to vector<6x8xf32>
    %570 = arith.mulf %568, %569 : vector<6x8xf32>
    %cst_262 = arith.constant dense<0xFF800000> : vector<6xf32>
    %571 = vector.multi_reduction <maximumf>, %570, %cst_262 [1] : vector<6x8xf32> to vector<6xf32>
    %572 = vector.shape_cast %571 : vector<6xf32> to vector<6x1xf32>
    %573 = vector.broadcast %572 : vector<6x1xf32> to vector<6x8xf32>
    %574 = arith.subf %570, %573 : vector<6x8xf32>
    %575 = math.exp %574 : vector<6x8xf32>
    %cst_263 = arith.constant dense<0.000000e+00> : vector<6xf32>
    %576 = vector.multi_reduction <add>, %575, %cst_263 [1] : vector<6x8xf32> to vector<6xf32>
    %577 = vector.shape_cast %576 : vector<6xf32> to vector<6x1xf32>
    %578 = tpu.reciprocal %577 {approx = true} : vector<6x1xf32> -> vector<6x1xf32>
    %579 = vector.broadcast %578 : vector<6x1xf32> to vector<6x8xf32>
    %580 = arith.mulf %575, %579 : vector<6x8xf32>
    %581 = vector.extract_strided_slice %548 {offsets = [0, 8], sizes = [8, 8], strides = [1, 1]} : vector<8x32xf32> to vector<8x8xf32>
    %cst_264 = arith.constant dense<0.000000e+00> : vector<6x8xf32>
    %582 = tpu.matmul %580, %581, %cst_264 {dimension_numbers = #tpu.dot_dimension_numbers<[1], [0], [0], [1], [0, 0, 1, 1], [], []>} : vector<6x8xf32>, vector<8x8xf32>, vector<6x8xf32> -> vector<6x8xf32>
    %583 = vector.extract_strided_slice %543 {offsets = [0, 16], sizes = [6, 8], strides = [1, 1]} : vector<6x32xf32> to vector<6x8xf32>
    %584 = vector.extract_strided_slice %547 {offsets = [0, 16], sizes = [8, 8], strides = [1, 1]} : vector<8x32xf32> to vector<8x8xf32>
    %cst_265 = arith.constant dense<0.000000e+00> : vector<6x8xf32>
    %585 = tpu.matmul %583, %584, %cst_265 {dimension_numbers = #tpu.dot_dimension_numbers<[1], [1], [0], [0], [0, 0, 1, 0], [], []>} : vector<6x8xf32>, vector<8x8xf32>, vector<6x8xf32> -> vector<6x8xf32>
    %cst_266 = arith.constant 0.353553385 : f32
    %586 = vector.broadcast %cst_266 : f32 to vector<6x8xf32>
    %587 = arith.mulf %585, %586 : vector<6x8xf32>
    %cst_267 = arith.constant dense<0xFF800000> : vector<6xf32>
    %588 = vector.multi_reduction <maximumf>, %587, %cst_267 [1] : vector<6x8xf32> to vector<6xf32>
    %589 = vector.shape_cast %588 : vector<6xf32> to vector<6x1xf32>
    %590 = vector.broadcast %589 : vector<6x1xf32> to vector<6x8xf32>
    %591 = arith.subf %587, %590 : vector<6x8xf32>
    %592 = math.exp %591 : vector<6x8xf32>
    %cst_268 = arith.constant dense<0.000000e+00> : vector<6xf32>
    %593 = vector.multi_reduction <add>, %592, %cst_268 [1] : vector<6x8xf32> to vector<6xf32>
    %594 = vector.shape_cast %593 : vector<6xf32> to vector<6x1xf32>
    %595 = tpu.reciprocal %594 {approx = true} : vector<6x1xf32> -> vector<6x1xf32>
    %596 = vector.broadcast %595 : vector<6x1xf32> to vector<6x8xf32>
    %597 = arith.mulf %592, %596 : vector<6x8xf32>
    %598 = vector.extract_strided_slice %548 {offsets = [0, 16], sizes = [8, 8], strides = [1, 1]} : vector<8x32xf32> to vector<8x8xf32>
    %cst_269 = arith.constant dense<0.000000e+00> : vector<6x8xf32>
    %599 = tpu.matmul %597, %598, %cst_269 {dimension_numbers = #tpu.dot_dimension_numbers<[1], [0], [0], [1], [0, 0, 1, 1], [], []>} : vector<6x8xf32>, vector<8x8xf32>, vector<6x8xf32> -> vector<6x8xf32>
    %600 = vector.extract_strided_slice %543 {offsets = [0, 24], sizes = [6, 8], strides = [1, 1]} : vector<6x32xf32> to vector<6x8xf32>
    %601 = vector.extract_strided_slice %547 {offsets = [0, 24], sizes = [8, 8], strides = [1, 1]} : vector<8x32xf32> to vector<8x8xf32>
    %cst_270 = arith.constant dense<0.000000e+00> : vector<6x8xf32>
    %602 = tpu.matmul %600, %601, %cst_270 {dimension_numbers = #tpu.dot_dimension_numbers<[1], [1], [0], [0], [0, 0, 1, 0], [], []>} : vector<6x8xf32>, vector<8x8xf32>, vector<6x8xf32> -> vector<6x8xf32>
    %cst_271 = arith.constant 0.353553385 : f32
    %603 = vector.broadcast %cst_271 : f32 to vector<6x8xf32>
    %604 = arith.mulf %602, %603 : vector<6x8xf32>
    %cst_272 = arith.constant dense<0xFF800000> : vector<6xf32>
    %605 = vector.multi_reduction <maximumf>, %604, %cst_272 [1] : vector<6x8xf32> to vector<6xf32>
    %606 = vector.shape_cast %605 : vector<6xf32> to vector<6x1xf32>
    %607 = vector.broadcast %606 : vector<6x1xf32> to vector<6x8xf32>
    %608 = arith.subf %604, %607 : vector<6x8xf32>
    %609 = math.exp %608 : vector<6x8xf32>
    %cst_273 = arith.constant dense<0.000000e+00> : vector<6xf32>
    %610 = vector.multi_reduction <add>, %609, %cst_273 [1] : vector<6x8xf32> to vector<6xf32>
    %611 = vector.shape_cast %610 : vector<6xf32> to vector<6x1xf32>
    %612 = tpu.reciprocal %611 {approx = true} : vector<6x1xf32> -> vector<6x1xf32>
    %613 = vector.broadcast %612 : vector<6x1xf32> to vector<6x8xf32>
    %614 = arith.mulf %609, %613 : vector<6x8xf32>
    %615 = vector.extract_strided_slice %548 {offsets = [0, 24], sizes = [8, 8], strides = [1, 1]} : vector<8x32xf32> to vector<8x8xf32>
    %cst_274 = arith.constant dense<0.000000e+00> : vector<6x8xf32>
    %616 = tpu.matmul %614, %615, %cst_274 {dimension_numbers = #tpu.dot_dimension_numbers<[1], [0], [0], [1], [0, 0, 1, 1], [], []>} : vector<6x8xf32>, vector<8x8xf32>, vector<6x8xf32> -> vector<6x8xf32>
    %617 = vector.extract_strided_slice %209 {offsets = [0, 0], sizes = [8, 32], strides = [1, 1]} : vector<32x32xf32> to vector<8x32xf32>
    %cst_275 = arith.constant dense<0.000000e+00> : vector<6x32xf32>
    %618 = tpu.matmul %565, %617, %cst_275 {dimension_numbers = #tpu.dot_dimension_numbers<[1], [0], [0], [1], [0, 0, 1, 1], [], []>} : vector<6x8xf32>, vector<8x32xf32>, vector<6x32xf32> -> vector<6x32xf32>
    %619 = vector.extract_strided_slice %209 {offsets = [8, 0], sizes = [8, 32], strides = [1, 1]} : vector<32x32xf32> to vector<8x32xf32>
    %cst_276 = arith.constant dense<0.000000e+00> : vector<6x32xf32>
    %620 = tpu.matmul %582, %619, %cst_276 {dimension_numbers = #tpu.dot_dimension_numbers<[1], [0], [0], [1], [0, 0, 1, 1], [], []>} : vector<6x8xf32>, vector<8x32xf32>, vector<6x32xf32> -> vector<6x32xf32>
    %621 = arith.addf %618, %620 : vector<6x32xf32>
    %622 = vector.extract_strided_slice %209 {offsets = [16, 0], sizes = [8, 32], strides = [1, 1]} : vector<32x32xf32> to vector<8x32xf32>
    %cst_277 = arith.constant dense<0.000000e+00> : vector<6x32xf32>
    %623 = tpu.matmul %599, %622, %cst_277 {dimension_numbers = #tpu.dot_dimension_numbers<[1], [0], [0], [1], [0, 0, 1, 1], [], []>} : vector<6x8xf32>, vector<8x32xf32>, vector<6x32xf32> -> vector<6x32xf32>
    %624 = arith.addf %621, %623 : vector<6x32xf32>
    %625 = vector.extract_strided_slice %209 {offsets = [24, 0], sizes = [8, 32], strides = [1, 1]} : vector<32x32xf32> to vector<8x32xf32>
    %cst_278 = arith.constant dense<0.000000e+00> : vector<6x32xf32>
    %626 = tpu.matmul %616, %625, %cst_278 {dimension_numbers = #tpu.dot_dimension_numbers<[1], [0], [0], [1], [0, 0, 1, 1], [], []>} : vector<6x8xf32>, vector<8x32xf32>, vector<6x32xf32> -> vector<6x32xf32>
    %627 = arith.addf %624, %626 : vector<6x32xf32>
    %628 = vector.broadcast %210 : vector<1x32xf32> to vector<6x32xf32>
    %629 = arith.addf %627, %628 : vector<6x32xf32>
    %630 = arith.addf %540, %629 : vector<6x32xf32>
    %cst_279 = arith.constant dense<0.000000e+00> : vector<6xf32>
    %631 = vector.multi_reduction <add>, %630, %cst_279 [1] : vector<6x32xf32> to vector<6xf32>
    %632 = vector.shape_cast %631 : vector<6xf32> to vector<6x1xf32>
    %cst_280 = arith.constant 3.200000e+01 : f32
    %633 = vector.broadcast %cst_280 : f32 to vector<6x1xf32>
    %634 = arith.divf %632, %633 : vector<6x1xf32>
    %635 = vector.broadcast %634 : vector<6x1xf32> to vector<6x32xf32>
    %636 = arith.subf %630, %635 : vector<6x32xf32>
    %637 = arith.mulf %636, %636 : vector<6x32xf32>
    %cst_281 = arith.constant dense<0.000000e+00> : vector<6xf32>
    %638 = vector.multi_reduction <add>, %637, %cst_281 [1] : vector<6x32xf32> to vector<6xf32>
    %639 = vector.shape_cast %638 : vector<6xf32> to vector<6x1xf32>
    %cst_282 = arith.constant 3.200000e+01 : f32
    %640 = vector.broadcast %cst_282 : f32 to vector<6x1xf32>
    %641 = arith.divf %639, %640 : vector<6x1xf32>
    %642 = vector.broadcast %634 : vector<6x1xf32> to vector<6x32xf32>
    %643 = arith.subf %630, %642 : vector<6x32xf32>
    %cst_283 = arith.constant 9.99999974E-6 : f32
    %644 = vector.broadcast %cst_283 : f32 to vector<6x1xf32>
    %645 = arith.addf %641, %644 : vector<6x1xf32>
    %646 = math.rsqrt %645 : vector<6x1xf32>
    %647 = vector.broadcast %646 : vector<6x1xf32> to vector<6x32xf32>
    %648 = arith.mulf %643, %647 : vector<6x32xf32>
    %649 = vector.broadcast %213 : vector<1x32xf32> to vector<6x32xf32>
    %650 = arith.mulf %648, %649 : vector<6x32xf32>
    %651 = vector.broadcast %214 : vector<1x32xf32> to vector<6x32xf32>
    %652 = arith.addf %650, %651 : vector<6x32xf32>
    %cst_284 = arith.constant dense<0.000000e+00> : vector<6x64xf32>
    %653 = tpu.matmul %652, %215, %cst_284 {dimension_numbers = #tpu.dot_dimension_numbers<[1], [0], [0], [1], [0, 0, 1, 1], [], []>} : vector<6x32xf32>, vector<32x64xf32>, vector<6x64xf32> -> vector<6x64xf32>
    %654 = vector.broadcast %216 : vector<1x64xf32> to vector<6x64xf32>
    %655 = arith.addf %653, %654 : vector<6x64xf32>
    %cst_285 = arith.constant 5.000000e-01 : f32
    %656 = vector.broadcast %cst_285 : f32 to vector<6x64xf32>
    %657 = arith.mulf %656, %655 : vector<6x64xf32>
    %cst_286 = arith.constant 0.707106769 : f32
    %658 = vector.broadcast %cst_286 : f32 to vector<6x64xf32>
    %659 = arith.mulf %655, %658 : vector<6x64xf32>
    %660 = math.erf %659 : vector<6x64xf32>
    %cst_287 = arith.constant 1.000000e+00 : f32
    %661 = vector.broadcast %cst_287 : f32 to vector<6x64xf32>
    %662 = arith.addf %661, %660 : vector<6x64xf32>
    %663 = arith.mulf %657, %662 : vector<6x64xf32>
    %cst_288 = arith.constant dense<0.000000e+00> : vector<6x32xf32>
    %664 = tpu.matmul %663, %217, %cst_288 {dimension_numbers = #tpu.dot_dimension_numbers<[1], [0], [0], [1], [0, 0, 1, 1], [], []>} : vector<6x64xf32>, vector<64x32xf32>, vector<6x32xf32> -> vector<6x32xf32>
    %665 = vector.broadcast %218 : vector<1x32xf32> to vector<6x32xf32>
    %666 = arith.addf %664, %665 : vector<6x32xf32>
    %667 = arith.addf %652, %666 : vector<6x32xf32>
    %cst_289 = arith.constant dense<0.000000e+00> : vector<6xf32>
    %668 = vector.multi_reduction <add>, %667, %cst_289 [1] : vector<6x32xf32> to vector<6xf32>
    %669 = vector.shape_cast %668 : vector<6xf32> to vector<6x1xf32>
    %cst_290 = arith.constant 3.200000e+01 : f32
    %670 = vector.broadcast %cst_290 : f32 to vector<6x1xf32>
    %671 = arith.divf %669, %670 : vector<6x1xf32>
    %672 = vector.broadcast %671 : vector<6x1xf32> to vector<6x32xf32>
    %673 = arith.subf %667, %672 : vector<6x32xf32>
    %674 = arith.mulf %673, %673 : vector<6x32xf32>
    %cst_291 = arith.constant dense<0.000000e+00> : vector<6xf32>
    %675 = vector.multi_reduction <add>, %674, %cst_291 [1] : vector<6x32xf32> to vector<6xf32>
    %676 = vector.shape_cast %675 : vector<6xf32> to vector<6x1xf32>
    %cst_292 = arith.constant 3.200000e+01 : f32
    %677 = vector.broadcast %cst_292 : f32 to vector<6x1xf32>
    %678 = arith.divf %676, %677 : vector<6x1xf32>
    %679 = vector.broadcast %671 : vector<6x1xf32> to vector<6x32xf32>
    %680 = arith.subf %667, %679 : vector<6x32xf32>
    %cst_293 = arith.constant 9.99999974E-6 : f32
    %681 = vector.broadcast %cst_293 : f32 to vector<6x1xf32>
    %682 = arith.addf %678, %681 : vector<6x1xf32>
    %683 = math.rsqrt %682 : vector<6x1xf32>
    %684 = vector.broadcast %683 : vector<6x1xf32> to vector<6x32xf32>
    %685 = arith.mulf %680, %684 : vector<6x32xf32>
    %686 = vector.broadcast %219 : vector<1x32xf32> to vector<6x32xf32>
    %687 = arith.mulf %685, %686 : vector<6x32xf32>
    %688 = vector.broadcast %220 : vector<1x32xf32> to vector<6x32xf32>
    %689 = arith.addf %687, %688 : vector<6x32xf32>
    %c0_294 = arith.constant 0 : index
    %c0_295 = arith.constant 0 : index
    %690 = vector.load %arg43[%c0_294, %c0_295] : memref<1x32xf32, #tpu.memory_space<vmem>>, vector<1x32xf32>
    %c0_296 = arith.constant 0 : index
    %c0_297 = arith.constant 0 : index
    %691 = vector.load %arg44[%c0_296, %c0_297] : memref<1x32xf32, #tpu.memory_space<vmem>>, vector<1x32xf32>
    %cst_298 = arith.constant dense<0.000000e+00> : vector<6xf32>
    %692 = vector.multi_reduction <add>, %689, %cst_298 [1] : vector<6x32xf32> to vector<6xf32>
    %693 = vector.shape_cast %692 : vector<6xf32> to vector<6x1xf32>
    %cst_299 = arith.constant 3.200000e+01 : f32
    %694 = vector.broadcast %cst_299 : f32 to vector<6x1xf32>
    %695 = arith.divf %693, %694 : vector<6x1xf32>
    %696 = vector.broadcast %695 : vector<6x1xf32> to vector<6x32xf32>
    %697 = arith.subf %689, %696 : vector<6x32xf32>
    %698 = arith.mulf %697, %697 : vector<6x32xf32>
    %cst_300 = arith.constant dense<0.000000e+00> : vector<6xf32>
    %699 = vector.multi_reduction <add>, %698, %cst_300 [1] : vector<6x32xf32> to vector<6xf32>
    %700 = vector.shape_cast %699 : vector<6xf32> to vector<6x1xf32>
    %cst_301 = arith.constant 3.200000e+01 : f32
    %701 = vector.broadcast %cst_301 : f32 to vector<6x1xf32>
    %702 = arith.divf %700, %701 : vector<6x1xf32>
    %703 = vector.broadcast %695 : vector<6x1xf32> to vector<6x32xf32>
    %704 = arith.subf %689, %703 : vector<6x32xf32>
    %cst_302 = arith.constant 9.99999974E-6 : f32
    %705 = vector.broadcast %cst_302 : f32 to vector<6x1xf32>
    %706 = arith.addf %702, %705 : vector<6x1xf32>
    %707 = math.rsqrt %706 : vector<6x1xf32>
    %708 = vector.broadcast %707 : vector<6x1xf32> to vector<6x32xf32>
    %709 = arith.mulf %704, %708 : vector<6x32xf32>
    %710 = vector.broadcast %690 : vector<1x32xf32> to vector<6x32xf32>
    %711 = arith.mulf %709, %710 : vector<6x32xf32>
    %712 = vector.broadcast %691 : vector<1x32xf32> to vector<6x32xf32>
    %713 = arith.addf %711, %712 : vector<6x32xf32>
    %c0_303 = arith.constant 0 : index
    %c0_304 = arith.constant 0 : index
    %714 = vector.load %arg45[%c0_303, %c0_304] : memref<32x1xf32, #tpu.memory_space<vmem>>, vector<32x1xf32>
    %c0_305 = arith.constant 0 : index
    %c0_306 = arith.constant 0 : index
    %715 = vector.load %arg46[%c0_305, %c0_306] : memref<1x1xf32, #tpu.memory_space<vmem>>, vector<1x1xf32>
    %cst_307 = arith.constant dense<0.000000e+00> : vector<6x1xf32>
    %716 = tpu.matmul %713, %714, %cst_307 {dimension_numbers = #tpu.dot_dimension_numbers<[1], [0], [0], [1], [0, 0, 1, 1], [], []>} : vector<6x32xf32>, vector<32x1xf32>, vector<6x1xf32> -> vector<6x1xf32>
    %717 = vector.broadcast %715 : vector<1x1xf32> to vector<6x1xf32>
    %718 = arith.addf %716, %717 : vector<6x1xf32>
    %c0_308 = arith.constant 0 : index
    %c0_309 = arith.constant 0 : index
    %c0_310 = arith.constant 0 : index
    %719 = vector.load %arg47[%c0_308, %c0_309, %c0_310] : memref<1x6x1xf32, #tpu.memory_space<vmem>>, vector<1x6x1xf32>
    %720 = vector.shape_cast %719 : vector<1x6x1xf32> to vector<6x1xf32>
    %721 = vector.shape_cast %718 : vector<6x1xf32> to vector<1x6x1xf32>
    tpu.vector_store %arg47[%c0_308, %c0_309, %c0_310], %721 {strides = array<i32>} : memref<1x6x1xf32, #tpu.memory_space<vmem>>, vector<1x6x1xf32>,
    return
  }
  func.func @transform_0(%arg0: i32) -> (i32, i32, i32) {
    %c0_i32 = arith.constant 0 : i32
    %c0_i32_0 = arith.constant 0 : i32
    %c0_i32_1 = arith.constant 0 : i32
    return %arg0, %c0_i32, %c0_i32_0 : i32, i32, i32
  }
  func.func @transform_1(%arg0: i32) -> (i32, i32, i32) {
    %c0_i32 = arith.constant 0 : i32
    %c0_i32_0 = arith.constant 0 : i32
    %c0_i32_1 = arith.constant 0 : i32
    return %arg0, %c0_i32, %c0_i32_0 : i32, i32, i32
  }
  func.func @transform_2(%arg0: i32) -> (i32, i32) {
    %c0_i32 = arith.constant 0 : i32
    %c0_i32_0 = arith.constant 0 : i32
    %c0_i32_1 = arith.constant 0 : i32
    return %c0_i32, %c0_i32_0 : i32, i32
  }
  func.func @transform_3(%arg0: i32) -> (i32, i32) {
    %c0_i32 = arith.constant 0 : i32
    %c0_i32_0 = arith.constant 0 : i32
    %c0_i32_1 = arith.constant 0 : i32
    return %c0_i32, %c0_i32_0 : i32, i32
  }
  func.func @transform_4(%arg0: i32) -> (i32, i32) {
    %c0_i32 = arith.constant 0 : i32
    %c0_i32_0 = arith.constant 0 : i32
    %c0_i32_1 = arith.constant 0 : i32
    return %c0_i32, %c0_i32_0 : i32, i32
  }
  func.func @transform_5(%arg0: i32) -> (i32, i32) {
    %c0_i32 = arith.constant 0 : i32
    %c0_i32_0 = arith.constant 0 : i32
    %c0_i32_1 = arith.constant 0 : i32
    return %c0_i32, %c0_i32_0 : i32, i32
  }
  func.func @transform_6(%arg0: i32) -> (i32, i32) {
    %c0_i32 = arith.constant 0 : i32
    %c0_i32_0 = arith.constant 0 : i32
    %c0_i32_1 = arith.constant 0 : i32
    return %c0_i32, %c0_i32_0 : i32, i32
  }
  func.func @transform_7(%arg0: i32) -> (i32, i32) {
    %c0_i32 = arith.constant 0 : i32
    %c0_i32_0 = arith.constant 0 : i32
    %c0_i32_1 = arith.constant 0 : i32
    return %c0_i32, %c0_i32_0 : i32, i32
  }
  func.func @transform_8(%arg0: i32) -> (i32, i32) {
    %c0_i32 = arith.constant 0 : i32
    %c0_i32_0 = arith.constant 0 : i32
    %c0_i32_1 = arith.constant 0 : i32
    return %c0_i32, %c0_i32_0 : i32, i32
  }
  func.func @transform_9(%arg0: i32) -> (i32, i32) {
    %c0_i32 = arith.constant 0 : i32
    %c0_i32_0 = arith.constant 0 : i32
    %c0_i32_1 = arith.constant 0 : i32
    return %c0_i32, %c0_i32_0 : i32, i32
  }
  func.func @transform_10(%arg0: i32) -> (i32, i32) {
    %c0_i32 = arith.constant 0 : i32
    %c0_i32_0 = arith.constant 0 : i32
    %c0_i32_1 = arith.constant 0 : i32
    return %c0_i32, %c0_i32_0 : i32, i32
  }
  func.func @transform_11(%arg0: i32) -> (i32, i32) {
    %c0_i32 = arith.constant 0 : i32
    %c0_i32_0 = arith.constant 0 : i32
    %c0_i32_1 = arith.constant 0 : i32
    return %c0_i32, %c0_i32_0 : i32, i32
  }
  func.func @transform_12(%arg0: i32) -> (i32, i32) {
    %c0_i32 = arith.constant 0 : i32
    %c0_i32_0 = arith.constant 0 : i32
    %c0_i32_1 = arith.constant 0 : i32
    return %c0_i32, %c0_i32_0 : i32, i32
  }
  func.func @transform_13(%arg0: i32) -> (i32, i32) {
    %c0_i32 = arith.constant 0 : i32
    %c0_i32_0 = arith.constant 0 : i32
    %c0_i32_1 = arith.constant 0 : i32
    return %c0_i32, %c0_i32_0 : i32, i32
  }
  func.func @transform_14(%arg0: i32) -> (i32, i32) {
    %c0_i32 = arith.constant 0 : i32
    %c0_i32_0 = arith.constant 0 : i32
    %c0_i32_1 = arith.constant 0 : i32
    return %c0_i32, %c0_i32_0 : i32, i32
  }
  func.func @transform_15(%arg0: i32) -> (i32, i32) {
    %c0_i32 = arith.constant 0 : i32
    %c0_i32_0 = arith.constant 0 : i32
    %c0_i32_1 = arith.constant 0 : i32
    return %c0_i32, %c0_i32_0 : i32, i32
  }
  func.func @transform_16(%arg0: i32) -> (i32, i32) {
    %c0_i32 = arith.constant 0 : i32
    %c0_i32_0 = arith.constant 0 : i32
    %c0_i32_1 = arith.constant 0 : i32
    return %c0_i32, %c0_i32_0 : i32, i32
  }
  func.func @transform_17(%arg0: i32) -> (i32, i32) {
    %c0_i32 = arith.constant 0 : i32
    %c0_i32_0 = arith.constant 0 : i32
    %c0_i32_1 = arith.constant 0 : i32
    return %c0_i32, %c0_i32_0 : i32, i32
  }
  func.func @transform_18(%arg0: i32) -> (i32, i32) {
    %c0_i32 = arith.constant 0 : i32
    %c0_i32_0 = arith.constant 0 : i32
    %c0_i32_1 = arith.constant 0 : i32
    return %c0_i32, %c0_i32_0 : i32, i32
  }
  func.func @transform_19(%arg0: i32) -> (i32, i32) {
    %c0_i32 = arith.constant 0 : i32
    %c0_i32_0 = arith.constant 0 : i32
    %c0_i32_1 = arith.constant 0 : i32
    return %c0_i32, %c0_i32_0 : i32, i32
  }
  func.func @transform_20(%arg0: i32) -> (i32, i32) {
    %c0_i32 = arith.constant 0 : i32
    %c0_i32_0 = arith.constant 0 : i32
    %c0_i32_1 = arith.constant 0 : i32
    return %c0_i32, %c0_i32_0 : i32, i32
  }
  func.func @transform_21(%arg0: i32) -> (i32, i32) {
    %c0_i32 = arith.constant 0 : i32
    %c0_i32_0 = arith.constant 0 : i32
    %c0_i32_1 = arith.constant 0 : i32
    return %c0_i32, %c0_i32_0 : i32, i32
  }
  func.func @transform_22(%arg0: i32) -> (i32, i32) {
    %c0_i32 = arith.constant 0 : i32
    %c0_i32_0 = arith.constant 0 : i32
    %c0_i32_1 = arith.constant 0 : i32
    return %c0_i32, %c0_i32_0 : i32, i32
  }
  func.func @transform_23(%arg0: i32) -> (i32, i32) {
    %c0_i32 = arith.constant 0 : i32
    %c0_i32_0 = arith.constant 0 : i32
    %c0_i32_1 = arith.constant 0 : i32
    return %c0_i32, %c0_i32_0 : i32, i32
  }
  func.func @transform_24(%arg0: i32) -> (i32, i32) {
    %c0_i32 = arith.constant 0 : i32
    %c0_i32_0 = arith.constant 0 : i32
    %c0_i32_1 = arith.constant 0 : i32
    return %c0_i32, %c0_i32_0 : i32, i32
  }
  func.func @transform_25(%arg0: i32) -> (i32, i32) {
    %c0_i32 = arith.constant 0 : i32
    %c0_i32_0 = arith.constant 0 : i32
    %c0_i32_1 = arith.constant 0 : i32
    return %c0_i32, %c0_i32_0 : i32, i32
  }
  func.func @transform_26(%arg0: i32) -> (i32, i32) {
    %c0_i32 = arith.constant 0 : i32
    %c0_i32_0 = arith.constant 0 : i32
    %c0_i32_1 = arith.constant 0 : i32
    return %c0_i32, %c0_i32_0 : i32, i32
  }
  func.func @transform_27(%arg0: i32) -> (i32, i32) {
    %c0_i32 = arith.constant 0 : i32
    %c0_i32_0 = arith.constant 0 : i32
    %c0_i32_1 = arith.constant 0 : i32
    return %c0_i32, %c0_i32_0 : i32, i32
  }
  func.func @transform_28(%arg0: i32) -> (i32, i32) {
    %c0_i32 = arith.constant 0 : i32
    %c0_i32_0 = arith.constant 0 : i32
    %c0_i32_1 = arith.constant 0 : i32
    return %c0_i32, %c0_i32_0 : i32, i32
  }
  func.func @transform_29(%arg0: i32) -> (i32, i32) {
    %c0_i32 = arith.constant 0 : i32
    %c0_i32_0 = arith.constant 0 : i32
    %c0_i32_1 = arith.constant 0 : i32
    return %c0_i32, %c0_i32_0 : i32, i32
  }
  func.func @transform_30(%arg0: i32) -> (i32, i32) {
    %c0_i32 = arith.constant 0 : i32
    %c0_i32_0 = arith.constant 0 : i32
    %c0_i32_1 = arith.constant 0 : i32
    return %c0_i32, %c0_i32_0 : i32, i32
  }
  func.func @transform_31(%arg0: i32) -> (i32, i32) {
    %c0_i32 = arith.constant 0 : i32
    %c0_i32_0 = arith.constant 0 : i32
    %c0_i32_1 = arith.constant 0 : i32
    return %c0_i32, %c0_i32_0 : i32, i32
  }
  func.func @transform_32(%arg0: i32) -> (i32, i32) {
    %c0_i32 = arith.constant 0 : i32
    %c0_i32_0 = arith.constant 0 : i32
    %c0_i32_1 = arith.constant 0 : i32
    return %c0_i32, %c0_i32_0 : i32, i32
  }
  func.func @transform_33(%arg0: i32) -> (i32, i32) {
    %c0_i32 = arith.constant 0 : i32
    %c0_i32_0 = arith.constant 0 : i32
    %c0_i32_1 = arith.constant 0 : i32
    return %c0_i32, %c0_i32_0 : i32, i32
  }
  func.func @transform_34(%arg0: i32) -> (i32, i32) {
    %c0_i32 = arith.constant 0 : i32
    %c0_i32_0 = arith.constant 0 : i32
    %c0_i32_1 = arith.constant 0 : i32
    return %c0_i32, %c0_i32_0 : i32, i32
  }
  func.func @transform_35(%arg0: i32) -> (i32, i32) {
    %c0_i32 = arith.constant 0 : i32
    %c0_i32_0 = arith.constant 0 : i32
    %c0_i32_1 = arith.constant 0 : i32
    return %c0_i32, %c0_i32_0 : i32, i32
  }
  func.func @transform_36(%arg0: i32) -> (i32, i32) {
    %c0_i32 = arith.constant 0 : i32
    %c0_i32_0 = arith.constant 0 : i32
    %c0_i32_1 = arith.constant 0 : i32
    return %c0_i32, %c0_i32_0 : i32, i32
  }
  func.func @transform_37(%arg0: i32) -> (i32, i32) {
    %c0_i32 = arith.constant 0 : i32
    %c0_i32_0 = arith.constant 0 : i32
    %c0_i32_1 = arith.constant 0 : i32
    return %c0_i32, %c0_i32_0 : i32, i32
  }
  func.func @transform_38(%arg0: i32) -> (i32, i32) {
    %c0_i32 = arith.constant 0 : i32
    %c0_i32_0 = arith.constant 0 : i32
    %c0_i32_1 = arith.constant 0 : i32
    return %c0_i32, %c0_i32_0 : i32, i32
  }
  func.func @transform_39(%arg0: i32) -> (i32, i32) {
    %c0_i32 = arith.constant 0 : i32
    %c0_i32_0 = arith.constant 0 : i32
    %c0_i32_1 = arith.constant 0 : i32
    return %c0_i32, %c0_i32_0 : i32, i32
  }
  func.func @transform_40(%arg0: i32) -> (i32, i32) {
    %c0_i32 = arith.constant 0 : i32
    %c0_i32_0 = arith.constant 0 : i32
    %c0_i32_1 = arith.constant 0 : i32
    return %c0_i32, %c0_i32_0 : i32, i32
  }
  func.func @transform_41(%arg0: i32) -> (i32, i32) {
    %c0_i32 = arith.constant 0 : i32
    %c0_i32_0 = arith.constant 0 : i32
    %c0_i32_1 = arith.constant 0 : i32
    return %c0_i32, %c0_i32_0 : i32, i32
  }
  func.func @transform_42(%arg0: i32) -> (i32, i32) {
    %c0_i32 = arith.constant 0 : i32
    %c0_i32_0 = arith.constant 0 : i32
    %c0_i32_1 = arith.constant 0 : i32
    return %c0_i32, %c0_i32_0 : i32, i32
  }
  func.func @transform_43(%arg0: i32) -> (i32, i32) {
    %c0_i32 = arith.constant 0 : i32
    %c0_i32_0 = arith.constant 0 : i32
    %c0_i32_1 = arith.constant 0 : i32
    return %c0_i32, %c0_i32_0 : i32, i32
  }
  func.func @transform_44(%arg0: i32) -> (i32, i32) {
    %c0_i32 = arith.constant 0 : i32
    %c0_i32_0 = arith.constant 0 : i32
    %c0_i32_1 = arith.constant 0 : i32
    return %c0_i32, %c0_i32_0 : i32, i32
  }
  func.func @transform_45(%arg0: i32) -> (i32, i32) {
    %c0_i32 = arith.constant 0 : i32
    %c0_i32_0 = arith.constant 0 : i32
    %c0_i32_1 = arith.constant 0 : i32
    return %c0_i32, %c0_i32_0 : i32, i32
  }
  func.func @transform_46(%arg0: i32) -> (i32, i32, i32) {
    %c0_i32 = arith.constant 0 : i32
    %c0_i32_0 = arith.constant 0 : i32
    %c0_i32_1 = arith.constant 0 : i32
    return %arg0, %c0_i32, %c0_i32_0 : i32, i32, i32
  }
}

</mosaic_0001>

<llo_original>
// kernel: prt_plus_forward.1
$region0: #{prt_plus_forward.1}
  #allocation0 [shape = 'u32[]', space=smem, size = 0x4, offset = 0x4, fixed_abs, tag = 'smem constant byte address 0x4 - core index']
  #allocation1 [shape = 'u32[144,128]{1,0:T(1,128)}', space=vmem, size = 0x12000, scoped, tag = 'internal scratch']
  #allocation2 [shape = 'f32[1,1]{1,0:T(1,128)S(1)}', space=vmem, size = 0x200, scoped, tag = 'scoped memory for prt_plus_forward.1']
  %s0 = inlined_call_operand.smem [shape: u32[47], index: -1, kind: input, shape index: {}]
  %s1 = sld [smem:[%s0]]
  %s2 = scalar_lea.smem %s0, 1
  %s3 = sld [smem:[%s2]]
  %s4 = scalar_lea.smem %s0, 2
  %s5 = sld [smem:[%s4]]
  %s6 = scalar_lea.smem %s0, 3
  %s7 = sld [smem:[%s6]]
  %s8 = scalar_lea.smem %s0, 4
  %s9 = sld [smem:[%s8]]
  %s10 = scalar_lea.smem %s0, 5
  %s11 = sld [smem:[%s10]]
  %s12 = scalar_lea.smem %s0, 6
  %s13 = sld [smem:[%s12]]
  %s14 = scalar_lea.smem %s0, 7
  %s15 = sld [smem:[%s14]]
  %s16 = scalar_lea.smem %s0, 8
  %s17 = sld [smem:[%s16]]
  %s18 = scalar_lea.smem %s0, 9
  %s19 = sld [smem:[%s18]]
  %s20 = scalar_lea.smem %s0, 10
  %s21 = sld [smem:[%s20]]
  %s22 = scalar_lea.smem %s0, 11
  %s23 = sld [smem:[%s22]]
  %s24 = scalar_lea.smem %s0, 12
  %s25 = sld [smem:[%s24]]
  %s26 = scalar_lea.smem %s0, 13
  %s27 = sld [smem:[%s26]]
  %s28 = scalar_lea.smem %s0, 14
  %s29 = sld [smem:[%s28]]
  %s30 = scalar_lea.smem %s0, 15
  %s31 = sld [smem:[%s30]]
  %s32 = scalar_lea.smem %s0, 16
  %s33 = sld [smem:[%s32]]
  %s34 = scalar_lea.smem %s0, 17
  %s35 = sld [smem:[%s34]]
  %s36 = scalar_lea.smem %s0, 18
  %s37 = sld [smem:[%s36]]
  %s38 = scalar_lea.smem %s0, 19
  %s39 = sld [smem:[%s38]]
  %s40 = scalar_lea.smem %s0, 20
  %s41 = sld [smem:[%s40]]
  %s42 = scalar_lea.smem %s0, 21
  %s43 = sld [smem:[%s42]]
  %s44 = scalar_lea.smem %s0, 22
  %s45 = sld [smem:[%s44]]
  %s46 = scalar_lea.smem %s0, 23
  %s47 = sld [smem:[%s46]]
  %s48 = scalar_lea.smem %s0, 24
  %s49 = sld [smem:[%s48]]
  %s50 = scalar_lea.smem %s0, 25
  %s51 = sld [smem:[%s50]]
  %s52 = scalar_lea.smem %s0, 26
  %s53 = sld [smem:[%s52]]
  %s54 = scalar_lea.smem %s0, 27
  %s55 = sld [smem:[%s54]]
  %s56 = scalar_lea.smem %s0, 28
  %s57 = sld [smem:[%s56]]
  %s58 = scalar_lea.smem %s0, 29
  %s59 = sld [smem:[%s58]]
  %s60 = scalar_lea.smem %s0, 30
  %s61 = sld [smem:[%s60]]
  %s62 = scalar_lea.smem %s0, 31
  %s63 = sld [smem:[%s62]]
  %s64 = scalar_lea.smem %s0, 32
  %s65 = sld [smem:[%s64]]
  %s66 = scalar_lea.smem %s0, 33
  %s67 = sld [smem:[%s66]]
  %s68 = scalar_lea.smem %s0, 34
  %s69 = sld [smem:[%s68]]
  %s70 = scalar_lea.smem %s0, 35
  %s71 = sld [smem:[%s70]]
  %s72 = scalar_lea.smem %s0, 36
  %s73 = sld [smem:[%s72]]
  %s74 = scalar_lea.smem %s0, 37
  %s75 = sld [smem:[%s74]]
  %s76 = scalar_lea.smem %s0, 38
  %s77 = sld [smem:[%s76]]
  %s78 = scalar_lea.smem %s0, 39
  %s79 = sld [smem:[%s78]]
  %s80 = scalar_lea.smem %s0, 40
  %s81 = sld [smem:[%s80]]
  %s82 = scalar_lea.smem %s0, 41
  %s83 = sld [smem:[%s82]]
  %s84 = scalar_lea.smem %s0, 42
  %s85 = sld [smem:[%s84]]
  %s86 = scalar_lea.smem %s0, 43
  %s87 = sld [smem:[%s86]]
  %s88 = scalar_lea.smem %s0, 44
  %s89 = sld [smem:[%s88]]
  %s90 = scalar_lea.smem %s0, 45
  %s91 = sld [smem:[%s90]]
  %s92 = scalar_lea.smem %s0, 46
  %s93 = sld [smem:[%s92]]
  %s94 = sld [smem:[#allocation0]]
  $region233: #{prt_plus_forward.1} parent=0
    _
  %s96 = ssub.s32 1, %s94
  %s97 = scalar_select 0, %s96, %s94
  %v98 = vstv %s91
  %99 = vst [vmem:[#allocation2] sm:$0x1] %v98
  $region1: #{prt_plus_forward.1} parent=0
    #allocation3 [shape = 'u8[512]{0}', space=vmem, size = 0x400, scoped, tag = 'input window, operand 40, single buffered']
    #allocation4 [shape = 's32[2]{0}', space=sflag, size = 0x8, scoped, tag = 'scoped memory for prt_plus_forward.1']
    #allocation5 [shape = 'u8[512]{0}', space=vmem, size = 0x400, scoped, tag = 'input window, operand 41, single buffered']
    #allocation6 [shape = 's32[1]{0}', space=sflag, size = 0x4, scoped, tag = 'scoped memory for prt_plus_forward.1']
    #allocation7 [shape = 'u8[512]{0}', space=vmem, size = 0x400, scoped, tag = 'input window, operand 42, single buffered']
    #allocation8 [shape = 'u8[512]{0}', space=vmem, size = 0x400, scoped, tag = 'input window, operand 43, single buffered']
    #allocation9 [shape = 's32[1]{0}', space=sflag, size = 0x4, scoped, tag = 'scoped memory for prt_plus_forward.1']
    %100 = vsyncpa [#allocation4], 0
    %101 = vsyncpa [#allocation6], 0
    %102 = vsyncpa [#allocation9], 0
    loop: start=0, step=1, limit=4
    $region2: #{prt_plus_forward.1} parent=1 // loop_pre_header
      _
    $region3: #{prt_plus_forward.1} parent=1 // loop_header
      %s104 = sphi 0, %s108
      %p105 = scmp.ge.s32.totalorder %s104, 4
      %s114 = sphi 0, %s116
      %s117 = sphi 0, %s114
      %s118 = sphi 0, %s117
      %s134 = sphi 0, %s118
      %s140 = sphi 0, %s142
      %s143 = sphi 0, %s140
      %s144 = sphi 0, %s143
      %s160 = sphi 0, %s144
      %s164 = sphi 0, %s164
      %s166 = sphi 0, %s164
      %s167 = sphi 0, %s166
      %s181 = sphi 0, %s167
      %s185 = sphi 0, %s185
      %s187 = sphi 0, %s185
      %s188 = sphi 0, %s187
      %s202 = sphi 0, %s188
      %s206 = sphi 0, %s206
      %s208 = sphi 0, %s206
      %s209 = sphi 0, %s208
      %s223 = sphi 0, %s209
      %s227 = sphi 0, %s227
      %s229 = sphi 0, %s227
      %s230 = sphi 0, %s229
      %s244 = sphi 0, %s230
      %s248 = sphi 0, %s248
      %s250 = sphi 0, %s248
      %s251 = sphi 0, %s250
      %s265 = sphi 0, %s251
      %s269 = sphi 0, %s269
      %s271 = sphi 0, %s269
      %s272 = sphi 0, %s271
      %s286 = sphi 0, %s272
      %s290 = sphi 0, %s290
      %s292 = sphi 0, %s290
      %s293 = sphi 0, %s292
      %s307 = sphi 0, %s293
      %s311 = sphi 0, %s311
      %s313 = sphi 0, %s311
      %s314 = sphi 0, %s313
      %s328 = sphi 0, %s314
      %s332 = sphi 0, %s332
      %s334 = sphi 0, %s332
      %s335 = sphi 0, %s334
      %s349 = sphi 0, %s335
      %s353 = sphi 0, %s353
      %s355 = sphi 0, %s353
      %s356 = sphi 0, %s355
      %s370 = sphi 0, %s356
      %s374 = sphi 0, %s374
      %s376 = sphi 0, %s374
      %s377 = sphi 0, %s376
      %s391 = sphi 0, %s377
      %s395 = sphi 0, %s395
      %s397 = sphi 0, %s395
      %s398 = sphi 0, %s397
      %s412 = sphi 0, %s398
      %s416 = sphi 0, %s416
      %s418 = sphi 0, %s416
      %s419 = sphi 0, %s418
      %s433 = sphi 0, %s419
      %s437 = sphi 0, %s437
      %s439 = sphi 0, %s437
      %s440 = sphi 0, %s439
      %s454 = sphi 0, %s440
      %s458 = sphi 0, %s458
      %s460 = sphi 0, %s458
      %s461 = sphi 0, %s460
      %s475 = sphi 0, %s461
      %s479 = sphi 0, %s479
      %s481 = sphi 0, %s479
      %s482 = sphi 0, %s481
      %s496 = sphi 0, %s482
      %s500 = sphi 0, %s500
      %s502 = sphi 0, %s500
      %s503 = sphi 0, %s502
      %s517 = sphi 0, %s503
      %s521 = sphi 0, %s521
      %s523 = sphi 0, %s521
      %s524 = sphi 0, %s523
      %s538 = sphi 0, %s524
      %s542 = sphi 0, %s542
      %s544 = sphi 0, %s542
      %s545 = sphi 0, %s544
      %s559 = sphi 0, %s545
      %s563 = sphi 0, %s563
      %s565 = sphi 0, %s563
      %s566 = sphi 0, %s565
      %s580 = sphi 0, %s566
      %s584 = sphi 0, %s584
      %s586 = sphi 0, %s584
      %s587 = sphi 0, %s586
      %s601 = sphi 0, %s587
      %s605 = sphi 0, %s605
      %s607 = sphi 0, %s605
      %s608 = sphi 0, %s607
      %s622 = sphi 0, %s608
      %s626 = sphi 0, %s626
      %s628 = sphi 0, %s626
      %s629 = sphi 0, %s628
      %s643 = sphi 0, %s629
      %s647 = sphi 0, %s647
      %s649 = sphi 0, %s647
      %s650 = sphi 0, %s649
      %s664 = sphi 0, %s650
      %s668 = sphi 0, %s668
      %s670 = sphi 0, %s668
      %s671 = sphi 0, %s670
      %s685 = sphi 0, %s671
      %s689 = sphi 0, %s689
      %s691 = sphi 0, %s689
      %s692 = sphi 0, %s691
      %s706 = sphi 0, %s692
      %s710 = sphi 0, %s710
      %s712 = sphi 0, %s710
      %s713 = sphi 0, %s712
      %s727 = sphi 0, %s713
      %s731 = sphi 0, %s731
      %s733 = sphi 0, %s731
      %s734 = sphi 0, %s733
      %s748 = sphi 0, %s734
      %s752 = sphi 0, %s752
      %s754 = sphi 0, %s752
      %s755 = sphi 0, %s754
      %s769 = sphi 0, %s755
      %s773 = sphi 0, %s773
      %s775 = sphi 0, %s773
      %s776 = sphi 0, %s775
      %s790 = sphi 0, %s776
      %s794 = sphi 0, %s794
      %s796 = sphi 0, %s794
      %s797 = sphi 0, %s796
      %s811 = sphi 0, %s797
      %s815 = sphi 0, %s815
      %s817 = sphi 0, %s815
      %s818 = sphi 0, %s817
      %s832 = sphi 0, %s818
      %s836 = sphi 0, %s836
      %s838 = sphi 0, %s836
      %s839 = sphi 0, %s838
      %s853 = sphi 0, %s839
      %s857 = sphi 0, %s857
      %s859 = sphi 0, %s857
      %s860 = sphi 0, %s859
      %s874 = sphi 0, %s860
      %s878 = sphi 0, %s878
      %s880 = sphi 0, %s878
      %s881 = sphi 0, %s880
      %s895 = sphi 0, %s881
      %s899 = sphi 0, %s899
      %s901 = sphi 0, %s899
      %s902 = sphi 0, %s901
      %s916 = sphi 0, %s902
      %s920 = sphi 0, %s920
      %s922 = sphi 0, %s920
      %s923 = sphi 0, %s922
      %s937 = sphi 0, %s923
      %s941 = sphi 0, %s941
      %s943 = sphi 0, %s941
      %s944 = sphi 0, %s943
      %s958 = sphi 0, %s944
      %s962 = sphi 0, %s962
      %s964 = sphi 0, %s962
      %s965 = sphi 0, %s964
      %s979 = sphi 0, %s965
      %s983 = sphi 0, %s983
      %s985 = sphi 0, %s983
      %s986 = sphi 0, %s985
      %s1000 = sphi 0, %s986
      %s1004 = sphi 0, %s1004
      %s1006 = sphi 0, %s1004
      %s1007 = sphi 0, %s1006
      %s1021 = sphi 0, %s1007
      %s1025 = sphi 0, %s1025
      %s1027 = sphi 0, %s1025
      %s1028 = sphi 0, %s1027
      %s1042 = sphi 0, %s1028
      %s1046 = sphi 0, %s1046
      %s1048 = sphi 0, %s1046
      %s1049 = sphi 0, %s1048
      %s1063 = sphi 0, %s1049
      %s1067 = sphi 0, %s1067
      %s1069 = sphi 0, %s1067
      %s1070 = sphi 0, %s1069
      %s1084 = sphi 0, %s1070
      %s1090 = sphi 0, %s1092
      %s1093 = sphi 0, %s1090
      %s1094 = sphi 0, %s1093
      %s1110 = sphi 0, %s1094
    $region4: #{prt_plus_forward.1} parent=1 // loop_header_branch
      %107 = sbr.rel (%p105) target = $region8
    $region5: #{prt_plus_forward.1} parent=1 // loop_body
      %s109 = ssub.s32 %s104, 1
      %s110 = ssub.s32 %s104, 2
      %s111 = sadd.s32 %s104, 1
      %s112 = ssub.s32 %s104, %s111
      %p113 = scmp.eq.s32.totalorder %s112, 0
      %s115 = sadd.s32 %s114, 1
      %s116 = scalar_select %p113, %s114, %s115
      %p119 = pneg %p113
      %p120 = scmp.eq.s32.totalorder %s104, 1
      %p121 = por %p119, %p120
      %p122 = scmp.ne.s32.totalorder %s114, %s117
      %p123 = scmp.eq.s32.totalorder %s104, 0
      %p124 = por %p122, %p123
      %p125 = scmp.ne.s32.totalorder %s114, %s117
      %p126 = scmp.eq.s32.totalorder %s109, 1
      %p127 = por %p125, %p126
      %p128 = scmp.ne.s32.totalorder %s117, %s118
      %p129 = scmp.eq.s32.totalorder %s109, 0
      %p130 = por %p128, %p129
      %p131 = scmp.ne.s32.totalorder %s117, %s118
      %p132 = scmp.eq.s32.totalorder %s110, 1
      %p133 = por %p131, %p132
      %p135 = scmp.ne.s32.totalorder %s118, %s134
      %p136 = scmp.eq.s32.totalorder %s110, 0
      %p137 = por %p135, %p136
      %s138 = ssub.s32 %s104, %s111
      %p139 = scmp.eq.s32.totalorder %s138, 0
      %s141 = sadd.s32 %s140, 1
      %s142 = scalar_select %p139, %s140, %s141
      %p145 = pneg %p139
      %p146 = scmp.eq.s32.totalorder %s104, 1
      %p147 = por %p145, %p146
      %p148 = scmp.ne.s32.totalorder %s140, %s143
      %p149 = scmp.eq.s32.totalorder %s104, 0
      %p150 = por %p148, %p149
      %p151 = scmp.ne.s32.totalorder %s140, %s143
      %p152 = scmp.eq.s32.totalorder %s109, 1
      %p153 = por %p151, %p152
      %p154 = scmp.ne.s32.totalorder %s143, %s144
      %p155 = scmp.eq.s32.totalorder %s109, 0
      %p156 = por %p154, %p155
      %p157 = scmp.ne.s32.totalorder %s143, %s144
      %p158 = scmp.eq.s32.totalorder %s110, 1
      %p159 = por %p157, %p158
      %p161 = scmp.ne.s32.totalorder %s144, %s160
      %p162 = scmp.eq.s32.totalorder %s110, 0
      %p163 = por %p161, %p162
      %s165 = sadd.s32 %s164, 1
      %p168 = scmp.eq.s32.totalorder %s104, 1
      %p169 = scmp.ne.s32.totalorder %s164, %s166
      %p170 = scmp.eq.s32.totalorder %s104, 0
      %p171 = por %p169, %p170
      %p172 = scmp.ne.s32.totalorder %s164, %s166
      %p173 = scmp.eq.s32.totalorder %s109, 1
      %p174 = por %p172, %p173
      %p175 = scmp.ne.s32.totalorder %s166, %s167
      %p176 = scmp.eq.s32.totalorder %s109, 0
      %p177 = por %p175, %p176
      %p178 = scmp.ne.s32.totalorder %s166, %s167
      %p179 = scmp.eq.s32.totalorder %s110, 1
      %p180 = por %p178, %p179
      %p182 = scmp.ne.s32.totalorder %s167, %s181
      %p183 = scmp.eq.s32.totalorder %s110, 0
      %p184 = por %p182, %p183
      %s186 = sadd.s32 %s185, 1
      %p189 = scmp.eq.s32.totalorder %s104, 1
      %p190 = scmp.ne.s32.totalorder %s185, %s187
      %p191 = scmp.eq.s32.totalorder %s104, 0
      %p192 = por %p190, %p191
      %p193 = scmp.ne.s32.totalorder %s185, %s187
      %p194 = scmp.eq.s32.totalorder %s109, 1
      %p195 = por %p193, %p194
      %p196 = scmp.ne.s32.totalorder %s187, %s188
      %p197 = scmp.eq.s32.totalorder %s109, 0
      %p198 = por %p196, %p197
      %p199 = scmp.ne.s32.totalorder %s187, %s188
      %p200 = scmp.eq.s32.totalorder %s110, 1
      %p201 = por %p199, %p200
      %p203 = scmp.ne.s32.totalorder %s188, %s202
      %p204 = scmp.eq.s32.totalorder %s110, 0
      %p205 = por %p203, %p204
      %s207 = sadd.s32 %s206, 1
      %p210 = scmp.eq.s32.totalorder %s104, 1
      %p211 = scmp.ne.s32.totalorder %s206, %s208
      %p212 = scmp.eq.s32.totalorder %s104, 0
      %p213 = por %p211, %p212
      %p214 = scmp.ne.s32.totalorder %s206, %s208
      %p215 = scmp.eq.s32.totalorder %s109, 1
      %p216 = por %p214, %p215
      %p217 = scmp.ne.s32.totalorder %s208, %s209
      %p218 = scmp.eq.s32.totalorder %s109, 0
      %p219 = por %p217, %p218
      %p220 = scmp.ne.s32.totalorder %s208, %s209
      %p221 = scmp.eq.s32.totalorder %s110, 1
      %p222 = por %p220, %p221
      %p224 = scmp.ne.s32.totalorder %s209, %s223
      %p225 = scmp.eq.s32.totalorder %s110, 0
      %p226 = por %p224, %p225
      %s228 = sadd.s32 %s227, 1
      %p231 = scmp.eq.s32.totalorder %s104, 1
      %p232 = scmp.ne.s32.totalorder %s227, %s229
      %p233 = scmp.eq.s32.totalorder %s104, 0
      %p234 = por %p232, %p233
      %p235 = scmp.ne.s32.totalorder %s227, %s229
      %p236 = scmp.eq.s32.totalorder %s109, 1
      %p237 = por %p235, %p236
      %p238 = scmp.ne.s32.totalorder %s229, %s230
      %p239 = scmp.eq.s32.totalorder %s109, 0
      %p240 = por %p238, %p239
      %p241 = scmp.ne.s32.totalorder %s229, %s230
      %p242 = scmp.eq.s32.totalorder %s110, 1
      %p243 = por %p241, %p242
      %p245 = scmp.ne.s32.totalorder %s230, %s244
      %p246 = scmp.eq.s32.totalorder %s110, 0
      %p247 = por %p245, %p246
      %s249 = sadd.s32 %s248, 1
      %p252 = scmp.eq.s32.totalorder %s104, 1
      %p253 = scmp.ne.s32.totalorder %s248, %s250
      %p254 = scmp.eq.s32.totalorder %s104, 0
      %p255 = por %p253, %p254
      %p256 = scmp.ne.s32.totalorder %s248, %s250
      %p257 = scmp.eq.s32.totalorder %s109, 1
      %p258 = por %p256, %p257
      %p259 = scmp.ne.s32.totalorder %s250, %s251
      %p260 = scmp.eq.s32.totalorder %s109, 0
      %p261 = por %p259, %p260
      %p262 = scmp.ne.s32.totalorder %s250, %s251
      %p263 = scmp.eq.s32.totalorder %s110, 1
      %p264 = por %p262, %p263
      %p266 = scmp.ne.s32.totalorder %s251, %s265
      %p267 = scmp.eq.s32.totalorder %s110, 0
      %p268 = por %p266, %p267
      %s270 = sadd.s32 %s269, 1
      %p273 = scmp.eq.s32.totalorder %s104, 1
      %p274 = scmp.ne.s32.totalorder %s269, %s271
      %p275 = scmp.eq.s32.totalorder %s104, 0
      %p276 = por %p274, %p275
      %p277 = scmp.ne.s32.totalorder %s269, %s271
      %p278 = scmp.eq.s32.totalorder %s109, 1
      %p279 = por %p277, %p278
      %p280 = scmp.ne.s32.totalorder %s271, %s272
      %p281 = scmp.eq.s32.totalorder %s109, 0
      %p282 = por %p280, %p281
      %p283 = scmp.ne.s32.totalorder %s271, %s272
      %p284 = scmp.eq.s32.totalorder %s110, 1
      %p285 = por %p283, %p284
      %p287 = scmp.ne.s32.totalorder %s272, %s286
      %p288 = scmp.eq.s32.totalorder %s110, 0
      %p289 = por %p287, %p288
      %s291 = sadd.s32 %s290, 1
      %p294 = scmp.eq.s32.totalorder %s104, 1
      %p295 = scmp.ne.s32.totalorder %s290, %s292
      %p296 = scmp.eq.s32.totalorder %s104, 0
      %p297 = por %p295, %p296
      %p298 = scmp.ne.s32.totalorder %s290, %s292
      %p299 = scmp.eq.s32.totalorder %s109, 1
      %p300 = por %p298, %p299
      %p301 = scmp.ne.s32.totalorder %s292, %s293
      %p302 = scmp.eq.s32.totalorder %s109, 0
      %p303 = por %p301, %p302
      %p304 = scmp.ne.s32.totalorder %s292, %s293
      %p305 = scmp.eq.s32.totalorder %s110, 1
      %p306 = por %p304, %p305
      %p308 = scmp.ne.s32.totalorder %s293, %s307
      %p309 = scmp.eq.s32.totalorder %s110, 0
      %p310 = por %p308, %p309
      %s312 = sadd.s32 %s311, 1
      %p315 = scmp.eq.s32.totalorder %s104, 1
      %p316 = scmp.ne.s32.totalorder %s311, %s313
      %p317 = scmp.eq.s32.totalorder %s104, 0
      %p318 = por %p316, %p317
      %p319 = scmp.ne.s32.totalorder %s311, %s313
      %p320 = scmp.eq.s32.totalorder %s109, 1
      %p321 = por %p319, %p320
      %p322 = scmp.ne.s32.totalorder %s313, %s314
      %p323 = scmp.eq.s32.totalorder %s109, 0
      %p324 = por %p322, %p323
      %p325 = scmp.ne.s32.totalorder %s313, %s314
      %p326 = scmp.eq.s32.totalorder %s110, 1
      %p327 = por %p325, %p326
      %p329 = scmp.ne.s32.totalorder %s314, %s328
      %p330 = scmp.eq.s32.totalorder %s110, 0
      %p331 = por %p329, %p330
      %s333 = sadd.s32 %s332, 1
      %p336 = scmp.eq.s32.totalorder %s104, 1
      %p337 = scmp.ne.s32.totalorder %s332, %s334
      %p338 = scmp.eq.s32.totalorder %s104, 0
      %p339 = por %p337, %p338
      %p340 = scmp.ne.s32.totalorder %s332, %s334
      %p341 = scmp.eq.s32.totalorder %s109, 1
      %p342 = por %p340, %p341
      %p343 = scmp.ne.s32.totalorder %s334, %s335
      %p344 = scmp.eq.s32.totalorder %s109, 0
      %p345 = por %p343, %p344
      %p346 = scmp.ne.s32.totalorder %s334, %s335
      %p347 = scmp.eq.s32.totalorder %s110, 1
      %p348 = por %p346, %p347
      %p350 = scmp.ne.s32.totalorder %s335, %s349
      %p351 = scmp.eq.s32.totalorder %s110, 0
      %p352 = por %p350, %p351
      %s354 = sadd.s32 %s353, 1
      %p357 = scmp.eq.s32.totalorder %s104, 1
      %p358 = scmp.ne.s32.totalorder %s353, %s355
      %p359 = scmp.eq.s32.totalorder %s104, 0
      %p360 = por %p358, %p359
      %p361 = scmp.ne.s32.totalorder %s353, %s355
      %p362 = scmp.eq.s32.totalorder %s109, 1
      %p363 = por %p361, %p362
      %p364 = scmp.ne.s32.totalorder %s355, %s356
      %p365 = scmp.eq.s32.totalorder %s109, 0
      %p366 = por %p364, %p365
      %p367 = scmp.ne.s32.totalorder %s355, %s356
      %p368 = scmp.eq.s32.totalorder %s110, 1
      %p369 = por %p367, %p368
      %p371 = scmp.ne.s32.totalorder %s356, %s370
      %p372 = scmp.eq.s32.totalorder %s110, 0
      %p373 = por %p371, %p372
      %s375 = sadd.s32 %s374, 1
      %p378 = scmp.eq.s32.totalorder %s104, 1
      %p379 = scmp.ne.s32.totalorder %s374, %s376
      %p380 = scmp.eq.s32.totalorder %s104, 0
      %p381 = por %p379, %p380
      %p382 = scmp.ne.s32.totalorder %s374, %s376
      %p383 = scmp.eq.s32.totalorder %s109, 1
      %p384 = por %p382, %p383
      %p385 = scmp.ne.s32.totalorder %s376, %s377
      %p386 = scmp.eq.s32.totalorder %s109, 0
      %p387 = por %p385, %p386
      %p388 = scmp.ne.s32.totalorder %s376, %s377
      %p389 = scmp.eq.s32.totalorder %s110, 1
      %p390 = por %p388, %p389
      %p392 = scmp.ne.s32.totalorder %s377, %s391
      %p393 = scmp.eq.s32.totalorder %s110, 0
      %p394 = por %p392, %p393
      %s396 = sadd.s32 %s395, 1
      %p399 = scmp.eq.s32.totalorder %s104, 1
      %p400 = scmp.ne.s32.totalorder %s395, %s397
      %p401 = scmp.eq.s32.totalorder %s104, 0
      %p402 = por %p400, %p401
      %p403 = scmp.ne.s32.totalorder %s395, %s397
      %p404 = scmp.eq.s32.totalorder %s109, 1
      %p405 = por %p403, %p404
      %p406 = scmp.ne.s32.totalorder %s397, %s398
      %p407 = scmp.eq.s32.totalorder %s109, 0
      %p408 = por %p406, %p407
      %p409 = scmp.ne.s32.totalorder %s397, %s398
      %p410 = scmp.eq.s32.totalorder %s110, 1
      %p411 = por %p409, %p410
      %p413 = scmp.ne.s32.totalorder %s398, %s412
      %p414 = scmp.eq.s32.totalorder %s110, 0
      %p415 = por %p413, %p414
      %s417 = sadd.s32 %s416, 1
      %p420 = scmp.eq.s32.totalorder %s104, 1
      %p421 = scmp.ne.s32.totalorder %s416, %s418
      %p422 = scmp.eq.s32.totalorder %s104, 0
      %p423 = por %p421, %p422
      %p424 = scmp.ne.s32.totalorder %s416, %s418
      %p425 = scmp.eq.s32.totalorder %s109, 1
      %p426 = por %p424, %p425
      %p427 = scmp.ne.s32.totalorder %s418, %s419
      %p428 = scmp.eq.s32.totalorder %s109, 0
      %p429 = por %p427, %p428
      %p430 = scmp.ne.s32.totalorder %s418, %s419
      %p431 = scmp.eq.s32.totalorder %s110, 1
      %p432 = por %p430, %p431
      %p434 = scmp.ne.s32.totalorder %s419, %s433
      %p435 = scmp.eq.s32.totalorder %s110, 0
      %p436 = por %p434, %p435
      %s438 = sadd.s32 %s437, 1
      %p441 = scmp.eq.s32.totalorder %s104, 1
      %p442 = scmp.ne.s32.totalorder %s437, %s439
      %p443 = scmp.eq.s32.totalorder %s104, 0
      %p444 = por %p442, %p443
      %p445 = scmp.ne.s32.totalorder %s437, %s439
      %p446 = scmp.eq.s32.totalorder %s109, 1
      %p447 = por %p445, %p446
      %p448 = scmp.ne.s32.totalorder %s439, %s440
      %p449 = scmp.eq.s32.totalorder %s109, 0
      %p450 = por %p448, %p449
      %p451 = scmp.ne.s32.totalorder %s439, %s440
      %p452 = scmp.eq.s32.totalorder %s110, 1
      %p453 = por %p451, %p452
      %p455 = scmp.ne.s32.totalorder %s440, %s454
      %p456 = scmp.eq.s32.totalorder %s110, 0
      %p457 = por %p455, %p456
      %s459 = sadd.s32 %s458, 1
      %p462 = scmp.eq.s32.totalorder %s104, 1
      %p463 = scmp.ne.s32.totalorder %s458, %s460
      %p464 = scmp.eq.s32.totalorder %s104, 0
      %p465 = por %p463, %p464
      %p466 = scmp.ne.s32.totalorder %s458, %s460
      %p467 = scmp.eq.s32.totalorder %s109, 1
      %p468 = por %p466, %p467
      %p469 = scmp.ne.s32.totalorder %s460, %s461
      %p470 = scmp.eq.s32.totalorder %s109, 0
      %p471 = por %p469, %p470
      %p472 = scmp.ne.s32.totalorder %s460, %s461
      %p473 = scmp.eq.s32.totalorder %s110, 1
      %p474 = por %p472, %p473
      %p476 = scmp.ne.s32.totalorder %s461, %s475
      %p477 = scmp.eq.s32.totalorder %s110, 0
      %p478 = por %p476, %p477
      %s480 = sadd.s32 %s479, 1
      %p483 = scmp.eq.s32.totalorder %s104, 1
      %p484 = scmp.ne.s32.totalorder %s479, %s481
      %p485 = scmp.eq.s32.totalorder %s104, 0
      %p486 = por %p484, %p485
      %p487 = scmp.ne.s32.totalorder %s479, %s481
      %p488 = scmp.eq.s32.totalorder %s109, 1
      %p489 = por %p487, %p488
      %p490 = scmp.ne.s32.totalorder %s481, %s482
      %p491 = scmp.eq.s32.totalorder %s109, 0
      %p492 = por %p490, %p491
      %p493 = scmp.ne.s32.totalorder %s481, %s482
      %p494 = scmp.eq.s32.totalorder %s110, 1
      %p495 = por %p493, %p494
      %p497 = scmp.ne.s32.totalorder %s482, %s496
      %p498 = scmp.eq.s32.totalorder %s110, 0
      %p499 = por %p497, %p498
      %s501 = sadd.s32 %s500, 1
      %p504 = scmp.eq.s32.totalorder %s104, 1
      %p505 = scmp.ne.s32.totalorder %s500, %s502
      %p506 = scmp.eq.s32.totalorder %s104, 0
      %p507 = por %p505, %p506
      %p508 = scmp.ne.s32.totalorder %s500, %s502
      %p509 = scmp.eq.s32.totalorder %s109, 1
      %p510 = por %p508, %p509
      %p511 = scmp.ne.s32.totalorder %s502, %s503
      %p512 = scmp.eq.s32.totalorder %s109, 0
      %p513 = por %p511, %p512
      %p514 = scmp.ne.s32.totalorder %s502, %s503
      %p515 = scmp.eq.s32.totalorder %s110, 1
      %p516 = por %p514, %p515
      %p518 = scmp.ne.s32.totalorder %s503, %s517
      %p519 = scmp.eq.s32.totalorder %s110, 0
      %p520 = por %p518, %p519
      %s522 = sadd.s32 %s521, 1
      %p525 = scmp.eq.s32.totalorder %s104, 1
      %p526 = scmp.ne.s32.totalorder %s521, %s523
      %p527 = scmp.eq.s32.totalorder %s104, 0
      %p528 = por %p526, %p527
      %p529 = scmp.ne.s32.totalorder %s521, %s523
      %p530 = scmp.eq.s32.totalorder %s109, 1
      %p531 = por %p529, %p530
      %p532 = scmp.ne.s32.totalorder %s523, %s524
      %p533 = scmp.eq.s32.totalorder %s109, 0
      %p534 = por %p532, %p533
      %p535 = scmp.ne.s32.totalorder %s523, %s524
      %p536 = scmp.eq.s32.totalorder %s110, 1
      %p537 = por %p535, %p536
      %p539 = scmp.ne.s32.totalorder %s524, %s538
      %p540 = scmp.eq.s32.totalorder %s110, 0
      %p541 = por %p539, %p540
      %s543 = sadd.s32 %s542, 1
      %p546 = scmp.eq.s32.totalorder %s104, 1
      %p547 = scmp.ne.s32.totalorder %s542, %s544
      %p548 = scmp.eq.s32.totalorder %s104, 0
      %p549 = por %p547, %p548
      %p550 = scmp.ne.s32.totalorder %s542, %s544
      %p551 = scmp.eq.s32.totalorder %s109, 1
      %p552 = por %p550, %p551
      %p553 = scmp.ne.s32.totalorder %s544, %s545
      %p554 = scmp.eq.s32.totalorder %s109, 0
      %p555 = por %p553, %p554
      %p556 = scmp.ne.s32.totalorder %s544, %s545
      %p557 = scmp.eq.s32.totalorder %s110, 1
      %p558 = por %p556, %p557
      %p560 = scmp.ne.s32.totalorder %s545, %s559
      %p561 = scmp.eq.s32.totalorder %s110, 0
      %p562 = por %p560, %p561
      %s564 = sadd.s32 %s563, 1
      %p567 = scmp.eq.s32.totalorder %s104, 1
      %p568 = scmp.ne.s32.totalorder %s563, %s565
      %p569 = scmp.eq.s32.totalorder %s104, 0
      %p570 = por %p568, %p569
      %p571 = scmp.ne.s32.totalorder %s563, %s565
      %p572 = scmp.eq.s32.totalorder %s109, 1
      %p573 = por %p571, %p572
      %p574 = scmp.ne.s32.totalorder %s565, %s566
      %p575 = scmp.eq.s32.totalorder %s109, 0
      %p576 = por %p574, %p575
      %p577 = scmp.ne.s32.totalorder %s565, %s566
      %p578 = scmp.eq.s32.totalorder %s110, 1
      %p579 = por %p577, %p578
      %p581 = scmp.ne.s32.totalorder %s566, %s580
      %p582 = scmp.eq.s32.totalorder %s110, 0
      %p583 = por %p581, %p582
      %s585 = sadd.s32 %s584, 1
      %p588 = scmp.eq.s32.totalorder %s104, 1
      %p589 = scmp.ne.s32.totalorder %s584, %s586
      %p590 = scmp.eq.s32.totalorder %s104, 0
      %p591 = por %p589, %p590
      %p592 = scmp.ne.s32.totalorder %s584, %s586
      %p593 = scmp.eq.s32.totalorder %s109, 1
      %p594 = por %p592, %p593
      %p595 = scmp.ne.s32.totalorder %s586, %s587
      %p596 = scmp.eq.s32.totalorder %s109, 0
      %p597 = por %p595, %p596
      %p598 = scmp.ne.s32.totalorder %s586, %s587
      %p599 = scmp.eq.s32.totalorder %s110, 1
      %p600 = por %p598, %p599
      %p602 = scmp.ne.s32.totalorder %s587, %s601
      %p603 = scmp.eq.s32.totalorder %s110, 0
      %p604 = por %p602, %p603
      %s606 = sadd.s32 %s605, 1
      %p609 = scmp.eq.s32.totalorder %s104, 1
      %p610 = scmp.ne.s32.totalorder %s605, %s607
      %p611 = scmp.eq.s32.totalorder %s104, 0
      %p612 = por %p610, %p611
      %p613 = scmp.ne.s32.totalorder %s605, %s607
      %p614 = scmp.eq.s32.totalorder %s109, 1
      %p615 = por %p613, %p614
      %p616 = scmp.ne.s32.totalorder %s607, %s608
      %p617 = scmp.eq.s32.totalorder %s109, 0
      %p618 = por %p616, %p617
      %p619 = scmp.ne.s32.totalorder %s607, %s608
      %p620 = scmp.eq.s32.totalorder %s110, 1
      %p621 = por %p619, %p620
      %p623 = scmp.ne.s32.totalorder %s608, %s622
      %p624 = scmp.eq.s32.totalorder %s110, 0
      %p625 = por %p623, %p624
      %s627 = sadd.s32 %s626, 1
      %p630 = scmp.eq.s32.totalorder %s104, 1
      %p631 = scmp.ne.s32.totalorder %s626, %s628
      %p632 = scmp.eq.s32.totalorder %s104, 0
      %p633 = por %p631, %p632
      %p634 = scmp.ne.s32.totalorder %s626, %s628
      %p635 = scmp.eq.s32.totalorder %s109, 1
      %p636 = por %p634, %p635
      %p637 = scmp.ne.s32.totalorder %s628, %s629
      %p638 = scmp.eq.s32.totalorder %s109, 0
      %p639 = por %p637, %p638
      %p640 = scmp.ne.s32.totalorder %s628, %s629
      %p641 = scmp.eq.s32.totalorder %s110, 1
      %p642 = por %p640, %p641
      %p644 = scmp.ne.s32.totalorder %s629, %s643
      %p645 = scmp.eq.s32.totalorder %s110, 0
      %p646 = por %p644, %p645
      %s648 = sadd.s32 %s647, 1
      %p651 = scmp.eq.s32.totalorder %s104, 1
      %p652 = scmp.ne.s32.totalorder %s647, %s649
      %p653 = scmp.eq.s32.totalorder %s104, 0
      %p654 = por %p652, %p653
      %p655 = scmp.ne.s32.totalorder %s647, %s649
      %p656 = scmp.eq.s32.totalorder %s109, 1
      %p657 = por %p655, %p656
      %p658 = scmp.ne.s32.totalorder %s649, %s650
      %p659 = scmp.eq.s32.totalorder %s109, 0
      %p660 = por %p658, %p659
      %p661 = scmp.ne.s32.totalorder %s649, %s650
      %p662 = scmp.eq.s32.totalorder %s110, 1
      %p663 = por %p661, %p662
      %p665 = scmp.ne.s32.totalorder %s650, %s664
      %p666 = scmp.eq.s32.totalorder %s110, 0
      %p667 = por %p665, %p666
      %s669 = sadd.s32 %s668, 1
      %p672 = scmp.eq.s32.totalorder %s104, 1
      %p673 = scmp.ne.s32.totalorder %s668, %s670
      %p674 = scmp.eq.s32.totalorder %s104, 0
      %p675 = por %p673, %p674
      %p676 = scmp.ne.s32.totalorder %s668, %s670
      %p677 = scmp.eq.s32.totalorder %s109, 1
      %p678 = por %p676, %p677
      %p679 = scmp.ne.s32.totalorder %s670, %s671
      %p680 = scmp.eq.s32.totalorder %s109, 0
      %p681 = por %p679, %p680
      %p682 = scmp.ne.s32.totalorder %s670, %s671
      %p683 = scmp.eq.s32.totalorder %s110, 1
      %p684 = por %p682, %p683
      %p686 = scmp.ne.s32.totalorder %s671, %s685
      %p687 = scmp.eq.s32.totalorder %s110, 0
      %p688 = por %p686, %p687
      %s690 = sadd.s32 %s689, 1
      %p693 = scmp.eq.s32.totalorder %s104, 1
      %p694 = scmp.ne.s32.totalorder %s689, %s691
      %p695 = scmp.eq.s32.totalorder %s104, 0
      %p696 = por %p694, %p695
      %p697 = scmp.ne.s32.totalorder %s689, %s691
      %p698 = scmp.eq.s32.totalorder %s109, 1
      %p699 = por %p697, %p698
      %p700 = scmp.ne.s32.totalorder %s691, %s692
      %p701 = scmp.eq.s32.totalorder %s109, 0
      %p702 = por %p700, %p701
      %p703 = scmp.ne.s32.totalorder %s691, %s692
      %p704 = scmp.eq.s32.totalorder %s110, 1
      %p705 = por %p703, %p704
      %p707 = scmp.ne.s32.totalorder %s692, %s706
      %p708 = scmp.eq.s32.totalorder %s110, 0
      %p709 = por %p707, %p708
      %s711 = sadd.s32 %s710, 1
      %p714 = scmp.eq.s32.totalorder %s104, 1
      %p715 = scmp.ne.s32.totalorder %s710, %s712
      %p716 = scmp.eq.s32.totalorder %s104, 0
      %p717 = por %p715, %p716
      %p718 = scmp.ne.s32.totalorder %s710, %s712
      %p719 = scmp.eq.s32.totalorder %s109, 1
      %p720 = por %p718, %p719
      %p721 = scmp.ne.s32.totalorder %s712, %s713
      %p722 = scmp.eq.s32.totalorder %s109, 0
      %p723 = por %p721, %p722
      %p724 = scmp.ne.s32.totalorder %s712, %s713
      %p725 = scmp.eq.s32.totalorder %s110, 1
      %p726 = por %p724, %p725
      %p728 = scmp.ne.s32.totalorder %s713, %s727
      %p729 = scmp.eq.s32.totalorder %s110, 0
      %p730 = por %p728, %p729
      %s732 = sadd.s32 %s731, 1
      %p735 = scmp.eq.s32.totalorder %s104, 1
      %p736 = scmp.ne.s32.totalorder %s731, %s733
      %p737 = scmp.eq.s32.totalorder %s104, 0
      %p738 = por %p736, %p737
      %p739 = scmp.ne.s32.totalorder %s731, %s733
      %p740 = scmp.eq.s32.totalorder %s109, 1
      %p741 = por %p739, %p740
      %p742 = scmp.ne.s32.totalorder %s733, %s734
      %p743 = scmp.eq.s32.totalorder %s109, 0
      %p744 = por %p742, %p743
      %p745 = scmp.ne.s32.totalorder %s733, %s734
      %p746 = scmp.eq.s32.totalorder %s110, 1
      %p747 = por %p745, %p746
      %p749 = scmp.ne.s32.totalorder %s734, %s748
      %p750 = scmp.eq.s32.totalorder %s110, 0
      %p751 = por %p749, %p750
      %s753 = sadd.s32 %s752, 1
      %p756 = scmp.eq.s32.totalorder %s104, 1
      %p757 = scmp.ne.s32.totalorder %s752, %s754
      %p758 = scmp.eq.s32.totalorder %s104, 0
      %p759 = por %p757, %p758
      %p760 = scmp.ne.s32.totalorder %s752, %s754
      %p761 = scmp.eq.s32.totalorder %s109, 1
      %p762 = por %p760, %p761
      %p763 = scmp.ne.s32.totalorder %s754, %s755
      %p764 = scmp.eq.s32.totalorder %s109, 0
      %p765 = por %p763, %p764
      %p766 = scmp.ne.s32.totalorder %s754, %s755
      %p767 = scmp.eq.s32.totalorder %s110, 1
      %p768 = por %p766, %p767
      %p770 = scmp.ne.s32.totalorder %s755, %s769
      %p771 = scmp.eq.s32.totalorder %s110, 0
      %p772 = por %p770, %p771
      %s774 = sadd.s32 %s773, 1
      %p777 = scmp.eq.s32.totalorder %s104, 1
      %p778 = scmp.ne.s32.totalorder %s773, %s775
      %p779 = scmp.eq.s32.totalorder %s104, 0
      %p780 = por %p778, %p779
      %p781 = scmp.ne.s32.totalorder %s773, %s775
      %p782 = scmp.eq.s32.totalorder %s109, 1
      %p783 = por %p781, %p782
      %p784 = scmp.ne.s32.totalorder %s775, %s776
      %p785 = scmp.eq.s32.totalorder %s109, 0
      %p786 = por %p784, %p785
      %p787 = scmp.ne.s32.totalorder %s775, %s776
      %p788 = scmp.eq.s32.totalorder %s110, 1
      %p789 = por %p787, %p788
      %p791 = scmp.ne.s32.totalorder %s776, %s790
      %p792 = scmp.eq.s32.totalorder %s110, 0
      %p793 = por %p791, %p792
      %s795 = sadd.s32 %s794, 1
      %p798 = scmp.eq.s32.totalorder %s104, 1
      %p799 = scmp.ne.s32.totalorder %s794, %s796
      %p800 = scmp.eq.s32.totalorder %s104, 0
      %p801 = por %p799, %p800
      %p802 = scmp.ne.s32.totalorder %s794, %s796
      %p803 = scmp.eq.s32.totalorder %s109, 1
      %p804 = por %p802, %p803
      %p805 = scmp.ne.s32.totalorder %s796, %s797
      %p806 = scmp.eq.s32.totalorder %s109, 0
      %p807 = por %p805, %p806
      %p808 = scmp.ne.s32.totalorder %s796, %s797
      %p809 = scmp.eq.s32.totalorder %s110, 1
      %p810 = por %p808, %p809
      %p812 = scmp.ne.s32.totalorder %s797, %s811
      %p813 = scmp.eq.s32.totalorder %s110, 0
      %p814 = por %p812, %p813
      %s816 = sadd.s32 %s815, 1
      %p819 = scmp.eq.s32.totalorder %s104, 1
      %p820 = scmp.ne.s32.totalorder %s815, %s817
      %p821 = scmp.eq.s32.totalorder %s104, 0
      %p822 = por %p820, %p821
      %p823 = scmp.ne.s32.totalorder %s815, %s817
      %p824 = scmp.eq.s32.totalorder %s109, 1
      %p825 = por %p823, %p824
      %p826 = scmp.ne.s32.totalorder %s817, %s818
      %p827 = scmp.eq.s32.totalorder %s109, 0
      %p828 = por %p826, %p827
      %p829 = scmp.ne.s32.totalorder %s817, %s818
      %p830 = scmp.eq.s32.totalorder %s110, 1
      %p831 = por %p829, %p830
      %p833 = scmp.ne.s32.totalorder %s818, %s832
      %p834 = scmp.eq.s32.totalorder %s110, 0
      %p835 = por %p833, %p834
      %s837 = sadd.s32 %s836, 1
      %p840 = scmp.eq.s32.totalorder %s104, 1
      %p841 = scmp.ne.s32.totalorder %s836, %s838
      %p842 = scmp.eq.s32.totalorder %s104, 0
      %p843 = por %p841, %p842
      %p844 = scmp.ne.s32.totalorder %s836, %s838
      %p845 = scmp.eq.s32.totalorder %s109, 1
      %p846 = por %p844, %p845
      %p847 = scmp.ne.s32.totalorder %s838, %s839
      %p848 = scmp.eq.s32.totalorder %s109, 0
      %p849 = por %p847, %p848
      %p850 = scmp.ne.s32.totalorder %s838, %s839
      %p851 = scmp.eq.s32.totalorder %s110, 1
      %p852 = por %p850, %p851
      %p854 = scmp.ne.s32.totalorder %s839, %s853
      %p855 = scmp.eq.s32.totalorder %s110, 0
      %p856 = por %p854, %p855
      %s858 = sadd.s32 %s857, 1
      %p861 = scmp.eq.s32.totalorder %s104, 1
      %p862 = scmp.ne.s32.totalorder %s857, %s859
      %p863 = scmp.eq.s32.totalorder %s104, 0
      %p864 = por %p862, %p863
      %p865 = scmp.ne.s32.totalorder %s857, %s859
      %p866 = scmp.eq.s32.totalorder %s109, 1
      %p867 = por %p865, %p866
      %p868 = scmp.ne.s32.totalorder %s859, %s860
      %p869 = scmp.eq.s32.totalorder %s109, 0
      %p870 = por %p868, %p869
      %p871 = scmp.ne.s32.totalorder %s859, %s860
      %p872 = scmp.eq.s32.totalorder %s110, 1
      %p873 = por %p871, %p872
      %p875 = scmp.ne.s32.totalorder %s860, %s874
      %p876 = scmp.eq.s32.totalorder %s110, 0
      %p877 = por %p875, %p876
      %s879 = sadd.s32 %s878, 1
      %p882 = scmp.eq.s32.totalorder %s104, 1
      %p883 = scmp.ne.s32.totalorder %s878, %s880
      %p884 = scmp.eq.s32.totalorder %s104, 0
      %p885 = por %p883, %p884
      %p886 = scmp.ne.s32.totalorder %s878, %s880
      %p887 = scmp.eq.s32.totalorder %s109, 1
      %p888 = por %p886, %p887
      %p889 = scmp.ne.s32.totalorder %s880, %s881
      %p890 = scmp.eq.s32.totalorder %s109, 0
      %p891 = por %p889, %p890
      %p892 = scmp.ne.s32.totalorder %s880, %s881
      %p893 = scmp.eq.s32.totalorder %s110, 1
      %p894 = por %p892, %p893
      %p896 = scmp.ne.s32.totalorder %s881, %s895
      %p897 = scmp.eq.s32.totalorder %s110, 0
      %p898 = por %p896, %p897
      %s900 = sadd.s32 %s899, 1
      %p903 = scmp.eq.s32.totalorder %s104, 1
      %p904 = scmp.ne.s32.totalorder %s899, %s901
      %p905 = scmp.eq.s32.totalorder %s104, 0
      %p906 = por %p904, %p905
      %p907 = scmp.ne.s32.totalorder %s899, %s901
      %p908 = scmp.eq.s32.totalorder %s109, 1
      %p909 = por %p907, %p908
      %p910 = scmp.ne.s32.totalorder %s901, %s902
      %p911 = scmp.eq.s32.totalorder %s109, 0
      %p912 = por %p910, %p911
      %p913 = scmp.ne.s32.totalorder %s901, %s902
      %p914 = scmp.eq.s32.totalorder %s110, 1
      %p915 = por %p913, %p914
      %p917 = scmp.ne.s32.totalorder %s902, %s916
      %p918 = scmp.eq.s32.totalorder %s110, 0
      %p919 = por %p917, %p918
      %s921 = sadd.s32 %s920, 1
      %p924 = scmp.eq.s32.totalorder %s104, 1
      %p925 = scmp.ne.s32.totalorder %s920, %s922
      %p926 = scmp.eq.s32.totalorder %s104, 0
      %p927 = por %p925, %p926
      %p928 = scmp.ne.s32.totalorder %s920, %s922
      %p929 = scmp.eq.s32.totalorder %s109, 1
      %p930 = por %p928, %p929
      %p931 = scmp.ne.s32.totalorder %s922, %s923
      %p932 = scmp.eq.s32.totalorder %s109, 0
      %p933 = por %p931, %p932
      %p934 = scmp.ne.s32.totalorder %s922, %s923
      %p935 = scmp.eq.s32.totalorder %s110, 1
      %p936 = por %p934, %p935
      %p938 = scmp.ne.s32.totalorder %s923, %s937
      %p939 = scmp.eq.s32.totalorder %s110, 0
      %p940 = por %p938, %p939
      %s942 = sadd.s32 %s941, 1
      %p945 = scmp.eq.s32.totalorder %s104, 1
      %p946 = scmp.ne.s32.totalorder %s941, %s943
      %p947 = scmp.eq.s32.totalorder %s104, 0
      %p948 = por %p946, %p947
      %p949 = scmp.ne.s32.totalorder %s941, %s943
      %p950 = scmp.eq.s32.totalorder %s109, 1
      %p951 = por %p949, %p950
      %p952 = scmp.ne.s32.totalorder %s943, %s944
      %p953 = scmp.eq.s32.totalorder %s109, 0
      %p954 = por %p952, %p953
      %p955 = scmp.ne.s32.totalorder %s943, %s944
      %p956 = scmp.eq.s32.totalorder %s110, 1
      %p957 = por %p955, %p956
      %p959 = scmp.ne.s32.totalorder %s944, %s958
      %p960 = scmp.eq.s32.totalorder %s110, 0
      %p961 = por %p959, %p960
      %s963 = sadd.s32 %s962, 1
      %p966 = scmp.eq.s32.totalorder %s104, 1
      %p967 = scmp.ne.s32.totalorder %s962, %s964
      %p968 = scmp.eq.s32.totalorder %s104, 0
      %p969 = por %p967, %p968
      %p970 = scmp.ne.s32.totalorder %s962, %s964
      %p971 = scmp.eq.s32.totalorder %s109, 1
      %p972 = por %p970, %p971
      %p973 = scmp.ne.s32.totalorder %s964, %s965
      %p974 = scmp.eq.s32.totalorder %s109, 0
      %p975 = por %p973, %p974
      %p976 = scmp.ne.s32.totalorder %s964, %s965
      %p977 = scmp.eq.s32.totalorder %s110, 1
      %p978 = por %p976, %p977
      %p980 = scmp.ne.s32.totalorder %s965, %s979
      %p981 = scmp.eq.s32.totalorder %s110, 0
      %p982 = por %p980, %p981
      %s984 = sadd.s32 %s983, 1
      %p987 = scmp.eq.s32.totalorder %s104, 1
      %p988 = scmp.ne.s32.totalorder %s983, %s985
      %p989 = scmp.eq.s32.totalorder %s104, 0
      %p990 = por %p988, %p989
      %p991 = scmp.ne.s32.totalorder %s983, %s985
      %p992 = scmp.eq.s32.totalorder %s109, 1
      %p993 = por %p991, %p992
      %p994 = scmp.ne.s32.totalorder %s985, %s986
      %p995 = scmp.eq.s32.totalorder %s109, 0
      %p996 = por %p994, %p995
      %p997 = scmp.ne.s32.totalorder %s985, %s986
      %p998 = scmp.eq.s32.totalorder %s110, 1
      %p999 = por %p997, %p998
      %p1001 = scmp.ne.s32.totalorder %s986, %s1000
      %p1002 = scmp.eq.s32.totalorder %s110, 0
      %p1003 = por %p1001, %p1002
      %s1005 = sadd.s32 %s1004, 1
      %p1008 = scmp.eq.s32.totalorder %s104, 1
      %p1009 = scmp.ne.s32.totalorder %s1004, %s1006
      %p1010 = scmp.eq.s32.totalorder %s104, 0
      %p1011 = por %p1009, %p1010
      %p1012 = scmp.ne.s32.totalorder %s1004, %s1006
      %p1013 = scmp.eq.s32.totalorder %s109, 1
      %p1014 = por %p1012, %p1013
      %p1015 = scmp.ne.s32.totalorder %s1006, %s1007
      %p1016 = scmp.eq.s32.totalorder %s109, 0
      %p1017 = por %p1015, %p1016
      %p1018 = scmp.ne.s32.totalorder %s1006, %s1007
      %p1019 = scmp.eq.s32.totalorder %s110, 1
      %p1020 = por %p1018, %p1019
      %p1022 = scmp.ne.s32.totalorder %s1007, %s1021
      %p1023 = scmp.eq.s32.totalorder %s110, 0
      %p1024 = por %p1022, %p1023
      %s1026 = sadd.s32 %s1025, 1
      %p1029 = scmp.eq.s32.totalorder %s104, 1
      %p1030 = scmp.ne.s32.totalorder %s1025, %s1027
      %p1031 = scmp.eq.s32.totalorder %s104, 0
      %p1032 = por %p1030, %p1031
      %p1033 = scmp.ne.s32.totalorder %s1025, %s1027
      %p1034 = scmp.eq.s32.totalorder %s109, 1
      %p1035 = por %p1033, %p1034
      %p1036 = scmp.ne.s32.totalorder %s1027, %s1028
      %p1037 = scmp.eq.s32.totalorder %s109, 0
      %p1038 = por %p1036, %p1037
      %p1039 = scmp.ne.s32.totalorder %s1027, %s1028
      %p1040 = scmp.eq.s32.totalorder %s110, 1
      %p1041 = por %p1039, %p1040
      %p1043 = scmp.ne.s32.totalorder %s1028, %s1042
      %p1044 = scmp.eq.s32.totalorder %s110, 0
      %p1045 = por %p1043, %p1044
      %s1047 = sadd.s32 %s1046, 1
      %p1050 = scmp.eq.s32.totalorder %s104, 1
      %p1051 = scmp.ne.s32.totalorder %s1046, %s1048
      %p1052 = scmp.eq.s32.totalorder %s104, 0
      %p1053 = por %p1051, %p1052
      %p1054 = scmp.ne.s32.totalorder %s1046, %s1048
      %p1055 = scmp.eq.s32.totalorder %s109, 1
      %p1056 = por %p1054, %p1055
      %p1057 = scmp.ne.s32.totalorder %s1048, %s1049
      %p1058 = scmp.eq.s32.totalorder %s109, 0
      %p1059 = por %p1057, %p1058
      %p1060 = scmp.ne.s32.totalorder %s1048, %s1049
      %p1061 = scmp.eq.s32.totalorder %s110, 1
      %p1062 = por %p1060, %p1061
      %p1064 = scmp.ne.s32.totalorder %s1049, %s1063
      %p1065 = scmp.eq.s32.totalorder %s110, 0
      %p1066 = por %p1064, %p1065
      %s1068 = sadd.s32 %s1067, 1
      %p1071 = scmp.eq.s32.totalorder %s104, 1
      %p1072 = scmp.ne.s32.totalorder %s1067, %s1069
      %p1073 = scmp.eq.s32.totalorder %s104, 0
      %p1074 = por %p1072, %p1073
      %p1075 = scmp.ne.s32.totalorder %s1067, %s1069
      %p1076 = scmp.eq.s32.totalorder %s109, 1
      %p1077 = por %p1075, %p1076
      %p1078 = scmp.ne.s32.totalorder %s1069, %s1070
      %p1079 = scmp.eq.s32.totalorder %s109, 0
      %p1080 = por %p1078, %p1079
      %p1081 = scmp.ne.s32.totalorder %s1069, %s1070
      %p1082 = scmp.eq.s32.totalorder %s110, 1
      %p1083 = por %p1081, %p1082
      %p1085 = scmp.ne.s32.totalorder %s1070, %s1084
      %p1086 = scmp.eq.s32.totalorder %s110, 0
      %p1087 = por %p1085, %p1086
      %s1088 = ssub.s32 %s104, %s111
      %p1089 = scmp.eq.s32.totalorder %s1088, 0
      %s1091 = sadd.s32 %s1090, 1
      %s1092 = scalar_select %p1089, %s1090, %s1091
      %p1095 = pneg %p1089
      %p1096 = scmp.eq.s32.totalorder %s104, 1
      %p1097 = por %p1095, %p1096
      %p1098 = scmp.ne.s32.totalorder %s1090, %s1093
      %p1099 = scmp.eq.s32.totalorder %s104, 0
      %p1100 = por %p1098, %p1099
      %p1101 = scmp.ne.s32.totalorder %s1090, %s1093
      %p1102 = scmp.eq.s32.totalorder %s109, 1
      %p1103 = por %p1101, %p1102
      %p1104 = scmp.ne.s32.totalorder %s1093, %s1094
      %p1105 = scmp.eq.s32.totalorder %s109, 0
      %p1106 = por %p1104, %p1105
      %p1107 = scmp.ne.s32.totalorder %s1093, %s1094
      %p1108 = scmp.eq.s32.totalorder %s110, 1
      %p1109 = por %p1107, %p1108
      %p1111 = scmp.ne.s32.totalorder %s1094, %s1110
      %p1112 = scmp.eq.s32.totalorder %s110, 0
      %p1113 = por %p1111, %p1112
      %p1114 = scmp.le.s32.totalorder 1, %s104
      %p1115 = scmp.lt.s32.totalorder %s104, 3
      %p1116 = pnand %p1114, %p1115
      %p1117 = pneg %p1116
      // Predicated region
      $region9: #{prt_plus_forward.1} parent=5 // pred_check
        _
      $region10: #{prt_plus_forward.1} parent=5 // pred_check_branch
        %1119 = sbr.rel (%p1116) target = $region12
      $region11: #{prt_plus_forward.1} parent=5 // pred_region
        %s1120 = ssub.s32 %s104, 1
        // Predicated region
        $region13: #{prt_plus_forward.1} parent=11 // pred_check
          %p1121 = pneg %p177
        $region14: #{prt_plus_forward.1} parent=11 // pred_check_branch
          %1123 = sbr.rel (%p1121) target = $region16
        $region15: #{prt_plus_forward.1} parent=11 // pred_region
          _
        $region16: #{prt_plus_forward.1} parent=11 // pred_fallthru
          _
        // Predicated region
        $region17: #{prt_plus_forward.1} parent=11 // pred_check
          %p1124 = pneg %p198
        $region18: #{prt_plus_forward.1} parent=11 // pred_check_branch
          %1126 = sbr.rel (%p1124) target = $region20
        $region19: #{prt_plus_forward.1} parent=11 // pred_region
          _
        $region20: #{prt_plus_forward.1} parent=11 // pred_fallthru
          _
        // Predicated region
        $region21: #{prt_plus_forward.1} parent=11 // pred_check
          %p1127 = pneg %p219
        $region22: #{prt_plus_forward.1} parent=11 // pred_check_branch
          %1129 = sbr.rel (%p1127) target = $region24
        $region23: #{prt_plus_forward.1} parent=11 // pred_region
          _
        $region24: #{prt_plus_forward.1} parent=11 // pred_fallthru
          _
        // Predicated region
        $region25: #{prt_plus_forward.1} parent=11 // pred_check
          %p1130 = pneg %p240
        $region26: #{prt_plus_forward.1} parent=11 // pred_check_branch
          %1132 = sbr.rel (%p1130) target = $region28
        $region27: #{prt_plus_forward.1} parent=11 // pred_region
          _
        $region28: #{prt_plus_forward.1} parent=11 // pred_fallthru
          _
        // Predicated region
        $region29: #{prt_plus_forward.1} parent=11 // pred_check
          %p1133 = pneg %p261
        $region30: #{prt_plus_forward.1} parent=11 // pred_check_branch
          %1135 = sbr.rel (%p1133) target = $region32
        $region31: #{prt_plus_forward.1} parent=11 // pred_region
          _
        $region32: #{prt_plus_forward.1} parent=11 // pred_fallthru
          _
        // Predicated region
        $region33: #{prt_plus_forward.1} parent=11 // pred_check
          %p1136 = pneg %p282
        $region34: #{prt_plus_forward.1} parent=11 // pred_check_branch
          %1138 = sbr.rel (%p1136) target = $region36
        $region35: #{prt_plus_forward.1} parent=11 // pred_region
          _
        $region36: #{prt_plus_forward.1} parent=11 // pred_fallthru
          _
        // Predicated region
        $region37: #{prt_plus_forward.1} parent=11 // pred_check
          %p1139 = pneg %p303
        $region38: #{prt_plus_forward.1} parent=11 // pred_check_branch
          %1141 = sbr.rel (%p1139) target = $region40
        $region39: #{prt_plus_forward.1} parent=11 // pred_region
          _
        $region40: #{prt_plus_forward.1} parent=11 // pred_fallthru
          _
        // Predicated region
        $region41: #{prt_plus_forward.1} parent=11 // pred_check
          %p1142 = pneg %p324
        $region42: #{prt_plus_forward.1} parent=11 // pred_check_branch
          %1144 = sbr.rel (%p1142) target = $region44
        $region43: #{prt_plus_forward.1} parent=11 // pred_region
          _
        $region44: #{prt_plus_forward.1} parent=11 // pred_fallthru
          _
        // Predicated region
        $region45: #{prt_plus_forward.1} parent=11 // pred_check
          %p1145 = pneg %p345
        $region46: #{prt_plus_forward.1} parent=11 // pred_check_branch
          %1147 = sbr.rel (%p1145) target = $region48
        $region47: #{prt_plus_forward.1} parent=11 // pred_region
          _
        $region48: #{prt_plus_forward.1} parent=11 // pred_fallthru
          _
        // Predicated region
        $region49: #{prt_plus_forward.1} parent=11 // pred_check
          %p1148 = pneg %p366
        $region50: #{prt_plus_forward.1} parent=11 // pred_check_branch
          %1150 = sbr.rel (%p1148) target = $region52
        $region51: #{prt_plus_forward.1} parent=11 // pred_region
          _
        $region52: #{prt_plus_forward.1} parent=11 // pred_fallthru
          _
        // Predicated region
        $region53: #{prt_plus_forward.1} parent=11 // pred_check
          %p1151 = pneg %p387
        $region54: #{prt_plus_forward.1} parent=11 // pred_check_branch
          %1153 = sbr.rel (%p1151) target = $region56
        $region55: #{prt_plus_forward.1} parent=11 // pred_region
          _
        $region56: #{prt_plus_forward.1} parent=11 // pred_fallthru
          _
        // Predicated region
        $region57: #{prt_plus_forward.1} parent=11 // pred_check
          %p1154 = pneg %p408
        $region58: #{prt_plus_forward.1} parent=11 // pred_check_branch
          %1156 = sbr.rel (%p1154) target = $region60
        $region59: #{prt_plus_forward.1} parent=11 // pred_region
          _
        $region60: #{prt_plus_forward.1} parent=11 // pred_fallthru
          _
        // Predicated region
        $region61: #{prt_plus_forward.1} parent=11 // pred_check
          %p1157 = pneg %p429
        $region62: #{prt_plus_forward.1} parent=11 // pred_check_branch
          %1159 = sbr.rel (%p1157) target = $region64
        $region63: #{prt_plus_forward.1} parent=11 // pred_region
          _
        $region64: #{prt_plus_forward.1} parent=11 // pred_fallthru
          _
        // Predicated region
        $region65: #{prt_plus_forward.1} parent=11 // pred_check
          %p1160 = pneg %p450
        $region66: #{prt_plus_forward.1} parent=11 // pred_check_branch
          %1162 = sbr.rel (%p1160) target = $region68
        $region67: #{prt_plus_forward.1} parent=11 // pred_region
          _
        $region68: #{prt_plus_forward.1} parent=11 // pred_fallthru
          _
        // Predicated region
        $region69: #{prt_plus_forward.1} parent=11 // pred_check
          %p1163 = pneg %p471
        $region70: #{prt_plus_forward.1} parent=11 // pred_check_branch
          %1165 = sbr.rel (%p1163) target = $region72
        $region71: #{prt_plus_forward.1} parent=11 // pred_region
          _
        $region72: #{prt_plus_forward.1} parent=11 // pred_fallthru
          _
        // Predicated region
        $region73: #{prt_plus_forward.1} parent=11 // pred_check
          %p1166 = pneg %p492
        $region74: #{prt_plus_forward.1} parent=11 // pred_check_branch
          %1168 = sbr.rel (%p1166) target = $region76
        $region75: #{prt_plus_forward.1} parent=11 // pred_region
          _
        $region76: #{prt_plus_forward.1} parent=11 // pred_fallthru
          _
        // Predicated region
        $region77: #{prt_plus_forward.1} parent=11 // pred_check
          %p1169 = pneg %p513
        $region78: #{prt_plus_forward.1} parent=11 // pred_check_branch
          %1171 = sbr.rel (%p1169) target = $region80
        $region79: #{prt_plus_forward.1} parent=11 // pred_region
          _
        $region80: #{prt_plus_forward.1} parent=11 // pred_fallthru
          _
        // Predicated region
        $region81: #{prt_plus_forward.1} parent=11 // pred_check
          %p1172 = pneg %p534
        $region82: #{prt_plus_forward.1} parent=11 // pred_check_branch
          %1174 = sbr.rel (%p1172) target = $region84
        $region83: #{prt_plus_forward.1} parent=11 // pred_region
          _
        $region84: #{prt_plus_forward.1} parent=11 // pred_fallthru
          _
        // Predicated region
        $region85: #{prt_plus_forward.1} parent=11 // pred_check
          %p1175 = pneg %p555
        $region86: #{prt_plus_forward.1} parent=11 // pred_check_branch
          %1177 = sbr.rel (%p1175) target = $region88
        $region87: #{prt_plus_forward.1} parent=11 // pred_region
          _
        $region88: #{prt_plus_forward.1} parent=11 // pred_fallthru
          _
        // Predicated region
        $region89: #{prt_plus_forward.1} parent=11 // pred_check
          %p1178 = pneg %p576
        $region90: #{prt_plus_forward.1} parent=11 // pred_check_branch
          %1180 = sbr.rel (%p1178) target = $region92
        $region91: #{prt_plus_forward.1} parent=11 // pred_region
          _
        $region92: #{prt_plus_forward.1} parent=11 // pred_fallthru
          _
        // Predicated region
        $region93: #{prt_plus_forward.1} parent=11 // pred_check
          %p1181 = pneg %p597
        $region94: #{prt_plus_forward.1} parent=11 // pred_check_branch
          %1183 = sbr.rel (%p1181) target = $region96
        $region95: #{prt_plus_forward.1} parent=11 // pred_region
          _
        $region96: #{prt_plus_forward.1} parent=11 // pred_fallthru
          _
        // Predicated region
        $region97: #{prt_plus_forward.1} parent=11 // pred_check
          %p1184 = pneg %p618
        $region98: #{prt_plus_forward.1} parent=11 // pred_check_branch
          %1186 = sbr.rel (%p1184) target = $region100
        $region99: #{prt_plus_forward.1} parent=11 // pred_region
          _
        $region100: #{prt_plus_forward.1} parent=11 // pred_fallthru
          _
        // Predicated region
        $region101: #{prt_plus_forward.1} parent=11 // pred_check
          %p1187 = pneg %p639
        $region102: #{prt_plus_forward.1} parent=11 // pred_check_branch
          %1189 = sbr.rel (%p1187) target = $region104
        $region103: #{prt_plus_forward.1} parent=11 // pred_region
          _
        $region104: #{prt_plus_forward.1} parent=11 // pred_fallthru
          _
        // Predicated region
        $region105: #{prt_plus_forward.1} parent=11 // pred_check
          %p1190 = pneg %p660
        $region106: #{prt_plus_forward.1} parent=11 // pred_check_branch
          %1192 = sbr.rel (%p1190) target = $region108
        $region107: #{prt_plus_forward.1} parent=11 // pred_region
          _
        $region108: #{prt_plus_forward.1} parent=11 // pred_fallthru
          _
        // Predicated region
        $region109: #{prt_plus_forward.1} parent=11 // pred_check
          %p1193 = pneg %p681
        $region110: #{prt_plus_forward.1} parent=11 // pred_check_branch
          %1195 = sbr.rel (%p1193) target = $region112
        $region111: #{prt_plus_forward.1} parent=11 // pred_region
          _
        $region112: #{prt_plus_forward.1} parent=11 // pred_fallthru
          _
        // Predicated region
        $region113: #{prt_plus_forward.1} parent=11 // pred_check
          %p1196 = pneg %p702
        $region114: #{prt_plus_forward.1} parent=11 // pred_check_branch
          %1198 = sbr.rel (%p1196) target = $region116
        $region115: #{prt_plus_forward.1} parent=11 // pred_region
          _
        $region116: #{prt_plus_forward.1} parent=11 // pred_fallthru
          _
        // Predicated region
        $region117: #{prt_plus_forward.1} parent=11 // pred_check
          %p1199 = pneg %p723
        $region118: #{prt_plus_forward.1} parent=11 // pred_check_branch
          %1201 = sbr.rel (%p1199) target = $region120
        $region119: #{prt_plus_forward.1} parent=11 // pred_region
          _
        $region120: #{prt_plus_forward.1} parent=11 // pred_fallthru
          _
        // Predicated region
        $region121: #{prt_plus_forward.1} parent=11 // pred_check
          %p1202 = pneg %p744
        $region122: #{prt_plus_forward.1} parent=11 // pred_check_branch
          %1204 = sbr.rel (%p1202) target = $region124
        $region123: #{prt_plus_forward.1} parent=11 // pred_region
          _
        $region124: #{prt_plus_forward.1} parent=11 // pred_fallthru
          _
        // Predicated region
        $region125: #{prt_plus_forward.1} parent=11 // pred_check
          %p1205 = pneg %p765
        $region126: #{prt_plus_forward.1} parent=11 // pred_check_branch
          %1207 = sbr.rel (%p1205) target = $region128
        $region127: #{prt_plus_forward.1} parent=11 // pred_region
          _
        $region128: #{prt_plus_forward.1} parent=11 // pred_fallthru
          _
        // Predicated region
        $region129: #{prt_plus_forward.1} parent=11 // pred_check
          %p1208 = pneg %p786
        $region130: #{prt_plus_forward.1} parent=11 // pred_check_branch
          %1210 = sbr.rel (%p1208) target = $region132
        $region131: #{prt_plus_forward.1} parent=11 // pred_region
          _
        $region132: #{prt_plus_forward.1} parent=11 // pred_fallthru
          _
        // Predicated region
        $region133: #{prt_plus_forward.1} parent=11 // pred_check
          %p1211 = pneg %p807
        $region134: #{prt_plus_forward.1} parent=11 // pred_check_branch
          %1213 = sbr.rel (%p1211) target = $region136
        $region135: #{prt_plus_forward.1} parent=11 // pred_region
          _
        $region136: #{prt_plus_forward.1} parent=11 // pred_fallthru
          _
        // Predicated region
        $region137: #{prt_plus_forward.1} parent=11 // pred_check
          %p1214 = pneg %p828
        $region138: #{prt_plus_forward.1} parent=11 // pred_check_branch
          %1216 = sbr.rel (%p1214) target = $region140
        $region139: #{prt_plus_forward.1} parent=11 // pred_region
          _
        $region140: #{prt_plus_forward.1} parent=11 // pred_fallthru
          _
        // Predicated region
        $region141: #{prt_plus_forward.1} parent=11 // pred_check
          %p1217 = pneg %p849
        $region142: #{prt_plus_forward.1} parent=11 // pred_check_branch
          %1219 = sbr.rel (%p1217) target = $region144
        $region143: #{prt_plus_forward.1} parent=11 // pred_region
          _
        $region144: #{prt_plus_forward.1} parent=11 // pred_fallthru
          _
        // Predicated region
        $region145: #{prt_plus_forward.1} parent=11 // pred_check
          %p1220 = pneg %p870
        $region146: #{prt_plus_forward.1} parent=11 // pred_check_branch
          %1222 = sbr.rel (%p1220) target = $region148
        $region147: #{prt_plus_forward.1} parent=11 // pred_region
          _
        $region148: #{prt_plus_forward.1} parent=11 // pred_fallthru
          _
        // Predicated region
        $region149: #{prt_plus_forward.1} parent=11 // pred_check
          %p1223 = pneg %p891
        $region150: #{prt_plus_forward.1} parent=11 // pred_check_branch
          %1225 = sbr.rel (%p1223) target = $region152
        $region151: #{prt_plus_forward.1} parent=11 // pred_region
          _
        $region152: #{prt_plus_forward.1} parent=11 // pred_fallthru
          _
        // Predicated region
        $region153: #{prt_plus_forward.1} parent=11 // pred_check
          %p1226 = pneg %p912
        $region154: #{prt_plus_forward.1} parent=11 // pred_check_branch
          %1228 = sbr.rel (%p1226) target = $region156
        $region155: #{prt_plus_forward.1} parent=11 // pred_region
          _
        $region156: #{prt_plus_forward.1} parent=11 // pred_fallthru
          _
        // Predicated region
        $region157: #{prt_plus_forward.1} parent=11 // pred_check
          %p1229 = pneg %p933
        $region158: #{prt_plus_forward.1} parent=11 // pred_check_branch
          %1231 = sbr.rel (%p1229) target = $region160
        $region159: #{prt_plus_forward.1} parent=11 // pred_region
          _
        $region160: #{prt_plus_forward.1} parent=11 // pred_fallthru
          _
        // Predicated region
        $region161: #{prt_plus_forward.1} parent=11 // pred_check
          %p1232 = pneg %p954
        $region162: #{prt_plus_forward.1} parent=11 // pred_check_branch
          %1234 = sbr.rel (%p1232) target = $region164
        $region163: #{prt_plus_forward.1} parent=11 // pred_region
          _
        $region164: #{prt_plus_forward.1} parent=11 // pred_fallthru
          _
        // Predicated region
        $region165: #{prt_plus_forward.1} parent=11 // pred_check
          %p1235 = pneg %p975
        $region166: #{prt_plus_forward.1} parent=11 // pred_check_branch
          %1237 = sbr.rel (%p1235) target = $region168
        $region167: #{prt_plus_forward.1} parent=11 // pred_region
          %s1239 = ssub.s32 16, 16
          %1240 = vsyncadd [#allocation4], %s1239
          %s1242 = sshll.u32 [#allocation3], 4
          %s1243 = int_to_ptr.vmem [resolvable:$true] %s1242
          %1245 = dma.hbm_to_vmem [thread:$0]  %s81, 16, %s1243, [#allocation4]
        $region168: #{prt_plus_forward.1} parent=11 // pred_fallthru
          _
        // Predicated region
        $region169: #{prt_plus_forward.1} parent=11 // pred_check
          %p1246 = pneg %p996
        $region170: #{prt_plus_forward.1} parent=11 // pred_check_branch
          %1248 = sbr.rel (%p1246) target = $region172
        $region171: #{prt_plus_forward.1} parent=11 // pred_region
          %s1250 = ssub.s32 16, 16
          %1251 = vsyncadd [#allocation6], %s1250
          %s1253 = sshll.u32 [#allocation5], 4
          %s1254 = int_to_ptr.vmem [resolvable:$true] %s1253
          %1256 = dma.hbm_to_vmem [thread:$0]  %s83, 16, %s1254, [#allocation6]
        $region172: #{prt_plus_forward.1} parent=11 // pred_fallthru
          _
        // Predicated region
        $region173: #{prt_plus_forward.1} parent=11 // pred_check
          %p1257 = pneg %p1017
        $region174: #{prt_plus_forward.1} parent=11 // pred_check_branch
          %1259 = sbr.rel (%p1257) target = $region176
        $region175: #{prt_plus_forward.1} parent=11 // pred_region
          %s1261 = ssub.s32 16, 16
          %1262 = vsyncadd [#allocation6], %s1261
          %s1264 = sshll.u32 [#allocation7], 4
          %s1265 = int_to_ptr.vmem [resolvable:$true] %s1264
          %1267 = dma.hbm_to_vmem [thread:$0]  %s85, 16, %s1265, [#allocation6]
        $region176: #{prt_plus_forward.1} parent=11 // pred_fallthru
          _
        // Predicated region
        $region177: #{prt_plus_forward.1} parent=11 // pred_check
          %p1268 = pneg %p1038
        $region178: #{prt_plus_forward.1} parent=11 // pred_check_branch
          %1270 = sbr.rel (%p1268) target = $region180
        $region179: #{prt_plus_forward.1} parent=11 // pred_region
          %s1272 = ssub.s32 16, 16
          %1273 = vsyncadd [#allocation9], %s1272
          %s1275 = sshll.u32 [#allocation8], 4
          %s1276 = int_to_ptr.vmem [resolvable:$true] %s1275
          %1278 = dma.hbm_to_vmem [thread:$0]  %s87, 16, %s1276, [#allocation9]
        $region180: #{prt_plus_forward.1} parent=11 // pred_fallthru
          _
        // Predicated region
        $region181: #{prt_plus_forward.1} parent=11 // pred_check
          %p1279 = pneg %p1059
        $region182: #{prt_plus_forward.1} parent=11 // pred_check_branch
          %1281 = sbr.rel (%p1279) target = $region184
        $region183: #{prt_plus_forward.1} parent=11 // pred_region
          _
        $region184: #{prt_plus_forward.1} parent=11 // pred_fallthru
          _
        // Predicated region
        $region185: #{prt_plus_forward.1} parent=11 // pred_check
          %p1282 = pneg %p1080
        $region186: #{prt_plus_forward.1} parent=11 // pred_check_branch
          %1284 = sbr.rel (%p1282) target = $region188
        $region187: #{prt_plus_forward.1} parent=11 // pred_region
          _
        $region188: #{prt_plus_forward.1} parent=11 // pred_fallthru
          _
      $region12: #{prt_plus_forward.1} parent=5 // pred_fallthru
        _
      %p1285 = scmp.lt.s32.totalorder %s104, 2
      // Predicated region
      $region189: #{prt_plus_forward.1} parent=5 // pred_check
        %p1286 = pneg %p1285
      $region190: #{prt_plus_forward.1} parent=5 // pred_check_branch
        %1288 = sbr.rel (%p1286) target = $region192
      $region191: #{prt_plus_forward.1} parent=5 // pred_region
        // Predicated region
        $region193: #{prt_plus_forward.1} parent=191 // pred_check
          %p1289 = pneg %p124
        $region194: #{prt_plus_forward.1} parent=191 // pred_check_branch
          %1291 = sbr.rel (%p1289) target = $region196
        $region195: #{prt_plus_forward.1} parent=191 // pred_region
          %p1292 = scmp.lt.s32.totalorder %s104, 1
          %s1293 = scalar_select %p1292, %s104, 1
          %s1294 = smul.addr %s1293, 8
          %s1295 = scalar_lea.vmem %s1, %s1294
        $region196: #{prt_plus_forward.1} parent=191 // pred_fallthru
          _
        // Predicated region
        $region197: #{prt_plus_forward.1} parent=191 // pred_check
          %p1296 = pneg %p150
        $region198: #{prt_plus_forward.1} parent=191 // pred_check_branch
          %1298 = sbr.rel (%p1296) target = $region200
        $region199: #{prt_plus_forward.1} parent=191 // pred_region
          %p1299 = scmp.lt.s32.totalorder %s104, 1
          %s1300 = scalar_select %p1299, %s104, 1
          %s1301 = smul.addr %s1300, 8
          %s1302 = scalar_lea.vmem %s3, %s1301
        $region200: #{prt_plus_forward.1} parent=191 // pred_fallthru
          _
      $region192: #{prt_plus_forward.1} parent=5 // pred_fallthru
        _
      %p1303 = scmp.le.s32.totalorder 1, %s104
      %p1304 = scmp.lt.s32.totalorder %s104, 3
      %p1305 = pnand %p1303, %p1304
      %p1306 = pneg %p1305
      // Predicated region
      $region201: #{prt_plus_forward.1} parent=5 // pred_check
        _
      $region202: #{prt_plus_forward.1} parent=5 // pred_check_branch
        %1308 = sbr.rel (%p1305) target = $region204
      $region203: #{prt_plus_forward.1} parent=5 // pred_region
        %s1309 = ssub.s32 %s104, 1
        // Predicated region
        $region205: #{prt_plus_forward.1} parent=203 // pred_check
          %p1310 = pneg %p975
        $region206: #{prt_plus_forward.1} parent=203 // pred_check_branch
          %1312 = sbr.rel (%p1310) target = $region208
        $region207: #{prt_plus_forward.1} parent=203 // pred_region
          %1313 = dma.done [#allocation4], 16
        $region208: #{prt_plus_forward.1} parent=203 // pred_fallthru
          _
        // Predicated region
        $region209: #{prt_plus_forward.1} parent=203 // pred_check
          %p1314 = pneg %p996
        $region210: #{prt_plus_forward.1} parent=203 // pred_check_branch
          %1316 = sbr.rel (%p1314) target = $region212
        $region211: #{prt_plus_forward.1} parent=203 // pred_region
          %1317 = dma.done [#allocation6], 16
        $region212: #{prt_plus_forward.1} parent=203 // pred_fallthru
          _
        // Predicated region
        $region213: #{prt_plus_forward.1} parent=203 // pred_check
          %p1318 = pneg %p1017
        $region214: #{prt_plus_forward.1} parent=203 // pred_check_branch
          %1320 = sbr.rel (%p1318) target = $region216
        $region215: #{prt_plus_forward.1} parent=203 // pred_region
          %1321 = dma.done [#allocation6], 16
        $region216: #{prt_plus_forward.1} parent=203 // pred_fallthru
          _
        // Predicated region
        $region217: #{prt_plus_forward.1} parent=203 // pred_check
          %p1322 = pneg %p1038
        $region218: #{prt_plus_forward.1} parent=203 // pred_check_branch
          %1324 = sbr.rel (%p1322) target = $region220
        $region219: #{prt_plus_forward.1} parent=203 // pred_region
          %1325 = dma.done [#allocation9], 16
        $region220: #{prt_plus_forward.1} parent=203 // pred_fallthru
          _
        %p1326 = scmp.lt.s32.totalorder %s109, 1
        %s1327 = scalar_select %p1326, %s109, 1
        %s1328 = smul.addr %s1327, 8
        %s1329 = scalar_lea.vmem %s1, %s1328
        %p1330 = pneg %p130
        %p1331 = pneg %p127
        %p1332 = scmp.lt.s32.totalorder %s109, 1
        %s1333 = scalar_select %p1332, %s109, 1
        %s1334 = smul.addr %s1333, 8
        %s1335 = scalar_lea.vmem %s3, %s1334
        %p1336 = pneg %p156
        %p1337 = pneg %p153
        %p1338 = pneg %p177
        %p1339 = pneg %p174
        %p1340 = pneg %p198
        %p1341 = pneg %p195
        %p1342 = pneg %p219
        %p1343 = pneg %p216
        %p1344 = pneg %p240
        %p1345 = pneg %p237
        %p1346 = pneg %p261
        %p1347 = pneg %p258
        %p1348 = pneg %p282
        %p1349 = pneg %p279
        %p1350 = pneg %p303
        %p1351 = pneg %p300
        %p1352 = pneg %p324
        %p1353 = pneg %p321
        %p1354 = pneg %p345
        %p1355 = pneg %p342
        %p1356 = pneg %p366
        %p1357 = pneg %p363
        %p1358 = pneg %p387
        %p1359 = pneg %p384
        %p1360 = pneg %p408
        %p1361 = pneg %p405
        %p1362 = pneg %p429
        %p1363 = pneg %p426
        %p1364 = pneg %p450
        %p1365 = pneg %p447
        %p1366 = pneg %p471
        %p1367 = pneg %p468
        %p1368 = pneg %p492
        %p1369 = pneg %p489
        %p1370 = pneg %p513
        %p1371 = pneg %p510
        %p1372 = pneg %p534
        %p1373 = pneg %p531
        %p1374 = pneg %p555
        %p1375 = pneg %p552
        %p1376 = pneg %p576
        %p1377 = pneg %p573
        %p1378 = pneg %p597
        %p1379 = pneg %p594
        %p1380 = pneg %p618
        %p1381 = pneg %p615
        %p1382 = pneg %p639
        %p1383 = pneg %p636
        %p1384 = pneg %p660
        %p1385 = pneg %p657
        %p1386 = pneg %p681
        %p1387 = pneg %p678
        %p1388 = pneg %p702
        %p1389 = pneg %p699
        %p1390 = pneg %p723
        %p1391 = pneg %p720
        %p1392 = pneg %p744
        %p1393 = pneg %p741
        %p1394 = pneg %p765
        %p1395 = pneg %p762
        %p1396 = pneg %p786
        %p1397 = pneg %p783
        %p1398 = pneg %p807
        %p1399 = pneg %p804
        %p1400 = pneg %p828
        %p1401 = pneg %p825
        %p1402 = pneg %p849
        %p1403 = pneg %p846
        %p1404 = pneg %p870
        %p1405 = pneg %p867
        %p1406 = pneg %p891
        %p1407 = pneg %p888
        %p1408 = pneg %p912
        %p1409 = pneg %p909
        %p1410 = pneg %p933
        %p1411 = pneg %p930
        %p1412 = pneg %p954
        %p1413 = pneg %p951
        %p1414 = pneg %p975
        %p1415 = pneg %p972
        %p1416 = pneg %p996
        %p1417 = pneg %p993
        %p1418 = pneg %p1017
        %p1419 = pneg %p1014
        %p1420 = pneg %p1038
        %p1421 = pneg %p1035
        %p1422 = pneg %p1059
        %p1423 = pneg %p1056
        %p1424 = pneg %p1080
        %p1425 = pneg %p1077
        %p1426 = pneg %p1106
        %p1427 = pneg %p1103
        %p1428 = scmp.lt.s32.totalorder %s109, 1
        %s1429 = scalar_select %p1428, %s109, 1
        %s1430 = smul.addr %s1429, 8
        %s1431 = scalar_lea.vmem %s93, %s1430
        %p1432 = scmp.lt.s32.totalorder %s109, 1
        %s1433 = scalar_select %p1432, %s109, 1
        %s1434 = smul.addr %s1433, 8
        %s1435 = scalar_lea.vmem %s1, %s1434
        %p1436 = scmp.lt.s32.totalorder %s109, 1
        %s1437 = scalar_select %p1436, %s109, 1
        %s1438 = smul.addr %s1437, 8
        %s1439 = scalar_lea.vmem %s3, %s1438
        %p1440 = scmp.lt.s32.totalorder %s109, 1
        %s1441 = scalar_select %p1440, %s109, 1
        %s1442 = smul.addr %s1441, 8
        %s1443 = scalar_lea.vmem %s93, %s1442
        %v1444 = vld [vmem:[%s1435] sm:$0xff]
        %v1445 = vld [vmem:[%s1439] sm:$0x3f]
        %v1446 = vld [vmem:[%s5] sm:$0xf]
        %v1447 = vld [vmem:[%s7] sm:$0x1]
        %v1448 = vld [vmem:[%s9] sm:$0xff]
        %v1450 = vlaneseq
        %v1451 = vshrl.u32 %v1450, 7
        %v1452 = vsub.s32 0, %v1451
        %v1453 = vrot.slane %v1447, %v1452
        %vm1455 = vcmask 31744
        %v1457 = vsel %vm1455, %v1444, 0
        %vm1459 = vcmask 1043456
        %v1461 = vsel %vm1459, %v1446, 0
        %1463 = vmatprep.subr.mxu0 0.0
        %1464 = vmatpush1.msra.mxu0 %v1461
        %1465 = vmatprep.subr.mxu0 0.0
        %1466 = vmatpush1.msra.mxu0 0.0
        %1467 = vmatprep.subr.mxu0 0.0
        %1468 = vmatpush1.msra.mxu0 0.0
        %1469 = vmatprep.subr.mxu0 0.0
        %1470 = vmatpush1.msra.mxu0 0.0
        %1471 = vmatprep.subr.mxu0 0.0
        %1472 = vmatpush1.msra.mxu0 0.0
        %1473 = vmatprep.subr.mxu0 0.0
        %1474 = vmatpush1.msra.mxu0 0.0
        %1475 = vmatprep.subr.mxu0 0.0
        %1476 = vmatpush1.msra.mxu0 0.0
        %1477 = vmatprep.subr.mxu0 0.0
        %1478 = vmatpush1.msra.mxu0 0.0
        %1479 = vmatprep.subr.mxu0 0.0
        %1480 = vmatpush1.msra.mxu0 0.0
        %1481 = vmatprep.subr.mxu0 0.0
        %1482 = vmatpush1.msra.mxu0 0.0
        %1483 = vmatprep.subr.mxu0 0.0
        %1484 = vmatpush1.msra.mxu0 0.0
        %1485 = vmatprep.subr.mxu0 0.0
        %1486 = vmatpush1.msra.mxu0 0.0
        %1487 = vmatprep.subr.mxu0 0.0
        %1488 = vmatpush1.msra.mxu0 0.0
        %1489 = vmatprep.subr.mxu0 0.0
        %1490 = vmatpush1.msra.mxu0 0.0
        %1491 = vmatprep.subr.mxu0 0.0
        %1492 = vmatpush1.msra.mxu0 0.0
        %1493 = vmatprep.subr.mxu0 0.0
        %1494 = vmatpush1.msra.mxu0 0.0
        %1495 = vmatprep.subr.mxu0 0.0
        %1496 = vmatpush1.msra.mxu0 0.0
        %1497 = vmatprep.subr.mxu0 0.0
        %1498 = vmatpush1.msra.mxu0 0.0
        %1499 = vmatprep.subr.mxu0 0.0
        %1500 = vmatpush1.msra.mxu0 0.0
        %1501 = vmatprep.subr.mxu0 0.0
        %1502 = vmatpush1.msra.mxu0 0.0
        %1503 = vmatprep.subr.mxu0 0.0
        %1504 = vmatpush1.msra.mxu0 0.0
        %1505 = vmatprep.subr.mxu0 0.0
        %1506 = vmatpush1.msra.mxu0 0.0
        %1507 = vmatprep.subr.mxu0 0.0
        %1508 = vmatpush1.msra.mxu0 0.0
        %1509 = vmatprep.subr.mxu0 0.0
        %1510 = vmatpush1.msra.mxu0 0.0
        %1511 = vmatprep.subr.mxu0 0.0
        %1512 = vmatpush1.msra.mxu0 0.0
        %1513 = vmatprep.subr.mxu0 0.0
        %1514 = vmatpush1.msra.mxu0 0.0
        %1515 = vmatprep.subr.mxu0 0.0
        %1516 = vmatpush1.msra.mxu0 0.0
        %1517 = vmatprep.subr.mxu0 0.0
        %1518 = vmatpush1.msra.mxu0 0.0
        %1519 = vmatprep.subr.mxu0 0.0
        %1520 = vmatpush1.msra.mxu0 0.0
        %1521 = vmatprep.subr.mxu0 0.0
        %1522 = vmatpush1.msra.mxu0 0.0
        %1523 = vmatprep.subr.mxu0 0.0
        %1524 = vmatpush1.msra.mxu0 0.0
        %1525 = vmatprep.subr.mxu0 0.0
        %1526 = vmatpush1.msra.mxu0 0.0
        %1527 = vmatprep.mubr.f32.mxu0 0.0
        %1528 = vmatmul.mubr.f32.gmra.mrb[0].mxu0 %v1457
        %v1529 = vpop.f32.mrb[0].mxu0
        %v1530 = vadd.f32 %v1453, %v1529
        %v1531 = vpop.f32.mrb[0].mxu0
        %1532 = vdwg.mxu0
        %v1533 = vadd.f32 %v1530, %v1448
        %v1534 = vld [vmem:[%s11] sm:$0xff]
        %v1535 = vld [vmem:[%s11 + $0x8] sm:$0xff]
        %v1536 = vld [vmem:[%s11 + $0x10] sm:$0xff]
        %v1537 = vld [vmem:[%s11 + $0x18] sm:$0xff]
        %v1538 = vld [vmem:[%s13] sm:$0x1]
        %v1539 = vld [vmem:[%s15] sm:$0xff]
        %v1540 = vld [vmem:[%s15 + $0x8] sm:$0xff]
        %v1541 = vld [vmem:[%s15 + $0x10] sm:$0xff]
        %v1542 = vld [vmem:[%s15 + $0x18] sm:$0xff]
        %v1543 = vld [vmem:[%s17] sm:$0x1]
        %v1544 = vld [vmem:[%s19] sm:$0x1]
        %v1545 = vld [vmem:[%s21] sm:$0x1]
        %v1546 = vld [vmem:[%s23] sm:$0xff]
        %v1547 = vld [vmem:[%s23 + $0x8] sm:$0xff]
        %v1548 = vld [vmem:[%s23 + $0x10] sm:$0xff]
        %v1549 = vld [vmem:[%s23 + $0x18] sm:$0xff]
        %v1550 = vld [vmem:[%s25] sm:$0x1]
        %v1551 = vld [vmem:[%s27] sm:$0xff]
        %v1552 = vld [vmem:[%s27 + $0x8] sm:$0xff]
        %v1553 = vld [vmem:[%s27 + $0x10] sm:$0xff]
        %v1554 = vld [vmem:[%s27 + $0x18] sm:$0xff]
        %v1555 = vld [vmem:[%s27 + $0x20] sm:$0xff]
        %v1556 = vld [vmem:[%s27 + $0x28] sm:$0xff]
        %v1557 = vld [vmem:[%s27 + $0x30] sm:$0xff]
        %v1558 = vld [vmem:[%s27 + $0x38] sm:$0xff]
        %v1559 = vld [vmem:[%s29] sm:$0x1]
        %v1560 = vld [vmem:[%s31] sm:$0x1]
        %v1561 = vld [vmem:[%s33] sm:$0x1]
        %v1563 = vlaneseq
        %v1564 = vshrl.u32 %v1563, 7
        %v1565 = vsub.s32 0, %v1564
        %v1566 = vrot.slane %v1538, %v1565
        %vm1568 = vcmask 261120
        %v1570 = vsel %vm1568, %v1533, 0
        %1572 = vmatprep.subr.mxu0 0.0
        %1573 = vmatpush1.msra.mxu0 %v1534
        %1574 = vmatprep.subr.mxu0 0.0
        %1575 = vmatpush1.msra.mxu0 %v1535
        %1576 = vmatprep.subr.mxu0 0.0
        %1577 = vmatpush1.msra.mxu0 %v1536
        %1578 = vmatprep.subr.mxu0 0.0
        %1579 = vmatpush1.msra.mxu0 %v1537
        %1580 = vmatprep.subr.mxu0 0.0
        %1581 = vmatpush1.msra.mxu0 0.0
        %1582 = vmatprep.subr.mxu0 0.0
        %1583 = vmatpush1.msra.mxu0 0.0
        %1584 = vmatprep.subr.mxu0 0.0
        %1585 = vmatpush1.msra.mxu0 0.0
        %1586 = vmatprep.subr.mxu0 0.0
        %1587 = vmatpush1.msra.mxu0 0.0
        %1588 = vmatprep.subr.mxu0 0.0
        %1589 = vmatpush1.msra.mxu0 0.0
        %1590 = vmatprep.subr.mxu0 0.0
        %1591 = vmatpush1.msra.mxu0 0.0
        %1592 = vmatprep.subr.mxu0 0.0
        %1593 = vmatpush1.msra.mxu0 0.0
        %1594 = vmatprep.subr.mxu0 0.0
        %1595 = vmatpush1.msra.mxu0 0.0
        %1596 = vmatprep.subr.mxu0 0.0
        %1597 = vmatpush1.msra.mxu0 0.0
        %1598 = vmatprep.subr.mxu0 0.0
        %1599 = vmatpush1.msra.mxu0 0.0
        %1600 = vmatprep.subr.mxu0 0.0
        %1601 = vmatpush1.msra.mxu0 0.0
        %1602 = vmatprep.subr.mxu0 0.0
        %1603 = vmatpush1.msra.mxu0 0.0
        %1604 = vmatprep.subr.mxu0 0.0
        %1605 = vmatpush1.msra.mxu0 0.0
        %1606 = vmatprep.subr.mxu0 0.0
        %1607 = vmatpush1.msra.mxu0 0.0
        %1608 = vmatprep.subr.mxu0 0.0
        %1609 = vmatpush1.msra.mxu0 0.0
        %1610 = vmatprep.subr.mxu0 0.0
        %1611 = vmatpush1.msra.mxu0 0.0
        %1612 = vmatprep.subr.mxu0 0.0
        %1613 = vmatpush1.msra.mxu0 0.0
        %1614 = vmatprep.subr.mxu0 0.0
        %1615 = vmatpush1.msra.mxu0 0.0
        %1616 = vmatprep.subr.mxu0 0.0
        %1617 = vmatpush1.msra.mxu0 0.0
        %1618 = vmatprep.subr.mxu0 0.0
        %1619 = vmatpush1.msra.mxu0 0.0
        %1620 = vmatprep.subr.mxu0 0.0
        %1621 = vmatpush1.msra.mxu0 0.0
        %1622 = vmatprep.subr.mxu0 0.0
        %1623 = vmatpush1.msra.mxu0 0.0
        %1624 = vmatprep.subr.mxu0 0.0
        %1625 = vmatpush1.msra.mxu0 0.0
        %1626 = vmatprep.subr.mxu0 0.0
        %1627 = vmatpush1.msra.mxu0 0.0
        %1628 = vmatprep.subr.mxu0 0.0
        %1629 = vmatpush1.msra.mxu0 0.0
        %1630 = vmatprep.subr.mxu0 0.0
        %1631 = vmatpush1.msra.mxu0 0.0
        %1632 = vmatprep.subr.mxu0 0.0
        %1633 = vmatpush1.msra.mxu0 0.0
        %1634 = vmatprep.subr.mxu0 0.0
        %1635 = vmatpush1.msra.mxu0 0.0
        %1636 = vmatprep.mubr.f32.mxu0 0.0
        %1637 = vmatmul.mubr.f32.gmra.mrb[0].mxu0 %v1570
        %v1638 = vpop.f32.mrb[0].mxu0
        %v1639 = vadd.f32 %v1566, %v1638
        %v1640 = vpop.f32.mrb[0].mxu0
        %1641 = vdwg.mxu0
        %1643 = vrot.lane.b32.xlu0 %v1639, 96
        %v1644 = vpop.permute.xlu0 %1643
        %vm1645 = vcmask 64512
        %v1646 = vsel %vm1645, %v1639, 0
        %v1648 = vsel %vm1645, %v1644, 0
        %1650 = vmatprep.subr.mxu0 0.0
        %1651 = vmatpush1.xpose.msra.mxu0 %v1648
        %1652 = vmatprep.subr.mxu0 0.0
        %1653 = vmatpush1.xpose.msra.mxu0 0.0
        %1654 = vmatprep.subr.mxu0 0.0
        %1655 = vmatpush1.xpose.msra.mxu0 0.0
        %1656 = vmatprep.subr.mxu0 0.0
        %1657 = vmatpush1.xpose.msra.mxu0 0.0
        %1658 = vmatprep.subr.mxu0 0.0
        %1659 = vmatpush1.xpose.msra.mxu0 0.0
        %1660 = vmatprep.subr.mxu0 0.0
        %1661 = vmatpush1.xpose.msra.mxu0 0.0
        %1662 = vmatprep.subr.mxu0 0.0
        %1663 = vmatpush1.xpose.msra.mxu0 0.0
        %1664 = vmatprep.subr.mxu0 0.0
        %1665 = vmatpush1.xpose.msra.mxu0 0.0
        %1666 = vmatprep.subr.mxu0 0.0
        %1667 = vmatpush1.xpose.msra.mxu0 0.0
        %1668 = vmatprep.subr.mxu0 0.0
        %1669 = vmatpush1.xpose.msra.mxu0 0.0
        %1670 = vmatprep.subr.mxu0 0.0
        %1671 = vmatpush1.xpose.msra.mxu0 0.0
        %1672 = vmatprep.subr.mxu0 0.0
        %1673 = vmatpush1.xpose.msra.mxu0 0.0
        %1674 = vmatprep.subr.mxu0 0.0
        %1675 = vmatpush1.xpose.msra.mxu0 0.0
        %1676 = vmatprep.subr.mxu0 0.0
        %1677 = vmatpush1.xpose.msra.mxu0 0.0
        %1678 = vmatprep.subr.mxu0 0.0
        %1679 = vmatpush1.xpose.msra.mxu0 0.0
        %1680 = vmatprep.subr.mxu0 0.0
        %1681 = vmatpush1.xpose.msra.mxu0 0.0
        %1682 = vmatprep.subr.mxu0 0.0
        %1683 = vmatpush1.xpose.msra.mxu0 0.0
        %1684 = vmatprep.subr.mxu0 0.0
        %1685 = vmatpush1.xpose.msra.mxu0 0.0
        %1686 = vmatprep.subr.mxu0 0.0
        %1687 = vmatpush1.xpose.msra.mxu0 0.0
        %1688 = vmatprep.subr.mxu0 0.0
        %1689 = vmatpush1.xpose.msra.mxu0 0.0
        %1690 = vmatprep.subr.mxu0 0.0
        %1691 = vmatpush1.xpose.msra.mxu0 0.0
        %1692 = vmatprep.subr.mxu0 0.0
        %1693 = vmatpush1.xpose.msra.mxu0 0.0
        %1694 = vmatprep.subr.mxu0 0.0
        %1695 = vmatpush1.xpose.msra.mxu0 0.0
        %1696 = vmatprep.subr.mxu0 0.0
        %1697 = vmatpush1.xpose.msra.mxu0 0.0
        %1698 = vmatprep.subr.mxu0 0.0
        %1699 = vmatpush1.xpose.msra.mxu0 0.0
        %1700 = vmatprep.subr.mxu0 0.0
        %1701 = vmatpush1.xpose.msra.mxu0 0.0
        %1702 = vmatprep.subr.mxu0 0.0
        %1703 = vmatpush1.xpose.msra.mxu0 0.0
        %1704 = vmatprep.subr.mxu0 0.0
        %1705 = vmatpush1.xpose.msra.mxu0 0.0
        %1706 = vmatprep.subr.mxu0 0.0
        %1707 = vmatpush1.xpose.msra.mxu0 0.0
        %1708 = vmatprep.subr.mxu0 0.0
        %1709 = vmatpush1.xpose.msra.mxu0 0.0
        %1710 = vmatprep.subr.mxu0 0.0
        %1711 = vmatpush1.xpose.msra.mxu0 0.0
        %1712 = vmatprep.subr.mxu0 0.0
        %1713 = vmatpush1.xpose.msra.mxu0 0.0
        %1714 = vmatprep.mubr.f32.mxu0 0.0
        %1715 = vmatmul.mubr.f32.gmra.mrb[0].mxu0 %v1646
        %v1716 = vpop.f32.mrb[0].mxu0
        %v1717 = vadd.f32 0.0, %v1716
        %v1718 = vpop.f32.mrb[0].mxu0
        %1719 = vdwg.mxu0
        %v1720 = vmul.f32 %v1717, 0.35355338
        %v1721 = vsel %vm1645, %v1720, -inf
        %1722 = vmax.xlane.f32.xlu0 %v1721
        %v1723 = vpop.xlane.xlu0 %1722
        %v1724 = vsub.f32 %v1720, %v1723
        %v1725 = vmul.f32 %v1724, 1.442695
        %v1726 = vpow.pop %v1725
        %v1727 = vsel %vm1645, %v1726, 0.0
        %1728 = vadd.xlane.f32.xlu0 %v1727
        %v1729 = vpop.xlane.xlu0 %1728
        %v1730 = vrcp.pop %v1729
        %v1731 = vmul.f32 %v1726, %v1730
        %1732 = vrot.lane.b32.xlu0 %v1639, 64
        %v1733 = vpop.permute.xlu0 %1732
        %v1736 = vsel %vm1645, %v1731, 0
        %1738 = vmatprep.subr.mxu0 0.0
        %1739 = vmatpush1.msra.mxu0 %v1733
        %1740 = vmatprep.subr.mxu0 0.0
        %1741 = vmatpush1.msra.mxu0 0.0
        %1742 = vmatprep.subr.mxu0 0.0
        %1743 = vmatpush1.msra.mxu0 0.0
        %1744 = vmatprep.subr.mxu0 0.0
        %1745 = vmatpush1.msra.mxu0 0.0
        %1746 = vmatprep.subr.mxu0 0.0
        %1747 = vmatpush1.msra.mxu0 0.0
        %1748 = vmatprep.subr.mxu0 0.0
        %1749 = vmatpush1.msra.mxu0 0.0
        %1750 = vmatprep.subr.mxu0 0.0
        %1751 = vmatpush1.msra.mxu0 0.0
        %1752 = vmatprep.subr.mxu0 0.0
        %1753 = vmatpush1.msra.mxu0 0.0
        %1754 = vmatprep.subr.mxu0 0.0
        %1755 = vmatpush1.msra.mxu0 0.0
        %1756 = vmatprep.subr.mxu0 0.0
        %1757 = vmatpush1.msra.mxu0 0.0
        %1758 = vmatprep.subr.mxu0 0.0
        %1759 = vmatpush1.msra.mxu0 0.0
        %1760 = vmatprep.subr.mxu0 0.0
        %1761 = vmatpush1.msra.mxu0 0.0
        %1762 = vmatprep.subr.mxu0 0.0
        %1763 = vmatpush1.msra.mxu0 0.0
        %1764 = vmatprep.subr.mxu0 0.0
        %1765 = vmatpush1.msra.mxu0 0.0
        %1766 = vmatprep.subr.mxu0 0.0
        %1767 = vmatpush1.msra.mxu0 0.0
        %1768 = vmatprep.subr.mxu0 0.0
        %1769 = vmatpush1.msra.mxu0 0.0
        %1770 = vmatprep.subr.mxu0 0.0
        %1771 = vmatpush1.msra.mxu0 0.0
        %1772 = vmatprep.subr.mxu0 0.0
        %1773 = vmatpush1.msra.mxu0 0.0
        %1774 = vmatprep.subr.mxu0 0.0
        %1775 = vmatpush1.msra.mxu0 0.0
        %1776 = vmatprep.subr.mxu0 0.0
        %1777 = vmatpush1.msra.mxu0 0.0
        %1778 = vmatprep.subr.mxu0 0.0
        %1779 = vmatpush1.msra.mxu0 0.0
        %1780 = vmatprep.subr.mxu0 0.0
        %1781 = vmatpush1.msra.mxu0 0.0
        %1782 = vmatprep.subr.mxu0 0.0
        %1783 = vmatpush1.msra.mxu0 0.0
        %1784 = vmatprep.subr.mxu0 0.0
        %1785 = vmatpush1.msra.mxu0 0.0
        %1786 = vmatprep.subr.mxu0 0.0
        %1787 = vmatpush1.msra.mxu0 0.0
        %1788 = vmatprep.subr.mxu0 0.0
        %1789 = vmatpush1.msra.mxu0 0.0
        %1790 = vmatprep.subr.mxu0 0.0
        %1791 = vmatpush1.msra.mxu0 0.0
        %1792 = vmatprep.subr.mxu0 0.0
        %1793 = vmatpush1.msra.mxu0 0.0
        %1794 = vmatprep.subr.mxu0 0.0
        %1795 = vmatpush1.msra.mxu0 0.0
        %1796 = vmatprep.subr.mxu0 0.0
        %1797 = vmatpush1.msra.mxu0 0.0
        %1798 = vmatprep.subr.mxu0 0.0
        %1799 = vmatpush1.msra.mxu0 0.0
        %1800 = vmatprep.subr.mxu0 0.0
        %1801 = vmatpush1.msra.mxu0 0.0
        %1802 = vmatprep.mubr.f32.mxu0 0.0
        %1803 = vmatmul.mubr.f32.gmra.mrb[0].mxu0 %v1736
        %v1804 = vpop.f32.mrb[0].mxu0
        %v1805 = vadd.f32 0.0, %v1804
        %v1806 = vpop.f32.mrb[0].mxu0
        %1807 = vdwg.mxu0
        %1808 = vrot.lane.b32.xlu0 %v1639, 120
        %v1809 = vpop.permute.xlu0 %1808
        %1810 = vrot.lane.b32.xlu0 %v1639, 88
        %v1811 = vpop.permute.xlu0 %1810
        %v1812 = vsel %vm1645, %v1809, 0
        %v1814 = vsel %vm1645, %v1811, 0
        %1816 = vmatprep.subr.mxu0 0.0
        %1817 = vmatpush1.xpose.msra.mxu0 %v1814
        %1818 = vmatprep.subr.mxu0 0.0
        %1819 = vmatpush1.xpose.msra.mxu0 0.0
        %1820 = vmatprep.subr.mxu0 0.0
        %1821 = vmatpush1.xpose.msra.mxu0 0.0
        %1822 = vmatprep.subr.mxu0 0.0
        %1823 = vmatpush1.xpose.msra.mxu0 0.0
        %1824 = vmatprep.subr.mxu0 0.0
        %1825 = vmatpush1.xpose.msra.mxu0 0.0
        %1826 = vmatprep.subr.mxu0 0.0
        %1827 = vmatpush1.xpose.msra.mxu0 0.0
        %1828 = vmatprep.subr.mxu0 0.0
        %1829 = vmatpush1.xpose.msra.mxu0 0.0
        %1830 = vmatprep.subr.mxu0 0.0
        %1831 = vmatpush1.xpose.msra.mxu0 0.0
        %1832 = vmatprep.subr.mxu0 0.0
        %1833 = vmatpush1.xpose.msra.mxu0 0.0
        %1834 = vmatprep.subr.mxu0 0.0
        %1835 = vmatpush1.xpose.msra.mxu0 0.0
        %1836 = vmatprep.subr.mxu0 0.0
        %1837 = vmatpush1.xpose.msra.mxu0 0.0
        %1838 = vmatprep.subr.mxu0 0.0
        %1839 = vmatpush1.xpose.msra.mxu0 0.0
        %1840 = vmatprep.subr.mxu0 0.0
        %1841 = vmatpush1.xpose.msra.mxu0 0.0
        %1842 = vmatprep.subr.mxu0 0.0
        %1843 = vmatpush1.xpose.msra.mxu0 0.0
        %1844 = vmatprep.subr.mxu0 0.0
        %1845 = vmatpush1.xpose.msra.mxu0 0.0
        %1846 = vmatprep.subr.mxu0 0.0
        %1847 = vmatpush1.xpose.msra.mxu0 0.0
        %1848 = vmatprep.subr.mxu0 0.0
        %1849 = vmatpush1.xpose.msra.mxu0 0.0
        %1850 = vmatprep.subr.mxu0 0.0
        %1851 = vmatpush1.xpose.msra.mxu0 0.0
        %1852 = vmatprep.subr.mxu0 0.0
        %1853 = vmatpush1.xpose.msra.mxu0 0.0
        %1854 = vmatprep.subr.mxu0 0.0
        %1855 = vmatpush1.xpose.msra.mxu0 0.0
        %1856 = vmatprep.subr.mxu0 0.0
        %1857 = vmatpush1.xpose.msra.mxu0 0.0
        %1858 = vmatprep.subr.mxu0 0.0
        %1859 = vmatpush1.xpose.msra.mxu0 0.0
        %1860 = vmatprep.subr.mxu0 0.0
        %1861 = vmatpush1.xpose.msra.mxu0 0.0
        %1862 = vmatprep.subr.mxu0 0.0
        %1863 = vmatpush1.xpose.msra.mxu0 0.0
        %1864 = vmatprep.subr.mxu0 0.0
        %1865 = vmatpush1.xpose.msra.mxu0 0.0
        %1866 = vmatprep.subr.mxu0 0.0
        %1867 = vmatpush1.xpose.msra.mxu0 0.0
        %1868 = vmatprep.subr.mxu0 0.0
        %1869 = vmatpush1.xpose.msra.mxu0 0.0
        %1870 = vmatprep.subr.mxu0 0.0
        %1871 = vmatpush1.xpose.msra.mxu0 0.0
        %1872 = vmatprep.subr.mxu0 0.0
        %1873 = vmatpush1.xpose.msra.mxu0 0.0
        %1874 = vmatprep.subr.mxu0 0.0
        %1875 = vmatpush1.xpose.msra.mxu0 0.0
        %1876 = vmatprep.subr.mxu0 0.0
        %1877 = vmatpush1.xpose.msra.mxu0 0.0
        %1878 = vmatprep.subr.mxu0 0.0
        %1879 = vmatpush1.xpose.msra.mxu0 0.0
        %1880 = vmatprep.mubr.f32.mxu0 0.0
        %1881 = vmatmul.mubr.f32.gmra.mrb[0].mxu0 %v1812
        %v1882 = vpop.f32.mrb[0].mxu0
        %v1883 = vadd.f32 0.0, %v1882
        %v1884 = vpop.f32.mrb[0].mxu0
        %1885 = vdwg.mxu0
        %v1886 = vmul.f32 %v1883, 0.35355338
        %v1887 = vsel %vm1645, %v1886, -inf
        %1888 = vmax.xlane.f32.xlu0 %v1887
        %v1889 = vpop.xlane.xlu0 %1888
        %v1890 = vsub.f32 %v1886, %v1889
        %v1891 = vmul.f32 %v1890, 1.442695
        %v1892 = vpow.pop %v1891
        %v1893 = vsel %vm1645, %v1892, 0.0
        %1894 = vadd.xlane.f32.xlu0 %v1893
        %v1895 = vpop.xlane.xlu0 %1894
        %v1896 = vrcp.pop %v1895
        %v1897 = vmul.f32 %v1892, %v1896
        %1898 = vrot.lane.b32.xlu0 %v1639, 56
        %v1899 = vpop.permute.xlu0 %1898
        %v1902 = vsel %vm1645, %v1897, 0
        %1904 = vmatprep.subr.mxu0 0.0
        %1905 = vmatpush1.msra.mxu0 %v1899
        %1906 = vmatprep.subr.mxu0 0.0
        %1907 = vmatpush1.msra.mxu0 0.0
        %1908 = vmatprep.subr.mxu0 0.0
        %1909 = vmatpush1.msra.mxu0 0.0
        %1910 = vmatprep.subr.mxu0 0.0
        %1911 = vmatpush1.msra.mxu0 0.0
        %1912 = vmatprep.subr.mxu0 0.0
        %1913 = vmatpush1.msra.mxu0 0.0
        %1914 = vmatprep.subr.mxu0 0.0
        %1915 = vmatpush1.msra.mxu0 0.0
        %1916 = vmatprep.subr.mxu0 0.0
        %1917 = vmatpush1.msra.mxu0 0.0
        %1918 = vmatprep.subr.mxu0 0.0
        %1919 = vmatpush1.msra.mxu0 0.0
        %1920 = vmatprep.subr.mxu0 0.0
        %1921 = vmatpush1.msra.mxu0 0.0
        %1922 = vmatprep.subr.mxu0 0.0
        %1923 = vmatpush1.msra.mxu0 0.0
        %1924 = vmatprep.subr.mxu0 0.0
        %1925 = vmatpush1.msra.mxu0 0.0
        %1926 = vmatprep.subr.mxu0 0.0
        %1927 = vmatpush1.msra.mxu0 0.0
        %1928 = vmatprep.subr.mxu0 0.0
        %1929 = vmatpush1.msra.mxu0 0.0
        %1930 = vmatprep.subr.mxu0 0.0
        %1931 = vmatpush1.msra.mxu0 0.0
        %1932 = vmatprep.subr.mxu0 0.0
        %1933 = vmatpush1.msra.mxu0 0.0
        %1934 = vmatprep.subr.mxu0 0.0
        %1935 = vmatpush1.msra.mxu0 0.0
        %1936 = vmatprep.subr.mxu0 0.0
        %1937 = vmatpush1.msra.mxu0 0.0
        %1938 = vmatprep.subr.mxu0 0.0
        %1939 = vmatpush1.msra.mxu0 0.0
        %1940 = vmatprep.subr.mxu0 0.0
        %1941 = vmatpush1.msra.mxu0 0.0
        %1942 = vmatprep.subr.mxu0 0.0
        %1943 = vmatpush1.msra.mxu0 0.0
        %1944 = vmatprep.subr.mxu0 0.0
        %1945 = vmatpush1.msra.mxu0 0.0
        %1946 = vmatprep.subr.mxu0 0.0
        %1947 = vmatpush1.msra.mxu0 0.0
        %1948 = vmatprep.subr.mxu0 0.0
        %1949 = vmatpush1.msra.mxu0 0.0
        %1950 = vmatprep.subr.mxu0 0.0
        %1951 = vmatpush1.msra.mxu0 0.0
        %1952 = vmatprep.subr.mxu0 0.0
        %1953 = vmatpush1.msra.mxu0 0.0
        %1954 = vmatprep.subr.mxu0 0.0
        %1955 = vmatpush1.msra.mxu0 0.0
        %1956 = vmatprep.subr.mxu0 0.0
        %1957 = vmatpush1.msra.mxu0 0.0
        %1958 = vmatprep.subr.mxu0 0.0
        %1959 = vmatpush1.msra.mxu0 0.0
        %1960 = vmatprep.subr.mxu0 0.0
        %1961 = vmatpush1.msra.mxu0 0.0
        %1962 = vmatprep.subr.mxu0 0.0
        %1963 = vmatpush1.msra.mxu0 0.0
        %1964 = vmatprep.subr.mxu0 0.0
        %1965 = vmatpush1.msra.mxu0 0.0
        %1966 = vmatprep.subr.mxu0 0.0
        %1967 = vmatpush1.msra.mxu0 0.0
        %1968 = vmatprep.mubr.f32.mxu0 0.0
        %1969 = vmatmul.mubr.f32.gmra.mrb[0].mxu0 %v1902
        %v1970 = vpop.f32.mrb[0].mxu0
        %v1971 = vadd.f32 0.0, %v1970
        %v1972 = vpop.f32.mrb[0].mxu0
        %1973 = vdwg.mxu0
        %1974 = vrot.lane.b32.xlu0 %v1639, 112
        %v1975 = vpop.permute.xlu0 %1974
        %1976 = vrot.lane.b32.xlu0 %v1639, 80
        %v1977 = vpop.permute.xlu0 %1976
        %v1978 = vsel %vm1645, %v1975, 0
        %v1980 = vsel %vm1645, %v1977, 0
        %1982 = vmatprep.subr.mxu0 0.0
        %1983 = vmatpush1.xpose.msra.mxu0 %v1980
        %1984 = vmatprep.subr.mxu0 0.0
        %1985 = vmatpush1.xpose.msra.mxu0 0.0
        %1986 = vmatprep.subr.mxu0 0.0
        %1987 = vmatpush1.xpose.msra.mxu0 0.0
        %1988 = vmatprep.subr.mxu0 0.0
        %1989 = vmatpush1.xpose.msra.mxu0 0.0
        %1990 = vmatprep.subr.mxu0 0.0
        %1991 = vmatpush1.xpose.msra.mxu0 0.0
        %1992 = vmatprep.subr.mxu0 0.0
        %1993 = vmatpush1.xpose.msra.mxu0 0.0
        %1994 = vmatprep.subr.mxu0 0.0
        %1995 = vmatpush1.xpose.msra.mxu0 0.0
        %1996 = vmatprep.subr.mxu0 0.0
        %1997 = vmatpush1.xpose.msra.mxu0 0.0
        %1998 = vmatprep.subr.mxu0 0.0
        %1999 = vmatpush1.xpose.msra.mxu0 0.0
        %2000 = vmatprep.subr.mxu0 0.0
        %2001 = vmatpush1.xpose.msra.mxu0 0.0
        %2002 = vmatprep.subr.mxu0 0.0
        %2003 = vmatpush1.xpose.msra.mxu0 0.0
        %2004 = vmatprep.subr.mxu0 0.0
        %2005 = vmatpush1.xpose.msra.mxu0 0.0
        %2006 = vmatprep.subr.mxu0 0.0
        %2007 = vmatpush1.xpose.msra.mxu0 0.0
        %2008 = vmatprep.subr.mxu0 0.0
        %2009 = vmatpush1.xpose.msra.mxu0 0.0
        %2010 = vmatprep.subr.mxu0 0.0
        %2011 = vmatpush1.xpose.msra.mxu0 0.0
        %2012 = vmatprep.subr.mxu0 0.0
        %2013 = vmatpush1.xpose.msra.mxu0 0.0
        %2014 = vmatprep.subr.mxu0 0.0
        %2015 = vmatpush1.xpose.msra.mxu0 0.0
        %2016 = vmatprep.subr.mxu0 0.0
        %2017 = vmatpush1.xpose.msra.mxu0 0.0
        %2018 = vmatprep.subr.mxu0 0.0
        %2019 = vmatpush1.xpose.msra.mxu0 0.0
        %2020 = vmatprep.subr.mxu0 0.0
        %2021 = vmatpush1.xpose.msra.mxu0 0.0
        %2022 = vmatprep.subr.mxu0 0.0
        %2023 = vmatpush1.xpose.msra.mxu0 0.0
        %2024 = vmatprep.subr.mxu0 0.0
        %2025 = vmatpush1.xpose.msra.mxu0 0.0
        %2026 = vmatprep.subr.mxu0 0.0
        %2027 = vmatpush1.xpose.msra.mxu0 0.0
        %2028 = vmatprep.subr.mxu0 0.0
        %2029 = vmatpush1.xpose.msra.mxu0 0.0
        %2030 = vmatprep.subr.mxu0 0.0
        %2031 = vmatpush1.xpose.msra.mxu0 0.0
        %2032 = vmatprep.subr.mxu0 0.0
        %2033 = vmatpush1.xpose.msra.mxu0 0.0
        %2034 = vmatprep.subr.mxu0 0.0
        %2035 = vmatpush1.xpose.msra.mxu0 0.0
        %2036 = vmatprep.subr.mxu0 0.0
        %2037 = vmatpush1.xpose.msra.mxu0 0.0
        %2038 = vmatprep.subr.mxu0 0.0
        %2039 = vmatpush1.xpose.msra.mxu0 0.0
        %2040 = vmatprep.subr.mxu0 0.0
        %2041 = vmatpush1.xpose.msra.mxu0 0.0
        %2042 = vmatprep.subr.mxu0 0.0
        %2043 = vmatpush1.xpose.msra.mxu0 0.0
        %2044 = vmatprep.subr.mxu0 0.0
        %2045 = vmatpush1.xpose.msra.mxu0 0.0
        %2046 = vmatprep.mubr.f32.mxu0 0.0
        %2047 = vmatmul.mubr.f32.gmra.mrb[0].mxu0 %v1978
        %v2048 = vpop.f32.mrb[0].mxu0
        %v2049 = vadd.f32 0.0, %v2048
        %v2050 = vpop.f32.mrb[0].mxu0
        %2051 = vdwg.mxu0
        %v2052 = vmul.f32 %v2049, 0.35355338
        %v2053 = vsel %vm1645, %v2052, -inf
        %2054 = vmax.xlane.f32.xlu0 %v2053
        %v2055 = vpop.xlane.xlu0 %2054
        %v2056 = vsub.f32 %v2052, %v2055
        %v2057 = vmul.f32 %v2056, 1.442695
        %v2058 = vpow.pop %v2057
        %v2059 = vsel %vm1645, %v2058, 0.0
        %2060 = vadd.xlane.f32.xlu0 %v2059
        %v2061 = vpop.xlane.xlu0 %2060
        %v2062 = vrcp.pop %v2061
        %v2063 = vmul.f32 %v2058, %v2062
        %2064 = vrot.lane.b32.xlu0 %v1639, 48
        %v2065 = vpop.permute.xlu0 %2064
        %v2068 = vsel %vm1645, %v2063, 0
        %2070 = vmatprep.subr.mxu0 0.0
        %2071 = vmatpush1.msra.mxu0 %v2065
        %2072 = vmatprep.subr.mxu0 0.0
        %2073 = vmatpush1.msra.mxu0 0.0
        %2074 = vmatprep.subr.mxu0 0.0
        %2075 = vmatpush1.msra.mxu0 0.0
        %2076 = vmatprep.subr.mxu0 0.0
        %2077 = vmatpush1.msra.mxu0 0.0
        %2078 = vmatprep.subr.mxu0 0.0
        %2079 = vmatpush1.msra.mxu0 0.0
        %2080 = vmatprep.subr.mxu0 0.0
        %2081 = vmatpush1.msra.mxu0 0.0
        %2082 = vmatprep.subr.mxu0 0.0
        %2083 = vmatpush1.msra.mxu0 0.0
        %2084 = vmatprep.subr.mxu0 0.0
        %2085 = vmatpush1.msra.mxu0 0.0
        %2086 = vmatprep.subr.mxu0 0.0
        %2087 = vmatpush1.msra.mxu0 0.0
        %2088 = vmatprep.subr.mxu0 0.0
        %2089 = vmatpush1.msra.mxu0 0.0
        %2090 = vmatprep.subr.mxu0 0.0
        %2091 = vmatpush1.msra.mxu0 0.0
        %2092 = vmatprep.subr.mxu0 0.0
        %2093 = vmatpush1.msra.mxu0 0.0
        %2094 = vmatprep.subr.mxu0 0.0
        %2095 = vmatpush1.msra.mxu0 0.0
        %2096 = vmatprep.subr.mxu0 0.0
        %2097 = vmatpush1.msra.mxu0 0.0
        %2098 = vmatprep.subr.mxu0 0.0
        %2099 = vmatpush1.msra.mxu0 0.0
        %2100 = vmatprep.subr.mxu0 0.0
        %2101 = vmatpush1.msra.mxu0 0.0
        %2102 = vmatprep.subr.mxu0 0.0
        %2103 = vmatpush1.msra.mxu0 0.0
        %2104 = vmatprep.subr.mxu0 0.0
        %2105 = vmatpush1.msra.mxu0 0.0
        %2106 = vmatprep.subr.mxu0 0.0
        %2107 = vmatpush1.msra.mxu0 0.0
        %2108 = vmatprep.subr.mxu0 0.0
        %2109 = vmatpush1.msra.mxu0 0.0
        %2110 = vmatprep.subr.mxu0 0.0
        %2111 = vmatpush1.msra.mxu0 0.0
        %2112 = vmatprep.subr.mxu0 0.0
        %2113 = vmatpush1.msra.mxu0 0.0
        %2114 = vmatprep.subr.mxu0 0.0
        %2115 = vmatpush1.msra.mxu0 0.0
        %2116 = vmatprep.subr.mxu0 0.0
        %2117 = vmatpush1.msra.mxu0 0.0
        %2118 = vmatprep.subr.mxu0 0.0
        %2119 = vmatpush1.msra.mxu0 0.0
        %2120 = vmatprep.subr.mxu0 0.0
        %2121 = vmatpush1.msra.mxu0 0.0
        %2122 = vmatprep.subr.mxu0 0.0
        %2123 = vmatpush1.msra.mxu0 0.0
        %2124 = vmatprep.subr.mxu0 0.0
        %2125 = vmatpush1.msra.mxu0 0.0
        %2126 = vmatprep.subr.mxu0 0.0
        %2127 = vmatpush1.msra.mxu0 0.0
        %2128 = vmatprep.subr.mxu0 0.0
        %2129 = vmatpush1.msra.mxu0 0.0
        %2130 = vmatprep.subr.mxu0 0.0
        %2131 = vmatpush1.msra.mxu0 0.0
        %2132 = vmatprep.subr.mxu0 0.0
        %2133 = vmatpush1.msra.mxu0 0.0
        %2134 = vmatprep.mubr.f32.mxu0 0.0
        %2135 = vmatmul.mubr.f32.gmra.mrb[0].mxu0 %v2068
        %v2136 = vpop.f32.mrb[0].mxu0
        %v2137 = vadd.f32 0.0, %v2136
        %v2138 = vpop.f32.mrb[0].mxu0
        %2139 = vdwg.mxu0
        %2140 = vrot.lane.b32.xlu0 %v1639, 104
        %v2141 = vpop.permute.xlu0 %2140
        %2142 = vrot.lane.b32.xlu0 %v1639, 72
        %v2143 = vpop.permute.xlu0 %2142
        %v2144 = vsel %vm1645, %v2141, 0
        %v2146 = vsel %vm1645, %v2143, 0
        %2148 = vmatprep.subr.mxu0 0.0
        %2149 = vmatpush1.xpose.msra.mxu0 %v2146
        %2150 = vmatprep.subr.mxu0 0.0
        %2151 = vmatpush1.xpose.msra.mxu0 0.0
        %2152 = vmatprep.subr.mxu0 0.0
        %2153 = vmatpush1.xpose.msra.mxu0 0.0
        %2154 = vmatprep.subr.mxu0 0.0
        %2155 = vmatpush1.xpose.msra.mxu0 0.0
        %2156 = vmatprep.subr.mxu0 0.0
        %2157 = vmatpush1.xpose.msra.mxu0 0.0
        %2158 = vmatprep.subr.mxu0 0.0
        %2159 = vmatpush1.xpose.msra.mxu0 0.0
        %2160 = vmatprep.subr.mxu0 0.0
        %2161 = vmatpush1.xpose.msra.mxu0 0.0
        %2162 = vmatprep.subr.mxu0 0.0
        %2163 = vmatpush1.xpose.msra.mxu0 0.0
        %2164 = vmatprep.subr.mxu0 0.0
        %2165 = vmatpush1.xpose.msra.mxu0 0.0
        %2166 = vmatprep.subr.mxu0 0.0
        %2167 = vmatpush1.xpose.msra.mxu0 0.0
        %2168 = vmatprep.subr.mxu0 0.0
        %2169 = vmatpush1.xpose.msra.mxu0 0.0
        %2170 = vmatprep.subr.mxu0 0.0
        %2171 = vmatpush1.xpose.msra.mxu0 0.0
        %2172 = vmatprep.subr.mxu0 0.0
        %2173 = vmatpush1.xpose.msra.mxu0 0.0
        %2174 = vmatprep.subr.mxu0 0.0
        %2175 = vmatpush1.xpose.msra.mxu0 0.0
        %2176 = vmatprep.subr.mxu0 0.0
        %2177 = vmatpush1.xpose.msra.mxu0 0.0
        %2178 = vmatprep.subr.mxu0 0.0
        %2179 = vmatpush1.xpose.msra.mxu0 0.0
        %2180 = vmatprep.subr.mxu0 0.0
        %2181 = vmatpush1.xpose.msra.mxu0 0.0
        %2182 = vmatprep.subr.mxu0 0.0
        %2183 = vmatpush1.xpose.msra.mxu0 0.0
        %2184 = vmatprep.subr.mxu0 0.0
        %2185 = vmatpush1.xpose.msra.mxu0 0.0
        %2186 = vmatprep.subr.mxu0 0.0
        %2187 = vmatpush1.xpose.msra.mxu0 0.0
        %2188 = vmatprep.subr.mxu0 0.0
        %2189 = vmatpush1.xpose.msra.mxu0 0.0
        %2190 = vmatprep.subr.mxu0 0.0
        %2191 = vmatpush1.xpose.msra.mxu0 0.0
        %2192 = vmatprep.subr.mxu0 0.0
        %2193 = vmatpush1.xpose.msra.mxu0 0.0
        %2194 = vmatprep.subr.mxu0 0.0
        %2195 = vmatpush1.xpose.msra.mxu0 0.0
        %2196 = vmatprep.subr.mxu0 0.0
        %2197 = vmatpush1.xpose.msra.mxu0 0.0
        %2198 = vmatprep.subr.mxu0 0.0
        %2199 = vmatpush1.xpose.msra.mxu0 0.0
        %2200 = vmatprep.subr.mxu0 0.0
        %2201 = vmatpush1.xpose.msra.mxu0 0.0
        %2202 = vmatprep.subr.mxu0 0.0
        %2203 = vmatpush1.xpose.msra.mxu0 0.0
        %2204 = vmatprep.subr.mxu0 0.0
        %2205 = vmatpush1.xpose.msra.mxu0 0.0
        %2206 = vmatprep.subr.mxu0 0.0
        %2207 = vmatpush1.xpose.msra.mxu0 0.0
        %2208 = vmatprep.subr.mxu0 0.0
        %2209 = vmatpush1.xpose.msra.mxu0 0.0
        %2210 = vmatprep.subr.mxu0 0.0
        %2211 = vmatpush1.xpose.msra.mxu0 0.0
        %2212 = vmatprep.mubr.f32.mxu0 0.0
        %2213 = vmatmul.mubr.f32.gmra.mrb[0].mxu0 %v2144
        %v2214 = vpop.f32.mrb[0].mxu0
        %v2215 = vadd.f32 0.0, %v2214
        %v2216 = vpop.f32.mrb[0].mxu0
        %2217 = vdwg.mxu0
        %v2218 = vmul.f32 %v2215, 0.35355338
        %v2219 = vsel %vm1645, %v2218, -inf
        %2220 = vmax.xlane.f32.xlu0 %v2219
        %v2221 = vpop.xlane.xlu0 %2220
        %v2222 = vsub.f32 %v2218, %v2221
        %v2223 = vmul.f32 %v2222, 1.442695
        %v2224 = vpow.pop %v2223
        %v2225 = vsel %vm1645, %v2224, 0.0
        %2226 = vadd.xlane.f32.xlu0 %v2225
        %v2227 = vpop.xlane.xlu0 %2226
        %v2228 = vrcp.pop %v2227
        %v2229 = vmul.f32 %v2224, %v2228
        %2230 = vrot.lane.b32.xlu0 %v1639, 40
        %v2231 = vpop.permute.xlu0 %2230
        %v2234 = vsel %vm1645, %v2229, 0
        %2236 = vmatprep.subr.mxu0 0.0
        %2237 = vmatpush1.msra.mxu0 %v2231
        %2238 = vmatprep.subr.mxu0 0.0
        %2239 = vmatpush1.msra.mxu0 0.0
        %2240 = vmatprep.subr.mxu0 0.0
        %2241 = vmatpush1.msra.mxu0 0.0
        %2242 = vmatprep.subr.mxu0 0.0
        %2243 = vmatpush1.msra.mxu0 0.0
        %2244 = vmatprep.subr.mxu0 0.0
        %2245 = vmatpush1.msra.mxu0 0.0
        %2246 = vmatprep.subr.mxu0 0.0
        %2247 = vmatpush1.msra.mxu0 0.0
        %2248 = vmatprep.subr.mxu0 0.0
        %2249 = vmatpush1.msra.mxu0 0.0
        %2250 = vmatprep.subr.mxu0 0.0
        %2251 = vmatpush1.msra.mxu0 0.0
        %2252 = vmatprep.subr.mxu0 0.0
        %2253 = vmatpush1.msra.mxu0 0.0
        %2254 = vmatprep.subr.mxu0 0.0
        %2255 = vmatpush1.msra.mxu0 0.0
        %2256 = vmatprep.subr.mxu0 0.0
        %2257 = vmatpush1.msra.mxu0 0.0
        %2258 = vmatprep.subr.mxu0 0.0
        %2259 = vmatpush1.msra.mxu0 0.0
        %2260 = vmatprep.subr.mxu0 0.0
        %2261 = vmatpush1.msra.mxu0 0.0
        %2262 = vmatprep.subr.mxu0 0.0
        %2263 = vmatpush1.msra.mxu0 0.0
        %2264 = vmatprep.subr.mxu0 0.0
        %2265 = vmatpush1.msra.mxu0 0.0
        %2266 = vmatprep.subr.mxu0 0.0
        %2267 = vmatpush1.msra.mxu0 0.0
        %2268 = vmatprep.subr.mxu0 0.0
        %2269 = vmatpush1.msra.mxu0 0.0
        %2270 = vmatprep.subr.mxu0 0.0
        %2271 = vmatpush1.msra.mxu0 0.0
        %2272 = vmatprep.subr.mxu0 0.0
        %2273 = vmatpush1.msra.mxu0 0.0
        %2274 = vmatprep.subr.mxu0 0.0
        %2275 = vmatpush1.msra.mxu0 0.0
        %2276 = vmatprep.subr.mxu0 0.0
        %2277 = vmatpush1.msra.mxu0 0.0
        %2278 = vmatprep.subr.mxu0 0.0
        %2279 = vmatpush1.msra.mxu0 0.0
        %2280 = vmatprep.subr.mxu0 0.0
        %2281 = vmatpush1.msra.mxu0 0.0
        %2282 = vmatprep.subr.mxu0 0.0
        %2283 = vmatpush1.msra.mxu0 0.0
        %2284 = vmatprep.subr.mxu0 0.0
        %2285 = vmatpush1.msra.mxu0 0.0
        %2286 = vmatprep.subr.mxu0 0.0
        %2287 = vmatpush1.msra.mxu0 0.0
        %2288 = vmatprep.subr.mxu0 0.0
        %2289 = vmatpush1.msra.mxu0 0.0
        %2290 = vmatprep.subr.mxu0 0.0
        %2291 = vmatpush1.msra.mxu0 0.0
        %2292 = vmatprep.subr.mxu0 0.0
        %2293 = vmatpush1.msra.mxu0 0.0
        %2294 = vmatprep.subr.mxu0 0.0
        %2295 = vmatpush1.msra.mxu0 0.0
        %2296 = vmatprep.subr.mxu0 0.0
        %2297 = vmatpush1.msra.mxu0 0.0
        %2298 = vmatprep.subr.mxu0 0.0
        %2299 = vmatpush1.msra.mxu0 0.0
        %2300 = vmatprep.mubr.f32.mxu0 0.0
        %2301 = vmatmul.mubr.f32.gmra.mrb[0].mxu0 %v2234
        %v2302 = vpop.f32.mrb[0].mxu0
        %v2303 = vadd.f32 0.0, %v2302
        %v2304 = vpop.f32.mrb[0].mxu0
        %2305 = vdwg.mxu0
        %v2307 = vsel %vm1645, %v1971, 0
        %2309 = vmatprep.subr.mxu0 0.0
        %2310 = vmatpush1.msra.mxu0 %v1540
        %2311 = vmatprep.subr.mxu0 0.0
        %2312 = vmatpush1.msra.mxu0 0.0
        %2313 = vmatprep.subr.mxu0 0.0
        %2314 = vmatpush1.msra.mxu0 0.0
        %2315 = vmatprep.subr.mxu0 0.0
        %2316 = vmatpush1.msra.mxu0 0.0
        %2317 = vmatprep.subr.mxu0 0.0
        %2318 = vmatpush1.msra.mxu0 0.0
        %2319 = vmatprep.subr.mxu0 0.0
        %2320 = vmatpush1.msra.mxu0 0.0
        %2321 = vmatprep.subr.mxu0 0.0
        %2322 = vmatpush1.msra.mxu0 0.0
        %2323 = vmatprep.subr.mxu0 0.0
        %2324 = vmatpush1.msra.mxu0 0.0
        %2325 = vmatprep.subr.mxu0 0.0
        %2326 = vmatpush1.msra.mxu0 0.0
        %2327 = vmatprep.subr.mxu0 0.0
        %2328 = vmatpush1.msra.mxu0 0.0
        %2329 = vmatprep.subr.mxu0 0.0
        %2330 = vmatpush1.msra.mxu0 0.0
        %2331 = vmatprep.subr.mxu0 0.0
        %2332 = vmatpush1.msra.mxu0 0.0
        %2333 = vmatprep.subr.mxu0 0.0
        %2334 = vmatpush1.msra.mxu0 0.0
        %2335 = vmatprep.subr.mxu0 0.0
        %2336 = vmatpush1.msra.mxu0 0.0
        %2337 = vmatprep.subr.mxu0 0.0
        %2338 = vmatpush1.msra.mxu0 0.0
        %2339 = vmatprep.subr.mxu0 0.0
        %2340 = vmatpush1.msra.mxu0 0.0
        %2341 = vmatprep.subr.mxu0 0.0
        %2342 = vmatpush1.msra.mxu0 0.0
        %2343 = vmatprep.subr.mxu0 0.0
        %2344 = vmatpush1.msra.mxu0 0.0
        %2345 = vmatprep.subr.mxu0 0.0
        %2346 = vmatpush1.msra.mxu0 0.0
        %2347 = vmatprep.subr.mxu0 0.0
        %2348 = vmatpush1.msra.mxu0 0.0
        %2349 = vmatprep.subr.mxu0 0.0
        %2350 = vmatpush1.msra.mxu0 0.0
        %2351 = vmatprep.subr.mxu0 0.0
        %2352 = vmatpush1.msra.mxu0 0.0
        %2353 = vmatprep.subr.mxu0 0.0
        %2354 = vmatpush1.msra.mxu0 0.0
        %2355 = vmatprep.subr.mxu0 0.0
        %2356 = vmatpush1.msra.mxu0 0.0
        %2357 = vmatprep.subr.mxu0 0.0
        %2358 = vmatpush1.msra.mxu0 0.0
        %2359 = vmatprep.subr.mxu0 0.0
        %2360 = vmatpush1.msra.mxu0 0.0
        %2361 = vmatprep.subr.mxu0 0.0
        %2362 = vmatpush1.msra.mxu0 0.0
        %2363 = vmatprep.subr.mxu0 0.0
        %2364 = vmatpush1.msra.mxu0 0.0
        %2365 = vmatprep.subr.mxu0 0.0
        %2366 = vmatpush1.msra.mxu0 0.0
        %2367 = vmatprep.subr.mxu0 0.0
        %2368 = vmatpush1.msra.mxu0 0.0
        %2369 = vmatprep.subr.mxu0 0.0
        %2370 = vmatpush1.msra.mxu0 0.0
        %2371 = vmatprep.subr.mxu0 0.0
        %2372 = vmatpush1.msra.mxu0 0.0
        %2373 = vmatprep.mubr.f32.mxu0 0.0
        %2374 = vmatmul.mubr.f32.gmra.mrb[0].mxu0 %v2307
        %v2375 = vpop.f32.mrb[0].mxu0
        %v2376 = vadd.f32 0.0, %v2375
        %v2377 = vpop.f32.mrb[0].mxu0
        %2378 = vdwg.mxu0
        %v2380 = vsel %vm1645, %v1805, 0
        %2382 = vmatprep.subr.mxu0 0.0
        %2383 = vmatpush1.msra.mxu0 %v1539
        %2384 = vmatprep.subr.mxu0 0.0
        %2385 = vmatpush1.msra.mxu0 0.0
        %2386 = vmatprep.subr.mxu0 0.0
        %2387 = vmatpush1.msra.mxu0 0.0
        %2388 = vmatprep.subr.mxu0 0.0
        %2389 = vmatpush1.msra.mxu0 0.0
        %2390 = vmatprep.subr.mxu0 0.0
        %2391 = vmatpush1.msra.mxu0 0.0
        %2392 = vmatprep.subr.mxu0 0.0
        %2393 = vmatpush1.msra.mxu0 0.0
        %2394 = vmatprep.subr.mxu0 0.0
        %2395 = vmatpush1.msra.mxu0 0.0
        %2396 = vmatprep.subr.mxu0 0.0
        %2397 = vmatpush1.msra.mxu0 0.0
        %2398 = vmatprep.subr.mxu0 0.0
        %2399 = vmatpush1.msra.mxu0 0.0
        %2400 = vmatprep.subr.mxu0 0.0
        %2401 = vmatpush1.msra.mxu0 0.0
        %2402 = vmatprep.subr.mxu0 0.0
        %2403 = vmatpush1.msra.mxu0 0.0
        %2404 = vmatprep.subr.mxu0 0.0
        %2405 = vmatpush1.msra.mxu0 0.0
        %2406 = vmatprep.subr.mxu0 0.0
        %2407 = vmatpush1.msra.mxu0 0.0
        %2408 = vmatprep.subr.mxu0 0.0
        %2409 = vmatpush1.msra.mxu0 0.0
        %2410 = vmatprep.subr.mxu0 0.0
        %2411 = vmatpush1.msra.mxu0 0.0
        %2412 = vmatprep.subr.mxu0 0.0
        %2413 = vmatpush1.msra.mxu0 0.0
        %2414 = vmatprep.subr.mxu0 0.0
        %2415 = vmatpush1.msra.mxu0 0.0
        %2416 = vmatprep.subr.mxu0 0.0
        %2417 = vmatpush1.msra.mxu0 0.0
        %2418 = vmatprep.subr.mxu0 0.0
        %2419 = vmatpush1.msra.mxu0 0.0
        %2420 = vmatprep.subr.mxu0 0.0
        %2421 = vmatpush1.msra.mxu0 0.0
        %2422 = vmatprep.subr.mxu0 0.0
        %2423 = vmatpush1.msra.mxu0 0.0
        %2424 = vmatprep.subr.mxu0 0.0
        %2425 = vmatpush1.msra.mxu0 0.0
        %2426 = vmatprep.subr.mxu0 0.0
        %2427 = vmatpush1.msra.mxu0 0.0
        %2428 = vmatprep.subr.mxu0 0.0
        %2429 = vmatpush1.msra.mxu0 0.0
        %2430 = vmatprep.subr.mxu0 0.0
        %2431 = vmatpush1.msra.mxu0 0.0
        %2432 = vmatprep.subr.mxu0 0.0
        %2433 = vmatpush1.msra.mxu0 0.0
        %2434 = vmatprep.subr.mxu0 0.0
        %2435 = vmatpush1.msra.mxu0 0.0
        %2436 = vmatprep.subr.mxu0 0.0
        %2437 = vmatpush1.msra.mxu0 0.0
        %2438 = vmatprep.subr.mxu0 0.0
        %2439 = vmatpush1.msra.mxu0 0.0
        %2440 = vmatprep.subr.mxu0 0.0
        %2441 = vmatpush1.msra.mxu0 0.0
        %2442 = vmatprep.subr.mxu0 0.0
        %2443 = vmatpush1.msra.mxu0 0.0
        %2444 = vmatprep.subr.mxu0 0.0
        %2445 = vmatpush1.msra.mxu0 0.0
        %2446 = vmatprep.mubr.f32.mxu0 0.0
        %2447 = vmatmul.mubr.f32.gmra.mrb[0].mxu0 %v2380
        %v2448 = vpop.f32.mrb[0].mxu0
        %v2449 = vadd.f32 %v2376, %v2448
        %v2450 = vpop.f32.mrb[0].mxu0
        %2451 = vdwg.mxu0
        %v2453 = vsel %vm1645, %v2137, 0
        %2455 = vmatprep.subr.mxu0 0.0
        %2456 = vmatpush1.msra.mxu0 %v1541
        %2457 = vmatprep.subr.mxu0 0.0
        %2458 = vmatpush1.msra.mxu0 0.0
        %2459 = vmatprep.subr.mxu0 0.0
        %2460 = vmatpush1.msra.mxu0 0.0
        %2461 = vmatprep.subr.mxu0 0.0
        %2462 = vmatpush1.msra.mxu0 0.0
        %2463 = vmatprep.subr.mxu0 0.0
        %2464 = vmatpush1.msra.mxu0 0.0
        %2465 = vmatprep.subr.mxu0 0.0
        %2466 = vmatpush1.msra.mxu0 0.0
        %2467 = vmatprep.subr.mxu0 0.0
        %2468 = vmatpush1.msra.mxu0 0.0
        %2469 = vmatprep.subr.mxu0 0.0
        %2470 = vmatpush1.msra.mxu0 0.0
        %2471 = vmatprep.subr.mxu0 0.0
        %2472 = vmatpush1.msra.mxu0 0.0
        %2473 = vmatprep.subr.mxu0 0.0
        %2474 = vmatpush1.msra.mxu0 0.0
        %2475 = vmatprep.subr.mxu0 0.0
        %2476 = vmatpush1.msra.mxu0 0.0
        %2477 = vmatprep.subr.mxu0 0.0
        %2478 = vmatpush1.msra.mxu0 0.0
        %2479 = vmatprep.subr.mxu0 0.0
        %2480 = vmatpush1.msra.mxu0 0.0
        %2481 = vmatprep.subr.mxu0 0.0
        %2482 = vmatpush1.msra.mxu0 0.0
        %2483 = vmatprep.subr.mxu0 0.0
        %2484 = vmatpush1.msra.mxu0 0.0
        %2485 = vmatprep.subr.mxu0 0.0
        %2486 = vmatpush1.msra.mxu0 0.0
        %2487 = vmatprep.subr.mxu0 0.0
        %2488 = vmatpush1.msra.mxu0 0.0
        %2489 = vmatprep.subr.mxu0 0.0
        %2490 = vmatpush1.msra.mxu0 0.0
        %2491 = vmatprep.subr.mxu0 0.0
        %2492 = vmatpush1.msra.mxu0 0.0
        %2493 = vmatprep.subr.mxu0 0.0
        %2494 = vmatpush1.msra.mxu0 0.0
        %2495 = vmatprep.subr.mxu0 0.0
        %2496 = vmatpush1.msra.mxu0 0.0
        %2497 = vmatprep.subr.mxu0 0.0
        %2498 = vmatpush1.msra.mxu0 0.0
        %2499 = vmatprep.subr.mxu0 0.0
        %2500 = vmatpush1.msra.mxu0 0.0
        %2501 = vmatprep.subr.mxu0 0.0
        %2502 = vmatpush1.msra.mxu0 0.0
        %2503 = vmatprep.subr.mxu0 0.0
        %2504 = vmatpush1.msra.mxu0 0.0
        %2505 = vmatprep.subr.mxu0 0.0
        %2506 = vmatpush1.msra.mxu0 0.0
        %2507 = vmatprep.subr.mxu0 0.0
        %2508 = vmatpush1.msra.mxu0 0.0
        %2509 = vmatprep.subr.mxu0 0.0
        %2510 = vmatpush1.msra.mxu0 0.0
        %2511 = vmatprep.subr.mxu0 0.0
        %2512 = vmatpush1.msra.mxu0 0.0
        %2513 = vmatprep.subr.mxu0 0.0
        %2514 = vmatpush1.msra.mxu0 0.0
        %2515 = vmatprep.subr.mxu0 0.0
        %2516 = vmatpush1.msra.mxu0 0.0
        %2517 = vmatprep.subr.mxu0 0.0
        %2518 = vmatpush1.msra.mxu0 0.0
        %2519 = vmatprep.mubr.f32.mxu0 0.0
        %2520 = vmatmul.mubr.f32.gmra.mrb[0].mxu0 %v2453
        %v2521 = vpop.f32.mrb[0].mxu0
        %v2522 = vadd.f32 0.0, %v2521
        %v2523 = vpop.f32.mrb[0].mxu0
        %2524 = vdwg.mxu0
        %v2525 = vadd.f32 %v2449, %v2522
        %v2527 = vsel %vm1645, %v2303, 0
        %2529 = vmatprep.subr.mxu0 0.0
        %2530 = vmatpush1.msra.mxu0 %v1542
        %2531 = vmatprep.subr.mxu0 0.0
        %2532 = vmatpush1.msra.mxu0 0.0
        %2533 = vmatprep.subr.mxu0 0.0
        %2534 = vmatpush1.msra.mxu0 0.0
        %2535 = vmatprep.subr.mxu0 0.0
        %2536 = vmatpush1.msra.mxu0 0.0
        %2537 = vmatprep.subr.mxu0 0.0
        %2538 = vmatpush1.msra.mxu0 0.0
        %2539 = vmatprep.subr.mxu0 0.0
        %2540 = vmatpush1.msra.mxu0 0.0
        %2541 = vmatprep.subr.mxu0 0.0
        %2542 = vmatpush1.msra.mxu0 0.0
        %2543 = vmatprep.subr.mxu0 0.0
        %2544 = vmatpush1.msra.mxu0 0.0
        %2545 = vmatprep.subr.mxu0 0.0
        %2546 = vmatpush1.msra.mxu0 0.0
        %2547 = vmatprep.subr.mxu0 0.0
        %2548 = vmatpush1.msra.mxu0 0.0
        %2549 = vmatprep.subr.mxu0 0.0
        %2550 = vmatpush1.msra.mxu0 0.0
        %2551 = vmatprep.subr.mxu0 0.0
        %2552 = vmatpush1.msra.mxu0 0.0
        %2553 = vmatprep.subr.mxu0 0.0
        %2554 = vmatpush1.msra.mxu0 0.0
        %2555 = vmatprep.subr.mxu0 0.0
        %2556 = vmatpush1.msra.mxu0 0.0
        %2557 = vmatprep.subr.mxu0 0.0
        %2558 = vmatpush1.msra.mxu0 0.0
        %2559 = vmatprep.subr.mxu0 0.0
        %2560 = vmatpush1.msra.mxu0 0.0
        %2561 = vmatprep.subr.mxu0 0.0
        %2562 = vmatpush1.msra.mxu0 0.0
        %2563 = vmatprep.subr.mxu0 0.0
        %2564 = vmatpush1.msra.mxu0 0.0
        %2565 = vmatprep.subr.mxu0 0.0
        %2566 = vmatpush1.msra.mxu0 0.0
        %2567 = vmatprep.subr.mxu0 0.0
        %2568 = vmatpush1.msra.mxu0 0.0
        %2569 = vmatprep.subr.mxu0 0.0
        %2570 = vmatpush1.msra.mxu0 0.0
        %2571 = vmatprep.subr.mxu0 0.0
        %2572 = vmatpush1.msra.mxu0 0.0
        %2573 = vmatprep.subr.mxu0 0.0
        %2574 = vmatpush1.msra.mxu0 0.0
        %2575 = vmatprep.subr.mxu0 0.0
        %2576 = vmatpush1.msra.mxu0 0.0
        %2577 = vmatprep.subr.mxu0 0.0
        %2578 = vmatpush1.msra.mxu0 0.0
        %2579 = vmatprep.subr.mxu0 0.0
        %2580 = vmatpush1.msra.mxu0 0.0
        %2581 = vmatprep.subr.mxu0 0.0
        %2582 = vmatpush1.msra.mxu0 0.0
        %2583 = vmatprep.subr.mxu0 0.0
        %2584 = vmatpush1.msra.mxu0 0.0
        %2585 = vmatprep.subr.mxu0 0.0
        %2586 = vmatpush1.msra.mxu0 0.0
        %2587 = vmatprep.subr.mxu0 0.0
        %2588 = vmatpush1.msra.mxu0 0.0
        %2589 = vmatprep.subr.mxu0 0.0
        %2590 = vmatpush1.msra.mxu0 0.0
        %2591 = vmatprep.subr.mxu0 0.0
        %2592 = vmatpush1.msra.mxu0 0.0
        %2593 = vmatprep.mubr.f32.mxu0 0.0
        %2594 = vmatmul.mubr.f32.gmra.mrb[0].mxu0 %v2527
        %v2595 = vpop.f32.mrb[0].mxu0
        %v2596 = vadd.f32 0.0, %v2595
        %v2597 = vpop.f32.mrb[0].mxu0
        %2598 = vdwg.mxu0
        %v2599 = vadd.f32 %v2525, %v2596
        %v2601 = vlaneseq
        %v2602 = vshrl.u32 %v2601, 7
        %v2603 = vsub.s32 0, %v2602
        %v2604 = vrot.slane %v1543, %v2603
        %v2606 = vadd.f32 %v2599, %v2604
        %v2607 = vadd.f32 %v1533, %v2606
        %v2608 = vsel %vm1568, %v2607, 0.0
        %2609 = vadd.xlane.f32.xlu0 %v2608
        %v2610 = vpop.xlane.xlu0 %2609
        %v2611 = vrcp.pop 32.0
        %v2612 = vmul.f32 %v2610, %v2611
        %v2613 = vsub.f32 %v2607, %v2612
        %v2614 = vmul.f32 %v2613, %v2613
        %v2615 = vsel %vm1568, %v2614, 0.0
        %2616 = vadd.xlane.f32.xlu0 %v2615
        %v2617 = vpop.xlane.xlu0 %2616
        %v2618 = vmul.f32 %v2617, %v2611
        %v2619 = vadd.f32 %v2618, 1e-05
        %v2620 = vrsqrt.pop %v2619
        %v2621 = vmul.f32 %v2613, %v2620
        %v2623 = vlaneseq
        %v2624 = vshrl.u32 %v2623, 7
        %v2625 = vsub.s32 0, %v2624
        %v2626 = vrot.slane %v1544, %v2625
        %v2628 = vmul.f32 %v2621, %v2626
        %v2630 = vlaneseq
        %v2631 = vshrl.u32 %v2630, 7
        %v2632 = vsub.s32 0, %v2631
        %v2633 = vrot.slane %v1545, %v2632
        %v2635 = vadd.f32 %v2628, %v2633
        %v2637 = vlaneseq
        %v2638 = vshrl.u32 %v2637, 7
        %v2639 = vsub.s32 0, %v2638
        %v2640 = vrot.slane %v1550, %v2639
        %v2643 = vsel %vm1568, %v2635, 0
        %2645 = vmatprep.subr.mxu0 0.0
        %2646 = vmatpush1.msra.mxu0 %v1546
        %2647 = vmatprep.subr.mxu0 0.0
        %2648 = vmatpush1.msra.mxu0 %v1547
        %2649 = vmatprep.subr.mxu0 0.0
        %2650 = vmatpush1.msra.mxu0 %v1548
        %2651 = vmatprep.subr.mxu0 0.0
        %2652 = vmatpush1.msra.mxu0 %v1549
        %2653 = vmatprep.subr.mxu0 0.0
        %2654 = vmatpush1.msra.mxu0 0.0
        %2655 = vmatprep.subr.mxu0 0.0
        %2656 = vmatpush1.msra.mxu0 0.0
        %2657 = vmatprep.subr.mxu0 0.0
        %2658 = vmatpush1.msra.mxu0 0.0
        %2659 = vmatprep.subr.mxu0 0.0
        %2660 = vmatpush1.msra.mxu0 0.0
        %2661 = vmatprep.subr.mxu0 0.0
        %2662 = vmatpush1.msra.mxu0 0.0
        %2663 = vmatprep.subr.mxu0 0.0
        %2664 = vmatpush1.msra.mxu0 0.0
        %2665 = vmatprep.subr.mxu0 0.0
        %2666 = vmatpush1.msra.mxu0 0.0
        %2667 = vmatprep.subr.mxu0 0.0
        %2668 = vmatpush1.msra.mxu0 0.0
        %2669 = vmatprep.subr.mxu0 0.0
        %2670 = vmatpush1.msra.mxu0 0.0
        %2671 = vmatprep.subr.mxu0 0.0
        %2672 = vmatpush1.msra.mxu0 0.0
        %2673 = vmatprep.subr.mxu0 0.0
        %2674 = vmatpush1.msra.mxu0 0.0
        %2675 = vmatprep.subr.mxu0 0.0
        %2676 = vmatpush1.msra.mxu0 0.0
        %2677 = vmatprep.subr.mxu0 0.0
        %2678 = vmatpush1.msra.mxu0 0.0
        %2679 = vmatprep.subr.mxu0 0.0
        %2680 = vmatpush1.msra.mxu0 0.0
        %2681 = vmatprep.subr.mxu0 0.0
        %2682 = vmatpush1.msra.mxu0 0.0
        %2683 = vmatprep.subr.mxu0 0.0
        %2684 = vmatpush1.msra.mxu0 0.0
        %2685 = vmatprep.subr.mxu0 0.0
        %2686 = vmatpush1.msra.mxu0 0.0
        %2687 = vmatprep.subr.mxu0 0.0
        %2688 = vmatpush1.msra.mxu0 0.0
        %2689 = vmatprep.subr.mxu0 0.0
        %2690 = vmatpush1.msra.mxu0 0.0
        %2691 = vmatprep.subr.mxu0 0.0
        %2692 = vmatpush1.msra.mxu0 0.0
        %2693 = vmatprep.subr.mxu0 0.0
        %2694 = vmatpush1.msra.mxu0 0.0
        %2695 = vmatprep.subr.mxu0 0.0
        %2696 = vmatpush1.msra.mxu0 0.0
        %2697 = vmatprep.subr.mxu0 0.0
        %2698 = vmatpush1.msra.mxu0 0.0
        %2699 = vmatprep.subr.mxu0 0.0
        %2700 = vmatpush1.msra.mxu0 0.0
        %2701 = vmatprep.subr.mxu0 0.0
        %2702 = vmatpush1.msra.mxu0 0.0
        %2703 = vmatprep.subr.mxu0 0.0
        %2704 = vmatpush1.msra.mxu0 0.0
        %2705 = vmatprep.subr.mxu0 0.0
        %2706 = vmatpush1.msra.mxu0 0.0
        %2707 = vmatprep.subr.mxu0 0.0
        %2708 = vmatpush1.msra.mxu0 0.0
        %2709 = vmatprep.mubr.f32.mxu0 0.0
        %2710 = vmatmul.mubr.f32.gmra.mrb[0].mxu0 %v2643
        %v2711 = vpop.f32.mrb[0].mxu0
        %v2712 = vadd.f32 %v2640, %v2711
        %v2713 = vpop.f32.mrb[0].mxu0
        %2714 = vdwg.mxu0
        %v2715 = vmul.f32 %v2712, 0.5
        %v2716 = vmul.f32 %v2712, 0.70710677
        %v2717 = verf.f32.pop %v2716
        %v2718 = vadd.f32 %v2717, 1.0
        %v2719 = vmul.f32 %v2715, %v2718
        %v2721 = vlaneseq
        %v2722 = vshrl.u32 %v2721, 7
        %v2723 = vsub.s32 0, %v2722
        %v2724 = vrot.slane %v1559, %v2723
        %vm2726 = vcmask 523264
        %v2728 = vsel %vm2726, %v2719, 0
        %2730 = vmatprep.subr.mxu0 0.0
        %2731 = vmatpush1.msra.mxu0 %v1551
        %2732 = vmatprep.subr.mxu0 0.0
        %2733 = vmatpush1.msra.mxu0 %v1552
        %2734 = vmatprep.subr.mxu0 0.0
        %2735 = vmatpush1.msra.mxu0 %v1553
        %2736 = vmatprep.subr.mxu0 0.0
        %2737 = vmatpush1.msra.mxu0 %v1554
        %2738 = vmatprep.subr.mxu0 0.0
        %2739 = vmatpush1.msra.mxu0 %v1555
        %2740 = vmatprep.subr.mxu0 0.0
        %2741 = vmatpush1.msra.mxu0 %v1556
        %2742 = vmatprep.subr.mxu0 0.0
        %2743 = vmatpush1.msra.mxu0 %v1557
        %2744 = vmatprep.subr.mxu0 0.0
        %2745 = vmatpush1.msra.mxu0 %v1558
        %2746 = vmatprep.subr.mxu0 0.0
        %2747 = vmatpush1.msra.mxu0 0.0
        %2748 = vmatprep.subr.mxu0 0.0
        %2749 = vmatpush1.msra.mxu0 0.0
        %2750 = vmatprep.subr.mxu0 0.0
        %2751 = vmatpush1.msra.mxu0 0.0
        %2752 = vmatprep.subr.mxu0 0.0
        %2753 = vmatpush1.msra.mxu0 0.0
        %2754 = vmatprep.subr.mxu0 0.0
        %2755 = vmatpush1.msra.mxu0 0.0
        %2756 = vmatprep.subr.mxu0 0.0
        %2757 = vmatpush1.msra.mxu0 0.0
        %2758 = vmatprep.subr.mxu0 0.0
        %2759 = vmatpush1.msra.mxu0 0.0
        %2760 = vmatprep.subr.mxu0 0.0
        %2761 = vmatpush1.msra.mxu0 0.0
        %2762 = vmatprep.subr.mxu0 0.0
        %2763 = vmatpush1.msra.mxu0 0.0
        %2764 = vmatprep.subr.mxu0 0.0
        %2765 = vmatpush1.msra.mxu0 0.0
        %2766 = vmatprep.subr.mxu0 0.0
        %2767 = vmatpush1.msra.mxu0 0.0
        %2768 = vmatprep.subr.mxu0 0.0
        %2769 = vmatpush1.msra.mxu0 0.0
        %2770 = vmatprep.subr.mxu0 0.0
        %2771 = vmatpush1.msra.mxu0 0.0
        %2772 = vmatprep.subr.mxu0 0.0
        %2773 = vmatpush1.msra.mxu0 0.0
        %2774 = vmatprep.subr.mxu0 0.0
        %2775 = vmatpush1.msra.mxu0 0.0
        %2776 = vmatprep.subr.mxu0 0.0
        %2777 = vmatpush1.msra.mxu0 0.0
        %2778 = vmatprep.subr.mxu0 0.0
        %2779 = vmatpush1.msra.mxu0 0.0
        %2780 = vmatprep.subr.mxu0 0.0
        %2781 = vmatpush1.msra.mxu0 0.0
        %2782 = vmatprep.subr.mxu0 0.0
        %2783 = vmatpush1.msra.mxu0 0.0
        %2784 = vmatprep.subr.mxu0 0.0
        %2785 = vmatpush1.msra.mxu0 0.0
        %2786 = vmatprep.subr.mxu0 0.0
        %2787 = vmatpush1.msra.mxu0 0.0
        %2788 = vmatprep.subr.mxu0 0.0
        %2789 = vmatpush1.msra.mxu0 0.0
        %2790 = vmatprep.subr.mxu0 0.0
        %2791 = vmatpush1.msra.mxu0 0.0
        %2792 = vmatprep.subr.mxu0 0.0
        %2793 = vmatpush1.msra.mxu0 0.0
        %2794 = vmatprep.mubr.f32.mxu0 0.0
        %2795 = vmatmul.mubr.f32.gmra.mrb[0].mxu0 %v2728
        %v2796 = vpop.f32.mrb[0].mxu0
        %v2797 = vadd.f32 %v2724, %v2796
        %v2798 = vpop.f32.mrb[0].mxu0
        %2799 = vdwg.mxu0
        %v2800 = vadd.f32 %v2635, %v2797
        %v2801 = vsel %vm1568, %v2800, 0.0
        %2802 = vadd.xlane.f32.xlu0 %v2801
        %v2803 = vpop.xlane.xlu0 %2802
        %v2804 = vmul.f32 %v2803, %v2611
        %v2805 = vsub.f32 %v2800, %v2804
        %v2806 = vmul.f32 %v2805, %v2805
        %v2807 = vsel %vm1568, %v2806, 0.0
        %2808 = vadd.xlane.f32.xlu0 %v2807
        %v2809 = vpop.xlane.xlu0 %2808
        %v2810 = vmul.f32 %v2809, %v2611
        %v2811 = vadd.f32 %v2810, 1e-05
        %v2812 = vrsqrt.pop %v2811
        %v2813 = vmul.f32 %v2805, %v2812
        %v2815 = vlaneseq
        %v2816 = vshrl.u32 %v2815, 7
        %v2817 = vsub.s32 0, %v2816
        %v2818 = vrot.slane %v1560, %v2817
        %v2820 = vmul.f32 %v2813, %v2818
        %v2822 = vlaneseq
        %v2823 = vshrl.u32 %v2822, 7
        %v2824 = vsub.s32 0, %v2823
        %v2825 = vrot.slane %v1561, %v2824
        %v2827 = vadd.f32 %v2820, %v2825
        %v2828 = vld [vmem:[%s35] sm:$0x1]
        %v2829 = vld [vmem:[%s37] sm:$0x1]
        %v2830 = vsel %vm1568, %v2827, 0.0
        %2831 = vadd.xlane.f32.xlu0 %v2830
        %v2832 = vpop.xlane.xlu0 %2831
        %v2833 = vmul.f32 %v2832, %v2611
        %v2834 = vsub.f32 %v2827, %v2833
        %v2835 = vmul.f32 %v2834, %v2834
        %v2836 = vsel %vm1568, %v2835, 0.0
        %2837 = vadd.xlane.f32.xlu0 %v2836
        %v2838 = vpop.xlane.xlu0 %2837
        %v2839 = vmul.f32 %v2838, %v2611
        %v2840 = vadd.f32 %v2839, 1e-05
        %v2841 = vrsqrt.pop %v2840
        %v2842 = vmul.f32 %v2834, %v2841
        %v2844 = vlaneseq
        %v2845 = vshrl.u32 %v2844, 7
        %v2846 = vsub.s32 0, %v2845
        %v2847 = vrot.slane %v2828, %v2846
        %v2849 = vmul.f32 %v2842, %v2847
        %v2851 = vlaneseq
        %v2852 = vshrl.u32 %v2851, 7
        %v2853 = vsub.s32 0, %v2852
        %v2854 = vrot.slane %v2829, %v2853
        %v2856 = vadd.f32 %v2849, %v2854
        %v2857 = vld [vmem:[%s39] sm:$0xf]
        %v2858 = vld [vmem:[%s41] sm:$0x1]
        %v2859 = vld [vmem:[%s43] sm:$0x3f]
        %v2861 = vlaneseq
        %v2862 = vshrl.u32 %v2861, 7
        %v2863 = vsub.s32 0, %v2862
        %v2864 = vrot.slane %v2858, %v2863
        %v2867 = vsel %vm1455, %v1445, 0
        %v2870 = vsel %vm1459, %v2857, 0
        %2872 = vmatprep.subr.mxu0 0.0
        %2873 = vmatpush1.msra.mxu0 %v2870
        %2874 = vmatprep.subr.mxu0 0.0
        %2875 = vmatpush1.msra.mxu0 0.0
        %2876 = vmatprep.subr.mxu0 0.0
        %2877 = vmatpush1.msra.mxu0 0.0
        %2878 = vmatprep.subr.mxu0 0.0
        %2879 = vmatpush1.msra.mxu0 0.0
        %2880 = vmatprep.subr.mxu0 0.0
        %2881 = vmatpush1.msra.mxu0 0.0
        %2882 = vmatprep.subr.mxu0 0.0
        %2883 = vmatpush1.msra.mxu0 0.0
        %2884 = vmatprep.subr.mxu0 0.0
        %2885 = vmatpush1.msra.mxu0 0.0
        %2886 = vmatprep.subr.mxu0 0.0
        %2887 = vmatpush1.msra.mxu0 0.0
        %2888 = vmatprep.subr.mxu0 0.0
        %2889 = vmatpush1.msra.mxu0 0.0
        %2890 = vmatprep.subr.mxu0 0.0
        %2891 = vmatpush1.msra.mxu0 0.0
        %2892 = vmatprep.subr.mxu0 0.0
        %2893 = vmatpush1.msra.mxu0 0.0
        %2894 = vmatprep.subr.mxu0 0.0
        %2895 = vmatpush1.msra.mxu0 0.0
        %2896 = vmatprep.subr.mxu0 0.0
        %2897 = vmatpush1.msra.mxu0 0.0
        %2898 = vmatprep.subr.mxu0 0.0
        %2899 = vmatpush1.msra.mxu0 0.0
        %2900 = vmatprep.subr.mxu0 0.0
        %2901 = vmatpush1.msra.mxu0 0.0
        %2902 = vmatprep.subr.mxu0 0.0
        %2903 = vmatpush1.msra.mxu0 0.0
        %2904 = vmatprep.subr.mxu0 0.0
        %2905 = vmatpush1.msra.mxu0 0.0
        %2906 = vmatprep.subr.mxu0 0.0
        %2907 = vmatpush1.msra.mxu0 0.0
        %2908 = vmatprep.subr.mxu0 0.0
        %2909 = vmatpush1.msra.mxu0 0.0
        %2910 = vmatprep.subr.mxu0 0.0
        %2911 = vmatpush1.msra.mxu0 0.0
        %2912 = vmatprep.subr.mxu0 0.0
        %2913 = vmatpush1.msra.mxu0 0.0
        %2914 = vmatprep.subr.mxu0 0.0
        %2915 = vmatpush1.msra.mxu0 0.0
        %2916 = vmatprep.subr.mxu0 0.0
        %2917 = vmatpush1.msra.mxu0 0.0
        %2918 = vmatprep.subr.mxu0 0.0
        %2919 = vmatpush1.msra.mxu0 0.0
        %2920 = vmatprep.subr.mxu0 0.0
        %2921 = vmatpush1.msra.mxu0 0.0
        %2922 = vmatprep.subr.mxu0 0.0
        %2923 = vmatpush1.msra.mxu0 0.0
        %2924 = vmatprep.subr.mxu0 0.0
        %2925 = vmatpush1.msra.mxu0 0.0
        %2926 = vmatprep.subr.mxu0 0.0
        %2927 = vmatpush1.msra.mxu0 0.0
        %2928 = vmatprep.subr.mxu0 0.0
        %2929 = vmatpush1.msra.mxu0 0.0
        %2930 = vmatprep.subr.mxu0 0.0
        %2931 = vmatpush1.msra.mxu0 0.0
        %2932 = vmatprep.subr.mxu0 0.0
        %2933 = vmatpush1.msra.mxu0 0.0
        %2934 = vmatprep.subr.mxu0 0.0
        %2935 = vmatpush1.msra.mxu0 0.0
        %2936 = vmatprep.mubr.f32.mxu0 0.0
        %2937 = vmatmul.mubr.f32.gmra.mrb[0].mxu0 %v2867
        %v2938 = vpop.f32.mrb[0].mxu0
        %v2939 = vadd.f32 %v2864, %v2938
        %v2940 = vpop.f32.mrb[0].mxu0
        %2941 = vdwg.mxu0
        %v2942 = vadd.f32 %v2939, %v2859
        %v2943 = vld [vmem:[%s45] sm:$0xff]
        %v2944 = vld [vmem:[%s45 + $0x8] sm:$0xff]
        %v2945 = vld [vmem:[%s45 + $0x10] sm:$0xff]
        %v2946 = vld [vmem:[%s45 + $0x18] sm:$0xff]
        %v2947 = vld [vmem:[%s47] sm:$0x1]
        %v2948 = vld [vmem:[%s49] sm:$0xff]
        %v2949 = vld [vmem:[%s49 + $0x8] sm:$0xff]
        %v2950 = vld [vmem:[%s49 + $0x10] sm:$0xff]
        %v2951 = vld [vmem:[%s49 + $0x18] sm:$0xff]
        %v2952 = vld [vmem:[%s51] sm:$0x1]
        %v2953 = vld [vmem:[%s53] sm:$0xff]
        %v2954 = vld [vmem:[%s53 + $0x8] sm:$0xff]
        %v2955 = vld [vmem:[%s53 + $0x10] sm:$0xff]
        %v2956 = vld [vmem:[%s53 + $0x18] sm:$0xff]
        %v2957 = vld [vmem:[%s55] sm:$0x1]
        %v2958 = vld [vmem:[%s57] sm:$0xff]
        %v2959 = vld [vmem:[%s57 + $0x8] sm:$0xff]
        %v2960 = vld [vmem:[%s57 + $0x10] sm:$0xff]
        %v2961 = vld [vmem:[%s57 + $0x18] sm:$0xff]
        %v2962 = vld [vmem:[%s59] sm:$0x1]
        %v2963 = vld [vmem:[%s61] sm:$0xff]
        %v2964 = vld [vmem:[%s61 + $0x8] sm:$0xff]
        %v2965 = vld [vmem:[%s61 + $0x10] sm:$0xff]
        %v2966 = vld [vmem:[%s61 + $0x18] sm:$0xff]
        %v2967 = vld [vmem:[%s63] sm:$0x1]
        %v2968 = vld [vmem:[%s65] sm:$0x1]
        %v2969 = vld [vmem:[%s67] sm:$0x1]
        %v2970 = vld [vmem:[%s69] sm:$0x1]
        %v2971 = vld [vmem:[%s71] sm:$0x1]
        %v2972 = vld [vmem:[%s73] sm:$0xff]
        %v2973 = vld [vmem:[%s73 + $0x8] sm:$0xff]
        %v2974 = vld [vmem:[%s73 + $0x10] sm:$0xff]
        %v2975 = vld [vmem:[%s73 + $0x18] sm:$0xff]
        %v2976 = vld [vmem:[%s75] sm:$0x1]
        %v2977 = vld [vmem:[%s77] sm:$0xff]
        %v2978 = vld [vmem:[%s77 + $0x8] sm:$0xff]
        %v2979 = vld [vmem:[%s77 + $0x10] sm:$0xff]
        %v2980 = vld [vmem:[%s77 + $0x18] sm:$0xff]
        %v2981 = vld [vmem:[%s77 + $0x20] sm:$0xff]
        %v2982 = vld [vmem:[%s77 + $0x28] sm:$0xff]
        %v2983 = vld [vmem:[%s77 + $0x30] sm:$0xff]
        %v2984 = vld [vmem:[%s77 + $0x38] sm:$0xff]
        %v2985 = vld [vmem:[%s79] sm:$0x1]
        %v2986 = vld [vmem:[#allocation3] sm:$0x1]
        %v2987 = vld [vmem:[#allocation5] sm:$0x1]
        %v2989 = vlaneseq
        %v2990 = vshrl.u32 %v2989, 7
        %v2991 = vsub.s32 0, %v2990
        %v2992 = vrot.slane %v2947, %v2991
        %v2995 = vsel %vm1568, %v2942, 0
        %2997 = vmatprep.subr.mxu0 0.0
        %2998 = vmatpush1.msra.mxu0 %v2943
        %2999 = vmatprep.subr.mxu0 0.0
        %3000 = vmatpush1.msra.mxu0 %v2944
        %3001 = vmatprep.subr.mxu0 0.0
        %3002 = vmatpush1.msra.mxu0 %v2945
        %3003 = vmatprep.subr.mxu0 0.0
        %3004 = vmatpush1.msra.mxu0 %v2946
        %3005 = vmatprep.subr.mxu0 0.0
        %3006 = vmatpush1.msra.mxu0 0.0
        %3007 = vmatprep.subr.mxu0 0.0
        %3008 = vmatpush1.msra.mxu0 0.0
        %3009 = vmatprep.subr.mxu0 0.0
        %3010 = vmatpush1.msra.mxu0 0.0
        %3011 = vmatprep.subr.mxu0 0.0
        %3012 = vmatpush1.msra.mxu0 0.0
        %3013 = vmatprep.subr.mxu0 0.0
        %3014 = vmatpush1.msra.mxu0 0.0
        %3015 = vmatprep.subr.mxu0 0.0
        %3016 = vmatpush1.msra.mxu0 0.0
        %3017 = vmatprep.subr.mxu0 0.0
        %3018 = vmatpush1.msra.mxu0 0.0
        %3019 = vmatprep.subr.mxu0 0.0
        %3020 = vmatpush1.msra.mxu0 0.0
        %3021 = vmatprep.subr.mxu0 0.0
        %3022 = vmatpush1.msra.mxu0 0.0
        %3023 = vmatprep.subr.mxu0 0.0
        %3024 = vmatpush1.msra.mxu0 0.0
        %3025 = vmatprep.subr.mxu0 0.0
        %3026 = vmatpush1.msra.mxu0 0.0
        %3027 = vmatprep.subr.mxu0 0.0
        %3028 = vmatpush1.msra.mxu0 0.0
        %3029 = vmatprep.subr.mxu0 0.0
        %3030 = vmatpush1.msra.mxu0 0.0
        %3031 = vmatprep.subr.mxu0 0.0
        %3032 = vmatpush1.msra.mxu0 0.0
        %3033 = vmatprep.subr.mxu0 0.0
        %3034 = vmatpush1.msra.mxu0 0.0
        %3035 = vmatprep.subr.mxu0 0.0
        %3036 = vmatpush1.msra.mxu0 0.0
        %3037 = vmatprep.subr.mxu0 0.0
        %3038 = vmatpush1.msra.mxu0 0.0
        %3039 = vmatprep.subr.mxu0 0.0
        %3040 = vmatpush1.msra.mxu0 0.0
        %3041 = vmatprep.subr.mxu0 0.0
        %3042 = vmatpush1.msra.mxu0 0.0
        %3043 = vmatprep.subr.mxu0 0.0
        %3044 = vmatpush1.msra.mxu0 0.0
        %3045 = vmatprep.subr.mxu0 0.0
        %3046 = vmatpush1.msra.mxu0 0.0
        %3047 = vmatprep.subr.mxu0 0.0
        %3048 = vmatpush1.msra.mxu0 0.0
        %3049 = vmatprep.subr.mxu0 0.0
        %3050 = vmatpush1.msra.mxu0 0.0
        %3051 = vmatprep.subr.mxu0 0.0
        %3052 = vmatpush1.msra.mxu0 0.0
        %3053 = vmatprep.subr.mxu0 0.0
        %3054 = vmatpush1.msra.mxu0 0.0
        %3055 = vmatprep.subr.mxu0 0.0
        %3056 = vmatpush1.msra.mxu0 0.0
        %3057 = vmatprep.subr.mxu0 0.0
        %3058 = vmatpush1.msra.mxu0 0.0
        %3059 = vmatprep.subr.mxu0 0.0
        %3060 = vmatpush1.msra.mxu0 0.0
        %3061 = vmatprep.mubr.f32.mxu0 0.0
        %3062 = vmatmul.mubr.f32.gmra.mrb[0].mxu0 %v2995
        %v3063 = vpop.f32.mrb[0].mxu0
        %v3064 = vadd.f32 %v2992, %v3063
        %v3065 = vpop.f32.mrb[0].mxu0
        %3066 = vdwg.mxu0
        %3068 = vrot.lane.b32.xlu0 %v3064, 96
        %v3069 = vpop.permute.xlu0 %3068
        %v3070 = vsel %vm1645, %v3064, 0
        %v3072 = vsel %vm1645, %v3069, 0
        %3074 = vmatprep.subr.mxu0 0.0
        %3075 = vmatpush1.xpose.msra.mxu0 %v3072
        %3076 = vmatprep.subr.mxu0 0.0
        %3077 = vmatpush1.xpose.msra.mxu0 0.0
        %3078 = vmatprep.subr.mxu0 0.0
        %3079 = vmatpush1.xpose.msra.mxu0 0.0
        %3080 = vmatprep.subr.mxu0 0.0
        %3081 = vmatpush1.xpose.msra.mxu0 0.0
        %3082 = vmatprep.subr.mxu0 0.0
        %3083 = vmatpush1.xpose.msra.mxu0 0.0
        %3084 = vmatprep.subr.mxu0 0.0
        %3085 = vmatpush1.xpose.msra.mxu0 0.0
        %3086 = vmatprep.subr.mxu0 0.0
        %3087 = vmatpush1.xpose.msra.mxu0 0.0
        %3088 = vmatprep.subr.mxu0 0.0
        %3089 = vmatpush1.xpose.msra.mxu0 0.0
        %3090 = vmatprep.subr.mxu0 0.0
        %3091 = vmatpush1.xpose.msra.mxu0 0.0
        %3092 = vmatprep.subr.mxu0 0.0
        %3093 = vmatpush1.xpose.msra.mxu0 0.0
        %3094 = vmatprep.subr.mxu0 0.0
        %3095 = vmatpush1.xpose.msra.mxu0 0.0
        %3096 = vmatprep.subr.mxu0 0.0
        %3097 = vmatpush1.xpose.msra.mxu0 0.0
        %3098 = vmatprep.subr.mxu0 0.0
        %3099 = vmatpush1.xpose.msra.mxu0 0.0
        %3100 = vmatprep.subr.mxu0 0.0
        %3101 = vmatpush1.xpose.msra.mxu0 0.0
        %3102 = vmatprep.subr.mxu0 0.0
        %3103 = vmatpush1.xpose.msra.mxu0 0.0
        %3104 = vmatprep.subr.mxu0 0.0
        %3105 = vmatpush1.xpose.msra.mxu0 0.0
        %3106 = vmatprep.subr.mxu0 0.0
        %3107 = vmatpush1.xpose.msra.mxu0 0.0
        %3108 = vmatprep.subr.mxu0 0.0
        %3109 = vmatpush1.xpose.msra.mxu0 0.0
        %3110 = vmatprep.subr.mxu0 0.0
        %3111 = vmatpush1.xpose.msra.mxu0 0.0
        %3112 = vmatprep.subr.mxu0 0.0
        %3113 = vmatpush1.xpose.msra.mxu0 0.0
        %3114 = vmatprep.subr.mxu0 0.0
        %3115 = vmatpush1.xpose.msra.mxu0 0.0
        %3116 = vmatprep.subr.mxu0 0.0
        %3117 = vmatpush1.xpose.msra.mxu0 0.0
        %3118 = vmatprep.subr.mxu0 0.0
        %3119 = vmatpush1.xpose.msra.mxu0 0.0
        %3120 = vmatprep.subr.mxu0 0.0
        %3121 = vmatpush1.xpose.msra.mxu0 0.0
        %3122 = vmatprep.subr.mxu0 0.0
        %3123 = vmatpush1.xpose.msra.mxu0 0.0
        %3124 = vmatprep.subr.mxu0 0.0
        %3125 = vmatpush1.xpose.msra.mxu0 0.0
        %3126 = vmatprep.subr.mxu0 0.0
        %3127 = vmatpush1.xpose.msra.mxu0 0.0
        %3128 = vmatprep.subr.mxu0 0.0
        %3129 = vmatpush1.xpose.msra.mxu0 0.0
        %3130 = vmatprep.subr.mxu0 0.0
        %3131 = vmatpush1.xpose.msra.mxu0 0.0
        %3132 = vmatprep.subr.mxu0 0.0
        %3133 = vmatpush1.xpose.msra.mxu0 0.0
        %3134 = vmatprep.subr.mxu0 0.0
        %3135 = vmatpush1.xpose.msra.mxu0 0.0
        %3136 = vmatprep.subr.mxu0 0.0
        %3137 = vmatpush1.xpose.msra.mxu0 0.0
        %3138 = vmatprep.mubr.f32.mxu0 0.0
        %3139 = vmatmul.mubr.f32.gmra.mrb[0].mxu0 %v3070
        %v3140 = vpop.f32.mrb[0].mxu0
        %v3141 = vadd.f32 0.0, %v3140
        %v3142 = vpop.f32.mrb[0].mxu0
        %3143 = vdwg.mxu0
        %v3144 = vmul.f32 %v3141, 0.35355338
        %v3145 = vlaneseq
        %v3146 = vshrl.u32 %v3145, 7
        %v3147 = vlaneseq
        %v3148 = vand.u32 %v3147, 127
        %vm3149 = vcmp.le.s32.totalorder %v3148, %v3146
        %v3150 = vsel %vm3149, %v3144, -1e+30
        %vm3151 = vcmask 46080
        %v3152 = vsel %vm3151, %v3150, -inf
        %3153 = vmax.xlane.f32.xlu0 %v3152
        %v3154 = vpop.xlane.xlu0 %3153
        %v3155 = vsub.f32 %v3150, %v3154
        %v3156 = vmul.f32 %v3155, 1.442695
        %v3157 = vpow.pop %v3156
        %v3158 = vsel %vm3151, %v3157, 0.0
        %3159 = vadd.xlane.f32.xlu0 %v3158
        %v3160 = vpop.xlane.xlu0 %3159
        %v3161 = vrcp.pop %v3160
        %v3162 = vmul.f32 %v3157, %v3161
        %3163 = vrot.lane.b32.xlu0 %v3064, 64
        %v3164 = vpop.permute.xlu0 %3163
        %vm3165 = vcmask 48128
        %v3167 = vsel %vm3165, %v3162, 0
        %vm3169 = vcmask 1045504
        %v3170 = vsel %vm3169, %v3164, 0
        %3172 = vmatprep.subr.mxu0 0.0
        %3173 = vmatpush1.msra.mxu0 %v3170
        %3174 = vmatprep.subr.mxu0 0.0
        %3175 = vmatpush1.msra.mxu0 0.0
        %3176 = vmatprep.subr.mxu0 0.0
        %3177 = vmatpush1.msra.mxu0 0.0
        %3178 = vmatprep.subr.mxu0 0.0
        %3179 = vmatpush1.msra.mxu0 0.0
        %3180 = vmatprep.subr.mxu0 0.0
        %3181 = vmatpush1.msra.mxu0 0.0
        %3182 = vmatprep.subr.mxu0 0.0
        %3183 = vmatpush1.msra.mxu0 0.0
        %3184 = vmatprep.subr.mxu0 0.0
        %3185 = vmatpush1.msra.mxu0 0.0
        %3186 = vmatprep.subr.mxu0 0.0
        %3187 = vmatpush1.msra.mxu0 0.0
        %3188 = vmatprep.subr.mxu0 0.0
        %3189 = vmatpush1.msra.mxu0 0.0
        %3190 = vmatprep.subr.mxu0 0.0
        %3191 = vmatpush1.msra.mxu0 0.0
        %3192 = vmatprep.subr.mxu0 0.0
        %3193 = vmatpush1.msra.mxu0 0.0
        %3194 = vmatprep.subr.mxu0 0.0
        %3195 = vmatpush1.msra.mxu0 0.0
        %3196 = vmatprep.subr.mxu0 0.0
        %3197 = vmatpush1.msra.mxu0 0.0
        %3198 = vmatprep.subr.mxu0 0.0
        %3199 = vmatpush1.msra.mxu0 0.0
        %3200 = vmatprep.subr.mxu0 0.0
        %3201 = vmatpush1.msra.mxu0 0.0
        %3202 = vmatprep.subr.mxu0 0.0
        %3203 = vmatpush1.msra.mxu0 0.0
        %3204 = vmatprep.subr.mxu0 0.0
        %3205 = vmatpush1.msra.mxu0 0.0
        %3206 = vmatprep.subr.mxu0 0.0
        %3207 = vmatpush1.msra.mxu0 0.0
        %3208 = vmatprep.subr.mxu0 0.0
        %3209 = vmatpush1.msra.mxu0 0.0
        %3210 = vmatprep.subr.mxu0 0.0
        %3211 = vmatpush1.msra.mxu0 0.0
        %3212 = vmatprep.subr.mxu0 0.0
        %3213 = vmatpush1.msra.mxu0 0.0
        %3214 = vmatprep.subr.mxu0 0.0
        %3215 = vmatpush1.msra.mxu0 0.0
        %3216 = vmatprep.subr.mxu0 0.0
        %3217 = vmatpush1.msra.mxu0 0.0
        %3218 = vmatprep.subr.mxu0 0.0
        %3219 = vmatpush1.msra.mxu0 0.0
        %3220 = vmatprep.subr.mxu0 0.0
        %3221 = vmatpush1.msra.mxu0 0.0
        %3222 = vmatprep.subr.mxu0 0.0
        %3223 = vmatpush1.msra.mxu0 0.0
        %3224 = vmatprep.subr.mxu0 0.0
        %3225 = vmatpush1.msra.mxu0 0.0
        %3226 = vmatprep.subr.mxu0 0.0
        %3227 = vmatpush1.msra.mxu0 0.0
        %3228 = vmatprep.subr.mxu0 0.0
        %3229 = vmatpush1.msra.mxu0 0.0
        %3230 = vmatprep.subr.mxu0 0.0
        %3231 = vmatpush1.msra.mxu0 0.0
        %3232 = vmatprep.subr.mxu0 0.0
        %3233 = vmatpush1.msra.mxu0 0.0
        %3234 = vmatprep.subr.mxu0 0.0
        %3235 = vmatpush1.msra.mxu0 0.0
        %3236 = vmatprep.mubr.f32.mxu0 0.0
        %3237 = vmatmul.mubr.f32.gmra.mrb[0].mxu0 %v3167
        %v3238 = vpop.f32.mrb[0].mxu0
        %v3239 = vadd.f32 0.0, %v3238
        %v3240 = vpop.f32.mrb[0].mxu0
        %3241 = vdwg.mxu0
        %3242 = vrot.lane.b32.xlu0 %v3064, 120
        %v3243 = vpop.permute.xlu0 %3242
        %3244 = vrot.lane.b32.xlu0 %v3064, 88
        %v3245 = vpop.permute.xlu0 %3244
        %v3246 = vsel %vm1645, %v3243, 0
        %v3248 = vsel %vm1645, %v3245, 0
        %3250 = vmatprep.subr.mxu0 0.0
        %3251 = vmatpush1.xpose.msra.mxu0 %v3248
        %3252 = vmatprep.subr.mxu0 0.0
        %3253 = vmatpush1.xpose.msra.mxu0 0.0
        %3254 = vmatprep.subr.mxu0 0.0
        %3255 = vmatpush1.xpose.msra.mxu0 0.0
        %3256 = vmatprep.subr.mxu0 0.0
        %3257 = vmatpush1.xpose.msra.mxu0 0.0
        %3258 = vmatprep.subr.mxu0 0.0
        %3259 = vmatpush1.xpose.msra.mxu0 0.0
        %3260 = vmatprep.subr.mxu0 0.0
        %3261 = vmatpush1.xpose.msra.mxu0 0.0
        %3262 = vmatprep.subr.mxu0 0.0
        %3263 = vmatpush1.xpose.msra.mxu0 0.0
        %3264 = vmatprep.subr.mxu0 0.0
        %3265 = vmatpush1.xpose.msra.mxu0 0.0
        %3266 = vmatprep.subr.mxu0 0.0
        %3267 = vmatpush1.xpose.msra.mxu0 0.0
        %3268 = vmatprep.subr.mxu0 0.0
        %3269 = vmatpush1.xpose.msra.mxu0 0.0
        %3270 = vmatprep.subr.mxu0 0.0
        %3271 = vmatpush1.xpose.msra.mxu0 0.0
        %3272 = vmatprep.subr.mxu0 0.0
        %3273 = vmatpush1.xpose.msra.mxu0 0.0
        %3274 = vmatprep.subr.mxu0 0.0
        %3275 = vmatpush1.xpose.msra.mxu0 0.0
        %3276 = vmatprep.subr.mxu0 0.0
        %3277 = vmatpush1.xpose.msra.mxu0 0.0
        %3278 = vmatprep.subr.mxu0 0.0
        %3279 = vmatpush1.xpose.msra.mxu0 0.0
        %3280 = vmatprep.subr.mxu0 0.0
        %3281 = vmatpush1.xpose.msra.mxu0 0.0
        %3282 = vmatprep.subr.mxu0 0.0
        %3283 = vmatpush1.xpose.msra.mxu0 0.0
        %3284 = vmatprep.subr.mxu0 0.0
        %3285 = vmatpush1.xpose.msra.mxu0 0.0
        %3286 = vmatprep.subr.mxu0 0.0
        %3287 = vmatpush1.xpose.msra.mxu0 0.0
        %3288 = vmatprep.subr.mxu0 0.0
        %3289 = vmatpush1.xpose.msra.mxu0 0.0
        %3290 = vmatprep.subr.mxu0 0.0
        %3291 = vmatpush1.xpose.msra.mxu0 0.0
        %3292 = vmatprep.subr.mxu0 0.0
        %3293 = vmatpush1.xpose.msra.mxu0 0.0
        %3294 = vmatprep.subr.mxu0 0.0
        %3295 = vmatpush1.xpose.msra.mxu0 0.0
        %3296 = vmatprep.subr.mxu0 0.0
        %3297 = vmatpush1.xpose.msra.mxu0 0.0
        %3298 = vmatprep.subr.mxu0 0.0
        %3299 = vmatpush1.xpose.msra.mxu0 0.0
        %3300 = vmatprep.subr.mxu0 0.0
        %3301 = vmatpush1.xpose.msra.mxu0 0.0
        %3302 = vmatprep.subr.mxu0 0.0
        %3303 = vmatpush1.xpose.msra.mxu0 0.0
        %3304 = vmatprep.subr.mxu0 0.0
        %3305 = vmatpush1.xpose.msra.mxu0 0.0
        %3306 = vmatprep.subr.mxu0 0.0
        %3307 = vmatpush1.xpose.msra.mxu0 0.0
        %3308 = vmatprep.subr.mxu0 0.0
        %3309 = vmatpush1.xpose.msra.mxu0 0.0
        %3310 = vmatprep.subr.mxu0 0.0
        %3311 = vmatpush1.xpose.msra.mxu0 0.0
        %3312 = vmatprep.subr.mxu0 0.0
        %3313 = vmatpush1.xpose.msra.mxu0 0.0
        %3314 = vmatprep.mubr.f32.mxu0 0.0
        %3315 = vmatmul.mubr.f32.gmra.mrb[0].mxu0 %v3246
        %v3316 = vpop.f32.mrb[0].mxu0
        %v3317 = vadd.f32 0.0, %v3316
        %v3318 = vpop.f32.mrb[0].mxu0
        %3319 = vdwg.mxu0
        %v3320 = vmul.f32 %v3317, 0.35355338
        %v3321 = vsel %vm3149, %v3320, -1e+30
        %v3322 = vsel %vm3151, %v3321, -inf
        %3323 = vmax.xlane.f32.xlu0 %v3322
        %v3324 = vpop.xlane.xlu0 %3323
        %v3325 = vsub.f32 %v3321, %v3324
        %v3326 = vmul.f32 %v3325, 1.442695
        %v3327 = vpow.pop %v3326
        %v3328 = vsel %vm3151, %v3327, 0.0
        %3329 = vadd.xlane.f32.xlu0 %v3328
        %v3330 = vpop.xlane.xlu0 %3329
        %v3331 = vrcp.pop %v3330
        %v3332 = vmul.f32 %v3327, %v3331
        %3333 = vrot.lane.b32.xlu0 %v3064, 56
        %v3334 = vpop.permute.xlu0 %3333
        %v3336 = vsel %vm3165, %v3332, 0
        %v3338 = vsel %vm3169, %v3334, 0
        %3340 = vmatprep.subr.mxu0 0.0
        %3341 = vmatpush1.msra.mxu0 %v3338
        %3342 = vmatprep.subr.mxu0 0.0
        %3343 = vmatpush1.msra.mxu0 0.0
        %3344 = vmatprep.subr.mxu0 0.0
        %3345 = vmatpush1.msra.mxu0 0.0
        %3346 = vmatprep.subr.mxu0 0.0
        %3347 = vmatpush1.msra.mxu0 0.0
        %3348 = vmatprep.subr.mxu0 0.0
        %3349 = vmatpush1.msra.mxu0 0.0
        %3350 = vmatprep.subr.mxu0 0.0
        %3351 = vmatpush1.msra.mxu0 0.0
        %3352 = vmatprep.subr.mxu0 0.0
        %3353 = vmatpush1.msra.mxu0 0.0
        %3354 = vmatprep.subr.mxu0 0.0
        %3355 = vmatpush1.msra.mxu0 0.0
        %3356 = vmatprep.subr.mxu0 0.0
        %3357 = vmatpush1.msra.mxu0 0.0
        %3358 = vmatprep.subr.mxu0 0.0
        %3359 = vmatpush1.msra.mxu0 0.0
        %3360 = vmatprep.subr.mxu0 0.0
        %3361 = vmatpush1.msra.mxu0 0.0
        %3362 = vmatprep.subr.mxu0 0.0
        %3363 = vmatpush1.msra.mxu0 0.0
        %3364 = vmatprep.subr.mxu0 0.0
        %3365 = vmatpush1.msra.mxu0 0.0
        %3366 = vmatprep.subr.mxu0 0.0
        %3367 = vmatpush1.msra.mxu0 0.0
        %3368 = vmatprep.subr.mxu0 0.0
        %3369 = vmatpush1.msra.mxu0 0.0
        %3370 = vmatprep.subr.mxu0 0.0
        %3371 = vmatpush1.msra.mxu0 0.0
        %3372 = vmatprep.subr.mxu0 0.0
        %3373 = vmatpush1.msra.mxu0 0.0
        %3374 = vmatprep.subr.mxu0 0.0
        %3375 = vmatpush1.msra.mxu0 0.0
        %3376 = vmatprep.subr.mxu0 0.0
        %3377 = vmatpush1.msra.mxu0 0.0
        %3378 = vmatprep.subr.mxu0 0.0
        %3379 = vmatpush1.msra.mxu0 0.0
        %3380 = vmatprep.subr.mxu0 0.0
        %3381 = vmatpush1.msra.mxu0 0.0
        %3382 = vmatprep.subr.mxu0 0.0
        %3383 = vmatpush1.msra.mxu0 0.0
        %3384 = vmatprep.subr.mxu0 0.0
        %3385 = vmatpush1.msra.mxu0 0.0
        %3386 = vmatprep.subr.mxu0 0.0
        %3387 = vmatpush1.msra.mxu0 0.0
        %3388 = vmatprep.subr.mxu0 0.0
        %3389 = vmatpush1.msra.mxu0 0.0
        %3390 = vmatprep.subr.mxu0 0.0
        %3391 = vmatpush1.msra.mxu0 0.0
        %3392 = vmatprep.subr.mxu0 0.0
        %3393 = vmatpush1.msra.mxu0 0.0
        %3394 = vmatprep.subr.mxu0 0.0
        %3395 = vmatpush1.msra.mxu0 0.0
        %3396 = vmatprep.subr.mxu0 0.0
        %3397 = vmatpush1.msra.mxu0 0.0
        %3398 = vmatprep.subr.mxu0 0.0
        %3399 = vmatpush1.msra.mxu0 0.0
        %3400 = vmatprep.subr.mxu0 0.0
        %3401 = vmatpush1.msra.mxu0 0.0
        %3402 = vmatprep.subr.mxu0 0.0
        %3403 = vmatpush1.msra.mxu0 0.0
        %3404 = vmatprep.mubr.f32.mxu0 0.0
        %3405 = vmatmul.mubr.f32.gmra.mrb[0].mxu0 %v3336
        %v3406 = vpop.f32.mrb[0].mxu0
        %v3407 = vadd.f32 0.0, %v3406
        %v3408 = vpop.f32.mrb[0].mxu0
        %3409 = vdwg.mxu0
        %3410 = vrot.lane.b32.xlu0 %v3064, 112
        %v3411 = vpop.permute.xlu0 %3410
        %3412 = vrot.lane.b32.xlu0 %v3064, 80
        %v3413 = vpop.permute.xlu0 %3412
        %v3414 = vsel %vm1645, %v3411, 0
        %v3416 = vsel %vm1645, %v3413, 0
        %3418 = vmatprep.subr.mxu0 0.0
        %3419 = vmatpush1.xpose.msra.mxu0 %v3416
        %3420 = vmatprep.subr.mxu0 0.0
        %3421 = vmatpush1.xpose.msra.mxu0 0.0
        %3422 = vmatprep.subr.mxu0 0.0
        %3423 = vmatpush1.xpose.msra.mxu0 0.0
        %3424 = vmatprep.subr.mxu0 0.0
        %3425 = vmatpush1.xpose.msra.mxu0 0.0
        %3426 = vmatprep.subr.mxu0 0.0
        %3427 = vmatpush1.xpose.msra.mxu0 0.0
        %3428 = vmatprep.subr.mxu0 0.0
        %3429 = vmatpush1.xpose.msra.mxu0 0.0
        %3430 = vmatprep.subr.mxu0 0.0
        %3431 = vmatpush1.xpose.msra.mxu0 0.0
        %3432 = vmatprep.subr.mxu0 0.0
        %3433 = vmatpush1.xpose.msra.mxu0 0.0
        %3434 = vmatprep.subr.mxu0 0.0
        %3435 = vmatpush1.xpose.msra.mxu0 0.0
        %3436 = vmatprep.subr.mxu0 0.0
        %3437 = vmatpush1.xpose.msra.mxu0 0.0
        %3438 = vmatprep.subr.mxu0 0.0
        %3439 = vmatpush1.xpose.msra.mxu0 0.0
        %3440 = vmatprep.subr.mxu0 0.0
        %3441 = vmatpush1.xpose.msra.mxu0 0.0
        %3442 = vmatprep.subr.mxu0 0.0
        %3443 = vmatpush1.xpose.msra.mxu0 0.0
        %3444 = vmatprep.subr.mxu0 0.0
        %3445 = vmatpush1.xpose.msra.mxu0 0.0
        %3446 = vmatprep.subr.mxu0 0.0
        %3447 = vmatpush1.xpose.msra.mxu0 0.0
        %3448 = vmatprep.subr.mxu0 0.0
        %3449 = vmatpush1.xpose.msra.mxu0 0.0
        %3450 = vmatprep.subr.mxu0 0.0
        %3451 = vmatpush1.xpose.msra.mxu0 0.0
        %3452 = vmatprep.subr.mxu0 0.0
        %3453 = vmatpush1.xpose.msra.mxu0 0.0
        %3454 = vmatprep.subr.mxu0 0.0
        %3455 = vmatpush1.xpose.msra.mxu0 0.0
        %3456 = vmatprep.subr.mxu0 0.0
        %3457 = vmatpush1.xpose.msra.mxu0 0.0
        %3458 = vmatprep.subr.mxu0 0.0
        %3459 = vmatpush1.xpose.msra.mxu0 0.0
        %3460 = vmatprep.subr.mxu0 0.0
        %3461 = vmatpush1.xpose.msra.mxu0 0.0
        %3462 = vmatprep.subr.mxu0 0.0
        %3463 = vmatpush1.xpose.msra.mxu0 0.0
        %3464 = vmatprep.subr.mxu0 0.0
        %3465 = vmatpush1.xpose.msra.mxu0 0.0
        %3466 = vmatprep.subr.mxu0 0.0
        %3467 = vmatpush1.xpose.msra.mxu0 0.0
        %3468 = vmatprep.subr.mxu0 0.0
        %3469 = vmatpush1.xpose.msra.mxu0 0.0
        %3470 = vmatprep.subr.mxu0 0.0
        %3471 = vmatpush1.xpose.msra.mxu0 0.0
        %3472 = vmatprep.subr.mxu0 0.0
        %3473 = vmatpush1.xpose.msra.mxu0 0.0
        %3474 = vmatprep.subr.mxu0 0.0
        %3475 = vmatpush1.xpose.msra.mxu0 0.0
        %3476 = vmatprep.subr.mxu0 0.0
        %3477 = vmatpush1.xpose.msra.mxu0 0.0
        %3478 = vmatprep.subr.mxu0 0.0
        %3479 = vmatpush1.xpose.msra.mxu0 0.0
        %3480 = vmatprep.subr.mxu0 0.0
        %3481 = vmatpush1.xpose.msra.mxu0 0.0
        %3482 = vmatprep.mubr.f32.mxu0 0.0
        %3483 = vmatmul.mubr.f32.gmra.mrb[0].mxu0 %v3414
        %v3484 = vpop.f32.mrb[0].mxu0
        %v3485 = vadd.f32 0.0, %v3484
        %v3486 = vpop.f32.mrb[0].mxu0
        %3487 = vdwg.mxu0
        %v3488 = vmul.f32 %v3485, 0.35355338
        %v3489 = vsel %vm3149, %v3488, -1e+30
        %v3490 = vsel %vm3151, %v3489, -inf
        %3491 = vmax.xlane.f32.xlu0 %v3490
        %v3492 = vpop.xlane.xlu0 %3491
        %v3493 = vsub.f32 %v3489, %v3492
        %v3494 = vmul.f32 %v3493, 1.442695
        %v3495 = vpow.pop %v3494
        %v3496 = vsel %vm3151, %v3495, 0.0
        %3497 = vadd.xlane.f32.xlu0 %v3496
        %v3498 = vpop.xlane.xlu0 %3497
        %v3499 = vrcp.pop %v3498
        %v3500 = vmul.f32 %v3495, %v3499
        %3501 = vrot.lane.b32.xlu0 %v3064, 48
        %v3502 = vpop.permute.xlu0 %3501
        %v3504 = vsel %vm3165, %v3500, 0
        %v3506 = vsel %vm3169, %v3502, 0
        %3508 = vmatprep.subr.mxu0 0.0
        %3509 = vmatpush1.msra.mxu0 %v3506
        %3510 = vmatprep.subr.mxu0 0.0
        %3511 = vmatpush1.msra.mxu0 0.0
        %3512 = vmatprep.subr.mxu0 0.0
        %3513 = vmatpush1.msra.mxu0 0.0
        %3514 = vmatprep.subr.mxu0 0.0
        %3515 = vmatpush1.msra.mxu0 0.0
        %3516 = vmatprep.subr.mxu0 0.0
        %3517 = vmatpush1.msra.mxu0 0.0
        %3518 = vmatprep.subr.mxu0 0.0
        %3519 = vmatpush1.msra.mxu0 0.0
        %3520 = vmatprep.subr.mxu0 0.0
        %3521 = vmatpush1.msra.mxu0 0.0
        %3522 = vmatprep.subr.mxu0 0.0
        %3523 = vmatpush1.msra.mxu0 0.0
        %3524 = vmatprep.subr.mxu0 0.0
        %3525 = vmatpush1.msra.mxu0 0.0
        %3526 = vmatprep.subr.mxu0 0.0
        %3527 = vmatpush1.msra.mxu0 0.0
        %3528 = vmatprep.subr.mxu0 0.0
        %3529 = vmatpush1.msra.mxu0 0.0
        %3530 = vmatprep.subr.mxu0 0.0
        %3531 = vmatpush1.msra.mxu0 0.0
        %3532 = vmatprep.subr.mxu0 0.0
        %3533 = vmatpush1.msra.mxu0 0.0
        %3534 = vmatprep.subr.mxu0 0.0
        %3535 = vmatpush1.msra.mxu0 0.0
        %3536 = vmatprep.subr.mxu0 0.0
        %3537 = vmatpush1.msra.mxu0 0.0
        %3538 = vmatprep.subr.mxu0 0.0
        %3539 = vmatpush1.msra.mxu0 0.0
        %3540 = vmatprep.subr.mxu0 0.0
        %3541 = vmatpush1.msra.mxu0 0.0
        %3542 = vmatprep.subr.mxu0 0.0
        %3543 = vmatpush1.msra.mxu0 0.0
        %3544 = vmatprep.subr.mxu0 0.0
        %3545 = vmatpush1.msra.mxu0 0.0
        %3546 = vmatprep.subr.mxu0 0.0
        %3547 = vmatpush1.msra.mxu0 0.0
        %3548 = vmatprep.subr.mxu0 0.0
        %3549 = vmatpush1.msra.mxu0 0.0
        %3550 = vmatprep.subr.mxu0 0.0
        %3551 = vmatpush1.msra.mxu0 0.0
        %3552 = vmatprep.subr.mxu0 0.0
        %3553 = vmatpush1.msra.mxu0 0.0
        %3554 = vmatprep.subr.mxu0 0.0
        %3555 = vmatpush1.msra.mxu0 0.0
        %3556 = vmatprep.subr.mxu0 0.0
        %3557 = vmatpush1.msra.mxu0 0.0
        %3558 = vmatprep.subr.mxu0 0.0
        %3559 = vmatpush1.msra.mxu0 0.0
        %3560 = vmatprep.subr.mxu0 0.0
        %3561 = vmatpush1.msra.mxu0 0.0
        %3562 = vmatprep.subr.mxu0 0.0
        %3563 = vmatpush1.msra.mxu0 0.0
        %3564 = vmatprep.subr.mxu0 0.0
        %3565 = vmatpush1.msra.mxu0 0.0
        %3566 = vmatprep.subr.mxu0 0.0
        %3567 = vmatpush1.msra.mxu0 0.0
        %3568 = vmatprep.subr.mxu0 0.0
        %3569 = vmatpush1.msra.mxu0 0.0
        %3570 = vmatprep.subr.mxu0 0.0
        %3571 = vmatpush1.msra.mxu0 0.0
        %3572 = vmatprep.mubr.f32.mxu0 0.0
        %3573 = vmatmul.mubr.f32.gmra.mrb[0].mxu0 %v3504
        %v3574 = vpop.f32.mrb[0].mxu0
        %v3575 = vadd.f32 0.0, %v3574
        %v3576 = vpop.f32.mrb[0].mxu0
        %3577 = vdwg.mxu0
        %3578 = vrot.lane.b32.xlu0 %v3064, 104
        %v3579 = vpop.permute.xlu0 %3578
        %3580 = vrot.lane.b32.xlu0 %v3064, 72
        %v3581 = vpop.permute.xlu0 %3580
        %v3582 = vsel %vm1645, %v3579, 0
        %v3584 = vsel %vm1645, %v3581, 0
        %3586 = vmatprep.subr.mxu0 0.0
        %3587 = vmatpush1.xpose.msra.mxu0 %v3584
        %3588 = vmatprep.subr.mxu0 0.0
        %3589 = vmatpush1.xpose.msra.mxu0 0.0
        %3590 = vmatprep.subr.mxu0 0.0
        %3591 = vmatpush1.xpose.msra.mxu0 0.0
        %3592 = vmatprep.subr.mxu0 0.0
        %3593 = vmatpush1.xpose.msra.mxu0 0.0
        %3594 = vmatprep.subr.mxu0 0.0
        %3595 = vmatpush1.xpose.msra.mxu0 0.0
        %3596 = vmatprep.subr.mxu0 0.0
        %3597 = vmatpush1.xpose.msra.mxu0 0.0
        %3598 = vmatprep.subr.mxu0 0.0
        %3599 = vmatpush1.xpose.msra.mxu0 0.0
        %3600 = vmatprep.subr.mxu0 0.0
        %3601 = vmatpush1.xpose.msra.mxu0 0.0
        %3602 = vmatprep.subr.mxu0 0.0
        %3603 = vmatpush1.xpose.msra.mxu0 0.0
        %3604 = vmatprep.subr.mxu0 0.0
        %3605 = vmatpush1.xpose.msra.mxu0 0.0
        %3606 = vmatprep.subr.mxu0 0.0
        %3607 = vmatpush1.xpose.msra.mxu0 0.0
        %3608 = vmatprep.subr.mxu0 0.0
        %3609 = vmatpush1.xpose.msra.mxu0 0.0
        %3610 = vmatprep.subr.mxu0 0.0
        %3611 = vmatpush1.xpose.msra.mxu0 0.0
        %3612 = vmatprep.subr.mxu0 0.0
        %3613 = vmatpush1.xpose.msra.mxu0 0.0
        %3614 = vmatprep.subr.mxu0 0.0
        %3615 = vmatpush1.xpose.msra.mxu0 0.0
        %3616 = vmatprep.subr.mxu0 0.0
        %3617 = vmatpush1.xpose.msra.mxu0 0.0
        %3618 = vmatprep.subr.mxu0 0.0
        %3619 = vmatpush1.xpose.msra.mxu0 0.0
        %3620 = vmatprep.subr.mxu0 0.0
        %3621 = vmatpush1.xpose.msra.mxu0 0.0
        %3622 = vmatprep.subr.mxu0 0.0
        %3623 = vmatpush1.xpose.msra.mxu0 0.0
        %3624 = vmatprep.subr.mxu0 0.0
        %3625 = vmatpush1.xpose.msra.mxu0 0.0
        %3626 = vmatprep.subr.mxu0 0.0
        %3627 = vmatpush1.xpose.msra.mxu0 0.0
        %3628 = vmatprep.subr.mxu0 0.0
        %3629 = vmatpush1.xpose.msra.mxu0 0.0
        %3630 = vmatprep.subr.mxu0 0.0
        %3631 = vmatpush1.xpose.msra.mxu0 0.0
        %3632 = vmatprep.subr.mxu0 0.0
        %3633 = vmatpush1.xpose.msra.mxu0 0.0
        %3634 = vmatprep.subr.mxu0 0.0
        %3635 = vmatpush1.xpose.msra.mxu0 0.0
        %3636 = vmatprep.subr.mxu0 0.0
        %3637 = vmatpush1.xpose.msra.mxu0 0.0
        %3638 = vmatprep.subr.mxu0 0.0
        %3639 = vmatpush1.xpose.msra.mxu0 0.0
        %3640 = vmatprep.subr.mxu0 0.0
        %3641 = vmatpush1.xpose.msra.mxu0 0.0
        %3642 = vmatprep.subr.mxu0 0.0
        %3643 = vmatpush1.xpose.msra.mxu0 0.0
        %3644 = vmatprep.subr.mxu0 0.0
        %3645 = vmatpush1.xpose.msra.mxu0 0.0
        %3646 = vmatprep.subr.mxu0 0.0
        %3647 = vmatpush1.xpose.msra.mxu0 0.0
        %3648 = vmatprep.subr.mxu0 0.0
        %3649 = vmatpush1.xpose.msra.mxu0 0.0
        %3650 = vmatprep.mubr.f32.mxu0 0.0
        %3651 = vmatmul.mubr.f32.gmra.mrb[0].mxu0 %v3582
        %v3652 = vpop.f32.mrb[0].mxu0
        %v3653 = vadd.f32 0.0, %v3652
        %v3654 = vpop.f32.mrb[0].mxu0
        %3655 = vdwg.mxu0
        %v3656 = vmul.f32 %v3653, 0.35355338
        %v3657 = vsel %vm3149, %v3656, -1e+30
        %v3658 = vsel %vm3151, %v3657, -inf
        %3659 = vmax.xlane.f32.xlu0 %v3658
        %v3660 = vpop.xlane.xlu0 %3659
        %v3661 = vsub.f32 %v3657, %v3660
        %v3662 = vmul.f32 %v3661, 1.442695
        %v3663 = vpow.pop %v3662
        %v3664 = vsel %vm3151, %v3663, 0.0
        %3665 = vadd.xlane.f32.xlu0 %v3664
        %v3666 = vpop.xlane.xlu0 %3665
        %v3667 = vrcp.pop %v3666
        %v3668 = vmul.f32 %v3663, %v3667
        %3669 = vrot.lane.b32.xlu0 %v3064, 40
        %v3670 = vpop.permute.xlu0 %3669
        %v3672 = vsel %vm3165, %v3668, 0
        %v3674 = vsel %vm3169, %v3670, 0
        %3676 = vmatprep.subr.mxu0 0.0
        %3677 = vmatpush1.msra.mxu0 %v3674
        %3678 = vmatprep.subr.mxu0 0.0
        %3679 = vmatpush1.msra.mxu0 0.0
        %3680 = vmatprep.subr.mxu0 0.0
        %3681 = vmatpush1.msra.mxu0 0.0
        %3682 = vmatprep.subr.mxu0 0.0
        %3683 = vmatpush1.msra.mxu0 0.0
        %3684 = vmatprep.subr.mxu0 0.0
        %3685 = vmatpush1.msra.mxu0 0.0
        %3686 = vmatprep.subr.mxu0 0.0
        %3687 = vmatpush1.msra.mxu0 0.0
        %3688 = vmatprep.subr.mxu0 0.0
        %3689 = vmatpush1.msra.mxu0 0.0
        %3690 = vmatprep.subr.mxu0 0.0
        %3691 = vmatpush1.msra.mxu0 0.0
        %3692 = vmatprep.subr.mxu0 0.0
        %3693 = vmatpush1.msra.mxu0 0.0
        %3694 = vmatprep.subr.mxu0 0.0
        %3695 = vmatpush1.msra.mxu0 0.0
        %3696 = vmatprep.subr.mxu0 0.0
        %3697 = vmatpush1.msra.mxu0 0.0
        %3698 = vmatprep.subr.mxu0 0.0
        %3699 = vmatpush1.msra.mxu0 0.0
        %3700 = vmatprep.subr.mxu0 0.0
        %3701 = vmatpush1.msra.mxu0 0.0
        %3702 = vmatprep.subr.mxu0 0.0
        %3703 = vmatpush1.msra.mxu0 0.0
        %3704 = vmatprep.subr.mxu0 0.0
        %3705 = vmatpush1.msra.mxu0 0.0
        %3706 = vmatprep.subr.mxu0 0.0
        %3707 = vmatpush1.msra.mxu0 0.0
        %3708 = vmatprep.subr.mxu0 0.0
        %3709 = vmatpush1.msra.mxu0 0.0
        %3710 = vmatprep.subr.mxu0 0.0
        %3711 = vmatpush1.msra.mxu0 0.0
        %3712 = vmatprep.subr.mxu0 0.0
        %3713 = vmatpush1.msra.mxu0 0.0
        %3714 = vmatprep.subr.mxu0 0.0
        %3715 = vmatpush1.msra.mxu0 0.0
        %3716 = vmatprep.subr.mxu0 0.0
        %3717 = vmatpush1.msra.mxu0 0.0
        %3718 = vmatprep.subr.mxu0 0.0
        %3719 = vmatpush1.msra.mxu0 0.0
        %3720 = vmatprep.subr.mxu0 0.0
        %3721 = vmatpush1.msra.mxu0 0.0
        %3722 = vmatprep.subr.mxu0 0.0
        %3723 = vmatpush1.msra.mxu0 0.0
        %3724 = vmatprep.subr.mxu0 0.0
        %3725 = vmatpush1.msra.mxu0 0.0
        %3726 = vmatprep.subr.mxu0 0.0
        %3727 = vmatpush1.msra.mxu0 0.0
        %3728 = vmatprep.subr.mxu0 0.0
        %3729 = vmatpush1.msra.mxu0 0.0
        %3730 = vmatprep.subr.mxu0 0.0
        %3731 = vmatpush1.msra.mxu0 0.0
        %3732 = vmatprep.subr.mxu0 0.0
        %3733 = vmatpush1.msra.mxu0 0.0
        %3734 = vmatprep.subr.mxu0 0.0
        %3735 = vmatpush1.msra.mxu0 0.0
        %3736 = vmatprep.subr.mxu0 0.0
        %3737 = vmatpush1.msra.mxu0 0.0
        %3738 = vmatprep.subr.mxu0 0.0
        %3739 = vmatpush1.msra.mxu0 0.0
        %3740 = vmatprep.mubr.f32.mxu0 0.0
        %3741 = vmatmul.mubr.f32.gmra.mrb[0].mxu0 %v3672
        %v3742 = vpop.f32.mrb[0].mxu0
        %v3743 = vadd.f32 0.0, %v3742
        %v3744 = vpop.f32.mrb[0].mxu0
        %3745 = vdwg.mxu0
        %v3746 = vmul.u32 %v3146, 4
        %vm3747 = vcmp.eq.s32.totalorder %v3746, %v3148
        %v3748 = vsel %vm3747, 1.0, 0.0
        %v3749 = vadd.s32 %v3148, 6
        %vm3750 = vcmp.eq.s32.totalorder %v3746, %v3749
        %v3751 = vsel %vm3750, 1.0, 0.0
        %v3753 = vsel %vm3165, %v3751, 0
        %v3756 = vsel %vm3169, %v3407, 0
        %3758 = vmatprep.subr.mxu0 0.0
        %3759 = vmatpush1.msra.mxu0 %v3756
        %3760 = vmatprep.subr.mxu0 0.0
        %3761 = vmatpush1.msra.mxu0 0.0
        %3762 = vmatprep.subr.mxu0 0.0
        %3763 = vmatpush1.msra.mxu0 0.0
        %3764 = vmatprep.subr.mxu0 0.0
        %3765 = vmatpush1.msra.mxu0 0.0
        %3766 = vmatprep.subr.mxu0 0.0
        %3767 = vmatpush1.msra.mxu0 0.0
        %3768 = vmatprep.subr.mxu0 0.0
        %3769 = vmatpush1.msra.mxu0 0.0
        %3770 = vmatprep.subr.mxu0 0.0
        %3771 = vmatpush1.msra.mxu0 0.0
        %3772 = vmatprep.subr.mxu0 0.0
        %3773 = vmatpush1.msra.mxu0 0.0
        %3774 = vmatprep.subr.mxu0 0.0
        %3775 = vmatpush1.msra.mxu0 0.0
        %3776 = vmatprep.subr.mxu0 0.0
        %3777 = vmatpush1.msra.mxu0 0.0
        %3778 = vmatprep.subr.mxu0 0.0
        %3779 = vmatpush1.msra.mxu0 0.0
        %3780 = vmatprep.subr.mxu0 0.0
        %3781 = vmatpush1.msra.mxu0 0.0
        %3782 = vmatprep.subr.mxu0 0.0
        %3783 = vmatpush1.msra.mxu0 0.0
        %3784 = vmatprep.subr.mxu0 0.0
        %3785 = vmatpush1.msra.mxu0 0.0
        %3786 = vmatprep.subr.mxu0 0.0
        %3787 = vmatpush1.msra.mxu0 0.0
        %3788 = vmatprep.subr.mxu0 0.0
        %3789 = vmatpush1.msra.mxu0 0.0
        %3790 = vmatprep.subr.mxu0 0.0
        %3791 = vmatpush1.msra.mxu0 0.0
        %3792 = vmatprep.subr.mxu0 0.0
        %3793 = vmatpush1.msra.mxu0 0.0
        %3794 = vmatprep.subr.mxu0 0.0
        %3795 = vmatpush1.msra.mxu0 0.0
        %3796 = vmatprep.subr.mxu0 0.0
        %3797 = vmatpush1.msra.mxu0 0.0
        %3798 = vmatprep.subr.mxu0 0.0
        %3799 = vmatpush1.msra.mxu0 0.0
        %3800 = vmatprep.subr.mxu0 0.0
        %3801 = vmatpush1.msra.mxu0 0.0
        %3802 = vmatprep.subr.mxu0 0.0
        %3803 = vmatpush1.msra.mxu0 0.0
        %3804 = vmatprep.subr.mxu0 0.0
        %3805 = vmatpush1.msra.mxu0 0.0
        %3806 = vmatprep.subr.mxu0 0.0
        %3807 = vmatpush1.msra.mxu0 0.0
        %3808 = vmatprep.subr.mxu0 0.0
        %3809 = vmatpush1.msra.mxu0 0.0
        %3810 = vmatprep.subr.mxu0 0.0
        %3811 = vmatpush1.msra.mxu0 0.0
        %3812 = vmatprep.subr.mxu0 0.0
        %3813 = vmatpush1.msra.mxu0 0.0
        %3814 = vmatprep.subr.mxu0 0.0
        %3815 = vmatpush1.msra.mxu0 0.0
        %3816 = vmatprep.subr.mxu0 0.0
        %3817 = vmatpush1.msra.mxu0 0.0
        %3818 = vmatprep.subr.mxu0 0.0
        %3819 = vmatpush1.msra.mxu0 0.0
        %3820 = vmatprep.subr.mxu0 0.0
        %3821 = vmatpush1.msra.mxu0 0.0
        %3822 = vmatprep.mubr.f32.mxu0 0.0
        %3823 = vmatmul.mubr.f32.gmra.mrb[0].mxu0 %v3753
        %v3824 = vpop.f32.mrb[0].mxu0
        %v3825 = vadd.f32 0.0, %v3824
        %v3826 = vpop.f32.mrb[0].mxu0
        %3827 = vdwg.mxu0
        %v3829 = vsel %vm3165, %v3748, 0
        %v3832 = vsel %vm3169, %v3239, 0
        %3834 = vmatprep.subr.mxu0 0.0
        %3835 = vmatpush1.msra.mxu0 %v3832
        %3836 = vmatprep.subr.mxu0 0.0
        %3837 = vmatpush1.msra.mxu0 0.0
        %3838 = vmatprep.subr.mxu0 0.0
        %3839 = vmatpush1.msra.mxu0 0.0
        %3840 = vmatprep.subr.mxu0 0.0
        %3841 = vmatpush1.msra.mxu0 0.0
        %3842 = vmatprep.subr.mxu0 0.0
        %3843 = vmatpush1.msra.mxu0 0.0
        %3844 = vmatprep.subr.mxu0 0.0
        %3845 = vmatpush1.msra.mxu0 0.0
        %3846 = vmatprep.subr.mxu0 0.0
        %3847 = vmatpush1.msra.mxu0 0.0
        %3848 = vmatprep.subr.mxu0 0.0
        %3849 = vmatpush1.msra.mxu0 0.0
        %3850 = vmatprep.subr.mxu0 0.0
        %3851 = vmatpush1.msra.mxu0 0.0
        %3852 = vmatprep.subr.mxu0 0.0
        %3853 = vmatpush1.msra.mxu0 0.0
        %3854 = vmatprep.subr.mxu0 0.0
        %3855 = vmatpush1.msra.mxu0 0.0
        %3856 = vmatprep.subr.mxu0 0.0
        %3857 = vmatpush1.msra.mxu0 0.0
        %3858 = vmatprep.subr.mxu0 0.0
        %3859 = vmatpush1.msra.mxu0 0.0
        %3860 = vmatprep.subr.mxu0 0.0
        %3861 = vmatpush1.msra.mxu0 0.0
        %3862 = vmatprep.subr.mxu0 0.0
        %3863 = vmatpush1.msra.mxu0 0.0
        %3864 = vmatprep.subr.mxu0 0.0
        %3865 = vmatpush1.msra.mxu0 0.0
        %3866 = vmatprep.subr.mxu0 0.0
        %3867 = vmatpush1.msra.mxu0 0.0
        %3868 = vmatprep.subr.mxu0 0.0
        %3869 = vmatpush1.msra.mxu0 0.0
        %3870 = vmatprep.subr.mxu0 0.0
        %3871 = vmatpush1.msra.mxu0 0.0
        %3872 = vmatprep.subr.mxu0 0.0
        %3873 = vmatpush1.msra.mxu0 0.0
        %3874 = vmatprep.subr.mxu0 0.0
        %3875 = vmatpush1.msra.mxu0 0.0
        %3876 = vmatprep.subr.mxu0 0.0
        %3877 = vmatpush1.msra.mxu0 0.0
        %3878 = vmatprep.subr.mxu0 0.0
        %3879 = vmatpush1.msra.mxu0 0.0
        %3880 = vmatprep.subr.mxu0 0.0
        %3881 = vmatpush1.msra.mxu0 0.0
        %3882 = vmatprep.subr.mxu0 0.0
        %3883 = vmatpush1.msra.mxu0 0.0
        %3884 = vmatprep.subr.mxu0 0.0
        %3885 = vmatpush1.msra.mxu0 0.0
        %3886 = vmatprep.subr.mxu0 0.0
        %3887 = vmatpush1.msra.mxu0 0.0
        %3888 = vmatprep.subr.mxu0 0.0
        %3889 = vmatpush1.msra.mxu0 0.0
        %3890 = vmatprep.subr.mxu0 0.0
        %3891 = vmatpush1.msra.mxu0 0.0
        %3892 = vmatprep.subr.mxu0 0.0
        %3893 = vmatpush1.msra.mxu0 0.0
        %3894 = vmatprep.subr.mxu0 0.0
        %3895 = vmatpush1.msra.mxu0 0.0
        %3896 = vmatprep.subr.mxu0 0.0
        %3897 = vmatpush1.msra.mxu0 0.0
        %3898 = vmatprep.mubr.f32.mxu0 0.0
        %3899 = vmatmul.mubr.f32.gmra.mrb[0].mxu0 %v3829
        %v3900 = vpop.f32.mrb[0].mxu0
        %v3901 = vadd.f32 %v3825, %v3900
        %v3902 = vpop.f32.mrb[0].mxu0
        %3903 = vdwg.mxu0
        %v3904 = vadd.s32 %v3148, 12
        %vm3905 = vcmp.eq.s32.totalorder %v3746, %v3904
        %v3906 = vsel %vm3905, 1.0, 0.0
        %v3908 = vsel %vm3165, %v3906, 0
        %v3911 = vsel %vm3169, %v3575, 0
        %3913 = vmatprep.subr.mxu0 0.0
        %3914 = vmatpush1.msra.mxu0 %v3911
        %3915 = vmatprep.subr.mxu0 0.0
        %3916 = vmatpush1.msra.mxu0 0.0
        %3917 = vmatprep.subr.mxu0 0.0
        %3918 = vmatpush1.msra.mxu0 0.0
        %3919 = vmatprep.subr.mxu0 0.0
        %3920 = vmatpush1.msra.mxu0 0.0
        %3921 = vmatprep.subr.mxu0 0.0
        %3922 = vmatpush1.msra.mxu0 0.0
        %3923 = vmatprep.subr.mxu0 0.0
        %3924 = vmatpush1.msra.mxu0 0.0
        %3925 = vmatprep.subr.mxu0 0.0
        %3926 = vmatpush1.msra.mxu0 0.0
        %3927 = vmatprep.subr.mxu0 0.0
        %3928 = vmatpush1.msra.mxu0 0.0
        %3929 = vmatprep.subr.mxu0 0.0
        %3930 = vmatpush1.msra.mxu0 0.0
        %3931 = vmatprep.subr.mxu0 0.0
        %3932 = vmatpush1.msra.mxu0 0.0
        %3933 = vmatprep.subr.mxu0 0.0
        %3934 = vmatpush1.msra.mxu0 0.0
        %3935 = vmatprep.subr.mxu0 0.0
        %3936 = vmatpush1.msra.mxu0 0.0
        %3937 = vmatprep.subr.mxu0 0.0
        %3938 = vmatpush1.msra.mxu0 0.0
        %3939 = vmatprep.subr.mxu0 0.0
        %3940 = vmatpush1.msra.mxu0 0.0
        %3941 = vmatprep.subr.mxu0 0.0
        %3942 = vmatpush1.msra.mxu0 0.0
        %3943 = vmatprep.subr.mxu0 0.0
        %3944 = vmatpush1.msra.mxu0 0.0
        %3945 = vmatprep.subr.mxu0 0.0
        %3946 = vmatpush1.msra.mxu0 0.0
        %3947 = vmatprep.subr.mxu0 0.0
        %3948 = vmatpush1.msra.mxu0 0.0
        %3949 = vmatprep.subr.mxu0 0.0
        %3950 = vmatpush1.msra.mxu0 0.0
        %3951 = vmatprep.subr.mxu0 0.0
        %3952 = vmatpush1.msra.mxu0 0.0
        %3953 = vmatprep.subr.mxu0 0.0
        %3954 = vmatpush1.msra.mxu0 0.0
        %3955 = vmatprep.subr.mxu0 0.0
        %3956 = vmatpush1.msra.mxu0 0.0
        %3957 = vmatprep.subr.mxu0 0.0
        %3958 = vmatpush1.msra.mxu0 0.0
        %3959 = vmatprep.subr.mxu0 0.0
        %3960 = vmatpush1.msra.mxu0 0.0
        %3961 = vmatprep.subr.mxu0 0.0
        %3962 = vmatpush1.msra.mxu0 0.0
        %3963 = vmatprep.subr.mxu0 0.0
        %3964 = vmatpush1.msra.mxu0 0.0
        %3965 = vmatprep.subr.mxu0 0.0
        %3966 = vmatpush1.msra.mxu0 0.0
        %3967 = vmatprep.subr.mxu0 0.0
        %3968 = vmatpush1.msra.mxu0 0.0
        %3969 = vmatprep.subr.mxu0 0.0
        %3970 = vmatpush1.msra.mxu0 0.0
        %3971 = vmatprep.subr.mxu0 0.0
        %3972 = vmatpush1.msra.mxu0 0.0
        %3973 = vmatprep.subr.mxu0 0.0
        %3974 = vmatpush1.msra.mxu0 0.0
        %3975 = vmatprep.subr.mxu0 0.0
        %3976 = vmatpush1.msra.mxu0 0.0
        %3977 = vmatprep.mubr.f32.mxu0 0.0
        %3978 = vmatmul.mubr.f32.gmra.mrb[0].mxu0 %v3908
        %v3979 = vpop.f32.mrb[0].mxu0
        %v3980 = vadd.f32 0.0, %v3979
        %v3981 = vpop.f32.mrb[0].mxu0
        %3982 = vdwg.mxu0
        %v3983 = vadd.f32 %v3901, %v3980
        %v3984 = vadd.s32 %v3148, 18
        %vm3985 = vcmp.eq.s32.totalorder %v3746, %v3984
        %v3986 = vsel %vm3985, 1.0, 0.0
        %v3988 = vsel %vm3165, %v3986, 0
        %v3991 = vsel %vm3169, %v3743, 0
        %3993 = vmatprep.subr.mxu0 0.0
        %3994 = vmatpush1.msra.mxu0 %v3991
        %3995 = vmatprep.subr.mxu0 0.0
        %3996 = vmatpush1.msra.mxu0 0.0
        %3997 = vmatprep.subr.mxu0 0.0
        %3998 = vmatpush1.msra.mxu0 0.0
        %3999 = vmatprep.subr.mxu0 0.0
        %4000 = vmatpush1.msra.mxu0 0.0
        %4001 = vmatprep.subr.mxu0 0.0
        %4002 = vmatpush1.msra.mxu0 0.0
        %4003 = vmatprep.subr.mxu0 0.0
        %4004 = vmatpush1.msra.mxu0 0.0
        %4005 = vmatprep.subr.mxu0 0.0
        %4006 = vmatpush1.msra.mxu0 0.0
        %4007 = vmatprep.subr.mxu0 0.0
        %4008 = vmatpush1.msra.mxu0 0.0
        %4009 = vmatprep.subr.mxu0 0.0
        %4010 = vmatpush1.msra.mxu0 0.0
        %4011 = vmatprep.subr.mxu0 0.0
        %4012 = vmatpush1.msra.mxu0 0.0
        %4013 = vmatprep.subr.mxu0 0.0
        %4014 = vmatpush1.msra.mxu0 0.0
        %4015 = vmatprep.subr.mxu0 0.0
        %4016 = vmatpush1.msra.mxu0 0.0
        %4017 = vmatprep.subr.mxu0 0.0
        %4018 = vmatpush1.msra.mxu0 0.0
        %4019 = vmatprep.subr.mxu0 0.0
        %4020 = vmatpush1.msra.mxu0 0.0
        %4021 = vmatprep.subr.mxu0 0.0
        %4022 = vmatpush1.msra.mxu0 0.0
        %4023 = vmatprep.subr.mxu0 0.0
        %4024 = vmatpush1.msra.mxu0 0.0
        %4025 = vmatprep.subr.mxu0 0.0
        %4026 = vmatpush1.msra.mxu0 0.0
        %4027 = vmatprep.subr.mxu0 0.0
        %4028 = vmatpush1.msra.mxu0 0.0
        %4029 = vmatprep.subr.mxu0 0.0
        %4030 = vmatpush1.msra.mxu0 0.0
        %4031 = vmatprep.subr.mxu0 0.0
        %4032 = vmatpush1.msra.mxu0 0.0
        %4033 = vmatprep.subr.mxu0 0.0
        %4034 = vmatpush1.msra.mxu0 0.0
        %4035 = vmatprep.subr.mxu0 0.0
        %4036 = vmatpush1.msra.mxu0 0.0
        %4037 = vmatprep.subr.mxu0 0.0
        %4038 = vmatpush1.msra.mxu0 0.0
        %4039 = vmatprep.subr.mxu0 0.0
        %4040 = vmatpush1.msra.mxu0 0.0
        %4041 = vmatprep.subr.mxu0 0.0
        %4042 = vmatpush1.msra.mxu0 0.0
        %4043 = vmatprep.subr.mxu0 0.0
        %4044 = vmatpush1.msra.mxu0 0.0
        %4045 = vmatprep.subr.mxu0 0.0
        %4046 = vmatpush1.msra.mxu0 0.0
        %4047 = vmatprep.subr.mxu0 0.0
        %4048 = vmatpush1.msra.mxu0 0.0
        %4049 = vmatprep.subr.mxu0 0.0
        %4050 = vmatpush1.msra.mxu0 0.0
        %4051 = vmatprep.subr.mxu0 0.0
        %4052 = vmatpush1.msra.mxu0 0.0
        %4053 = vmatprep.subr.mxu0 0.0
        %4054 = vmatpush1.msra.mxu0 0.0
        %4055 = vmatprep.subr.mxu0 0.0
        %4056 = vmatpush1.msra.mxu0 0.0
        %4057 = vmatprep.mubr.f32.mxu0 0.0
        %4058 = vmatmul.mubr.f32.gmra.mrb[0].mxu0 %v3988
        %v4059 = vpop.f32.mrb[0].mxu0
        %v4060 = vadd.f32 0.0, %v4059
        %v4061 = vpop.f32.mrb[0].mxu0
        %4062 = vdwg.mxu0
        %v4063 = vadd.f32 %v3983, %v4060
        %v4064 = vadd.s32 %v3746, 1
        %vm4065 = vcmp.eq.s32.totalorder %v4064, %v3148
        %v4066 = vsel %vm4065, 1.0, 0.0
        %vm4067 = vcmp.eq.s32.totalorder %v4064, %v3749
        %v4068 = vsel %vm4067, 1.0, 0.0
        %v4070 = vsel %vm3165, %v4068, 0
        %4072 = vmatprep.subr.mxu0 0.0
        %4073 = vmatpush1.msra.mxu0 %v3756
        %4074 = vmatprep.subr.mxu0 0.0
        %4075 = vmatpush1.msra.mxu0 0.0
        %4076 = vmatprep.subr.mxu0 0.0
        %4077 = vmatpush1.msra.mxu0 0.0
        %4078 = vmatprep.subr.mxu0 0.0
        %4079 = vmatpush1.msra.mxu0 0.0
        %4080 = vmatprep.subr.mxu0 0.0
        %4081 = vmatpush1.msra.mxu0 0.0
        %4082 = vmatprep.subr.mxu0 0.0
        %4083 = vmatpush1.msra.mxu0 0.0
        %4084 = vmatprep.subr.mxu0 0.0
        %4085 = vmatpush1.msra.mxu0 0.0
        %4086 = vmatprep.subr.mxu0 0.0
        %4087 = vmatpush1.msra.mxu0 0.0
        %4088 = vmatprep.subr.mxu0 0.0
        %4089 = vmatpush1.msra.mxu0 0.0
        %4090 = vmatprep.subr.mxu0 0.0
        %4091 = vmatpush1.msra.mxu0 0.0
        %4092 = vmatprep.subr.mxu0 0.0
        %4093 = vmatpush1.msra.mxu0 0.0
        %4094 = vmatprep.subr.mxu0 0.0
        %4095 = vmatpush1.msra.mxu0 0.0
        %4096 = vmatprep.subr.mxu0 0.0
        %4097 = vmatpush1.msra.mxu0 0.0
        %4098 = vmatprep.subr.mxu0 0.0
        %4099 = vmatpush1.msra.mxu0 0.0
        %4100 = vmatprep.subr.mxu0 0.0
        %4101 = vmatpush1.msra.mxu0 0.0
        %4102 = vmatprep.subr.mxu0 0.0
        %4103 = vmatpush1.msra.mxu0 0.0
        %4104 = vmatprep.subr.mxu0 0.0
        %4105 = vmatpush1.msra.mxu0 0.0
        %4106 = vmatprep.subr.mxu0 0.0
        %4107 = vmatpush1.msra.mxu0 0.0
        %4108 = vmatprep.subr.mxu0 0.0
        %4109 = vmatpush1.msra.mxu0 0.0
        %4110 = vmatprep.subr.mxu0 0.0
        %4111 = vmatpush1.msra.mxu0 0.0
        %4112 = vmatprep.subr.mxu0 0.0
        %4113 = vmatpush1.msra.mxu0 0.0
        %4114 = vmatprep.subr.mxu0 0.0
        %4115 = vmatpush1.msra.mxu0 0.0
        %4116 = vmatprep.subr.mxu0 0.0
        %4117 = vmatpush1.msra.mxu0 0.0
        %4118 = vmatprep.subr.mxu0 0.0
        %4119 = vmatpush1.msra.mxu0 0.0
        %4120 = vmatprep.subr.mxu0 0.0
        %4121 = vmatpush1.msra.mxu0 0.0
        %4122 = vmatprep.subr.mxu0 0.0
        %4123 = vmatpush1.msra.mxu0 0.0
        %4124 = vmatprep.subr.mxu0 0.0
        %4125 = vmatpush1.msra.mxu0 0.0
        %4126 = vmatprep.subr.mxu0 0.0
        %4127 = vmatpush1.msra.mxu0 0.0
        %4128 = vmatprep.subr.mxu0 0.0
        %4129 = vmatpush1.msra.mxu0 0.0
        %4130 = vmatprep.subr.mxu0 0.0
        %4131 = vmatpush1.msra.mxu0 0.0
        %4132 = vmatprep.subr.mxu0 0.0
        %4133 = vmatpush1.msra.mxu0 0.0
        %4134 = vmatprep.subr.mxu0 0.0
        %4135 = vmatpush1.msra.mxu0 0.0
        %4136 = vmatprep.mubr.f32.mxu0 0.0
        %4137 = vmatmul.mubr.f32.gmra.mrb[0].mxu0 %v4070
        %v4138 = vpop.f32.mrb[0].mxu0
        %v4139 = vadd.f32 0.0, %v4138
        %v4140 = vpop.f32.mrb[0].mxu0
        %4141 = vdwg.mxu0
        %v4143 = vsel %vm3165, %v4066, 0
        %4145 = vmatprep.subr.mxu0 0.0
        %4146 = vmatpush1.msra.mxu0 %v3832
        %4147 = vmatprep.subr.mxu0 0.0
        %4148 = vmatpush1.msra.mxu0 0.0
        %4149 = vmatprep.subr.mxu0 0.0
        %4150 = vmatpush1.msra.mxu0 0.0
        %4151 = vmatprep.subr.mxu0 0.0
        %4152 = vmatpush1.msra.mxu0 0.0
        %4153 = vmatprep.subr.mxu0 0.0
        %4154 = vmatpush1.msra.mxu0 0.0
        %4155 = vmatprep.subr.mxu0 0.0
        %4156 = vmatpush1.msra.mxu0 0.0
        %4157 = vmatprep.subr.mxu0 0.0
        %4158 = vmatpush1.msra.mxu0 0.0
        %4159 = vmatprep.subr.mxu0 0.0
        %4160 = vmatpush1.msra.mxu0 0.0
        %4161 = vmatprep.subr.mxu0 0.0
        %4162 = vmatpush1.msra.mxu0 0.0
        %4163 = vmatprep.subr.mxu0 0.0
        %4164 = vmatpush1.msra.mxu0 0.0
        %4165 = vmatprep.subr.mxu0 0.0
        %4166 = vmatpush1.msra.mxu0 0.0
        %4167 = vmatprep.subr.mxu0 0.0
        %4168 = vmatpush1.msra.mxu0 0.0
        %4169 = vmatprep.subr.mxu0 0.0
        %4170 = vmatpush1.msra.mxu0 0.0
        %4171 = vmatprep.subr.mxu0 0.0
        %4172 = vmatpush1.msra.mxu0 0.0
        %4173 = vmatprep.subr.mxu0 0.0
        %4174 = vmatpush1.msra.mxu0 0.0
        %4175 = vmatprep.subr.mxu0 0.0
        %4176 = vmatpush1.msra.mxu0 0.0
        %4177 = vmatprep.subr.mxu0 0.0
        %4178 = vmatpush1.msra.mxu0 0.0
        %4179 = vmatprep.subr.mxu0 0.0
        %4180 = vmatpush1.msra.mxu0 0.0
        %4181 = vmatprep.subr.mxu0 0.0
        %4182 = vmatpush1.msra.mxu0 0.0
        %4183 = vmatprep.subr.mxu0 0.0
        %4184 = vmatpush1.msra.mxu0 0.0
        %4185 = vmatprep.subr.mxu0 0.0
        %4186 = vmatpush1.msra.mxu0 0.0
        %4187 = vmatprep.subr.mxu0 0.0
        %4188 = vmatpush1.msra.mxu0 0.0
        %4189 = vmatprep.subr.mxu0 0.0
        %4190 = vmatpush1.msra.mxu0 0.0
        %4191 = vmatprep.subr.mxu0 0.0
        %4192 = vmatpush1.msra.mxu0 0.0
        %4193 = vmatprep.subr.mxu0 0.0
        %4194 = vmatpush1.msra.mxu0 0.0
        %4195 = vmatprep.subr.mxu0 0.0
        %4196 = vmatpush1.msra.mxu0 0.0
        %4197 = vmatprep.subr.mxu0 0.0
        %4198 = vmatpush1.msra.mxu0 0.0
        %4199 = vmatprep.subr.mxu0 0.0
        %4200 = vmatpush1.msra.mxu0 0.0
        %4201 = vmatprep.subr.mxu0 0.0
        %4202 = vmatpush1.msra.mxu0 0.0
        %4203 = vmatprep.subr.mxu0 0.0
        %4204 = vmatpush1.msra.mxu0 0.0
        %4205 = vmatprep.subr.mxu0 0.0
        %4206 = vmatpush1.msra.mxu0 0.0
        %4207 = vmatprep.subr.mxu0 0.0
        %4208 = vmatpush1.msra.mxu0 0.0
        %4209 = vmatprep.mubr.f32.mxu0 0.0
        %4210 = vmatmul.mubr.f32.gmra.mrb[0].mxu0 %v4143
        %v4211 = vpop.f32.mrb[0].mxu0
        %v4212 = vadd.f32 %v4139, %v4211
        %v4213 = vpop.f32.mrb[0].mxu0
        %4214 = vdwg.mxu0
        %vm4215 = vcmp.eq.s32.totalorder %v4064, %v3904
        %v4216 = vsel %vm4215, 1.0, 0.0
        %v4218 = vsel %vm3165, %v4216, 0
        %4220 = vmatprep.subr.mxu0 0.0
        %4221 = vmatpush1.msra.mxu0 %v3911
        %4222 = vmatprep.subr.mxu0 0.0
        %4223 = vmatpush1.msra.mxu0 0.0
        %4224 = vmatprep.subr.mxu0 0.0
        %4225 = vmatpush1.msra.mxu0 0.0
        %4226 = vmatprep.subr.mxu0 0.0
        %4227 = vmatpush1.msra.mxu0 0.0
        %4228 = vmatprep.subr.mxu0 0.0
        %4229 = vmatpush1.msra.mxu0 0.0
        %4230 = vmatprep.subr.mxu0 0.0
        %4231 = vmatpush1.msra.mxu0 0.0
        %4232 = vmatprep.subr.mxu0 0.0
        %4233 = vmatpush1.msra.mxu0 0.0
        %4234 = vmatprep.subr.mxu0 0.0
        %4235 = vmatpush1.msra.mxu0 0.0
        %4236 = vmatprep.subr.mxu0 0.0
        %4237 = vmatpush1.msra.mxu0 0.0
        %4238 = vmatprep.subr.mxu0 0.0
        %4239 = vmatpush1.msra.mxu0 0.0
        %4240 = vmatprep.subr.mxu0 0.0
        %4241 = vmatpush1.msra.mxu0 0.0
        %4242 = vmatprep.subr.mxu0 0.0
        %4243 = vmatpush1.msra.mxu0 0.0
        %4244 = vmatprep.subr.mxu0 0.0
        %4245 = vmatpush1.msra.mxu0 0.0
        %4246 = vmatprep.subr.mxu0 0.0
        %4247 = vmatpush1.msra.mxu0 0.0
        %4248 = vmatprep.subr.mxu0 0.0
        %4249 = vmatpush1.msra.mxu0 0.0
        %4250 = vmatprep.subr.mxu0 0.0
        %4251 = vmatpush1.msra.mxu0 0.0
        %4252 = vmatprep.subr.mxu0 0.0
        %4253 = vmatpush1.msra.mxu0 0.0
        %4254 = vmatprep.subr.mxu0 0.0
        %4255 = vmatpush1.msra.mxu0 0.0
        %4256 = vmatprep.subr.mxu0 0.0
        %4257 = vmatpush1.msra.mxu0 0.0
        %4258 = vmatprep.subr.mxu0 0.0
        %4259 = vmatpush1.msra.mxu0 0.0
        %4260 = vmatprep.subr.mxu0 0.0
        %4261 = vmatpush1.msra.mxu0 0.0
        %4262 = vmatprep.subr.mxu0 0.0
        %4263 = vmatpush1.msra.mxu0 0.0
        %4264 = vmatprep.subr.mxu0 0.0
        %4265 = vmatpush1.msra.mxu0 0.0
        %4266 = vmatprep.subr.mxu0 0.0
        %4267 = vmatpush1.msra.mxu0 0.0
        %4268 = vmatprep.subr.mxu0 0.0
        %4269 = vmatpush1.msra.mxu0 0.0
        %4270 = vmatprep.subr.mxu0 0.0
        %4271 = vmatpush1.msra.mxu0 0.0
        %4272 = vmatprep.subr.mxu0 0.0
        %4273 = vmatpush1.msra.mxu0 0.0
        %4274 = vmatprep.subr.mxu0 0.0
        %4275 = vmatpush1.msra.mxu0 0.0
        %4276 = vmatprep.subr.mxu0 0.0
        %4277 = vmatpush1.msra.mxu0 0.0
        %4278 = vmatprep.subr.mxu0 0.0
        %4279 = vmatpush1.msra.mxu0 0.0
        %4280 = vmatprep.subr.mxu0 0.0
        %4281 = vmatpush1.msra.mxu0 0.0
        %4282 = vmatprep.subr.mxu0 0.0
        %4283 = vmatpush1.msra.mxu0 0.0
        %4284 = vmatprep.mubr.f32.mxu0 0.0
        %4285 = vmatmul.mubr.f32.gmra.mrb[0].mxu0 %v4218
        %v4286 = vpop.f32.mrb[0].mxu0
        %v4287 = vadd.f32 0.0, %v4286
        %v4288 = vpop.f32.mrb[0].mxu0
        %4289 = vdwg.mxu0
        %v4290 = vadd.f32 %v4212, %v4287
        %vm4291 = vcmp.eq.s32.totalorder %v4064, %v3984
        %v4292 = vsel %vm4291, 1.0, 0.0
        %v4294 = vsel %vm3165, %v4292, 0
        %4296 = vmatprep.subr.mxu0 0.0
        %4297 = vmatpush1.msra.mxu0 %v3991
        %4298 = vmatprep.subr.mxu0 0.0
        %4299 = vmatpush1.msra.mxu0 0.0
        %4300 = vmatprep.subr.mxu0 0.0
        %4301 = vmatpush1.msra.mxu0 0.0
        %4302 = vmatprep.subr.mxu0 0.0
        %4303 = vmatpush1.msra.mxu0 0.0
        %4304 = vmatprep.subr.mxu0 0.0
        %4305 = vmatpush1.msra.mxu0 0.0
        %4306 = vmatprep.subr.mxu0 0.0
        %4307 = vmatpush1.msra.mxu0 0.0
        %4308 = vmatprep.subr.mxu0 0.0
        %4309 = vmatpush1.msra.mxu0 0.0
        %4310 = vmatprep.subr.mxu0 0.0
        %4311 = vmatpush1.msra.mxu0 0.0
        %4312 = vmatprep.subr.mxu0 0.0
        %4313 = vmatpush1.msra.mxu0 0.0
        %4314 = vmatprep.subr.mxu0 0.0
        %4315 = vmatpush1.msra.mxu0 0.0
        %4316 = vmatprep.subr.mxu0 0.0
        %4317 = vmatpush1.msra.mxu0 0.0
        %4318 = vmatprep.subr.mxu0 0.0
        %4319 = vmatpush1.msra.mxu0 0.0
        %4320 = vmatprep.subr.mxu0 0.0
        %4321 = vmatpush1.msra.mxu0 0.0
        %4322 = vmatprep.subr.mxu0 0.0
        %4323 = vmatpush1.msra.mxu0 0.0
        %4324 = vmatprep.subr.mxu0 0.0
        %4325 = vmatpush1.msra.mxu0 0.0
        %4326 = vmatprep.subr.mxu0 0.0
        %4327 = vmatpush1.msra.mxu0 0.0
        %4328 = vmatprep.subr.mxu0 0.0
        %4329 = vmatpush1.msra.mxu0 0.0
        %4330 = vmatprep.subr.mxu0 0.0
        %4331 = vmatpush1.msra.mxu0 0.0
        %4332 = vmatprep.subr.mxu0 0.0
        %4333 = vmatpush1.msra.mxu0 0.0
        %4334 = vmatprep.subr.mxu0 0.0
        %4335 = vmatpush1.msra.mxu0 0.0
        %4336 = vmatprep.subr.mxu0 0.0
        %4337 = vmatpush1.msra.mxu0 0.0
        %4338 = vmatprep.subr.mxu0 0.0
        %4339 = vmatpush1.msra.mxu0 0.0
        %4340 = vmatprep.subr.mxu0 0.0
        %4341 = vmatpush1.msra.mxu0 0.0
        %4342 = vmatprep.subr.mxu0 0.0
        %4343 = vmatpush1.msra.mxu0 0.0
        %4344 = vmatprep.subr.mxu0 0.0
        %4345 = vmatpush1.msra.mxu0 0.0
        %4346 = vmatprep.subr.mxu0 0.0
        %4347 = vmatpush1.msra.mxu0 0.0
        %4348 = vmatprep.subr.mxu0 0.0
        %4349 = vmatpush1.msra.mxu0 0.0
        %4350 = vmatprep.subr.mxu0 0.0
        %4351 = vmatpush1.msra.mxu0 0.0
        %4352 = vmatprep.subr.mxu0 0.0
        %4353 = vmatpush1.msra.mxu0 0.0
        %4354 = vmatprep.subr.mxu0 0.0
        %4355 = vmatpush1.msra.mxu0 0.0
        %4356 = vmatprep.subr.mxu0 0.0
        %4357 = vmatpush1.msra.mxu0 0.0
        %4358 = vmatprep.subr.mxu0 0.0
        %4359 = vmatpush1.msra.mxu0 0.0
        %4360 = vmatprep.mubr.f32.mxu0 0.0
        %4361 = vmatmul.mubr.f32.gmra.mrb[0].mxu0 %v4294
        %v4362 = vpop.f32.mrb[0].mxu0
        %v4363 = vadd.f32 0.0, %v4362
        %v4364 = vpop.f32.mrb[0].mxu0
        %4365 = vdwg.mxu0
        %v4366 = vadd.f32 %v4290, %v4363
        %v4368 = vsel %vm1645, %v4366, 0
        %4370 = vmatprep.subr.mxu0 0.0
        %4371 = vmatpush1.msra.mxu0 %v2949
        %4372 = vmatprep.subr.mxu0 0.0
        %4373 = vmatpush1.msra.mxu0 0.0
        %4374 = vmatprep.subr.mxu0 0.0
        %4375 = vmatpush1.msra.mxu0 0.0
        %4376 = vmatprep.subr.mxu0 0.0
        %4377 = vmatpush1.msra.mxu0 0.0
        %4378 = vmatprep.subr.mxu0 0.0
        %4379 = vmatpush1.msra.mxu0 0.0
        %4380 = vmatprep.subr.mxu0 0.0
        %4381 = vmatpush1.msra.mxu0 0.0
        %4382 = vmatprep.subr.mxu0 0.0
        %4383 = vmatpush1.msra.mxu0 0.0
        %4384 = vmatprep.subr.mxu0 0.0
        %4385 = vmatpush1.msra.mxu0 0.0
        %4386 = vmatprep.subr.mxu0 0.0
        %4387 = vmatpush1.msra.mxu0 0.0
        %4388 = vmatprep.subr.mxu0 0.0
        %4389 = vmatpush1.msra.mxu0 0.0
        %4390 = vmatprep.subr.mxu0 0.0
        %4391 = vmatpush1.msra.mxu0 0.0
        %4392 = vmatprep.subr.mxu0 0.0
        %4393 = vmatpush1.msra.mxu0 0.0
        %4394 = vmatprep.subr.mxu0 0.0
        %4395 = vmatpush1.msra.mxu0 0.0
        %4396 = vmatprep.subr.mxu0 0.0
        %4397 = vmatpush1.msra.mxu0 0.0
        %4398 = vmatprep.subr.mxu0 0.0
        %4399 = vmatpush1.msra.mxu0 0.0
        %4400 = vmatprep.subr.mxu0 0.0
        %4401 = vmatpush1.msra.mxu0 0.0
        %4402 = vmatprep.subr.mxu0 0.0
        %4403 = vmatpush1.msra.mxu0 0.0
        %4404 = vmatprep.subr.mxu0 0.0
        %4405 = vmatpush1.msra.mxu0 0.0
        %4406 = vmatprep.subr.mxu0 0.0
        %4407 = vmatpush1.msra.mxu0 0.0
        %4408 = vmatprep.subr.mxu0 0.0
        %4409 = vmatpush1.msra.mxu0 0.0
        %4410 = vmatprep.subr.mxu0 0.0
        %4411 = vmatpush1.msra.mxu0 0.0
        %4412 = vmatprep.subr.mxu0 0.0
        %4413 = vmatpush1.msra.mxu0 0.0
        %4414 = vmatprep.subr.mxu0 0.0
        %4415 = vmatpush1.msra.mxu0 0.0
        %4416 = vmatprep.subr.mxu0 0.0
        %4417 = vmatpush1.msra.mxu0 0.0
        %4418 = vmatprep.subr.mxu0 0.0
        %4419 = vmatpush1.msra.mxu0 0.0
        %4420 = vmatprep.subr.mxu0 0.0
        %4421 = vmatpush1.msra.mxu0 0.0
        %4422 = vmatprep.subr.mxu0 0.0
        %4423 = vmatpush1.msra.mxu0 0.0
        %4424 = vmatprep.subr.mxu0 0.0
        %4425 = vmatpush1.msra.mxu0 0.0
        %4426 = vmatprep.subr.mxu0 0.0
        %4427 = vmatpush1.msra.mxu0 0.0
        %4428 = vmatprep.subr.mxu0 0.0
        %4429 = vmatpush1.msra.mxu0 0.0
        %4430 = vmatprep.subr.mxu0 0.0
        %4431 = vmatpush1.msra.mxu0 0.0
        %4432 = vmatprep.subr.mxu0 0.0
        %4433 = vmatpush1.msra.mxu0 0.0
        %4434 = vmatprep.mubr.f32.mxu0 0.0
        %4435 = vmatmul.mubr.f32.gmra.mrb[0].mxu0 %v4368
        %v4436 = vpop.f32.mrb[0].mxu0
        %v4437 = vadd.f32 0.0, %v4436
        %v4438 = vpop.f32.mrb[0].mxu0
        %4439 = vdwg.mxu0
        %v4441 = vsel %vm1645, %v4063, 0
        %4443 = vmatprep.subr.mxu0 0.0
        %4444 = vmatpush1.msra.mxu0 %v2948
        %4445 = vmatprep.subr.mxu0 0.0
        %4446 = vmatpush1.msra.mxu0 0.0
        %4447 = vmatprep.subr.mxu0 0.0
        %4448 = vmatpush1.msra.mxu0 0.0
        %4449 = vmatprep.subr.mxu0 0.0
        %4450 = vmatpush1.msra.mxu0 0.0
        %4451 = vmatprep.subr.mxu0 0.0
        %4452 = vmatpush1.msra.mxu0 0.0
        %4453 = vmatprep.subr.mxu0 0.0
        %4454 = vmatpush1.msra.mxu0 0.0
        %4455 = vmatprep.subr.mxu0 0.0
        %4456 = vmatpush1.msra.mxu0 0.0
        %4457 = vmatprep.subr.mxu0 0.0
        %4458 = vmatpush1.msra.mxu0 0.0
        %4459 = vmatprep.subr.mxu0 0.0
        %4460 = vmatpush1.msra.mxu0 0.0
        %4461 = vmatprep.subr.mxu0 0.0
        %4462 = vmatpush1.msra.mxu0 0.0
        %4463 = vmatprep.subr.mxu0 0.0
        %4464 = vmatpush1.msra.mxu0 0.0
        %4465 = vmatprep.subr.mxu0 0.0
        %4466 = vmatpush1.msra.mxu0 0.0
        %4467 = vmatprep.subr.mxu0 0.0
        %4468 = vmatpush1.msra.mxu0 0.0
        %4469 = vmatprep.subr.mxu0 0.0
        %4470 = vmatpush1.msra.mxu0 0.0
        %4471 = vmatprep.subr.mxu0 0.0
        %4472 = vmatpush1.msra.mxu0 0.0
        %4473 = vmatprep.subr.mxu0 0.0
        %4474 = vmatpush1.msra.mxu0 0.0
        %4475 = vmatprep.subr.mxu0 0.0
        %4476 = vmatpush1.msra.mxu0 0.0
        %4477 = vmatprep.subr.mxu0 0.0
        %4478 = vmatpush1.msra.mxu0 0.0
        %4479 = vmatprep.subr.mxu0 0.0
        %4480 = vmatpush1.msra.mxu0 0.0
        %4481 = vmatprep.subr.mxu0 0.0
        %4482 = vmatpush1.msra.mxu0 0.0
        %4483 = vmatprep.subr.mxu0 0.0
        %4484 = vmatpush1.msra.mxu0 0.0
        %4485 = vmatprep.subr.mxu0 0.0
        %4486 = vmatpush1.msra.mxu0 0.0
        %4487 = vmatprep.subr.mxu0 0.0
        %4488 = vmatpush1.msra.mxu0 0.0
        %4489 = vmatprep.subr.mxu0 0.0
        %4490 = vmatpush1.msra.mxu0 0.0
        %4491 = vmatprep.subr.mxu0 0.0
        %4492 = vmatpush1.msra.mxu0 0.0
        %4493 = vmatprep.subr.mxu0 0.0
        %4494 = vmatpush1.msra.mxu0 0.0
        %4495 = vmatprep.subr.mxu0 0.0
        %4496 = vmatpush1.msra.mxu0 0.0
        %4497 = vmatprep.subr.mxu0 0.0
        %4498 = vmatpush1.msra.mxu0 0.0
        %4499 = vmatprep.subr.mxu0 0.0
        %4500 = vmatpush1.msra.mxu0 0.0
        %4501 = vmatprep.subr.mxu0 0.0
        %4502 = vmatpush1.msra.mxu0 0.0
        %4503 = vmatprep.subr.mxu0 0.0
        %4504 = vmatpush1.msra.mxu0 0.0
        %4505 = vmatprep.subr.mxu0 0.0
        %4506 = vmatpush1.msra.mxu0 0.0
        %4507 = vmatprep.mubr.f32.mxu0 0.0
        %4508 = vmatmul.mubr.f32.gmra.mrb[0].mxu0 %v4441
        %v4509 = vpop.f32.mrb[0].mxu0
        %v4510 = vadd.f32 %v4437, %v4509
        %v4511 = vpop.f32.mrb[0].mxu0
        %4512 = vdwg.mxu0
        %v4513 = vadd.s32 %v3746, 2
        %vm4514 = vcmp.eq.s32.totalorder %v4513, %v3148
        %v4515 = vsel %vm4514, 1.0, 0.0
        %vm4516 = vcmp.eq.s32.totalorder %v4513, %v3749
        %v4517 = vsel %vm4516, 1.0, 0.0
        %v4519 = vsel %vm3165, %v4517, 0
        %4521 = vmatprep.subr.mxu0 0.0
        %4522 = vmatpush1.msra.mxu0 %v3756
        %4523 = vmatprep.subr.mxu0 0.0
        %4524 = vmatpush1.msra.mxu0 0.0
        %4525 = vmatprep.subr.mxu0 0.0
        %4526 = vmatpush1.msra.mxu0 0.0
        %4527 = vmatprep.subr.mxu0 0.0
        %4528 = vmatpush1.msra.mxu0 0.0
        %4529 = vmatprep.subr.mxu0 0.0
        %4530 = vmatpush1.msra.mxu0 0.0
        %4531 = vmatprep.subr.mxu0 0.0
        %4532 = vmatpush1.msra.mxu0 0.0
        %4533 = vmatprep.subr.mxu0 0.0
        %4534 = vmatpush1.msra.mxu0 0.0
        %4535 = vmatprep.subr.mxu0 0.0
        %4536 = vmatpush1.msra.mxu0 0.0
        %4537 = vmatprep.subr.mxu0 0.0
        %4538 = vmatpush1.msra.mxu0 0.0
        %4539 = vmatprep.subr.mxu0 0.0
        %4540 = vmatpush1.msra.mxu0 0.0
        %4541 = vmatprep.subr.mxu0 0.0
        %4542 = vmatpush1.msra.mxu0 0.0
        %4543 = vmatprep.subr.mxu0 0.0
        %4544 = vmatpush1.msra.mxu0 0.0
        %4545 = vmatprep.subr.mxu0 0.0
        %4546 = vmatpush1.msra.mxu0 0.0
        %4547 = vmatprep.subr.mxu0 0.0
        %4548 = vmatpush1.msra.mxu0 0.0
        %4549 = vmatprep.subr.mxu0 0.0
        %4550 = vmatpush1.msra.mxu0 0.0
        %4551 = vmatprep.subr.mxu0 0.0
        %4552 = vmatpush1.msra.mxu0 0.0
        %4553 = vmatprep.subr.mxu0 0.0
        %4554 = vmatpush1.msra.mxu0 0.0
        %4555 = vmatprep.subr.mxu0 0.0
        %4556 = vmatpush1.msra.mxu0 0.0
        %4557 = vmatprep.subr.mxu0 0.0
        %4558 = vmatpush1.msra.mxu0 0.0
        %4559 = vmatprep.subr.mxu0 0.0
        %4560 = vmatpush1.msra.mxu0 0.0
        %4561 = vmatprep.subr.mxu0 0.0
        %4562 = vmatpush1.msra.mxu0 0.0
        %4563 = vmatprep.subr.mxu0 0.0
        %4564 = vmatpush1.msra.mxu0 0.0
        %4565 = vmatprep.subr.mxu0 0.0
        %4566 = vmatpush1.msra.mxu0 0.0
        %4567 = vmatprep.subr.mxu0 0.0
        %4568 = vmatpush1.msra.mxu0 0.0
        %4569 = vmatprep.subr.mxu0 0.0
        %4570 = vmatpush1.msra.mxu0 0.0
        %4571 = vmatprep.subr.mxu0 0.0
        %4572 = vmatpush1.msra.mxu0 0.0
        %4573 = vmatprep.subr.mxu0 0.0
        %4574 = vmatpush1.msra.mxu0 0.0
        %4575 = vmatprep.subr.mxu0 0.0
        %4576 = vmatpush1.msra.mxu0 0.0
        %4577 = vmatprep.subr.mxu0 0.0
        %4578 = vmatpush1.msra.mxu0 0.0
        %4579 = vmatprep.subr.mxu0 0.0
        %4580 = vmatpush1.msra.mxu0 0.0
        %4581 = vmatprep.subr.mxu0 0.0
        %4582 = vmatpush1.msra.mxu0 0.0
        %4583 = vmatprep.subr.mxu0 0.0
        %4584 = vmatpush1.msra.mxu0 0.0
        %4585 = vmatprep.mubr.f32.mxu0 0.0
        %4586 = vmatmul.mubr.f32.gmra.mrb[0].mxu0 %v4519
        %v4587 = vpop.f32.mrb[0].mxu0
        %v4588 = vadd.f32 0.0, %v4587
        %v4589 = vpop.f32.mrb[0].mxu0
        %4590 = vdwg.mxu0
        %v4592 = vsel %vm3165, %v4515, 0
        %4594 = vmatprep.subr.mxu0 0.0
        %4595 = vmatpush1.msra.mxu0 %v3832
        %4596 = vmatprep.subr.mxu0 0.0
        %4597 = vmatpush1.msra.mxu0 0.0
        %4598 = vmatprep.subr.mxu0 0.0
        %4599 = vmatpush1.msra.mxu0 0.0
        %4600 = vmatprep.subr.mxu0 0.0
        %4601 = vmatpush1.msra.mxu0 0.0
        %4602 = vmatprep.subr.mxu0 0.0
        %4603 = vmatpush1.msra.mxu0 0.0
        %4604 = vmatprep.subr.mxu0 0.0
        %4605 = vmatpush1.msra.mxu0 0.0
        %4606 = vmatprep.subr.mxu0 0.0
        %4607 = vmatpush1.msra.mxu0 0.0
        %4608 = vmatprep.subr.mxu0 0.0
        %4609 = vmatpush1.msra.mxu0 0.0
        %4610 = vmatprep.subr.mxu0 0.0
        %4611 = vmatpush1.msra.mxu0 0.0
        %4612 = vmatprep.subr.mxu0 0.0
        %4613 = vmatpush1.msra.mxu0 0.0
        %4614 = vmatprep.subr.mxu0 0.0
        %4615 = vmatpush1.msra.mxu0 0.0
        %4616 = vmatprep.subr.mxu0 0.0
        %4617 = vmatpush1.msra.mxu0 0.0
        %4618 = vmatprep.subr.mxu0 0.0
        %4619 = vmatpush1.msra.mxu0 0.0
        %4620 = vmatprep.subr.mxu0 0.0
        %4621 = vmatpush1.msra.mxu0 0.0
        %4622 = vmatprep.subr.mxu0 0.0
        %4623 = vmatpush1.msra.mxu0 0.0
        %4624 = vmatprep.subr.mxu0 0.0
        %4625 = vmatpush1.msra.mxu0 0.0
        %4626 = vmatprep.subr.mxu0 0.0
        %4627 = vmatpush1.msra.mxu0 0.0
        %4628 = vmatprep.subr.mxu0 0.0
        %4629 = vmatpush1.msra.mxu0 0.0
        %4630 = vmatprep.subr.mxu0 0.0
        %4631 = vmatpush1.msra.mxu0 0.0
        %4632 = vmatprep.subr.mxu0 0.0
        %4633 = vmatpush1.msra.mxu0 0.0
        %4634 = vmatprep.subr.mxu0 0.0
        %4635 = vmatpush1.msra.mxu0 0.0
        %4636 = vmatprep.subr.mxu0 0.0
        %4637 = vmatpush1.msra.mxu0 0.0
        %4638 = vmatprep.subr.mxu0 0.0
        %4639 = vmatpush1.msra.mxu0 0.0
        %4640 = vmatprep.subr.mxu0 0.0
        %4641 = vmatpush1.msra.mxu0 0.0
        %4642 = vmatprep.subr.mxu0 0.0
        %4643 = vmatpush1.msra.mxu0 0.0
        %4644 = vmatprep.subr.mxu0 0.0
        %4645 = vmatpush1.msra.mxu0 0.0
        %4646 = vmatprep.subr.mxu0 0.0
        %4647 = vmatpush1.msra.mxu0 0.0
        %4648 = vmatprep.subr.mxu0 0.0
        %4649 = vmatpush1.msra.mxu0 0.0
        %4650 = vmatprep.subr.mxu0 0.0
        %4651 = vmatpush1.msra.mxu0 0.0
        %4652 = vmatprep.subr.mxu0 0.0
        %4653 = vmatpush1.msra.mxu0 0.0
        %4654 = vmatprep.subr.mxu0 0.0
        %4655 = vmatpush1.msra.mxu0 0.0
        %4656 = vmatprep.subr.mxu0 0.0
        %4657 = vmatpush1.msra.mxu0 0.0
        %4658 = vmatprep.mubr.f32.mxu0 0.0
        %4659 = vmatmul.mubr.f32.gmra.mrb[0].mxu0 %v4592
        %v4660 = vpop.f32.mrb[0].mxu0
        %v4661 = vadd.f32 %v4588, %v4660
        %v4662 = vpop.f32.mrb[0].mxu0
        %4663 = vdwg.mxu0
        %vm4664 = vcmp.eq.s32.totalorder %v4513, %v3904
        %v4665 = vsel %vm4664, 1.0, 0.0
        %v4667 = vsel %vm3165, %v4665, 0
        %4669 = vmatprep.subr.mxu0 0.0
        %4670 = vmatpush1.msra.mxu0 %v3911
        %4671 = vmatprep.subr.mxu0 0.0
        %4672 = vmatpush1.msra.mxu0 0.0
        %4673 = vmatprep.subr.mxu0 0.0
        %4674 = vmatpush1.msra.mxu0 0.0
        %4675 = vmatprep.subr.mxu0 0.0
        %4676 = vmatpush1.msra.mxu0 0.0
        %4677 = vmatprep.subr.mxu0 0.0
        %4678 = vmatpush1.msra.mxu0 0.0
        %4679 = vmatprep.subr.mxu0 0.0
        %4680 = vmatpush1.msra.mxu0 0.0
        %4681 = vmatprep.subr.mxu0 0.0
        %4682 = vmatpush1.msra.mxu0 0.0
        %4683 = vmatprep.subr.mxu0 0.0
        %4684 = vmatpush1.msra.mxu0 0.0
        %4685 = vmatprep.subr.mxu0 0.0
        %4686 = vmatpush1.msra.mxu0 0.0
        %4687 = vmatprep.subr.mxu0 0.0
        %4688 = vmatpush1.msra.mxu0 0.0
        %4689 = vmatprep.subr.mxu0 0.0
        %4690 = vmatpush1.msra.mxu0 0.0
        %4691 = vmatprep.subr.mxu0 0.0
        %4692 = vmatpush1.msra.mxu0 0.0
        %4693 = vmatprep.subr.mxu0 0.0
        %4694 = vmatpush1.msra.mxu0 0.0
        %4695 = vmatprep.subr.mxu0 0.0
        %4696 = vmatpush1.msra.mxu0 0.0
        %4697 = vmatprep.subr.mxu0 0.0
        %4698 = vmatpush1.msra.mxu0 0.0
        %4699 = vmatprep.subr.mxu0 0.0
        %4700 = vmatpush1.msra.mxu0 0.0
        %4701 = vmatprep.subr.mxu0 0.0
        %4702 = vmatpush1.msra.mxu0 0.0
        %4703 = vmatprep.subr.mxu0 0.0
        %4704 = vmatpush1.msra.mxu0 0.0
        %4705 = vmatprep.subr.mxu0 0.0
        %4706 = vmatpush1.msra.mxu0 0.0
        %4707 = vmatprep.subr.mxu0 0.0
        %4708 = vmatpush1.msra.mxu0 0.0
        %4709 = vmatprep.subr.mxu0 0.0
        %4710 = vmatpush1.msra.mxu0 0.0
        %4711 = vmatprep.subr.mxu0 0.0
        %4712 = vmatpush1.msra.mxu0 0.0
        %4713 = vmatprep.subr.mxu0 0.0
        %4714 = vmatpush1.msra.mxu0 0.0
        %4715 = vmatprep.subr.mxu0 0.0
        %4716 = vmatpush1.msra.mxu0 0.0
        %4717 = vmatprep.subr.mxu0 0.0
        %4718 = vmatpush1.msra.mxu0 0.0
        %4719 = vmatprep.subr.mxu0 0.0
        %4720 = vmatpush1.msra.mxu0 0.0
        %4721 = vmatprep.subr.mxu0 0.0
        %4722 = vmatpush1.msra.mxu0 0.0
        %4723 = vmatprep.subr.mxu0 0.0
        %4724 = vmatpush1.msra.mxu0 0.0
        %4725 = vmatprep.subr.mxu0 0.0
        %4726 = vmatpush1.msra.mxu0 0.0
        %4727 = vmatprep.subr.mxu0 0.0
        %4728 = vmatpush1.msra.mxu0 0.0
        %4729 = vmatprep.subr.mxu0 0.0
        %4730 = vmatpush1.msra.mxu0 0.0
        %4731 = vmatprep.subr.mxu0 0.0
        %4732 = vmatpush1.msra.mxu0 0.0
        %4733 = vmatprep.mubr.f32.mxu0 0.0
        %4734 = vmatmul.mubr.f32.gmra.mrb[0].mxu0 %v4667
        %v4735 = vpop.f32.mrb[0].mxu0
        %v4736 = vadd.f32 0.0, %v4735
        %v4737 = vpop.f32.mrb[0].mxu0
        %4738 = vdwg.mxu0
        %v4739 = vadd.f32 %v4661, %v4736
        %vm4740 = vcmp.eq.s32.totalorder %v4513, %v3984
        %v4741 = vsel %vm4740, 1.0, 0.0
        %v4743 = vsel %vm3165, %v4741, 0
        %4745 = vmatprep.subr.mxu0 0.0
        %4746 = vmatpush1.msra.mxu0 %v3991
        %4747 = vmatprep.subr.mxu0 0.0
        %4748 = vmatpush1.msra.mxu0 0.0
        %4749 = vmatprep.subr.mxu0 0.0
        %4750 = vmatpush1.msra.mxu0 0.0
        %4751 = vmatprep.subr.mxu0 0.0
        %4752 = vmatpush1.msra.mxu0 0.0
        %4753 = vmatprep.subr.mxu0 0.0
        %4754 = vmatpush1.msra.mxu0 0.0
        %4755 = vmatprep.subr.mxu0 0.0
        %4756 = vmatpush1.msra.mxu0 0.0
        %4757 = vmatprep.subr.mxu0 0.0
        %4758 = vmatpush1.msra.mxu0 0.0
        %4759 = vmatprep.subr.mxu0 0.0
        %4760 = vmatpush1.msra.mxu0 0.0
        %4761 = vmatprep.subr.mxu0 0.0
        %4762 = vmatpush1.msra.mxu0 0.0
        %4763 = vmatprep.subr.mxu0 0.0
        %4764 = vmatpush1.msra.mxu0 0.0
        %4765 = vmatprep.subr.mxu0 0.0
        %4766 = vmatpush1.msra.mxu0 0.0
        %4767 = vmatprep.subr.mxu0 0.0
        %4768 = vmatpush1.msra.mxu0 0.0
        %4769 = vmatprep.subr.mxu0 0.0
        %4770 = vmatpush1.msra.mxu0 0.0
        %4771 = vmatprep.subr.mxu0 0.0
        %4772 = vmatpush1.msra.mxu0 0.0
        %4773 = vmatprep.subr.mxu0 0.0
        %4774 = vmatpush1.msra.mxu0 0.0
        %4775 = vmatprep.subr.mxu0 0.0
        %4776 = vmatpush1.msra.mxu0 0.0
        %4777 = vmatprep.subr.mxu0 0.0
        %4778 = vmatpush1.msra.mxu0 0.0
        %4779 = vmatprep.subr.mxu0 0.0
        %4780 = vmatpush1.msra.mxu0 0.0
        %4781 = vmatprep.subr.mxu0 0.0
        %4782 = vmatpush1.msra.mxu0 0.0
        %4783 = vmatprep.subr.mxu0 0.0
        %4784 = vmatpush1.msra.mxu0 0.0
        %4785 = vmatprep.subr.mxu0 0.0
        %4786 = vmatpush1.msra.mxu0 0.0
        %4787 = vmatprep.subr.mxu0 0.0
        %4788 = vmatpush1.msra.mxu0 0.0
        %4789 = vmatprep.subr.mxu0 0.0
        %4790 = vmatpush1.msra.mxu0 0.0
        %4791 = vmatprep.subr.mxu0 0.0
        %4792 = vmatpush1.msra.mxu0 0.0
        %4793 = vmatprep.subr.mxu0 0.0
        %4794 = vmatpush1.msra.mxu0 0.0
        %4795 = vmatprep.subr.mxu0 0.0
        %4796 = vmatpush1.msra.mxu0 0.0
        %4797 = vmatprep.subr.mxu0 0.0
        %4798 = vmatpush1.msra.mxu0 0.0
        %4799 = vmatprep.subr.mxu0 0.0
        %4800 = vmatpush1.msra.mxu0 0.0
        %4801 = vmatprep.subr.mxu0 0.0
        %4802 = vmatpush1.msra.mxu0 0.0
        %4803 = vmatprep.subr.mxu0 0.0
        %4804 = vmatpush1.msra.mxu0 0.0
        %4805 = vmatprep.subr.mxu0 0.0
        %4806 = vmatpush1.msra.mxu0 0.0
        %4807 = vmatprep.subr.mxu0 0.0
        %4808 = vmatpush1.msra.mxu0 0.0
        %4809 = vmatprep.mubr.f32.mxu0 0.0
        %4810 = vmatmul.mubr.f32.gmra.mrb[0].mxu0 %v4743
        %v4811 = vpop.f32.mrb[0].mxu0
        %v4812 = vadd.f32 0.0, %v4811
        %v4813 = vpop.f32.mrb[0].mxu0
        %4814 = vdwg.mxu0
        %v4815 = vadd.f32 %v4739, %v4812
        %v4817 = vsel %vm1645, %v4815, 0
        %4819 = vmatprep.subr.mxu0 0.0
        %4820 = vmatpush1.msra.mxu0 %v2950
        %4821 = vmatprep.subr.mxu0 0.0
        %4822 = vmatpush1.msra.mxu0 0.0
        %4823 = vmatprep.subr.mxu0 0.0
        %4824 = vmatpush1.msra.mxu0 0.0
        %4825 = vmatprep.subr.mxu0 0.0
        %4826 = vmatpush1.msra.mxu0 0.0
        %4827 = vmatprep.subr.mxu0 0.0
        %4828 = vmatpush1.msra.mxu0 0.0
        %4829 = vmatprep.subr.mxu0 0.0
        %4830 = vmatpush1.msra.mxu0 0.0
        %4831 = vmatprep.subr.mxu0 0.0
        %4832 = vmatpush1.msra.mxu0 0.0
        %4833 = vmatprep.subr.mxu0 0.0
        %4834 = vmatpush1.msra.mxu0 0.0
        %4835 = vmatprep.subr.mxu0 0.0
        %4836 = vmatpush1.msra.mxu0 0.0
        %4837 = vmatprep.subr.mxu0 0.0
        %4838 = vmatpush1.msra.mxu0 0.0
        %4839 = vmatprep.subr.mxu0 0.0
        %4840 = vmatpush1.msra.mxu0 0.0
        %4841 = vmatprep.subr.mxu0 0.0
        %4842 = vmatpush1.msra.mxu0 0.0
        %4843 = vmatprep.subr.mxu0 0.0
        %4844 = vmatpush1.msra.mxu0 0.0
        %4845 = vmatprep.subr.mxu0 0.0
        %4846 = vmatpush1.msra.mxu0 0.0
        %4847 = vmatprep.subr.mxu0 0.0
        %4848 = vmatpush1.msra.mxu0 0.0
        %4849 = vmatprep.subr.mxu0 0.0
        %4850 = vmatpush1.msra.mxu0 0.0
        %4851 = vmatprep.subr.mxu0 0.0
        %4852 = vmatpush1.msra.mxu0 0.0
        %4853 = vmatprep.subr.mxu0 0.0
        %4854 = vmatpush1.msra.mxu0 0.0
        %4855 = vmatprep.subr.mxu0 0.0
        %4856 = vmatpush1.msra.mxu0 0.0
        %4857 = vmatprep.subr.mxu0 0.0
        %4858 = vmatpush1.msra.mxu0 0.0
        %4859 = vmatprep.subr.mxu0 0.0
        %4860 = vmatpush1.msra.mxu0 0.0
        %4861 = vmatprep.subr.mxu0 0.0
        %4862 = vmatpush1.msra.mxu0 0.0
        %4863 = vmatprep.subr.mxu0 0.0
        %4864 = vmatpush1.msra.mxu0 0.0
        %4865 = vmatprep.subr.mxu0 0.0
        %4866 = vmatpush1.msra.mxu0 0.0
        %4867 = vmatprep.subr.mxu0 0.0
        %4868 = vmatpush1.msra.mxu0 0.0
        %4869 = vmatprep.subr.mxu0 0.0
        %4870 = vmatpush1.msra.mxu0 0.0
        %4871 = vmatprep.subr.mxu0 0.0
        %4872 = vmatpush1.msra.mxu0 0.0
        %4873 = vmatprep.subr.mxu0 0.0
        %4874 = vmatpush1.msra.mxu0 0.0
        %4875 = vmatprep.subr.mxu0 0.0
        %4876 = vmatpush1.msra.mxu0 0.0
        %4877 = vmatprep.subr.mxu0 0.0
        %4878 = vmatpush1.msra.mxu0 0.0
        %4879 = vmatprep.subr.mxu0 0.0
        %4880 = vmatpush1.msra.mxu0 0.0
        %4881 = vmatprep.subr.mxu0 0.0
        %4882 = vmatpush1.msra.mxu0 0.0
        %4883 = vmatprep.mubr.f32.mxu0 0.0
        %4884 = vmatmul.mubr.f32.gmra.mrb[0].mxu0 %v4817
        %v4885 = vpop.f32.mrb[0].mxu0
        %v4886 = vadd.f32 0.0, %v4885
        %v4887 = vpop.f32.mrb[0].mxu0
        %4888 = vdwg.mxu0
        %v4889 = vadd.f32 %v4510, %v4886
        %v4890 = vadd.s32 %v3746, 3
        %vm4891 = vcmp.eq.s32.totalorder %v4890, %v3148
        %v4892 = vsel %vm4891, 1.0, 0.0
        %vm4893 = vcmp.eq.s32.totalorder %v4890, %v3749
        %v4894 = vsel %vm4893, 1.0, 0.0
        %v4896 = vsel %vm3165, %v4894, 0
        %4898 = vmatprep.subr.mxu0 0.0
        %4899 = vmatpush1.msra.mxu0 %v3756
        %4900 = vmatprep.subr.mxu0 0.0
        %4901 = vmatpush1.msra.mxu0 0.0
        %4902 = vmatprep.subr.mxu0 0.0
        %4903 = vmatpush1.msra.mxu0 0.0
        %4904 = vmatprep.subr.mxu0 0.0
        %4905 = vmatpush1.msra.mxu0 0.0
        %4906 = vmatprep.subr.mxu0 0.0
        %4907 = vmatpush1.msra.mxu0 0.0
        %4908 = vmatprep.subr.mxu0 0.0
        %4909 = vmatpush1.msra.mxu0 0.0
        %4910 = vmatprep.subr.mxu0 0.0
        %4911 = vmatpush1.msra.mxu0 0.0
        %4912 = vmatprep.subr.mxu0 0.0
        %4913 = vmatpush1.msra.mxu0 0.0
        %4914 = vmatprep.subr.mxu0 0.0
        %4915 = vmatpush1.msra.mxu0 0.0
        %4916 = vmatprep.subr.mxu0 0.0
        %4917 = vmatpush1.msra.mxu0 0.0
        %4918 = vmatprep.subr.mxu0 0.0
        %4919 = vmatpush1.msra.mxu0 0.0
        %4920 = vmatprep.subr.mxu0 0.0
        %4921 = vmatpush1.msra.mxu0 0.0
        %4922 = vmatprep.subr.mxu0 0.0
        %4923 = vmatpush1.msra.mxu0 0.0
        %4924 = vmatprep.subr.mxu0 0.0
        %4925 = vmatpush1.msra.mxu0 0.0
        %4926 = vmatprep.subr.mxu0 0.0
        %4927 = vmatpush1.msra.mxu0 0.0
        %4928 = vmatprep.subr.mxu0 0.0
        %4929 = vmatpush1.msra.mxu0 0.0
        %4930 = vmatprep.subr.mxu0 0.0
        %4931 = vmatpush1.msra.mxu0 0.0
        %4932 = vmatprep.subr.mxu0 0.0
        %4933 = vmatpush1.msra.mxu0 0.0
        %4934 = vmatprep.subr.mxu0 0.0
        %4935 = vmatpush1.msra.mxu0 0.0
        %4936 = vmatprep.subr.mxu0 0.0
        %4937 = vmatpush1.msra.mxu0 0.0
        %4938 = vmatprep.subr.mxu0 0.0
        %4939 = vmatpush1.msra.mxu0 0.0
        %4940 = vmatprep.subr.mxu0 0.0
        %4941 = vmatpush1.msra.mxu0 0.0
        %4942 = vmatprep.subr.mxu0 0.0
        %4943 = vmatpush1.msra.mxu0 0.0
        %4944 = vmatprep.subr.mxu0 0.0
        %4945 = vmatpush1.msra.mxu0 0.0
        %4946 = vmatprep.subr.mxu0 0.0
        %4947 = vmatpush1.msra.mxu0 0.0
        %4948 = vmatprep.subr.mxu0 0.0
        %4949 = vmatpush1.msra.mxu0 0.0
        %4950 = vmatprep.subr.mxu0 0.0
        %4951 = vmatpush1.msra.mxu0 0.0
        %4952 = vmatprep.subr.mxu0 0.0
        %4953 = vmatpush1.msra.mxu0 0.0
        %4954 = vmatprep.subr.mxu0 0.0
        %4955 = vmatpush1.msra.mxu0 0.0
        %4956 = vmatprep.subr.mxu0 0.0
        %4957 = vmatpush1.msra.mxu0 0.0
        %4958 = vmatprep.subr.mxu0 0.0
        %4959 = vmatpush1.msra.mxu0 0.0
        %4960 = vmatprep.subr.mxu0 0.0
        %4961 = vmatpush1.msra.mxu0 0.0
        %4962 = vmatprep.mubr.f32.mxu0 0.0
        %4963 = vmatmul.mubr.f32.gmra.mrb[0].mxu0 %v4896
        %v4964 = vpop.f32.mrb[0].mxu0
        %v4965 = vadd.f32 0.0, %v4964
        %v4966 = vpop.f32.mrb[0].mxu0
        %4967 = vdwg.mxu0
        %v4969 = vsel %vm3165, %v4892, 0
        %4971 = vmatprep.subr.mxu0 0.0
        %4972 = vmatpush1.msra.mxu0 %v3832
        %4973 = vmatprep.subr.mxu0 0.0
        %4974 = vmatpush1.msra.mxu0 0.0
        %4975 = vmatprep.subr.mxu0 0.0
        %4976 = vmatpush1.msra.mxu0 0.0
        %4977 = vmatprep.subr.mxu0 0.0
        %4978 = vmatpush1.msra.mxu0 0.0
        %4979 = vmatprep.subr.mxu0 0.0
        %4980 = vmatpush1.msra.mxu0 0.0
        %4981 = vmatprep.subr.mxu0 0.0
        %4982 = vmatpush1.msra.mxu0 0.0
        %4983 = vmatprep.subr.mxu0 0.0
        %4984 = vmatpush1.msra.mxu0 0.0
        %4985 = vmatprep.subr.mxu0 0.0
        %4986 = vmatpush1.msra.mxu0 0.0
        %4987 = vmatprep.subr.mxu0 0.0
        %4988 = vmatpush1.msra.mxu0 0.0
        %4989 = vmatprep.subr.mxu0 0.0
        %4990 = vmatpush1.msra.mxu0 0.0
        %4991 = vmatprep.subr.mxu0 0.0
        %4992 = vmatpush1.msra.mxu0 0.0
        %4993 = vmatprep.subr.mxu0 0.0
        %4994 = vmatpush1.msra.mxu0 0.0
        %4995 = vmatprep.subr.mxu0 0.0
        %4996 = vmatpush1.msra.mxu0 0.0
        %4997 = vmatprep.subr.mxu0 0.0
        %4998 = vmatpush1.msra.mxu0 0.0
        %4999 = vmatprep.subr.mxu0 0.0
        %5000 = vmatpush1.msra.mxu0 0.0
        %5001 = vmatprep.subr.mxu0 0.0
        %5002 = vmatpush1.msra.mxu0 0.0
        %5003 = vmatprep.subr.mxu0 0.0
        %5004 = vmatpush1.msra.mxu0 0.0
        %5005 = vmatprep.subr.mxu0 0.0
        %5006 = vmatpush1.msra.mxu0 0.0
        %5007 = vmatprep.subr.mxu0 0.0
        %5008 = vmatpush1.msra.mxu0 0.0
        %5009 = vmatprep.subr.mxu0 0.0
        %5010 = vmatpush1.msra.mxu0 0.0
        %5011 = vmatprep.subr.mxu0 0.0
        %5012 = vmatpush1.msra.mxu0 0.0
        %5013 = vmatprep.subr.mxu0 0.0
        %5014 = vmatpush1.msra.mxu0 0.0
        %5015 = vmatprep.subr.mxu0 0.0
        %5016 = vmatpush1.msra.mxu0 0.0
        %5017 = vmatprep.subr.mxu0 0.0
        %5018 = vmatpush1.msra.mxu0 0.0
        %5019 = vmatprep.subr.mxu0 0.0
        %5020 = vmatpush1.msra.mxu0 0.0
        %5021 = vmatprep.subr.mxu0 0.0
        %5022 = vmatpush1.msra.mxu0 0.0
        %5023 = vmatprep.subr.mxu0 0.0
        %5024 = vmatpush1.msra.mxu0 0.0
        %5025 = vmatprep.subr.mxu0 0.0
        %5026 = vmatpush1.msra.mxu0 0.0
        %5027 = vmatprep.subr.mxu0 0.0
        %5028 = vmatpush1.msra.mxu0 0.0
        %5029 = vmatprep.subr.mxu0 0.0
        %5030 = vmatpush1.msra.mxu0 0.0
        %5031 = vmatprep.subr.mxu0 0.0
        %5032 = vmatpush1.msra.mxu0 0.0
        %5033 = vmatprep.subr.mxu0 0.0
        %5034 = vmatpush1.msra.mxu0 0.0
        %5035 = vmatprep.mubr.f32.mxu0 0.0
        %5036 = vmatmul.mubr.f32.gmra.mrb[0].mxu0 %v4969
        %v5037 = vpop.f32.mrb[0].mxu0
        %v5038 = vadd.f32 %v4965, %v5037
        %v5039 = vpop.f32.mrb[0].mxu0
        %5040 = vdwg.mxu0
        %vm5041 = vcmp.eq.s32.totalorder %v4890, %v3904
        %v5042 = vsel %vm5041, 1.0, 0.0
        %v5044 = vsel %vm3165, %v5042, 0
        %5046 = vmatprep.subr.mxu0 0.0
        %5047 = vmatpush1.msra.mxu0 %v3911
        %5048 = vmatprep.subr.mxu0 0.0
        %5049 = vmatpush1.msra.mxu0 0.0
        %5050 = vmatprep.subr.mxu0 0.0
        %5051 = vmatpush1.msra.mxu0 0.0
        %5052 = vmatprep.subr.mxu0 0.0
        %5053 = vmatpush1.msra.mxu0 0.0
        %5054 = vmatprep.subr.mxu0 0.0
        %5055 = vmatpush1.msra.mxu0 0.0
        %5056 = vmatprep.subr.mxu0 0.0
        %5057 = vmatpush1.msra.mxu0 0.0
        %5058 = vmatprep.subr.mxu0 0.0
        %5059 = vmatpush1.msra.mxu0 0.0
        %5060 = vmatprep.subr.mxu0 0.0
        %5061 = vmatpush1.msra.mxu0 0.0
        %5062 = vmatprep.subr.mxu0 0.0
        %5063 = vmatpush1.msra.mxu0 0.0
        %5064 = vmatprep.subr.mxu0 0.0
        %5065 = vmatpush1.msra.mxu0 0.0
        %5066 = vmatprep.subr.mxu0 0.0
        %5067 = vmatpush1.msra.mxu0 0.0
        %5068 = vmatprep.subr.mxu0 0.0
        %5069 = vmatpush1.msra.mxu0 0.0
        %5070 = vmatprep.subr.mxu0 0.0
        %5071 = vmatpush1.msra.mxu0 0.0
        %5072 = vmatprep.subr.mxu0 0.0
        %5073 = vmatpush1.msra.mxu0 0.0
        %5074 = vmatprep.subr.mxu0 0.0
        %5075 = vmatpush1.msra.mxu0 0.0
        %5076 = vmatprep.subr.mxu0 0.0
        %5077 = vmatpush1.msra.mxu0 0.0
        %5078 = vmatprep.subr.mxu0 0.0
        %5079 = vmatpush1.msra.mxu0 0.0
        %5080 = vmatprep.subr.mxu0 0.0
        %5081 = vmatpush1.msra.mxu0 0.0
        %5082 = vmatprep.subr.mxu0 0.0
        %5083 = vmatpush1.msra.mxu0 0.0
        %5084 = vmatprep.subr.mxu0 0.0
        %5085 = vmatpush1.msra.mxu0 0.0
        %5086 = vmatprep.subr.mxu0 0.0
        %5087 = vmatpush1.msra.mxu0 0.0
        %5088 = vmatprep.subr.mxu0 0.0
        %5089 = vmatpush1.msra.mxu0 0.0
        %5090 = vmatprep.subr.mxu0 0.0
        %5091 = vmatpush1.msra.mxu0 0.0
        %5092 = vmatprep.subr.mxu0 0.0
        %5093 = vmatpush1.msra.mxu0 0.0
        %5094 = vmatprep.subr.mxu0 0.0
        %5095 = vmatpush1.msra.mxu0 0.0
        %5096 = vmatprep.subr.mxu0 0.0
        %5097 = vmatpush1.msra.mxu0 0.0
        %5098 = vmatprep.subr.mxu0 0.0
        %5099 = vmatpush1.msra.mxu0 0.0
        %5100 = vmatprep.subr.mxu0 0.0
        %5101 = vmatpush1.msra.mxu0 0.0
        %5102 = vmatprep.subr.mxu0 0.0
        %5103 = vmatpush1.msra.mxu0 0.0
        %5104 = vmatprep.subr.mxu0 0.0
        %5105 = vmatpush1.msra.mxu0 0.0
        %5106 = vmatprep.subr.mxu0 0.0
        %5107 = vmatpush1.msra.mxu0 0.0
        %5108 = vmatprep.subr.mxu0 0.0
        %5109 = vmatpush1.msra.mxu0 0.0
        %5110 = vmatprep.mubr.f32.mxu0 0.0
        %5111 = vmatmul.mubr.f32.gmra.mrb[0].mxu0 %v5044
        %v5112 = vpop.f32.mrb[0].mxu0
        %v5113 = vadd.f32 0.0, %v5112
        %v5114 = vpop.f32.mrb[0].mxu0
        %5115 = vdwg.mxu0
        %v5116 = vadd.f32 %v5038, %v5113
        %vm5117 = vcmp.eq.s32.totalorder %v4890, %v3984
        %v5118 = vsel %vm5117, 1.0, 0.0
        %v5120 = vsel %vm3165, %v5118, 0
        %5122 = vmatprep.subr.mxu0 0.0
        %5123 = vmatpush1.msra.mxu0 %v3991
        %5124 = vmatprep.subr.mxu0 0.0
        %5125 = vmatpush1.msra.mxu0 0.0
        %5126 = vmatprep.subr.mxu0 0.0
        %5127 = vmatpush1.msra.mxu0 0.0
        %5128 = vmatprep.subr.mxu0 0.0
        %5129 = vmatpush1.msra.mxu0 0.0
        %5130 = vmatprep.subr.mxu0 0.0
        %5131 = vmatpush1.msra.mxu0 0.0
        %5132 = vmatprep.subr.mxu0 0.0
        %5133 = vmatpush1.msra.mxu0 0.0
        %5134 = vmatprep.subr.mxu0 0.0
        %5135 = vmatpush1.msra.mxu0 0.0
        %5136 = vmatprep.subr.mxu0 0.0
        %5137 = vmatpush1.msra.mxu0 0.0
        %5138 = vmatprep.subr.mxu0 0.0
        %5139 = vmatpush1.msra.mxu0 0.0
        %5140 = vmatprep.subr.mxu0 0.0
        %5141 = vmatpush1.msra.mxu0 0.0
        %5142 = vmatprep.subr.mxu0 0.0
        %5143 = vmatpush1.msra.mxu0 0.0
        %5144 = vmatprep.subr.mxu0 0.0
        %5145 = vmatpush1.msra.mxu0 0.0
        %5146 = vmatprep.subr.mxu0 0.0
        %5147 = vmatpush1.msra.mxu0 0.0
        %5148 = vmatprep.subr.mxu0 0.0
        %5149 = vmatpush1.msra.mxu0 0.0
        %5150 = vmatprep.subr.mxu0 0.0
        %5151 = vmatpush1.msra.mxu0 0.0
        %5152 = vmatprep.subr.mxu0 0.0
        %5153 = vmatpush1.msra.mxu0 0.0
        %5154 = vmatprep.subr.mxu0 0.0
        %5155 = vmatpush1.msra.mxu0 0.0
        %5156 = vmatprep.subr.mxu0 0.0
        %5157 = vmatpush1.msra.mxu0 0.0
        %5158 = vmatprep.subr.mxu0 0.0
        %5159 = vmatpush1.msra.mxu0 0.0
        %5160 = vmatprep.subr.mxu0 0.0
        %5161 = vmatpush1.msra.mxu0 0.0
        %5162 = vmatprep.subr.mxu0 0.0
        %5163 = vmatpush1.msra.mxu0 0.0
        %5164 = vmatprep.subr.mxu0 0.0
        %5165 = vmatpush1.msra.mxu0 0.0
        %5166 = vmatprep.subr.mxu0 0.0
        %5167 = vmatpush1.msra.mxu0 0.0
        %5168 = vmatprep.subr.mxu0 0.0
        %5169 = vmatpush1.msra.mxu0 0.0
        %5170 = vmatprep.subr.mxu0 0.0
        %5171 = vmatpush1.msra.mxu0 0.0
        %5172 = vmatprep.subr.mxu0 0.0
        %5173 = vmatpush1.msra.mxu0 0.0
        %5174 = vmatprep.subr.mxu0 0.0
        %5175 = vmatpush1.msra.mxu0 0.0
        %5176 = vmatprep.subr.mxu0 0.0
        %5177 = vmatpush1.msra.mxu0 0.0
        %5178 = vmatprep.subr.mxu0 0.0
        %5179 = vmatpush1.msra.mxu0 0.0
        %5180 = vmatprep.subr.mxu0 0.0
        %5181 = vmatpush1.msra.mxu0 0.0
        %5182 = vmatprep.subr.mxu0 0.0
        %5183 = vmatpush1.msra.mxu0 0.0
        %5184 = vmatprep.subr.mxu0 0.0
        %5185 = vmatpush1.msra.mxu0 0.0
        %5186 = vmatprep.mubr.f32.mxu0 0.0
        %5187 = vmatmul.mubr.f32.gmra.mrb[0].mxu0 %v5120
        %v5188 = vpop.f32.mrb[0].mxu0
        %v5189 = vadd.f32 0.0, %v5188
        %v5190 = vpop.f32.mrb[0].mxu0
        %5191 = vdwg.mxu0
        %v5192 = vadd.f32 %v5116, %v5189
        %v5194 = vsel %vm1645, %v5192, 0
        %5196 = vmatprep.subr.mxu0 0.0
        %5197 = vmatpush1.msra.mxu0 %v2951
        %5198 = vmatprep.subr.mxu0 0.0
        %5199 = vmatpush1.msra.mxu0 0.0
        %5200 = vmatprep.subr.mxu0 0.0
        %5201 = vmatpush1.msra.mxu0 0.0
        %5202 = vmatprep.subr.mxu0 0.0
        %5203 = vmatpush1.msra.mxu0 0.0
        %5204 = vmatprep.subr.mxu0 0.0
        %5205 = vmatpush1.msra.mxu0 0.0
        %5206 = vmatprep.subr.mxu0 0.0
        %5207 = vmatpush1.msra.mxu0 0.0
        %5208 = vmatprep.subr.mxu0 0.0
        %5209 = vmatpush1.msra.mxu0 0.0
        %5210 = vmatprep.subr.mxu0 0.0
        %5211 = vmatpush1.msra.mxu0 0.0
        %5212 = vmatprep.subr.mxu0 0.0
        %5213 = vmatpush1.msra.mxu0 0.0
        %5214 = vmatprep.subr.mxu0 0.0
        %5215 = vmatpush1.msra.mxu0 0.0
        %5216 = vmatprep.subr.mxu0 0.0
        %5217 = vmatpush1.msra.mxu0 0.0
        %5218 = vmatprep.subr.mxu0 0.0
        %5219 = vmatpush1.msra.mxu0 0.0
        %5220 = vmatprep.subr.mxu0 0.0
        %5221 = vmatpush1.msra.mxu0 0.0
        %5222 = vmatprep.subr.mxu0 0.0
        %5223 = vmatpush1.msra.mxu0 0.0
        %5224 = vmatprep.subr.mxu0 0.0
        %5225 = vmatpush1.msra.mxu0 0.0
        %5226 = vmatprep.subr.mxu0 0.0
        %5227 = vmatpush1.msra.mxu0 0.0
        %5228 = vmatprep.subr.mxu0 0.0
        %5229 = vmatpush1.msra.mxu0 0.0
        %5230 = vmatprep.subr.mxu0 0.0
        %5231 = vmatpush1.msra.mxu0 0.0
        %5232 = vmatprep.subr.mxu0 0.0
        %5233 = vmatpush1.msra.mxu0 0.0
        %5234 = vmatprep.subr.mxu0 0.0
        %5235 = vmatpush1.msra.mxu0 0.0
        %5236 = vmatprep.subr.mxu0 0.0
        %5237 = vmatpush1.msra.mxu0 0.0
        %5238 = vmatprep.subr.mxu0 0.0
        %5239 = vmatpush1.msra.mxu0 0.0
        %5240 = vmatprep.subr.mxu0 0.0
        %5241 = vmatpush1.msra.mxu0 0.0
        %5242 = vmatprep.subr.mxu0 0.0
        %5243 = vmatpush1.msra.mxu0 0.0
        %5244 = vmatprep.subr.mxu0 0.0
        %5245 = vmatpush1.msra.mxu0 0.0
        %5246 = vmatprep.subr.mxu0 0.0
        %5247 = vmatpush1.msra.mxu0 0.0
        %5248 = vmatprep.subr.mxu0 0.0
        %5249 = vmatpush1.msra.mxu0 0.0
        %5250 = vmatprep.subr.mxu0 0.0
        %5251 = vmatpush1.msra.mxu0 0.0
        %5252 = vmatprep.subr.mxu0 0.0
        %5253 = vmatpush1.msra.mxu0 0.0
        %5254 = vmatprep.subr.mxu0 0.0
        %5255 = vmatpush1.msra.mxu0 0.0
        %5256 = vmatprep.subr.mxu0 0.0
        %5257 = vmatpush1.msra.mxu0 0.0
        %5258 = vmatprep.subr.mxu0 0.0
        %5259 = vmatpush1.msra.mxu0 0.0
        %5260 = vmatprep.mubr.f32.mxu0 0.0
        %5261 = vmatmul.mubr.f32.gmra.mrb[0].mxu0 %v5194
        %v5262 = vpop.f32.mrb[0].mxu0
        %v5263 = vadd.f32 0.0, %v5262
        %v5264 = vpop.f32.mrb[0].mxu0
        %5265 = vdwg.mxu0
        %v5266 = vadd.f32 %v4889, %v5263
        %v5268 = vlaneseq
        %v5269 = vshrl.u32 %v5268, 7
        %v5270 = vsub.s32 0, %v5269
        %v5271 = vrot.slane %v2952, %v5270
        %v5273 = vadd.f32 %v5266, %v5271
        %v5274 = vadd.f32 %v2942, %v5273
        %vm5275 = vcmask 259072
        %v5276 = vsel %vm5275, %v5274, 0.0
        %5277 = vadd.xlane.f32.xlu0 %v5276
        %v5278 = vpop.xlane.xlu0 %5277
        %v5279 = vmul.f32 %v5278, %v2611
        %v5280 = vsub.f32 %v5274, %v5279
        %v5281 = vmul.f32 %v5280, %v5280
        %v5282 = vsel %vm5275, %v5281, 0.0
        %5283 = vadd.xlane.f32.xlu0 %v5282
        %v5284 = vpop.xlane.xlu0 %5283
        %v5285 = vmul.f32 %v5284, %v2611
        %v5286 = vadd.f32 %v5285, 1e-05
        %v5287 = vrsqrt.pop %v5286
        %v5288 = vmul.f32 %v5280, %v5287
        %v5290 = vlaneseq
        %v5291 = vshrl.u32 %v5290, 7
        %v5292 = vsub.s32 0, %v5291
        %v5293 = vrot.slane %v2968, %v5292
        %v5295 = vmul.f32 %v5288, %v5293
        %v5297 = vlaneseq
        %v5298 = vshrl.u32 %v5297, 7
        %v5299 = vsub.s32 0, %v5298
        %v5300 = vrot.slane %v2969, %v5299
        %v5302 = vadd.f32 %v5295, %v5300
        %v5304 = vlaneseq
        %v5305 = vshrl.u32 %v5304, 7
        %v5306 = vsub.s32 0, %v5305
        %v5307 = vrot.slane %v2957, %v5306
        %v5310 = vsel %vm1568, %v5302, 0
        %5312 = vmatprep.subr.mxu0 0.0
        %5313 = vmatpush1.msra.mxu0 %v2953
        %5314 = vmatprep.subr.mxu0 0.0
        %5315 = vmatpush1.msra.mxu0 %v2954
        %5316 = vmatprep.subr.mxu0 0.0
        %5317 = vmatpush1.msra.mxu0 %v2955
        %5318 = vmatprep.subr.mxu0 0.0
        %5319 = vmatpush1.msra.mxu0 %v2956
        %5320 = vmatprep.subr.mxu0 0.0
        %5321 = vmatpush1.msra.mxu0 0.0
        %5322 = vmatprep.subr.mxu0 0.0
        %5323 = vmatpush1.msra.mxu0 0.0
        %5324 = vmatprep.subr.mxu0 0.0
        %5325 = vmatpush1.msra.mxu0 0.0
        %5326 = vmatprep.subr.mxu0 0.0
        %5327 = vmatpush1.msra.mxu0 0.0
        %5328 = vmatprep.subr.mxu0 0.0
        %5329 = vmatpush1.msra.mxu0 0.0
        %5330 = vmatprep.subr.mxu0 0.0
        %5331 = vmatpush1.msra.mxu0 0.0
        %5332 = vmatprep.subr.mxu0 0.0
        %5333 = vmatpush1.msra.mxu0 0.0
        %5334 = vmatprep.subr.mxu0 0.0
        %5335 = vmatpush1.msra.mxu0 0.0
        %5336 = vmatprep.subr.mxu0 0.0
        %5337 = vmatpush1.msra.mxu0 0.0
        %5338 = vmatprep.subr.mxu0 0.0
        %5339 = vmatpush1.msra.mxu0 0.0
        %5340 = vmatprep.subr.mxu0 0.0
        %5341 = vmatpush1.msra.mxu0 0.0
        %5342 = vmatprep.subr.mxu0 0.0
        %5343 = vmatpush1.msra.mxu0 0.0
        %5344 = vmatprep.subr.mxu0 0.0
        %5345 = vmatpush1.msra.mxu0 0.0
        %5346 = vmatprep.subr.mxu0 0.0
        %5347 = vmatpush1.msra.mxu0 0.0
        %5348 = vmatprep.subr.mxu0 0.0
        %5349 = vmatpush1.msra.mxu0 0.0
        %5350 = vmatprep.subr.mxu0 0.0
        %5351 = vmatpush1.msra.mxu0 0.0
        %5352 = vmatprep.subr.mxu0 0.0
        %5353 = vmatpush1.msra.mxu0 0.0
        %5354 = vmatprep.subr.mxu0 0.0
        %5355 = vmatpush1.msra.mxu0 0.0
        %5356 = vmatprep.subr.mxu0 0.0
        %5357 = vmatpush1.msra.mxu0 0.0
        %5358 = vmatprep.subr.mxu0 0.0
        %5359 = vmatpush1.msra.mxu0 0.0
        %5360 = vmatprep.subr.mxu0 0.0
        %5361 = vmatpush1.msra.mxu0 0.0
        %5362 = vmatprep.subr.mxu0 0.0
        %5363 = vmatpush1.msra.mxu0 0.0
        %5364 = vmatprep.subr.mxu0 0.0
        %5365 = vmatpush1.msra.mxu0 0.0
        %5366 = vmatprep.subr.mxu0 0.0
        %5367 = vmatpush1.msra.mxu0 0.0
        %5368 = vmatprep.subr.mxu0 0.0
        %5369 = vmatpush1.msra.mxu0 0.0
        %5370 = vmatprep.subr.mxu0 0.0
        %5371 = vmatpush1.msra.mxu0 0.0
        %5372 = vmatprep.subr.mxu0 0.0
        %5373 = vmatpush1.msra.mxu0 0.0
        %5374 = vmatprep.subr.mxu0 0.0
        %5375 = vmatpush1.msra.mxu0 0.0
        %5376 = vmatprep.mubr.f32.mxu0 0.0
        %5377 = vmatmul.mubr.f32.gmra.mrb[0].mxu0 %v5310
        %v5378 = vpop.f32.mrb[0].mxu0
        %v5379 = vadd.f32 %v5307, %v5378
        %v5380 = vpop.f32.mrb[0].mxu0
        %5381 = vdwg.mxu0
        %v5383 = vlaneseq
        %v5384 = vshrl.u32 %v5383, 7
        %v5385 = vsub.s32 0, %v5384
        %v5386 = vrot.slane %v2962, %v5385
        %v5389 = vsel %vm1568, %v2856, 0
        %5391 = vmatprep.subr.mxu0 0.0
        %5392 = vmatpush1.msra.mxu0 %v2958
        %5393 = vmatprep.subr.mxu0 0.0
        %5394 = vmatpush1.msra.mxu0 %v2959
        %5395 = vmatprep.subr.mxu0 0.0
        %5396 = vmatpush1.msra.mxu0 %v2960
        %5397 = vmatprep.subr.mxu0 0.0
        %5398 = vmatpush1.msra.mxu0 %v2961
        %5399 = vmatprep.subr.mxu0 0.0
        %5400 = vmatpush1.msra.mxu0 0.0
        %5401 = vmatprep.subr.mxu0 0.0
        %5402 = vmatpush1.msra.mxu0 0.0
        %5403 = vmatprep.subr.mxu0 0.0
        %5404 = vmatpush1.msra.mxu0 0.0
        %5405 = vmatprep.subr.mxu0 0.0
        %5406 = vmatpush1.msra.mxu0 0.0
        %5407 = vmatprep.subr.mxu0 0.0
        %5408 = vmatpush1.msra.mxu0 0.0
        %5409 = vmatprep.subr.mxu0 0.0
        %5410 = vmatpush1.msra.mxu0 0.0
        %5411 = vmatprep.subr.mxu0 0.0
        %5412 = vmatpush1.msra.mxu0 0.0
        %5413 = vmatprep.subr.mxu0 0.0
        %5414 = vmatpush1.msra.mxu0 0.0
        %5415 = vmatprep.subr.mxu0 0.0
        %5416 = vmatpush1.msra.mxu0 0.0
        %5417 = vmatprep.subr.mxu0 0.0
        %5418 = vmatpush1.msra.mxu0 0.0
        %5419 = vmatprep.subr.mxu0 0.0
        %5420 = vmatpush1.msra.mxu0 0.0
        %5421 = vmatprep.subr.mxu0 0.0
        %5422 = vmatpush1.msra.mxu0 0.0
        %5423 = vmatprep.subr.mxu0 0.0
        %5424 = vmatpush1.msra.mxu0 0.0
        %5425 = vmatprep.subr.mxu0 0.0
        %5426 = vmatpush1.msra.mxu0 0.0
        %5427 = vmatprep.subr.mxu0 0.0
        %5428 = vmatpush1.msra.mxu0 0.0
        %5429 = vmatprep.subr.mxu0 0.0
        %5430 = vmatpush1.msra.mxu0 0.0
        %5431 = vmatprep.subr.mxu0 0.0
        %5432 = vmatpush1.msra.mxu0 0.0
        %5433 = vmatprep.subr.mxu0 0.0
        %5434 = vmatpush1.msra.mxu0 0.0
        %5435 = vmatprep.subr.mxu0 0.0
        %5436 = vmatpush1.msra.mxu0 0.0
        %5437 = vmatprep.subr.mxu0 0.0
        %5438 = vmatpush1.msra.mxu0 0.0
        %5439 = vmatprep.subr.mxu0 0.0
        %5440 = vmatpush1.msra.mxu0 0.0
        %5441 = vmatprep.subr.mxu0 0.0
        %5442 = vmatpush1.msra.mxu0 0.0
        %5443 = vmatprep.subr.mxu0 0.0
        %5444 = vmatpush1.msra.mxu0 0.0
        %5445 = vmatprep.subr.mxu0 0.0
        %5446 = vmatpush1.msra.mxu0 0.0
        %5447 = vmatprep.subr.mxu0 0.0
        %5448 = vmatpush1.msra.mxu0 0.0
        %5449 = vmatprep.subr.mxu0 0.0
        %5450 = vmatpush1.msra.mxu0 0.0
        %5451 = vmatprep.subr.mxu0 0.0
        %5452 = vmatpush1.msra.mxu0 0.0
        %5453 = vmatprep.subr.mxu0 0.0
        %5454 = vmatpush1.msra.mxu0 0.0
        %5455 = vmatprep.mubr.f32.mxu0 0.0
        %5456 = vmatmul.mubr.f32.gmra.mrb[0].mxu0 %v5389
        %v5457 = vpop.f32.mrb[0].mxu0
        %v5458 = vadd.f32 %v5386, %v5457
        %v5459 = vpop.f32.mrb[0].mxu0
        %5460 = vdwg.mxu0
        %v5462 = vsel %vm1645, %v5379, 0
        %v5465 = vsel %vm1645, %v5458, 0
        %5467 = vmatprep.subr.mxu0 0.0
        %5468 = vmatpush1.xpose.msra.mxu0 %v5465
        %5469 = vmatprep.subr.mxu0 0.0
        %5470 = vmatpush1.xpose.msra.mxu0 0.0
        %5471 = vmatprep.subr.mxu0 0.0
        %5472 = vmatpush1.xpose.msra.mxu0 0.0
        %5473 = vmatprep.subr.mxu0 0.0
        %5474 = vmatpush1.xpose.msra.mxu0 0.0
        %5475 = vmatprep.subr.mxu0 0.0
        %5476 = vmatpush1.xpose.msra.mxu0 0.0
        %5477 = vmatprep.subr.mxu0 0.0
        %5478 = vmatpush1.xpose.msra.mxu0 0.0
        %5479 = vmatprep.subr.mxu0 0.0
        %5480 = vmatpush1.xpose.msra.mxu0 0.0
        %5481 = vmatprep.subr.mxu0 0.0
        %5482 = vmatpush1.xpose.msra.mxu0 0.0
        %5483 = vmatprep.subr.mxu0 0.0
        %5484 = vmatpush1.xpose.msra.mxu0 0.0
        %5485 = vmatprep.subr.mxu0 0.0
        %5486 = vmatpush1.xpose.msra.mxu0 0.0
        %5487 = vmatprep.subr.mxu0 0.0
        %5488 = vmatpush1.xpose.msra.mxu0 0.0
        %5489 = vmatprep.subr.mxu0 0.0
        %5490 = vmatpush1.xpose.msra.mxu0 0.0
        %5491 = vmatprep.subr.mxu0 0.0
        %5492 = vmatpush1.xpose.msra.mxu0 0.0
        %5493 = vmatprep.subr.mxu0 0.0
        %5494 = vmatpush1.xpose.msra.mxu0 0.0
        %5495 = vmatprep.subr.mxu0 0.0
        %5496 = vmatpush1.xpose.msra.mxu0 0.0
        %5497 = vmatprep.subr.mxu0 0.0
        %5498 = vmatpush1.xpose.msra.mxu0 0.0
        %5499 = vmatprep.subr.mxu0 0.0
        %5500 = vmatpush1.xpose.msra.mxu0 0.0
        %5501 = vmatprep.subr.mxu0 0.0
        %5502 = vmatpush1.xpose.msra.mxu0 0.0
        %5503 = vmatprep.subr.mxu0 0.0
        %5504 = vmatpush1.xpose.msra.mxu0 0.0
        %5505 = vmatprep.subr.mxu0 0.0
        %5506 = vmatpush1.xpose.msra.mxu0 0.0
        %5507 = vmatprep.subr.mxu0 0.0
        %5508 = vmatpush1.xpose.msra.mxu0 0.0
        %5509 = vmatprep.subr.mxu0 0.0
        %5510 = vmatpush1.xpose.msra.mxu0 0.0
        %5511 = vmatprep.subr.mxu0 0.0
        %5512 = vmatpush1.xpose.msra.mxu0 0.0
        %5513 = vmatprep.subr.mxu0 0.0
        %5514 = vmatpush1.xpose.msra.mxu0 0.0
        %5515 = vmatprep.subr.mxu0 0.0
        %5516 = vmatpush1.xpose.msra.mxu0 0.0
        %5517 = vmatprep.subr.mxu0 0.0
        %5518 = vmatpush1.xpose.msra.mxu0 0.0
        %5519 = vmatprep.subr.mxu0 0.0
        %5520 = vmatpush1.xpose.msra.mxu0 0.0
        %5521 = vmatprep.subr.mxu0 0.0
        %5522 = vmatpush1.xpose.msra.mxu0 0.0
        %5523 = vmatprep.subr.mxu0 0.0
        %5524 = vmatpush1.xpose.msra.mxu0 0.0
        %5525 = vmatprep.subr.mxu0 0.0
        %5526 = vmatpush1.xpose.msra.mxu0 0.0
        %5527 = vmatprep.subr.mxu0 0.0
        %5528 = vmatpush1.xpose.msra.mxu0 0.0
        %5529 = vmatprep.subr.mxu0 0.0
        %5530 = vmatpush1.xpose.msra.mxu0 0.0
        %5531 = vmatprep.mubr.f32.mxu0 0.0
        %5532 = vmatmul.mubr.f32.gmra.mrb[0].mxu0 %v5462
        %v5533 = vpop.f32.mrb[0].mxu0
        %v5534 = vadd.f32 0.0, %v5533
        %v5535 = vpop.f32.mrb[0].mxu0
        %5536 = vdwg.mxu0
        %v5537 = vmul.f32 %v5534, 0.35355338
        %vm5538 = vcmask 62464
        %v5539 = vsel %vm5538, %v5537, -inf
        %5540 = vmax.xlane.f32.xlu0 %v5539
        %v5541 = vpop.xlane.xlu0 %5540
        %v5542 = vsub.f32 %v5537, %v5541
        %v5543 = vmul.f32 %v5542, 1.442695
        %v5544 = vpow.pop %v5543
        %v5545 = vsel %vm5538, %v5544, 0.0
        %5546 = vadd.xlane.f32.xlu0 %v5545
        %v5547 = vpop.xlane.xlu0 %5546
        %v5548 = vrcp.pop %v5547
        %v5549 = vmul.f32 %v5544, %v5548
        %5550 = vrot.lane.b32.xlu0 %v5458, 96
        %v5551 = vpop.permute.xlu0 %5550
        %v5554 = vsel %vm1645, %v5549, 0
        %5556 = vmatprep.subr.mxu0 0.0
        %5557 = vmatpush1.msra.mxu0 %v5551
        %5558 = vmatprep.subr.mxu0 0.0
        %5559 = vmatpush1.msra.mxu0 0.0
        %5560 = vmatprep.subr.mxu0 0.0
        %5561 = vmatpush1.msra.mxu0 0.0
        %5562 = vmatprep.subr.mxu0 0.0
        %5563 = vmatpush1.msra.mxu0 0.0
        %5564 = vmatprep.subr.mxu0 0.0
        %5565 = vmatpush1.msra.mxu0 0.0
        %5566 = vmatprep.subr.mxu0 0.0
        %5567 = vmatpush1.msra.mxu0 0.0
        %5568 = vmatprep.subr.mxu0 0.0
        %5569 = vmatpush1.msra.mxu0 0.0
        %5570 = vmatprep.subr.mxu0 0.0
        %5571 = vmatpush1.msra.mxu0 0.0
        %5572 = vmatprep.subr.mxu0 0.0
        %5573 = vmatpush1.msra.mxu0 0.0
        %5574 = vmatprep.subr.mxu0 0.0
        %5575 = vmatpush1.msra.mxu0 0.0
        %5576 = vmatprep.subr.mxu0 0.0
        %5577 = vmatpush1.msra.mxu0 0.0
        %5578 = vmatprep.subr.mxu0 0.0
        %5579 = vmatpush1.msra.mxu0 0.0
        %5580 = vmatprep.subr.mxu0 0.0
        %5581 = vmatpush1.msra.mxu0 0.0
        %5582 = vmatprep.subr.mxu0 0.0
        %5583 = vmatpush1.msra.mxu0 0.0
        %5584 = vmatprep.subr.mxu0 0.0
        %5585 = vmatpush1.msra.mxu0 0.0
        %5586 = vmatprep.subr.mxu0 0.0
        %5587 = vmatpush1.msra.mxu0 0.0
        %5588 = vmatprep.subr.mxu0 0.0
        %5589 = vmatpush1.msra.mxu0 0.0
        %5590 = vmatprep.subr.mxu0 0.0
        %5591 = vmatpush1.msra.mxu0 0.0
        %5592 = vmatprep.subr.mxu0 0.0
        %5593 = vmatpush1.msra.mxu0 0.0
        %5594 = vmatprep.subr.mxu0 0.0
        %5595 = vmatpush1.msra.mxu0 0.0
        %5596 = vmatprep.subr.mxu0 0.0
        %5597 = vmatpush1.msra.mxu0 0.0
        %5598 = vmatprep.subr.mxu0 0.0
        %5599 = vmatpush1.msra.mxu0 0.0
        %5600 = vmatprep.subr.mxu0 0.0
        %5601 = vmatpush1.msra.mxu0 0.0
        %5602 = vmatprep.subr.mxu0 0.0
        %5603 = vmatpush1.msra.mxu0 0.0
        %5604 = vmatprep.subr.mxu0 0.0
        %5605 = vmatpush1.msra.mxu0 0.0
        %5606 = vmatprep.subr.mxu0 0.0
        %5607 = vmatpush1.msra.mxu0 0.0
        %5608 = vmatprep.subr.mxu0 0.0
        %5609 = vmatpush1.msra.mxu0 0.0
        %5610 = vmatprep.subr.mxu0 0.0
        %5611 = vmatpush1.msra.mxu0 0.0
        %5612 = vmatprep.subr.mxu0 0.0
        %5613 = vmatpush1.msra.mxu0 0.0
        %5614 = vmatprep.subr.mxu0 0.0
        %5615 = vmatpush1.msra.mxu0 0.0
        %5616 = vmatprep.subr.mxu0 0.0
        %5617 = vmatpush1.msra.mxu0 0.0
        %5618 = vmatprep.subr.mxu0 0.0
        %5619 = vmatpush1.msra.mxu0 0.0
        %5620 = vmatprep.mubr.f32.mxu0 0.0
        %5621 = vmatmul.mubr.f32.gmra.mrb[0].mxu0 %v5554
        %v5622 = vpop.f32.mrb[0].mxu0
        %v5623 = vadd.f32 0.0, %v5622
        %v5624 = vpop.f32.mrb[0].mxu0
        %5625 = vdwg.mxu0
        %5626 = vrot.lane.b32.xlu0 %v5379, 120
        %v5627 = vpop.permute.xlu0 %5626
        %5628 = vrot.lane.b32.xlu0 %v5458, 120
        %v5629 = vpop.permute.xlu0 %5628
        %v5630 = vsel %vm1645, %v5627, 0
        %v5632 = vsel %vm1645, %v5629, 0
        %5634 = vmatprep.subr.mxu0 0.0
        %5635 = vmatpush1.xpose.msra.mxu0 %v5632
        %5636 = vmatprep.subr.mxu0 0.0
        %5637 = vmatpush1.xpose.msra.mxu0 0.0
        %5638 = vmatprep.subr.mxu0 0.0
        %5639 = vmatpush1.xpose.msra.mxu0 0.0
        %5640 = vmatprep.subr.mxu0 0.0
        %5641 = vmatpush1.xpose.msra.mxu0 0.0
        %5642 = vmatprep.subr.mxu0 0.0
        %5643 = vmatpush1.xpose.msra.mxu0 0.0
        %5644 = vmatprep.subr.mxu0 0.0
        %5645 = vmatpush1.xpose.msra.mxu0 0.0
        %5646 = vmatprep.subr.mxu0 0.0
        %5647 = vmatpush1.xpose.msra.mxu0 0.0
        %5648 = vmatprep.subr.mxu0 0.0
        %5649 = vmatpush1.xpose.msra.mxu0 0.0
        %5650 = vmatprep.subr.mxu0 0.0
        %5651 = vmatpush1.xpose.msra.mxu0 0.0
        %5652 = vmatprep.subr.mxu0 0.0
        %5653 = vmatpush1.xpose.msra.mxu0 0.0
        %5654 = vmatprep.subr.mxu0 0.0
        %5655 = vmatpush1.xpose.msra.mxu0 0.0
        %5656 = vmatprep.subr.mxu0 0.0
        %5657 = vmatpush1.xpose.msra.mxu0 0.0
        %5658 = vmatprep.subr.mxu0 0.0
        %5659 = vmatpush1.xpose.msra.mxu0 0.0
        %5660 = vmatprep.subr.mxu0 0.0
        %5661 = vmatpush1.xpose.msra.mxu0 0.0
        %5662 = vmatprep.subr.mxu0 0.0
        %5663 = vmatpush1.xpose.msra.mxu0 0.0
        %5664 = vmatprep.subr.mxu0 0.0
        %5665 = vmatpush1.xpose.msra.mxu0 0.0
        %5666 = vmatprep.subr.mxu0 0.0
        %5667 = vmatpush1.xpose.msra.mxu0 0.0
        %5668 = vmatprep.subr.mxu0 0.0
        %5669 = vmatpush1.xpose.msra.mxu0 0.0
        %5670 = vmatprep.subr.mxu0 0.0
        %5671 = vmatpush1.xpose.msra.mxu0 0.0
        %5672 = vmatprep.subr.mxu0 0.0
        %5673 = vmatpush1.xpose.msra.mxu0 0.0
        %5674 = vmatprep.subr.mxu0 0.0
        %5675 = vmatpush1.xpose.msra.mxu0 0.0
        %5676 = vmatprep.subr.mxu0 0.0
        %5677 = vmatpush1.xpose.msra.mxu0 0.0
        %5678 = vmatprep.subr.mxu0 0.0
        %5679 = vmatpush1.xpose.msra.mxu0 0.0
        %5680 = vmatprep.subr.mxu0 0.0
        %5681 = vmatpush1.xpose.msra.mxu0 0.0
        %5682 = vmatprep.subr.mxu0 0.0
        %5683 = vmatpush1.xpose.msra.mxu0 0.0
        %5684 = vmatprep.subr.mxu0 0.0
        %5685 = vmatpush1.xpose.msra.mxu0 0.0
        %5686 = vmatprep.subr.mxu0 0.0
        %5687 = vmatpush1.xpose.msra.mxu0 0.0
        %5688 = vmatprep.subr.mxu0 0.0
        %5689 = vmatpush1.xpose.msra.mxu0 0.0
        %5690 = vmatprep.subr.mxu0 0.0
        %5691 = vmatpush1.xpose.msra.mxu0 0.0
        %5692 = vmatprep.subr.mxu0 0.0
        %5693 = vmatpush1.xpose.msra.mxu0 0.0
        %5694 = vmatprep.subr.mxu0 0.0
        %5695 = vmatpush1.xpose.msra.mxu0 0.0
        %5696 = vmatprep.subr.mxu0 0.0
        %5697 = vmatpush1.xpose.msra.mxu0 0.0
        %5698 = vmatprep.mubr.f32.mxu0 0.0
        %5699 = vmatmul.mubr.f32.gmra.mrb[0].mxu0 %v5630
        %v5700 = vpop.f32.mrb[0].mxu0
        %v5701 = vadd.f32 0.0, %v5700
        %v5702 = vpop.f32.mrb[0].mxu0
        %5703 = vdwg.mxu0
        %v5704 = vmul.f32 %v5701, 0.35355338
        %v5705 = vsel %vm5538, %v5704, -inf
        %5706 = vmax.xlane.f32.xlu0 %v5705
        %v5707 = vpop.xlane.xlu0 %5706
        %v5708 = vsub.f32 %v5704, %v5707
        %v5709 = vmul.f32 %v5708, 1.442695
        %v5710 = vpow.pop %v5709
        %v5711 = vsel %vm5538, %v5710, 0.0
        %5712 = vadd.xlane.f32.xlu0 %v5711
        %v5713 = vpop.xlane.xlu0 %5712
        %v5714 = vrcp.pop %v5713
        %v5715 = vmul.f32 %v5710, %v5714
        %5716 = vrot.lane.b32.xlu0 %v5458, 88
        %v5717 = vpop.permute.xlu0 %5716
        %v5720 = vsel %vm1645, %v5715, 0
        %5722 = vmatprep.subr.mxu0 0.0
        %5723 = vmatpush1.msra.mxu0 %v5717
        %5724 = vmatprep.subr.mxu0 0.0
        %5725 = vmatpush1.msra.mxu0 0.0
        %5726 = vmatprep.subr.mxu0 0.0
        %5727 = vmatpush1.msra.mxu0 0.0
        %5728 = vmatprep.subr.mxu0 0.0
        %5729 = vmatpush1.msra.mxu0 0.0
        %5730 = vmatprep.subr.mxu0 0.0
        %5731 = vmatpush1.msra.mxu0 0.0
        %5732 = vmatprep.subr.mxu0 0.0
        %5733 = vmatpush1.msra.mxu0 0.0
        %5734 = vmatprep.subr.mxu0 0.0
        %5735 = vmatpush1.msra.mxu0 0.0
        %5736 = vmatprep.subr.mxu0 0.0
        %5737 = vmatpush1.msra.mxu0 0.0
        %5738 = vmatprep.subr.mxu0 0.0
        %5739 = vmatpush1.msra.mxu0 0.0
        %5740 = vmatprep.subr.mxu0 0.0
        %5741 = vmatpush1.msra.mxu0 0.0
        %5742 = vmatprep.subr.mxu0 0.0
        %5743 = vmatpush1.msra.mxu0 0.0
        %5744 = vmatprep.subr.mxu0 0.0
        %5745 = vmatpush1.msra.mxu0 0.0
        %5746 = vmatprep.subr.mxu0 0.0
        %5747 = vmatpush1.msra.mxu0 0.0
        %5748 = vmatprep.subr.mxu0 0.0
        %5749 = vmatpush1.msra.mxu0 0.0
        %5750 = vmatprep.subr.mxu0 0.0
        %5751 = vmatpush1.msra.mxu0 0.0
        %5752 = vmatprep.subr.mxu0 0.0
        %5753 = vmatpush1.msra.mxu0 0.0
        %5754 = vmatprep.subr.mxu0 0.0
        %5755 = vmatpush1.msra.mxu0 0.0
        %5756 = vmatprep.subr.mxu0 0.0
        %5757 = vmatpush1.msra.mxu0 0.0
        %5758 = vmatprep.subr.mxu0 0.0
        %5759 = vmatpush1.msra.mxu0 0.0
        %5760 = vmatprep.subr.mxu0 0.0
        %5761 = vmatpush1.msra.mxu0 0.0
        %5762 = vmatprep.subr.mxu0 0.0
        %5763 = vmatpush1.msra.mxu0 0.0
        %5764 = vmatprep.subr.mxu0 0.0
        %5765 = vmatpush1.msra.mxu0 0.0
        %5766 = vmatprep.subr.mxu0 0.0
        %5767 = vmatpush1.msra.mxu0 0.0
        %5768 = vmatprep.subr.mxu0 0.0
        %5769 = vmatpush1.msra.mxu0 0.0
        %5770 = vmatprep.subr.mxu0 0.0
        %5771 = vmatpush1.msra.mxu0 0.0
        %5772 = vmatprep.subr.mxu0 0.0
        %5773 = vmatpush1.msra.mxu0 0.0
        %5774 = vmatprep.subr.mxu0 0.0
        %5775 = vmatpush1.msra.mxu0 0.0
        %5776 = vmatprep.subr.mxu0 0.0
        %5777 = vmatpush1.msra.mxu0 0.0
        %5778 = vmatprep.subr.mxu0 0.0
        %5779 = vmatpush1.msra.mxu0 0.0
        %5780 = vmatprep.subr.mxu0 0.0
        %5781 = vmatpush1.msra.mxu0 0.0
        %5782 = vmatprep.subr.mxu0 0.0
        %5783 = vmatpush1.msra.mxu0 0.0
        %5784 = vmatprep.subr.mxu0 0.0
        %5785 = vmatpush1.msra.mxu0 0.0
        %5786 = vmatprep.mubr.f32.mxu0 0.0
        %5787 = vmatmul.mubr.f32.gmra.mrb[0].mxu0 %v5720
        %v5788 = vpop.f32.mrb[0].mxu0
        %v5789 = vadd.f32 0.0, %v5788
        %v5790 = vpop.f32.mrb[0].mxu0
        %5791 = vdwg.mxu0
        %5792 = vrot.lane.b32.xlu0 %v5379, 112
        %v5793 = vpop.permute.xlu0 %5792
        %5794 = vrot.lane.b32.xlu0 %v5458, 112
        %v5795 = vpop.permute.xlu0 %5794
        %v5796 = vsel %vm1645, %v5793, 0
        %v5798 = vsel %vm1645, %v5795, 0
        %5800 = vmatprep.subr.mxu0 0.0
        %5801 = vmatpush1.xpose.msra.mxu0 %v5798
        %5802 = vmatprep.subr.mxu0 0.0
        %5803 = vmatpush1.xpose.msra.mxu0 0.0
        %5804 = vmatprep.subr.mxu0 0.0
        %5805 = vmatpush1.xpose.msra.mxu0 0.0
        %5806 = vmatprep.subr.mxu0 0.0
        %5807 = vmatpush1.xpose.msra.mxu0 0.0
        %5808 = vmatprep.subr.mxu0 0.0
        %5809 = vmatpush1.xpose.msra.mxu0 0.0
        %5810 = vmatprep.subr.mxu0 0.0
        %5811 = vmatpush1.xpose.msra.mxu0 0.0
        %5812 = vmatprep.subr.mxu0 0.0
        %5813 = vmatpush1.xpose.msra.mxu0 0.0
        %5814 = vmatprep.subr.mxu0 0.0
        %5815 = vmatpush1.xpose.msra.mxu0 0.0
        %5816 = vmatprep.subr.mxu0 0.0
        %5817 = vmatpush1.xpose.msra.mxu0 0.0
        %5818 = vmatprep.subr.mxu0 0.0
        %5819 = vmatpush1.xpose.msra.mxu0 0.0
        %5820 = vmatprep.subr.mxu0 0.0
        %5821 = vmatpush1.xpose.msra.mxu0 0.0
        %5822 = vmatprep.subr.mxu0 0.0
        %5823 = vmatpush1.xpose.msra.mxu0 0.0
        %5824 = vmatprep.subr.mxu0 0.0
        %5825 = vmatpush1.xpose.msra.mxu0 0.0
        %5826 = vmatprep.subr.mxu0 0.0
        %5827 = vmatpush1.xpose.msra.mxu0 0.0
        %5828 = vmatprep.subr.mxu0 0.0
        %5829 = vmatpush1.xpose.msra.mxu0 0.0
        %5830 = vmatprep.subr.mxu0 0.0
        %5831 = vmatpush1.xpose.msra.mxu0 0.0
        %5832 = vmatprep.subr.mxu0 0.0
        %5833 = vmatpush1.xpose.msra.mxu0 0.0
        %5834 = vmatprep.subr.mxu0 0.0
        %5835 = vmatpush1.xpose.msra.mxu0 0.0
        %5836 = vmatprep.subr.mxu0 0.0
        %5837 = vmatpush1.xpose.msra.mxu0 0.0
        %5838 = vmatprep.subr.mxu0 0.0
        %5839 = vmatpush1.xpose.msra.mxu0 0.0
        %5840 = vmatprep.subr.mxu0 0.0
        %5841 = vmatpush1.xpose.msra.mxu0 0.0
        %5842 = vmatprep.subr.mxu0 0.0
        %5843 = vmatpush1.xpose.msra.mxu0 0.0
        %5844 = vmatprep.subr.mxu0 0.0
        %5845 = vmatpush1.xpose.msra.mxu0 0.0
        %5846 = vmatprep.subr.mxu0 0.0
        %5847 = vmatpush1.xpose.msra.mxu0 0.0
        %5848 = vmatprep.subr.mxu0 0.0
        %5849 = vmatpush1.xpose.msra.mxu0 0.0
        %5850 = vmatprep.subr.mxu0 0.0
        %5851 = vmatpush1.xpose.msra.mxu0 0.0
        %5852 = vmatprep.subr.mxu0 0.0
        %5853 = vmatpush1.xpose.msra.mxu0 0.0
        %5854 = vmatprep.subr.mxu0 0.0
        %5855 = vmatpush1.xpose.msra.mxu0 0.0
        %5856 = vmatprep.subr.mxu0 0.0
        %5857 = vmatpush1.xpose.msra.mxu0 0.0
        %5858 = vmatprep.subr.mxu0 0.0
        %5859 = vmatpush1.xpose.msra.mxu0 0.0
        %5860 = vmatprep.subr.mxu0 0.0
        %5861 = vmatpush1.xpose.msra.mxu0 0.0
        %5862 = vmatprep.subr.mxu0 0.0
        %5863 = vmatpush1.xpose.msra.mxu0 0.0
        %5864 = vmatprep.mubr.f32.mxu0 0.0
        %5865 = vmatmul.mubr.f32.gmra.mrb[0].mxu0 %v5796
        %v5866 = vpop.f32.mrb[0].mxu0
        %v5867 = vadd.f32 0.0, %v5866
        %v5868 = vpop.f32.mrb[0].mxu0
        %5869 = vdwg.mxu0
        %v5870 = vmul.f32 %v5867, 0.35355338
        %v5871 = vsel %vm5538, %v5870, -inf
        %5872 = vmax.xlane.f32.xlu0 %v5871
        %v5873 = vpop.xlane.xlu0 %5872
        %v5874 = vsub.f32 %v5870, %v5873
        %v5875 = vmul.f32 %v5874, 1.442695
        %v5876 = vpow.pop %v5875
        %v5877 = vsel %vm5538, %v5876, 0.0
        %5878 = vadd.xlane.f32.xlu0 %v5877
        %v5879 = vpop.xlane.xlu0 %5878
        %v5880 = vrcp.pop %v5879
        %v5881 = vmul.f32 %v5876, %v5880
        %5882 = vrot.lane.b32.xlu0 %v5458, 80
        %v5883 = vpop.permute.xlu0 %5882
        %v5886 = vsel %vm1645, %v5881, 0
        %5888 = vmatprep.subr.mxu0 0.0
        %5889 = vmatpush1.msra.mxu0 %v5883
        %5890 = vmatprep.subr.mxu0 0.0
        %5891 = vmatpush1.msra.mxu0 0.0
        %5892 = vmatprep.subr.mxu0 0.0
        %5893 = vmatpush1.msra.mxu0 0.0
        %5894 = vmatprep.subr.mxu0 0.0
        %5895 = vmatpush1.msra.mxu0 0.0
        %5896 = vmatprep.subr.mxu0 0.0
        %5897 = vmatpush1.msra.mxu0 0.0
        %5898 = vmatprep.subr.mxu0 0.0
        %5899 = vmatpush1.msra.mxu0 0.0
        %5900 = vmatprep.subr.mxu0 0.0
        %5901 = vmatpush1.msra.mxu0 0.0
        %5902 = vmatprep.subr.mxu0 0.0
        %5903 = vmatpush1.msra.mxu0 0.0
        %5904 = vmatprep.subr.mxu0 0.0
        %5905 = vmatpush1.msra.mxu0 0.0
        %5906 = vmatprep.subr.mxu0 0.0
        %5907 = vmatpush1.msra.mxu0 0.0
        %5908 = vmatprep.subr.mxu0 0.0
        %5909 = vmatpush1.msra.mxu0 0.0
        %5910 = vmatprep.subr.mxu0 0.0
        %5911 = vmatpush1.msra.mxu0 0.0
        %5912 = vmatprep.subr.mxu0 0.0
        %5913 = vmatpush1.msra.mxu0 0.0
        %5914 = vmatprep.subr.mxu0 0.0
        %5915 = vmatpush1.msra.mxu0 0.0
        %5916 = vmatprep.subr.mxu0 0.0
        %5917 = vmatpush1.msra.mxu0 0.0
        %5918 = vmatprep.subr.mxu0 0.0
        %5919 = vmatpush1.msra.mxu0 0.0
        %5920 = vmatprep.subr.mxu0 0.0
        %5921 = vmatpush1.msra.mxu0 0.0
        %5922 = vmatprep.subr.mxu0 0.0
        %5923 = vmatpush1.msra.mxu0 0.0
        %5924 = vmatprep.subr.mxu0 0.0
        %5925 = vmatpush1.msra.mxu0 0.0
        %5926 = vmatprep.subr.mxu0 0.0
        %5927 = vmatpush1.msra.mxu0 0.0
        %5928 = vmatprep.subr.mxu0 0.0
        %5929 = vmatpush1.msra.mxu0 0.0
        %5930 = vmatprep.subr.mxu0 0.0
        %5931 = vmatpush1.msra.mxu0 0.0
        %5932 = vmatprep.subr.mxu0 0.0
        %5933 = vmatpush1.msra.mxu0 0.0
        %5934 = vmatprep.subr.mxu0 0.0
        %5935 = vmatpush1.msra.mxu0 0.0
        %5936 = vmatprep.subr.mxu0 0.0
        %5937 = vmatpush1.msra.mxu0 0.0
        %5938 = vmatprep.subr.mxu0 0.0
        %5939 = vmatpush1.msra.mxu0 0.0
        %5940 = vmatprep.subr.mxu0 0.0
        %5941 = vmatpush1.msra.mxu0 0.0
        %5942 = vmatprep.subr.mxu0 0.0
        %5943 = vmatpush1.msra.mxu0 0.0
        %5944 = vmatprep.subr.mxu0 0.0
        %5945 = vmatpush1.msra.mxu0 0.0
        %5946 = vmatprep.subr.mxu0 0.0
        %5947 = vmatpush1.msra.mxu0 0.0
        %5948 = vmatprep.subr.mxu0 0.0
        %5949 = vmatpush1.msra.mxu0 0.0
        %5950 = vmatprep.subr.mxu0 0.0
        %5951 = vmatpush1.msra.mxu0 0.0
        %5952 = vmatprep.mubr.f32.mxu0 0.0
        %5953 = vmatmul.mubr.f32.gmra.mrb[0].mxu0 %v5886
        %v5954 = vpop.f32.mrb[0].mxu0
        %v5955 = vadd.f32 0.0, %v5954
        %v5956 = vpop.f32.mrb[0].mxu0
        %5957 = vdwg.mxu0
        %5958 = vrot.lane.b32.xlu0 %v5379, 104
        %v5959 = vpop.permute.xlu0 %5958
        %5960 = vrot.lane.b32.xlu0 %v5458, 104
        %v5961 = vpop.permute.xlu0 %5960
        %v5962 = vsel %vm1645, %v5959, 0
        %v5964 = vsel %vm1645, %v5961, 0
        %5966 = vmatprep.subr.mxu0 0.0
        %5967 = vmatpush1.xpose.msra.mxu0 %v5964
        %5968 = vmatprep.subr.mxu0 0.0
        %5969 = vmatpush1.xpose.msra.mxu0 0.0
        %5970 = vmatprep.subr.mxu0 0.0
        %5971 = vmatpush1.xpose.msra.mxu0 0.0
        %5972 = vmatprep.subr.mxu0 0.0
        %5973 = vmatpush1.xpose.msra.mxu0 0.0
        %5974 = vmatprep.subr.mxu0 0.0
        %5975 = vmatpush1.xpose.msra.mxu0 0.0
        %5976 = vmatprep.subr.mxu0 0.0
        %5977 = vmatpush1.xpose.msra.mxu0 0.0
        %5978 = vmatprep.subr.mxu0 0.0
        %5979 = vmatpush1.xpose.msra.mxu0 0.0
        %5980 = vmatprep.subr.mxu0 0.0
        %5981 = vmatpush1.xpose.msra.mxu0 0.0
        %5982 = vmatprep.subr.mxu0 0.0
        %5983 = vmatpush1.xpose.msra.mxu0 0.0
        %5984 = vmatprep.subr.mxu0 0.0
        %5985 = vmatpush1.xpose.msra.mxu0 0.0
        %5986 = vmatprep.subr.mxu0 0.0
        %5987 = vmatpush1.xpose.msra.mxu0 0.0
        %5988 = vmatprep.subr.mxu0 0.0
        %5989 = vmatpush1.xpose.msra.mxu0 0.0
        %5990 = vmatprep.subr.mxu0 0.0
        %5991 = vmatpush1.xpose.msra.mxu0 0.0
        %5992 = vmatprep.subr.mxu0 0.0
        %5993 = vmatpush1.xpose.msra.mxu0 0.0
        %5994 = vmatprep.subr.mxu0 0.0
        %5995 = vmatpush1.xpose.msra.mxu0 0.0
        %5996 = vmatprep.subr.mxu0 0.0
        %5997 = vmatpush1.xpose.msra.mxu0 0.0
        %5998 = vmatprep.subr.mxu0 0.0
        %5999 = vmatpush1.xpose.msra.mxu0 0.0
        %6000 = vmatprep.subr.mxu0 0.0
        %6001 = vmatpush1.xpose.msra.mxu0 0.0
        %6002 = vmatprep.subr.mxu0 0.0
        %6003 = vmatpush1.xpose.msra.mxu0 0.0
        %6004 = vmatprep.subr.mxu0 0.0
        %6005 = vmatpush1.xpose.msra.mxu0 0.0
        %6006 = vmatprep.subr.mxu0 0.0
        %6007 = vmatpush1.xpose.msra.mxu0 0.0
        %6008 = vmatprep.subr.mxu0 0.0
        %6009 = vmatpush1.xpose.msra.mxu0 0.0
        %6010 = vmatprep.subr.mxu0 0.0
        %6011 = vmatpush1.xpose.msra.mxu0 0.0
        %6012 = vmatprep.subr.mxu0 0.0
        %6013 = vmatpush1.xpose.msra.mxu0 0.0
        %6014 = vmatprep.subr.mxu0 0.0
        %6015 = vmatpush1.xpose.msra.mxu0 0.0
        %6016 = vmatprep.subr.mxu0 0.0
        %6017 = vmatpush1.xpose.msra.mxu0 0.0
        %6018 = vmatprep.subr.mxu0 0.0
        %6019 = vmatpush1.xpose.msra.mxu0 0.0
        %6020 = vmatprep.subr.mxu0 0.0
        %6021 = vmatpush1.xpose.msra.mxu0 0.0
        %6022 = vmatprep.subr.mxu0 0.0
        %6023 = vmatpush1.xpose.msra.mxu0 0.0
        %6024 = vmatprep.subr.mxu0 0.0
        %6025 = vmatpush1.xpose.msra.mxu0 0.0
        %6026 = vmatprep.subr.mxu0 0.0
        %6027 = vmatpush1.xpose.msra.mxu0 0.0
        %6028 = vmatprep.subr.mxu0 0.0
        %6029 = vmatpush1.xpose.msra.mxu0 0.0
        %6030 = vmatprep.mubr.f32.mxu0 0.0
        %6031 = vmatmul.mubr.f32.gmra.mrb[0].mxu0 %v5962
        %v6032 = vpop.f32.mrb[0].mxu0
        %v6033 = vadd.f32 0.0, %v6032
        %v6034 = vpop.f32.mrb[0].mxu0
        %6035 = vdwg.mxu0
        %v6036 = vmul.f32 %v6033, 0.35355338
        %v6037 = vsel %vm5538, %v6036, -inf
        %6038 = vmax.xlane.f32.xlu0 %v6037
        %v6039 = vpop.xlane.xlu0 %6038
        %v6040 = vsub.f32 %v6036, %v6039
        %v6041 = vmul.f32 %v6040, 1.442695
        %v6042 = vpow.pop %v6041
        %v6043 = vsel %vm5538, %v6042, 0.0
        %6044 = vadd.xlane.f32.xlu0 %v6043
        %v6045 = vpop.xlane.xlu0 %6044
        %v6046 = vrcp.pop %v6045
        %v6047 = vmul.f32 %v6042, %v6046
        %6048 = vrot.lane.b32.xlu0 %v5458, 72
        %v6049 = vpop.permute.xlu0 %6048
        %v6052 = vsel %vm1645, %v6047, 0
        %6054 = vmatprep.subr.mxu0 0.0
        %6055 = vmatpush1.msra.mxu0 %v6049
        %6056 = vmatprep.subr.mxu0 0.0
        %6057 = vmatpush1.msra.mxu0 0.0
        %6058 = vmatprep.subr.mxu0 0.0
        %6059 = vmatpush1.msra.mxu0 0.0
        %6060 = vmatprep.subr.mxu0 0.0
        %6061 = vmatpush1.msra.mxu0 0.0
        %6062 = vmatprep.subr.mxu0 0.0
        %6063 = vmatpush1.msra.mxu0 0.0
        %6064 = vmatprep.subr.mxu0 0.0
        %6065 = vmatpush1.msra.mxu0 0.0
        %6066 = vmatprep.subr.mxu0 0.0
        %6067 = vmatpush1.msra.mxu0 0.0
        %6068 = vmatprep.subr.mxu0 0.0
        %6069 = vmatpush1.msra.mxu0 0.0
        %6070 = vmatprep.subr.mxu0 0.0
        %6071 = vmatpush1.msra.mxu0 0.0
        %6072 = vmatprep.subr.mxu0 0.0
        %6073 = vmatpush1.msra.mxu0 0.0
        %6074 = vmatprep.subr.mxu0 0.0
        %6075 = vmatpush1.msra.mxu0 0.0
        %6076 = vmatprep.subr.mxu0 0.0
        %6077 = vmatpush1.msra.mxu0 0.0
        %6078 = vmatprep.subr.mxu0 0.0
        %6079 = vmatpush1.msra.mxu0 0.0
        %6080 = vmatprep.subr.mxu0 0.0
        %6081 = vmatpush1.msra.mxu0 0.0
        %6082 = vmatprep.subr.mxu0 0.0
        %6083 = vmatpush1.msra.mxu0 0.0
        %6084 = vmatprep.subr.mxu0 0.0
        %6085 = vmatpush1.msra.mxu0 0.0
        %6086 = vmatprep.subr.mxu0 0.0
        %6087 = vmatpush1.msra.mxu0 0.0
        %6088 = vmatprep.subr.mxu0 0.0
        %6089 = vmatpush1.msra.mxu0 0.0
        %6090 = vmatprep.subr.mxu0 0.0
        %6091 = vmatpush1.msra.mxu0 0.0
        %6092 = vmatprep.subr.mxu0 0.0
        %6093 = vmatpush1.msra.mxu0 0.0
        %6094 = vmatprep.subr.mxu0 0.0
        %6095 = vmatpush1.msra.mxu0 0.0
        %6096 = vmatprep.subr.mxu0 0.0
        %6097 = vmatpush1.msra.mxu0 0.0
        %6098 = vmatprep.subr.mxu0 0.0
        %6099 = vmatpush1.msra.mxu0 0.0
        %6100 = vmatprep.subr.mxu0 0.0
        %6101 = vmatpush1.msra.mxu0 0.0
        %6102 = vmatprep.subr.mxu0 0.0
        %6103 = vmatpush1.msra.mxu0 0.0
        %6104 = vmatprep.subr.mxu0 0.0
        %6105 = vmatpush1.msra.mxu0 0.0
        %6106 = vmatprep.subr.mxu0 0.0
        %6107 = vmatpush1.msra.mxu0 0.0
        %6108 = vmatprep.subr.mxu0 0.0
        %6109 = vmatpush1.msra.mxu0 0.0
        %6110 = vmatprep.subr.mxu0 0.0
        %6111 = vmatpush1.msra.mxu0 0.0
        %6112 = vmatprep.subr.mxu0 0.0
        %6113 = vmatpush1.msra.mxu0 0.0
        %6114 = vmatprep.subr.mxu0 0.0
        %6115 = vmatpush1.msra.mxu0 0.0
        %6116 = vmatprep.subr.mxu0 0.0
        %6117 = vmatpush1.msra.mxu0 0.0
        %6118 = vmatprep.mubr.f32.mxu0 0.0
        %6119 = vmatmul.mubr.f32.gmra.mrb[0].mxu0 %v6052
        %v6120 = vpop.f32.mrb[0].mxu0
        %v6121 = vadd.f32 0.0, %v6120
        %v6122 = vpop.f32.mrb[0].mxu0
        %6123 = vdwg.mxu0
        %v6125 = vsel %vm1645, %v5789, 0
        %6127 = vmatprep.subr.mxu0 0.0
        %6128 = vmatpush1.msra.mxu0 %v2964
        %6129 = vmatprep.subr.mxu0 0.0
        %6130 = vmatpush1.msra.mxu0 0.0
        %6131 = vmatprep.subr.mxu0 0.0
        %6132 = vmatpush1.msra.mxu0 0.0
        %6133 = vmatprep.subr.mxu0 0.0
        %6134 = vmatpush1.msra.mxu0 0.0
        %6135 = vmatprep.subr.mxu0 0.0
        %6136 = vmatpush1.msra.mxu0 0.0
        %6137 = vmatprep.subr.mxu0 0.0
        %6138 = vmatpush1.msra.mxu0 0.0
        %6139 = vmatprep.subr.mxu0 0.0
        %6140 = vmatpush1.msra.mxu0 0.0
        %6141 = vmatprep.subr.mxu0 0.0
        %6142 = vmatpush1.msra.mxu0 0.0
        %6143 = vmatprep.subr.mxu0 0.0
        %6144 = vmatpush1.msra.mxu0 0.0
        %6145 = vmatprep.subr.mxu0 0.0
        %6146 = vmatpush1.msra.mxu0 0.0
        %6147 = vmatprep.subr.mxu0 0.0
        %6148 = vmatpush1.msra.mxu0 0.0
        %6149 = vmatprep.subr.mxu0 0.0
        %6150 = vmatpush1.msra.mxu0 0.0
        %6151 = vmatprep.subr.mxu0 0.0
        %6152 = vmatpush1.msra.mxu0 0.0
        %6153 = vmatprep.subr.mxu0 0.0
        %6154 = vmatpush1.msra.mxu0 0.0
        %6155 = vmatprep.subr.mxu0 0.0
        %6156 = vmatpush1.msra.mxu0 0.0
        %6157 = vmatprep.subr.mxu0 0.0
        %6158 = vmatpush1.msra.mxu0 0.0
        %6159 = vmatprep.subr.mxu0 0.0
        %6160 = vmatpush1.msra.mxu0 0.0
        %6161 = vmatprep.subr.mxu0 0.0
        %6162 = vmatpush1.msra.mxu0 0.0
        %6163 = vmatprep.subr.mxu0 0.0
        %6164 = vmatpush1.msra.mxu0 0.0
        %6165 = vmatprep.subr.mxu0 0.0
        %6166 = vmatpush1.msra.mxu0 0.0
        %6167 = vmatprep.subr.mxu0 0.0
        %6168 = vmatpush1.msra.mxu0 0.0
        %6169 = vmatprep.subr.mxu0 0.0
        %6170 = vmatpush1.msra.mxu0 0.0
        %6171 = vmatprep.subr.mxu0 0.0
        %6172 = vmatpush1.msra.mxu0 0.0
        %6173 = vmatprep.subr.mxu0 0.0
        %6174 = vmatpush1.msra.mxu0 0.0
        %6175 = vmatprep.subr.mxu0 0.0
        %6176 = vmatpush1.msra.mxu0 0.0
        %6177 = vmatprep.subr.mxu0 0.0
        %6178 = vmatpush1.msra.mxu0 0.0
        %6179 = vmatprep.subr.mxu0 0.0
        %6180 = vmatpush1.msra.mxu0 0.0
        %6181 = vmatprep.subr.mxu0 0.0
        %6182 = vmatpush1.msra.mxu0 0.0
        %6183 = vmatprep.subr.mxu0 0.0
        %6184 = vmatpush1.msra.mxu0 0.0
        %6185 = vmatprep.subr.mxu0 0.0
        %6186 = vmatpush1.msra.mxu0 0.0
        %6187 = vmatprep.subr.mxu0 0.0
        %6188 = vmatpush1.msra.mxu0 0.0
        %6189 = vmatprep.subr.mxu0 0.0
        %6190 = vmatpush1.msra.mxu0 0.0
        %6191 = vmatprep.mubr.f32.mxu0 0.0
        %6192 = vmatmul.mubr.f32.gmra.mrb[0].mxu0 %v6125
        %v6193 = vpop.f32.mrb[0].mxu0
        %v6194 = vadd.f32 0.0, %v6193
        %v6195 = vpop.f32.mrb[0].mxu0
        %6196 = vdwg.mxu0
        %v6198 = vsel %vm1645, %v5623, 0
        %6200 = vmatprep.subr.mxu0 0.0
        %6201 = vmatpush1.msra.mxu0 %v2963
        %6202 = vmatprep.subr.mxu0 0.0
        %6203 = vmatpush1.msra.mxu0 0.0
        %6204 = vmatprep.subr.mxu0 0.0
        %6205 = vmatpush1.msra.mxu0 0.0
        %6206 = vmatprep.subr.mxu0 0.0
        %6207 = vmatpush1.msra.mxu0 0.0
        %6208 = vmatprep.subr.mxu0 0.0
        %6209 = vmatpush1.msra.mxu0 0.0
        %6210 = vmatprep.subr.mxu0 0.0
        %6211 = vmatpush1.msra.mxu0 0.0
        %6212 = vmatprep.subr.mxu0 0.0
        %6213 = vmatpush1.msra.mxu0 0.0
        %6214 = vmatprep.subr.mxu0 0.0
        %6215 = vmatpush1.msra.mxu0 0.0
        %6216 = vmatprep.subr.mxu0 0.0
        %6217 = vmatpush1.msra.mxu0 0.0
        %6218 = vmatprep.subr.mxu0 0.0
        %6219 = vmatpush1.msra.mxu0 0.0
        %6220 = vmatprep.subr.mxu0 0.0
        %6221 = vmatpush1.msra.mxu0 0.0
        %6222 = vmatprep.subr.mxu0 0.0
        %6223 = vmatpush1.msra.mxu0 0.0
        %6224 = vmatprep.subr.mxu0 0.0
        %6225 = vmatpush1.msra.mxu0 0.0
        %6226 = vmatprep.subr.mxu0 0.0
        %6227 = vmatpush1.msra.mxu0 0.0
        %6228 = vmatprep.subr.mxu0 0.0
        %6229 = vmatpush1.msra.mxu0 0.0
        %6230 = vmatprep.subr.mxu0 0.0
        %6231 = vmatpush1.msra.mxu0 0.0
        %6232 = vmatprep.subr.mxu0 0.0
        %6233 = vmatpush1.msra.mxu0 0.0
        %6234 = vmatprep.subr.mxu0 0.0
        %6235 = vmatpush1.msra.mxu0 0.0
        %6236 = vmatprep.subr.mxu0 0.0
        %6237 = vmatpush1.msra.mxu0 0.0
        %6238 = vmatprep.subr.mxu0 0.0
        %6239 = vmatpush1.msra.mxu0 0.0
        %6240 = vmatprep.subr.mxu0 0.0
        %6241 = vmatpush1.msra.mxu0 0.0
        %6242 = vmatprep.subr.mxu0 0.0
        %6243 = vmatpush1.msra.mxu0 0.0
        %6244 = vmatprep.subr.mxu0 0.0
        %6245 = vmatpush1.msra.mxu0 0.0
        %6246 = vmatprep.subr.mxu0 0.0
        %6247 = vmatpush1.msra.mxu0 0.0
        %6248 = vmatprep.subr.mxu0 0.0
        %6249 = vmatpush1.msra.mxu0 0.0
        %6250 = vmatprep.subr.mxu0 0.0
        %6251 = vmatpush1.msra.mxu0 0.0
        %6252 = vmatprep.subr.mxu0 0.0
        %6253 = vmatpush1.msra.mxu0 0.0
        %6254 = vmatprep.subr.mxu0 0.0
        %6255 = vmatpush1.msra.mxu0 0.0
        %6256 = vmatprep.subr.mxu0 0.0
        %6257 = vmatpush1.msra.mxu0 0.0
        %6258 = vmatprep.subr.mxu0 0.0
        %6259 = vmatpush1.msra.mxu0 0.0
        %6260 = vmatprep.subr.mxu0 0.0
        %6261 = vmatpush1.msra.mxu0 0.0
        %6262 = vmatprep.subr.mxu0 0.0
        %6263 = vmatpush1.msra.mxu0 0.0
        %6264 = vmatprep.mubr.f32.mxu0 0.0
        %6265 = vmatmul.mubr.f32.gmra.mrb[0].mxu0 %v6198
        %v6266 = vpop.f32.mrb[0].mxu0
        %v6267 = vadd.f32 %v6194, %v6266
        %v6268 = vpop.f32.mrb[0].mxu0
        %6269 = vdwg.mxu0
        %v6271 = vsel %vm1645, %v5955, 0
        %6273 = vmatprep.subr.mxu0 0.0
        %6274 = vmatpush1.msra.mxu0 %v2965
        %6275 = vmatprep.subr.mxu0 0.0
        %6276 = vmatpush1.msra.mxu0 0.0
        %6277 = vmatprep.subr.mxu0 0.0
        %6278 = vmatpush1.msra.mxu0 0.0
        %6279 = vmatprep.subr.mxu0 0.0
        %6280 = vmatpush1.msra.mxu0 0.0
        %6281 = vmatprep.subr.mxu0 0.0
        %6282 = vmatpush1.msra.mxu0 0.0
        %6283 = vmatprep.subr.mxu0 0.0
        %6284 = vmatpush1.msra.mxu0 0.0
        %6285 = vmatprep.subr.mxu0 0.0
        %6286 = vmatpush1.msra.mxu0 0.0
        %6287 = vmatprep.subr.mxu0 0.0
        %6288 = vmatpush1.msra.mxu0 0.0
        %6289 = vmatprep.subr.mxu0 0.0
        %6290 = vmatpush1.msra.mxu0 0.0
        %6291 = vmatprep.subr.mxu0 0.0
        %6292 = vmatpush1.msra.mxu0 0.0
        %6293 = vmatprep.subr.mxu0 0.0
        %6294 = vmatpush1.msra.mxu0 0.0
        %6295 = vmatprep.subr.mxu0 0.0
        %6296 = vmatpush1.msra.mxu0 0.0
        %6297 = vmatprep.subr.mxu0 0.0
        %6298 = vmatpush1.msra.mxu0 0.0
        %6299 = vmatprep.subr.mxu0 0.0
        %6300 = vmatpush1.msra.mxu0 0.0
        %6301 = vmatprep.subr.mxu0 0.0
        %6302 = vmatpush1.msra.mxu0 0.0
        %6303 = vmatprep.subr.mxu0 0.0
        %6304 = vmatpush1.msra.mxu0 0.0
        %6305 = vmatprep.subr.mxu0 0.0
        %6306 = vmatpush1.msra.mxu0 0.0
        %6307 = vmatprep.subr.mxu0 0.0
        %6308 = vmatpush1.msra.mxu0 0.0
        %6309 = vmatprep.subr.mxu0 0.0
        %6310 = vmatpush1.msra.mxu0 0.0
        %6311 = vmatprep.subr.mxu0 0.0
        %6312 = vmatpush1.msra.mxu0 0.0
        %6313 = vmatprep.subr.mxu0 0.0
        %6314 = vmatpush1.msra.mxu0 0.0
        %6315 = vmatprep.subr.mxu0 0.0
        %6316 = vmatpush1.msra.mxu0 0.0
        %6317 = vmatprep.subr.mxu0 0.0
        %6318 = vmatpush1.msra.mxu0 0.0
        %6319 = vmatprep.subr.mxu0 0.0
        %6320 = vmatpush1.msra.mxu0 0.0
        %6321 = vmatprep.subr.mxu0 0.0
        %6322 = vmatpush1.msra.mxu0 0.0
        %6323 = vmatprep.subr.mxu0 0.0
        %6324 = vmatpush1.msra.mxu0 0.0
        %6325 = vmatprep.subr.mxu0 0.0
        %6326 = vmatpush1.msra.mxu0 0.0
        %6327 = vmatprep.subr.mxu0 0.0
        %6328 = vmatpush1.msra.mxu0 0.0
        %6329 = vmatprep.subr.mxu0 0.0
        %6330 = vmatpush1.msra.mxu0 0.0
        %6331 = vmatprep.subr.mxu0 0.0
        %6332 = vmatpush1.msra.mxu0 0.0
        %6333 = vmatprep.subr.mxu0 0.0
        %6334 = vmatpush1.msra.mxu0 0.0
        %6335 = vmatprep.subr.mxu0 0.0
        %6336 = vmatpush1.msra.mxu0 0.0
        %6337 = vmatprep.mubr.f32.mxu0 0.0
        %6338 = vmatmul.mubr.f32.gmra.mrb[0].mxu0 %v6271
        %v6339 = vpop.f32.mrb[0].mxu0
        %v6340 = vadd.f32 0.0, %v6339
        %v6341 = vpop.f32.mrb[0].mxu0
        %6342 = vdwg.mxu0
        %v6343 = vadd.f32 %v6267, %v6340
        %v6345 = vsel %vm1645, %v6121, 0
        %6347 = vmatprep.subr.mxu0 0.0
        %6348 = vmatpush1.msra.mxu0 %v2966
        %6349 = vmatprep.subr.mxu0 0.0
        %6350 = vmatpush1.msra.mxu0 0.0
        %6351 = vmatprep.subr.mxu0 0.0
        %6352 = vmatpush1.msra.mxu0 0.0
        %6353 = vmatprep.subr.mxu0 0.0
        %6354 = vmatpush1.msra.mxu0 0.0
        %6355 = vmatprep.subr.mxu0 0.0
        %6356 = vmatpush1.msra.mxu0 0.0
        %6357 = vmatprep.subr.mxu0 0.0
        %6358 = vmatpush1.msra.mxu0 0.0
        %6359 = vmatprep.subr.mxu0 0.0
        %6360 = vmatpush1.msra.mxu0 0.0
        %6361 = vmatprep.subr.mxu0 0.0
        %6362 = vmatpush1.msra.mxu0 0.0
        %6363 = vmatprep.subr.mxu0 0.0
        %6364 = vmatpush1.msra.mxu0 0.0
        %6365 = vmatprep.subr.mxu0 0.0
        %6366 = vmatpush1.msra.mxu0 0.0
        %6367 = vmatprep.subr.mxu0 0.0
        %6368 = vmatpush1.msra.mxu0 0.0
        %6369 = vmatprep.subr.mxu0 0.0
        %6370 = vmatpush1.msra.mxu0 0.0
        %6371 = vmatprep.subr.mxu0 0.0
        %6372 = vmatpush1.msra.mxu0 0.0
        %6373 = vmatprep.subr.mxu0 0.0
        %6374 = vmatpush1.msra.mxu0 0.0
        %6375 = vmatprep.subr.mxu0 0.0
        %6376 = vmatpush1.msra.mxu0 0.0
        %6377 = vmatprep.subr.mxu0 0.0
        %6378 = vmatpush1.msra.mxu0 0.0
        %6379 = vmatprep.subr.mxu0 0.0
        %6380 = vmatpush1.msra.mxu0 0.0
        %6381 = vmatprep.subr.mxu0 0.0
        %6382 = vmatpush1.msra.mxu0 0.0
        %6383 = vmatprep.subr.mxu0 0.0
        %6384 = vmatpush1.msra.mxu0 0.0
        %6385 = vmatprep.subr.mxu0 0.0
        %6386 = vmatpush1.msra.mxu0 0.0
        %6387 = vmatprep.subr.mxu0 0.0
        %6388 = vmatpush1.msra.mxu0 0.0
        %6389 = vmatprep.subr.mxu0 0.0
        %6390 = vmatpush1.msra.mxu0 0.0
        %6391 = vmatprep.subr.mxu0 0.0
        %6392 = vmatpush1.msra.mxu0 0.0
        %6393 = vmatprep.subr.mxu0 0.0
        %6394 = vmatpush1.msra.mxu0 0.0
        %6395 = vmatprep.subr.mxu0 0.0
        %6396 = vmatpush1.msra.mxu0 0.0
        %6397 = vmatprep.subr.mxu0 0.0
        %6398 = vmatpush1.msra.mxu0 0.0
        %6399 = vmatprep.subr.mxu0 0.0
        %6400 = vmatpush1.msra.mxu0 0.0
        %6401 = vmatprep.subr.mxu0 0.0
        %6402 = vmatpush1.msra.mxu0 0.0
        %6403 = vmatprep.subr.mxu0 0.0
        %6404 = vmatpush1.msra.mxu0 0.0
        %6405 = vmatprep.subr.mxu0 0.0
        %6406 = vmatpush1.msra.mxu0 0.0
        %6407 = vmatprep.subr.mxu0 0.0
        %6408 = vmatpush1.msra.mxu0 0.0
        %6409 = vmatprep.subr.mxu0 0.0
        %6410 = vmatpush1.msra.mxu0 0.0
        %6411 = vmatprep.mubr.f32.mxu0 0.0
        %6412 = vmatmul.mubr.f32.gmra.mrb[0].mxu0 %v6345
        %v6413 = vpop.f32.mrb[0].mxu0
        %v6414 = vadd.f32 0.0, %v6413
        %v6415 = vpop.f32.mrb[0].mxu0
        %6416 = vdwg.mxu0
        %v6417 = vadd.f32 %v6343, %v6414
        %v6419 = vlaneseq
        %v6420 = vshrl.u32 %v6419, 7
        %v6421 = vsub.s32 0, %v6420
        %v6422 = vrot.slane %v2967, %v6421
        %v6424 = vadd.f32 %v6417, %v6422
        %v6425 = vadd.f32 %v5302, %v6424
        %v6426 = vsel %vm5275, %v6425, 0.0
        %6427 = vadd.xlane.f32.xlu0 %v6426
        %v6428 = vpop.xlane.xlu0 %6427
        %v6429 = vmul.f32 %v6428, %v2611
        %v6430 = vsub.f32 %v6425, %v6429
        %v6431 = vmul.f32 %v6430, %v6430
        %v6432 = vsel %vm5275, %v6431, 0.0
        %6433 = vadd.xlane.f32.xlu0 %v6432
        %v6434 = vpop.xlane.xlu0 %6433
        %v6435 = vmul.f32 %v6434, %v2611
        %v6436 = vadd.f32 %v6435, 1e-05
        %v6437 = vrsqrt.pop %v6436
        %v6438 = vmul.f32 %v6430, %v6437
        %v6440 = vlaneseq
        %v6441 = vshrl.u32 %v6440, 7
        %v6442 = vsub.s32 0, %v6441
        %v6443 = vrot.slane %v2970, %v6442
        %v6445 = vmul.f32 %v6438, %v6443
        %v6447 = vlaneseq
        %v6448 = vshrl.u32 %v6447, 7
        %v6449 = vsub.s32 0, %v6448
        %v6450 = vrot.slane %v2971, %v6449
        %v6452 = vadd.f32 %v6445, %v6450
        %v6454 = vlaneseq
        %v6455 = vshrl.u32 %v6454, 7
        %v6456 = vsub.s32 0, %v6455
        %v6457 = vrot.slane %v2976, %v6456
        %v6460 = vsel %vm1568, %v6452, 0
        %6462 = vmatprep.subr.mxu0 0.0
        %6463 = vmatpush1.msra.mxu0 %v2972
        %6464 = vmatprep.subr.mxu0 0.0
        %6465 = vmatpush1.msra.mxu0 %v2973
        %6466 = vmatprep.subr.mxu0 0.0
        %6467 = vmatpush1.msra.mxu0 %v2974
        %6468 = vmatprep.subr.mxu0 0.0
        %6469 = vmatpush1.msra.mxu0 %v2975
        %6470 = vmatprep.subr.mxu0 0.0
        %6471 = vmatpush1.msra.mxu0 0.0
        %6472 = vmatprep.subr.mxu0 0.0
        %6473 = vmatpush1.msra.mxu0 0.0
        %6474 = vmatprep.subr.mxu0 0.0
        %6475 = vmatpush1.msra.mxu0 0.0
        %6476 = vmatprep.subr.mxu0 0.0
        %6477 = vmatpush1.msra.mxu0 0.0
        %6478 = vmatprep.subr.mxu0 0.0
        %6479 = vmatpush1.msra.mxu0 0.0
        %6480 = vmatprep.subr.mxu0 0.0
        %6481 = vmatpush1.msra.mxu0 0.0
        %6482 = vmatprep.subr.mxu0 0.0
        %6483 = vmatpush1.msra.mxu0 0.0
        %6484 = vmatprep.subr.mxu0 0.0
        %6485 = vmatpush1.msra.mxu0 0.0
        %6486 = vmatprep.subr.mxu0 0.0
        %6487 = vmatpush1.msra.mxu0 0.0
        %6488 = vmatprep.subr.mxu0 0.0
        %6489 = vmatpush1.msra.mxu0 0.0
        %6490 = vmatprep.subr.mxu0 0.0
        %6491 = vmatpush1.msra.mxu0 0.0
        %6492 = vmatprep.subr.mxu0 0.0
        %6493 = vmatpush1.msra.mxu0 0.0
        %6494 = vmatprep.subr.mxu0 0.0
        %6495 = vmatpush1.msra.mxu0 0.0
        %6496 = vmatprep.subr.mxu0 0.0
        %6497 = vmatpush1.msra.mxu0 0.0
        %6498 = vmatprep.subr.mxu0 0.0
        %6499 = vmatpush1.msra.mxu0 0.0
        %6500 = vmatprep.subr.mxu0 0.0
        %6501 = vmatpush1.msra.mxu0 0.0
        %6502 = vmatprep.subr.mxu0 0.0
        %6503 = vmatpush1.msra.mxu0 0.0
        %6504 = vmatprep.subr.mxu0 0.0
        %6505 = vmatpush1.msra.mxu0 0.0
        %6506 = vmatprep.subr.mxu0 0.0
        %6507 = vmatpush1.msra.mxu0 0.0
        %6508 = vmatprep.subr.mxu0 0.0
        %6509 = vmatpush1.msra.mxu0 0.0
        %6510 = vmatprep.subr.mxu0 0.0
        %6511 = vmatpush1.msra.mxu0 0.0
        %6512 = vmatprep.subr.mxu0 0.0
        %6513 = vmatpush1.msra.mxu0 0.0
        %6514 = vmatprep.subr.mxu0 0.0
        %6515 = vmatpush1.msra.mxu0 0.0
        %6516 = vmatprep.subr.mxu0 0.0
        %6517 = vmatpush1.msra.mxu0 0.0
        %6518 = vmatprep.subr.mxu0 0.0
        %6519 = vmatpush1.msra.mxu0 0.0
        %6520 = vmatprep.subr.mxu0 0.0
        %6521 = vmatpush1.msra.mxu0 0.0
        %6522 = vmatprep.subr.mxu0 0.0
        %6523 = vmatpush1.msra.mxu0 0.0
        %6524 = vmatprep.subr.mxu0 0.0
        %6525 = vmatpush1.msra.mxu0 0.0
        %6526 = vmatprep.mubr.f32.mxu0 0.0
        %6527 = vmatmul.mubr.f32.gmra.mrb[0].mxu0 %v6460
        %v6528 = vpop.f32.mrb[0].mxu0
        %v6529 = vadd.f32 %v6457, %v6528
        %v6530 = vpop.f32.mrb[0].mxu0
        %6531 = vdwg.mxu0
        %v6532 = vmul.f32 %v6529, 0.5
        %v6533 = vmul.f32 %v6529, 0.70710677
        %v6534 = verf.f32.pop %v6533
        %v6535 = vadd.f32 %v6534, 1.0
        %v6536 = vmul.f32 %v6532, %v6535
        %v6538 = vlaneseq
        %v6539 = vshrl.u32 %v6538, 7
        %v6540 = vsub.s32 0, %v6539
        %v6541 = vrot.slane %v2985, %v6540
        %v6544 = vsel %vm2726, %v6536, 0
        %6546 = vmatprep.subr.mxu0 0.0
        %6547 = vmatpush1.msra.mxu0 %v2977
        %6548 = vmatprep.subr.mxu0 0.0
        %6549 = vmatpush1.msra.mxu0 %v2978
        %6550 = vmatprep.subr.mxu0 0.0
        %6551 = vmatpush1.msra.mxu0 %v2979
        %6552 = vmatprep.subr.mxu0 0.0
        %6553 = vmatpush1.msra.mxu0 %v2980
        %6554 = vmatprep.subr.mxu0 0.0
        %6555 = vmatpush1.msra.mxu0 %v2981
        %6556 = vmatprep.subr.mxu0 0.0
        %6557 = vmatpush1.msra.mxu0 %v2982
        %6558 = vmatprep.subr.mxu0 0.0
        %6559 = vmatpush1.msra.mxu0 %v2983
        %6560 = vmatprep.subr.mxu0 0.0
        %6561 = vmatpush1.msra.mxu0 %v2984
        %6562 = vmatprep.subr.mxu0 0.0
        %6563 = vmatpush1.msra.mxu0 0.0
        %6564 = vmatprep.subr.mxu0 0.0
        %6565 = vmatpush1.msra.mxu0 0.0
        %6566 = vmatprep.subr.mxu0 0.0
        %6567 = vmatpush1.msra.mxu0 0.0
        %6568 = vmatprep.subr.mxu0 0.0
        %6569 = vmatpush1.msra.mxu0 0.0
        %6570 = vmatprep.subr.mxu0 0.0
        %6571 = vmatpush1.msra.mxu0 0.0
        %6572 = vmatprep.subr.mxu0 0.0
        %6573 = vmatpush1.msra.mxu0 0.0
        %6574 = vmatprep.subr.mxu0 0.0
        %6575 = vmatpush1.msra.mxu0 0.0
        %6576 = vmatprep.subr.mxu0 0.0
        %6577 = vmatpush1.msra.mxu0 0.0
        %6578 = vmatprep.subr.mxu0 0.0
        %6579 = vmatpush1.msra.mxu0 0.0
        %6580 = vmatprep.subr.mxu0 0.0
        %6581 = vmatpush1.msra.mxu0 0.0
        %6582 = vmatprep.subr.mxu0 0.0
        %6583 = vmatpush1.msra.mxu0 0.0
        %6584 = vmatprep.subr.mxu0 0.0
        %6585 = vmatpush1.msra.mxu0 0.0
        %6586 = vmatprep.subr.mxu0 0.0
        %6587 = vmatpush1.msra.mxu0 0.0
        %6588 = vmatprep.subr.mxu0 0.0
        %6589 = vmatpush1.msra.mxu0 0.0
        %6590 = vmatprep.subr.mxu0 0.0
        %6591 = vmatpush1.msra.mxu0 0.0
        %6592 = vmatprep.subr.mxu0 0.0
        %6593 = vmatpush1.msra.mxu0 0.0
        %6594 = vmatprep.subr.mxu0 0.0
        %6595 = vmatpush1.msra.mxu0 0.0
        %6596 = vmatprep.subr.mxu0 0.0
        %6597 = vmatpush1.msra.mxu0 0.0
        %6598 = vmatprep.subr.mxu0 0.0
        %6599 = vmatpush1.msra.mxu0 0.0
        %6600 = vmatprep.subr.mxu0 0.0
        %6601 = vmatpush1.msra.mxu0 0.0
        %6602 = vmatprep.subr.mxu0 0.0
        %6603 = vmatpush1.msra.mxu0 0.0
        %6604 = vmatprep.subr.mxu0 0.0
        %6605 = vmatpush1.msra.mxu0 0.0
        %6606 = vmatprep.subr.mxu0 0.0
        %6607 = vmatpush1.msra.mxu0 0.0
        %6608 = vmatprep.subr.mxu0 0.0
        %6609 = vmatpush1.msra.mxu0 0.0
        %6610 = vmatprep.mubr.f32.mxu0 0.0
        %6611 = vmatmul.mubr.f32.gmra.mrb[0].mxu0 %v6544
        %v6612 = vpop.f32.mrb[0].mxu0
        %v6613 = vadd.f32 %v6541, %v6612
        %v6614 = vpop.f32.mrb[0].mxu0
        %6615 = vdwg.mxu0
        %v6616 = vadd.f32 %v6452, %v6613
        %v6617 = vsel %vm5275, %v6616, 0.0
        %6618 = vadd.xlane.f32.xlu0 %v6617
        %v6619 = vpop.xlane.xlu0 %6618
        %v6620 = vmul.f32 %v6619, %v2611
        %v6621 = vsub.f32 %v6616, %v6620
        %v6622 = vmul.f32 %v6621, %v6621
        %v6623 = vsel %vm5275, %v6622, 0.0
        %6624 = vadd.xlane.f32.xlu0 %v6623
        %v6625 = vpop.xlane.xlu0 %6624
        %v6626 = vmul.f32 %v6625, %v2611
        %v6627 = vadd.f32 %v6626, 1e-05
        %v6628 = vrsqrt.pop %v6627
        %v6629 = vmul.f32 %v6621, %v6628
        %v6631 = vlaneseq
        %v6632 = vshrl.u32 %v6631, 7
        %v6633 = vsub.s32 0, %v6632
        %v6634 = vrot.slane %v2986, %v6633
        %v6636 = vmul.f32 %v6629, %v6634
        %v6638 = vlaneseq
        %v6639 = vshrl.u32 %v6638, 7
        %v6640 = vsub.s32 0, %v6639
        %v6641 = vrot.slane %v2987, %v6640
        %v6643 = vadd.f32 %v6636, %v6641
        %v6644 = vld [vmem:[#allocation7] sm:$0x1]
        %v6645 = vld [vmem:[#allocation8] sm:$0x1]
        %v6646 = vsel %vm5275, %v6643, 0.0
        %6647 = vadd.xlane.f32.xlu0 %v6646
        %v6648 = vpop.xlane.xlu0 %6647
        %v6649 = vmul.f32 %v6648, %v2611
        %v6650 = vsub.f32 %v6643, %v6649
        %v6651 = vmul.f32 %v6650, %v6650
        %v6652 = vsel %vm5275, %v6651, 0.0
        %6653 = vadd.xlane.f32.xlu0 %v6652
        %v6654 = vpop.xlane.xlu0 %6653
        %v6655 = vmul.f32 %v6654, %v2611
        %v6656 = vadd.f32 %v6655, 1e-05
        %v6657 = vrsqrt.pop %v6656
        %v6658 = vmul.f32 %v6650, %v6657
        %v6660 = vlaneseq
        %v6661 = vshrl.u32 %v6660, 7
        %v6662 = vsub.s32 0, %v6661
        %v6663 = vrot.slane %v6644, %v6662
        %v6665 = vmul.f32 %v6658, %v6663
        %v6667 = vlaneseq
        %v6668 = vshrl.u32 %v6667, 7
        %v6669 = vsub.s32 0, %v6668
        %v6670 = vrot.slane %v6645, %v6669
        %v6672 = vadd.f32 %v6665, %v6670
        %v6673 = vld [vmem:[%s89] sm:$0xff]
        %v6674 = vld [vmem:[%s89 + $0x8] sm:$0xff]
        %v6675 = vld [vmem:[%s89 + $0x10] sm:$0xff]
        %v6676 = vld [vmem:[%s89 + $0x18] sm:$0xff]
        %v6677 = vld [vmem:[#allocation2] sm:$0x1]
        %v6679 = vlaneseq
        %v6680 = vshrl.u32 %v6679, 7
        %v6681 = vsub.s32 0, %v6680
        %v6682 = vrot.slane %v6677, %v6681
        %v6685 = vsel %vm1568, %v6672, 0
        %6687 = vmatprep.subr.mxu0 0.0
        %6688 = vmatpush1.msra.mxu0 %v6673
        %6689 = vmatprep.subr.mxu0 0.0
        %6690 = vmatpush1.msra.mxu0 %v6674
        %6691 = vmatprep.subr.mxu0 0.0
        %6692 = vmatpush1.msra.mxu0 %v6675
        %6693 = vmatprep.subr.mxu0 0.0
        %6694 = vmatpush1.msra.mxu0 %v6676
        %6695 = vmatprep.subr.mxu0 0.0
        %6696 = vmatpush1.msra.mxu0 0.0
        %6697 = vmatprep.subr.mxu0 0.0
        %6698 = vmatpush1.msra.mxu0 0.0
        %6699 = vmatprep.subr.mxu0 0.0
        %6700 = vmatpush1.msra.mxu0 0.0
        %6701 = vmatprep.subr.mxu0 0.0
        %6702 = vmatpush1.msra.mxu0 0.0
        %6703 = vmatprep.subr.mxu0 0.0
        %6704 = vmatpush1.msra.mxu0 0.0
        %6705 = vmatprep.subr.mxu0 0.0
        %6706 = vmatpush1.msra.mxu0 0.0
        %6707 = vmatprep.subr.mxu0 0.0
        %6708 = vmatpush1.msra.mxu0 0.0
        %6709 = vmatprep.subr.mxu0 0.0
        %6710 = vmatpush1.msra.mxu0 0.0
        %6711 = vmatprep.subr.mxu0 0.0
        %6712 = vmatpush1.msra.mxu0 0.0
        %6713 = vmatprep.subr.mxu0 0.0
        %6714 = vmatpush1.msra.mxu0 0.0
        %6715 = vmatprep.subr.mxu0 0.0
        %6716 = vmatpush1.msra.mxu0 0.0
        %6717 = vmatprep.subr.mxu0 0.0
        %6718 = vmatpush1.msra.mxu0 0.0
        %6719 = vmatprep.subr.mxu0 0.0
        %6720 = vmatpush1.msra.mxu0 0.0
        %6721 = vmatprep.subr.mxu0 0.0
        %6722 = vmatpush1.msra.mxu0 0.0
        %6723 = vmatprep.subr.mxu0 0.0
        %6724 = vmatpush1.msra.mxu0 0.0
        %6725 = vmatprep.subr.mxu0 0.0
        %6726 = vmatpush1.msra.mxu0 0.0
        %6727 = vmatprep.subr.mxu0 0.0
        %6728 = vmatpush1.msra.mxu0 0.0
        %6729 = vmatprep.subr.mxu0 0.0
        %6730 = vmatpush1.msra.mxu0 0.0
        %6731 = vmatprep.subr.mxu0 0.0
        %6732 = vmatpush1.msra.mxu0 0.0
        %6733 = vmatprep.subr.mxu0 0.0
        %6734 = vmatpush1.msra.mxu0 0.0
        %6735 = vmatprep.subr.mxu0 0.0
        %6736 = vmatpush1.msra.mxu0 0.0
        %6737 = vmatprep.subr.mxu0 0.0
        %6738 = vmatpush1.msra.mxu0 0.0
        %6739 = vmatprep.subr.mxu0 0.0
        %6740 = vmatpush1.msra.mxu0 0.0
        %6741 = vmatprep.subr.mxu0 0.0
        %6742 = vmatpush1.msra.mxu0 0.0
        %6743 = vmatprep.subr.mxu0 0.0
        %6744 = vmatpush1.msra.mxu0 0.0
        %6745 = vmatprep.subr.mxu0 0.0
        %6746 = vmatpush1.msra.mxu0 0.0
        %6747 = vmatprep.subr.mxu0 0.0
        %6748 = vmatpush1.msra.mxu0 0.0
        %6749 = vmatprep.subr.mxu0 0.0
        %6750 = vmatpush1.msra.mxu0 0.0
        %6751 = vmatprep.mubr.f32.mxu0 0.0
        %6752 = vmatmul.mubr.f32.gmra.mrb[0].mxu0 %v6685
        %v6753 = vpop.f32.mrb[0].mxu0
        %v6754 = vadd.f32 %v6682, %v6753
        %v6755 = vpop.f32.mrb[0].mxu0
        %6756 = vdwg.mxu0
        %vm6757 = vcmask 5120
        %6758 = vst.msk [vmem:[%s1443] sm:$0x3f] %vm6757, %v6754
        %p6759 = scmp.lt.s32.totalorder %s109, 1
        %s6760 = scalar_select %p6759, %s109, 1
        %s6761 = smul.addr %s6760, 8
        %s6762 = scalar_lea.vmem %s93, %s6761
        // Predicated region
        $region221: #{prt_plus_forward.1} parent=203 // pred_check
          %p6763 = pneg %p1103
        $region222: #{prt_plus_forward.1} parent=203 // pred_check_branch
          %6765 = sbr.rel (%p6763) target = $region224
        $region223: #{prt_plus_forward.1} parent=203 // pred_region
          _
        $region224: #{prt_plus_forward.1} parent=203 // pred_fallthru
          _
      $region204: #{prt_plus_forward.1} parent=5 // pred_fallthru
        _
      %p6766 = scmp.le.s32.totalorder 2, %s104
      // Predicated region
      $region225: #{prt_plus_forward.1} parent=5 // pred_check
        %p6767 = pneg %p6766
      $region226: #{prt_plus_forward.1} parent=5 // pred_check_branch
        %6769 = sbr.rel (%p6767) target = $region228
      $region227: #{prt_plus_forward.1} parent=5 // pred_region
        %s6770 = ssub.s32 %s104, 2
        // Predicated region
        $region229: #{prt_plus_forward.1} parent=227 // pred_check
          %p6771 = pneg %p1109
        $region230: #{prt_plus_forward.1} parent=227 // pred_check_branch
          %6773 = sbr.rel (%p6771) target = $region232
        $region231: #{prt_plus_forward.1} parent=227 // pred_region
          %p6774 = scmp.lt.s32.totalorder %s110, 1
          %s6775 = scalar_select %p6774, %s110, 1
          %s6776 = smul.addr %s6775, 8
          %s6777 = scalar_lea.vmem %s93, %s6776
        $region232: #{prt_plus_forward.1} parent=227 // pred_fallthru
          _
      $region228: #{prt_plus_forward.1} parent=5 // pred_fallthru
        _
    $region6: #{prt_plus_forward.1} parent=1 // loop_footer
      %s108 = sadd.s32 1, %s104
    $region7: #{prt_plus_forward.1} parent=1 // loop_footer_branch
      %103 = sbr.rel target = $region3
    $region8: #{prt_plus_forward.1} parent=1 // loop_exit
      _
    %6778 = vsyncpa [#allocation4], 1
    %s6779 = scalar_lea.sflag [#allocation4], 1
    %6780 = vsyncpa %s6779, 1
    %6781 = vsyncpa [#allocation6], 1
    %6782 = vsyncpa [#allocation9], 1

</llo_original>
